<compile_context>
chip_gen: v5e
topology: v5e:2x2
jax: 0.10.0
libtpu: 0.0.40
codegen_flags: <defaults>
</compile_context>

<pallas_src>
import math
from functools import partial
from types import SimpleNamespace

import numpy as np
import jax
import jax.numpy as jnp
from jax import lax
from jax.experimental import pallas as pl
from jax.experimental.pallas import tpu as pltpu

# ----------------------------- configuration -------------------------------
CFG = SimpleNamespace(
    T=10.0, t_ctx=2.0, t_unif_res=16,
    rtol=1e-4, atol=1e-5, solver="rk4",
    d_x=2, sig_y=0.1,
)
SPACE_RANGE = [[0.0, 1.0], [0.0, 1.0]]       # one range per spatial dim (d_x=2)

D_CTX = 4      # context feature dim
D_Z = 8        # latent dim (gamma / tau / z)
H_DYN = 32     # dynamics MLP hidden
H_PHI = 32     # continuous-decoder MLP hidden
D_U = 16       # u_hat feature dim
D_Y = 1        # observation (y) dim
N_MC = 32      # MonteCarlo samples (N=32 in the torch code)
LANES = 128    # lane-dense output width

WEIGHT_NAMES = ["enc_wg", "enc_bg", "enc_wt", "enc_bt",
                "dyn_w1", "dyn_b1", "dyn_w2", "dyn_b2",
                "phi_w1x", "phi_w1z", "phi_b1", "phi_w2", "phi_b2",
                "lm_w", "lm_b", "dec_w", "dec_b"]


# ------------------------------- fused kernel --------------------------------
def _fused_forward_kernel(
        ctx_ref, cmask_ref, eps_ref, tmask_ref, pts_ref, y_ref, wts_ref,
        wg_ref, bg_ref, wt_ref, bt_ref,
        dw1_ref, db1_ref, dw2_ref, db2_ref,
        pw1x_ref, pw1z_ref, pb1_ref, pw2_ref, pb2_ref,
        lw_ref, lb_ref, decw_ref, decb_ref,
        red_ref, aux_ref,
        *, dt, t_res, n_pad, bh, d_x, d_u, d_y, sig_y, last_core, last_local):
    """One grid step == bh trajectories batched on sublanes."""
    f32 = jnp.float32
    R = bh * n_pad                                        # stacked obs+MC rows

    # ---- encoder: masked mean-pool over context events + two linear heads ----
    pooled_rows = []
    for b in range(bh):                                   # static, bh <= 8
        m_b = cmask_ref[0, b]                             # [1, L]
        c_b = ctx_ref[0, b]                               # [L, Dc]
        s_b = jnp.dot(m_b, c_b, preferred_element_type=f32)           # [1, Dc]
        cnt = jnp.maximum(jnp.sum(m_b, axis=1, keepdims=True), 1.0)   # empty guard
        pooled_rows.append(s_b / cnt)
    pooled = pooled_rows[0] if bh == 1 else jnp.concatenate(pooled_rows, axis=0)

    gamma = jnp.dot(pooled, wg_ref[...], preferred_element_type=f32) + bg_ref[...]
    tau = jax.nn.softplus(
        jnp.dot(pooled, wt_ref[...], preferred_element_type=f32) + bt_ref[...])
    tmask = tmask_ref[0]                                  # [bh, 1] valid-traj mask
    # kl_norm_norm(gamma, 0, tau, 1).sum() per trajectory, masked for padding
    kl_rows = jnp.sum(-jnp.log(tau) + 0.5 * (tau * tau + gamma * gamma) - 0.5,
                      axis=1, keepdims=True)
    kl_sum = jnp.sum(tmask * kl_rows)

    z = gamma + tau * eps_ref[0]                          # [bh, Dz]

    # ---- fixed-step RK4 latent ODE roll-out (states collected, interp later) --
    # TODO(synk): adaptive odeint(rtol/atol/solver) replaced by fixed-step RK4
    # on the uniform t grid; tolerances are ignored.
    dw1 = dw1_ref[...]
    dw2 = dw2_ref[...]
    db1 = jnp.broadcast_to(db1_ref[...], (bh, dw1.shape[1]))   # hoisted broadcasts
    db2 = jnp.broadcast_to(db2_ref[...], (bh, dw2.shape[1]))

    def dyn(zz):
        h = jnp.tanh(jnp.dot(zz, dw1, preferred_element_type=f32) + db1)
        return jnp.dot(h, dw2, preferred_element_type=f32) + db2

    zs = [z]
    for _ in range(t_res - 1):                            # static unroll
        k1 = dyn(z)
        k2 = dyn(z + 0.5 * dt * k1)
        k3 = dyn(z + 0.5 * dt * k2)
        k4 = dyn(z + dt * k3)
        z = z + (dt / 6.0) * (k1 + 2.0 * k2 + 2.0 * k3 + k4)
        zs.append(z)

    # ---- hat-basis time interpolation as one matmul per trajectory (off-chain)
    pts = pts_ref[0]                                      # [R, 1+d_x]
    t_max = (t_res - 1) * dt
    t_q = jnp.clip(pts[:, 0:1], 0.0, t_max)               # clamp to grid
    x_q = pts[:, 1:1 + d_x]                               # [R, d_x]
    t_grid = lax.broadcasted_iota(jnp.int32, (1, t_res), 1).astype(f32) * dt
    w_full = jnp.maximum(0.0, 1.0 - jnp.abs(t_q - t_grid) * (1.0 / dt))  # [R,t_res]

    zq_rows = []
    for b in range(bh):                                   # static, tiny matmuls
        zs_b = jnp.concatenate([zk[b:b + 1, :] for zk in zs], axis=0)   # [t_res,Dz]
        w_b = w_full[b * n_pad:(b + 1) * n_pad, :]                      # [n_pad,t_res]
        zq_rows.append(jnp.dot(w_b, zs_b, preferred_element_type=f32))
    z_q = zq_rows[0] if bh == 1 else jnp.concatenate(zq_rows, axis=0)   # [R, Dz]

    # ---- continuous decoder phi (concat replaced by split matmuls) + heads ---
    h = jnp.tanh(jnp.dot(x_q, pw1x_ref[...], preferred_element_type=f32)
                 + jnp.dot(z_q, pw1z_ref[...], preferred_element_type=f32)
                 + pb1_ref[...])
    u = jnp.dot(h, pw2_ref[...], preferred_element_type=f32) + pb2_ref[...]     # [R,Du]
    lm = jax.nn.softplus(
        jnp.dot(u, lw_ref[...], preferred_element_type=f32) + lb_ref[...])      # [R,1]
    mu = jnp.dot(u, decw_ref[...], preferred_element_type=f32) + decb_ref[...]  # [R,1]

    # ---- reductions with host-precomputed per-row weights ---------------------
    wts = wts_ref[0]                                      # [R, 3]
    omask = wts[:, 0:1]                                   # obs rows
    wmae = wts[:, 1:2]                                    # 1/(n_obs_j * d_y)
    wmc = wts[:, 2:3]                                     # 1/N_MC on MC rows
    y = y_ref[0]                                          # [R, Dy]

    # TODO(synk): log is floored at 1e-37 to guard softplus underflow.
    log_lm = jnp.log(jnp.maximum(lm, 1e-37))
    log_norm = -0.5 * math.log(2.0 * math.pi) - math.log(sig_y)
    s_log = jnp.sum(omask * log_lm)                       # sum log lambda over obs
    gauss = jnp.sum(omask * (-0.5 * jnp.square((y - mu) / sig_y) + log_norm))
    mae_sum = jnp.sum(wmae * jnp.abs(mu - y))             # sum_j mean_j |mu - y|
    mc_sum = jnp.sum(wmc * lm)                            # sum_j MC-mean_j(lambda)

    # pack the 5 scalars into one lane-dense [1, 128] row
    lane = lax.broadcasted_iota(jnp.int32, (1, LANES), 1)

    def put(i, v):
        return jnp.where(lane == i, jnp.reshape(v, (1, 1)), 0.0)

    red_ref[0] = (put(0, s_log) + put(1, gauss) + put(2, mae_sum)
                  + put(3, mc_sum) + put(4, kl_sum))

    # ---- aux slab (u | lm | mu) only for the grid step owning the last traj --
    @pl.when(pl.program_id(0) == last_core)
    def _():
        r0 = last_local * n_pad                           # static
        u_last = u[r0:r0 + n_pad, :]
        lm_last = lm[r0:r0 + n_pad, :]
        mu_last = mu[r0:r0 + n_pad, :]
        aux_ref[0] = jnp.zeros((n_pad, LANES), f32)
        aux_ref[0, :, 0:d_u] = u_last
        aux_ref[0, :, d_u:d_u + 1] = lm_last
        aux_ref[0, :, d_u + 1:d_u + 1 + d_y] = mu_last


# ------------------------------- pallas wrapper -------------------------------
def fused_forward(ctx_c, cmask_c, eps_c, tmask_c, pts_c, y_c, wts_c, params, *,
                  dt, t_res, n_pad, bh, nc, d_x, sig_y, last_core, last_local):
    L, Dc = ctx_c.shape[2], ctx_c.shape[3]
    R = bh * n_pad
    P = pts_c.shape[2]

    data_specs = [
        pl.BlockSpec((1, bh, L, Dc), lambda c: (c, 0, 0, 0)),   # context
        pl.BlockSpec((1, bh, 1, L), lambda c: (c, 0, 0, 0)),    # context mask
        pl.BlockSpec((1, bh, D_Z), lambda c: (c, 0, 0)),        # eps
        pl.BlockSpec((1, bh, 1), lambda c: (c, 0, 0)),          # trajectory mask
        pl.BlockSpec((1, R, P), lambda c: (c, 0, 0)),           # points (obs+MC)
        pl.BlockSpec((1, R, D_Y), lambda c: (c, 0, 0)),         # y
        pl.BlockSpec((1, R, 3), lambda c: (c, 0, 0)),           # per-row weights
    ]
    # weights: full-array blocks with constant index_map -> VMEM-resident
    weight_specs = [pl.BlockSpec(params[name].shape, lambda c: (0, 0))
                    for name in WEIGHT_NAMES]

    out_shape = (jax.ShapeDtypeStruct((nc, 1, LANES), jnp.float32),
                 jax.ShapeDtypeStruct((nc, n_pad, LANES), jnp.float32))
    out_specs = (pl.BlockSpec((1, 1, LANES), lambda c: (c, 0, 0)),
                 pl.BlockSpec((1, n_pad, LANES), lambda c: (c, 0, 0)))

    red, aux_slab = pl.pallas_call(
        partial(_fused_forward_kernel, dt=dt, t_res=t_res, n_pad=n_pad, bh=bh,
                d_x=d_x, d_u=D_U, d_y=D_Y, sig_y=sig_y,
                last_core=last_core, last_local=last_local),
        grid=(nc,),
        out_shape=out_shape,
        in_specs=data_specs + weight_specs,
        out_specs=out_specs,
        compiler_params=pltpu.CompilerParams(
            dimension_semantics=("parallel",)),     # v7x: split halves over 2 TCs
    )(ctx_c, cmask_c, eps_c, tmask_c, pts_c, y_c, wts_c,
      *(params[name] for name in WEIGHT_NAMES))
    return red, aux_slab


# --------------------------- jitted device forward ----------------------------
@partial(jax.jit, static_argnames=(
    "nc", "bh", "n_pad", "n_obs_max", "dt", "t_res", "sig_y", "d_x",
    "volume", "batch_size", "last_core", "last_local"))
def _device_forward(params, key, context, cmask, tmask, pts_obs, yv, wts,
                    domain_lo, domain_width, *,
                    nc, bh, n_pad, n_obs_max, dt, t_res, sig_y, d_x,
                    volume, batch_size, last_core, last_local):
    b_pad = nc * bh
    p = 1 + d_x

    # RNG (reparameterisation eps + MonteCarlo query points) stays on device
    k_eps, k_mc = jax.random.split(key)
    eps = jax.random.normal(k_eps, (b_pad, D_Z), jnp.float32)
    unif = jax.random.uniform(k_mc, (b_pad, N_MC, p), jnp.float32)
    mc_pts = domain_lo + unif * domain_width
    pts = pts_obs.at[:, n_obs_max:n_obs_max + N_MC, :].set(mc_pts)

    L = context.shape[1]
    ctx_c = context.reshape(nc, bh, L, context.shape[2])
    cmask_c = cmask.reshape(nc, bh, 1, L)
    eps_c = eps.reshape(nc, bh, D_Z)
    tmask_c = tmask.reshape(nc, bh, 1)
    pts_c = pts.reshape(nc, bh * n_pad, p)
    y_c = yv.reshape(nc, bh * n_pad, D_Y)
    wts_c = wts.reshape(nc, bh * n_pad, 3)

    red, aux_slab = fused_forward(
        ctx_c, cmask_c, eps_c, tmask_c, pts_c, y_c, wts_c, params,
        dt=dt, t_res=t_res, n_pad=n_pad, bh=bh, nc=nc, d_x=d_x, sig_y=sig_y,
        last_core=last_core, last_local=last_local)

    s_log = jnp.sum(red[:, 0, 0])
    gauss = jnp.sum(red[:, 0, 1])
    mae_sum = jnp.sum(red[:, 0, 2])
    mc_sum = jnp.sum(red[:, 0, 3])
    kl_sum = jnp.sum(red[:, 0, 4])

    process_loglik = (s_log - volume * mc_sum)[None]
    obs_loglik = gauss[None]
    pred_mae = mae_sum / batch_size
    return obs_loglik, process_loglik, kl_sum, pred_mae, aux_slab


# ------------------------------- model glue ----------------------------------
def pad_context(contexts):
    L = max(c.shape[0] for c in contexts)
    B = len(contexts)
    Dc = contexts[0].shape[1]
    ctx = np.zeros((B, L, Dc), np.float32)
    mask = np.zeros((B, L), np.float32)
    for i, c in enumerate(contexts):
        ctx[i, : c.shape[0]] = c
        mask[i, : c.shape[0]] = 1.0
    return ctx, mask


def model_forward(params, batch, cfg, space_range, key):
    B = len(batch)
    contexts = [np.asarray(traj["context"], np.float32) for traj in batch]
    context, cmask2d = pad_context(contexts)                  # [B,L,Dc], [B,L]

    nc = 2 if B > 1 else 1                                    # 2-way split (v7x TCs)
    bh = -(-B // nc)                                          # ceil(B / nc)
    b_pad = nc * bh

    t_res = cfg.t_unif_res
    dt = (cfg.T - cfg.t_ctx) / (t_res - 1)
    P = 1 + cfg.d_x
    domain = np.array([[0.0, cfg.T - cfg.t_ctx]] + space_range, np.float32)
    volume = float(np.prod(domain[:, 1] - domain[:, 0]))

    obs = [tuple(np.asarray(a, np.float32) for a in traj["observations"])
           for traj in batch]
    n_obs = [o[0].shape[0] for o in obs]
    n_obs_max = max(n_obs)
    n_pad = int(math.ceil((n_obs_max + N_MC) / 8.0)) * 8      # sublane multiple

    L, Dc = context.shape[1], context.shape[2]
    ctx_pad = np.zeros((b_pad, L, Dc), np.float32); ctx_pad[:B] = context
    cm_pad = np.zeros((b_pad, L), np.float32);      cm_pad[:B] = cmask2d
    tmask = np.zeros((b_pad,), np.float32);         tmask[:B] = 1.0

    # stacked obs+MC points plus host-precomputed per-row reduction weights
    pts_np = np.zeros((b_pad, n_pad, P), np.float32)
    yv = np.zeros((b_pad, n_pad, D_Y), np.float32)
    wts = np.zeros((b_pad, n_pad, 3), np.float32)
    for j in range(B):
        t_j, x_j, y_j = obs[j]
        nj = n_obs[j]
        pts_np[j, :nj, 0] = t_j
        pts_np[j, :nj, 1:] = x_j
        yv[j, :nj, :] = y_j.reshape(nj, D_Y)
        wts[j, :nj, 0] = 1.0                                  # obs mask
        wts[j, :nj, 1] = 1.0 / (nj * D_Y)                     # per-traj MAE weight
        wts[j, n_obs_max:n_obs_max + N_MC, 2] = 1.0 / N_MC    # MC-mean weight

    last_core = (B - 1) // bh
    last_local = (B - 1) % bh

    obs_ll, proc_ll, kl_qp, pred_mae, aux_slab = _device_forward(
        params, key,
        jnp.asarray(ctx_pad), jnp.asarray(cm_pad), jnp.asarray(tmask),
        jnp.asarray(pts_np), jnp.asarray(yv), jnp.asarray(wts),
        jnp.asarray(domain[:, 0]), jnp.asarray(domain[:, 1] - domain[:, 0]),
        nc=nc, bh=bh, n_pad=n_pad, n_obs_max=n_obs_max, dt=dt, t_res=t_res,
        sig_y=cfg.sig_y, d_x=cfg.d_x, volume=volume, batch_size=B,
        last_core=last_core, last_local=last_local)

    # single host fetch, only for the aux dict (last trajectory's slab + mae)
    aux_np, mae_np = jax.device_get((aux_slab[last_core], pred_mae))
    n_last = n_obs[-1]
    t_l, x_l, y_l = obs[-1]
    aux = {
        "pred_mae": float(mae_np),
        "context": context[B - 1],
        "observations": np.concatenate(
            [t_l[:, None], x_l, y_l.reshape(-1, D_Y)], axis=-1),
        "u_hat": aux_np[:n_last, :D_U],
        "lm_hat": aux_np[:n_last, D_U:D_U + 1],
        "mu_hat": aux_np[:n_last, D_U + 1:D_U + 1 + D_Y],
    }
    return obs_ll, proc_ll, kl_qp, aux


# --------------------------- params / synthetic data -------------------------
def init_params(key):
    ks = jax.random.split(key, 8)

    def lin(k, fan_in, fan_out):
        return (1.0 / math.sqrt(fan_in)) * jax.random.normal(
            k, (fan_in, fan_out), jnp.float32)

    phi_w1 = lin(ks[4], CFG.d_x + D_Z, H_PHI)      # Linear(d_x+Dz, H), pre-split
    return {
        "enc_wg": lin(ks[0], D_CTX, D_Z), "enc_bg": jnp.zeros((1, D_Z), jnp.float32),
        "enc_wt": lin(ks[1], D_CTX, D_Z), "enc_bt": jnp.zeros((1, D_Z), jnp.float32),
        "dyn_w1": lin(ks[2], D_Z, H_DYN), "dyn_b1": jnp.zeros((1, H_DYN), jnp.float32),
        "dyn_w2": lin(ks[3], H_DYN, D_Z), "dyn_b2": jnp.zeros((1, D_Z), jnp.float32),
        "phi_w1x": phi_w1[:CFG.d_x],
        "phi_w1z": phi_w1[CFG.d_x:],
        "phi_b1": jnp.zeros((1, H_PHI), jnp.float32),
        "phi_w2": lin(ks[5], H_PHI, D_U), "phi_b2": jnp.zeros((1, D_U), jnp.float32),
        "lm_w": lin(ks[6], D_U, 1), "lm_b": jnp.zeros((1, 1), jnp.float32),
        "dec_w": lin(ks[7], D_U, D_Y), "dec_b": jnp.zeros((1, D_Y), jnp.float32),
    }


def make_batch(key, B=2, ctx_lens=(8, 6), n_obs=16):
    batch = []
    keys = jax.random.split(key, B)
    for b in range(B):
        kk = jax.random.split(keys[b], 4)
        ctx = np.asarray(jax.random.normal(kk[0], (ctx_lens[b], D_CTX)), np.float32)
        t = np.asarray(jax.random.uniform(kk[1], (n_obs,), minval=0.0,
                                          maxval=CFG.T - CFG.t_ctx), np.float32)
        x = np.asarray(jax.random.uniform(kk[2], (n_obs, CFG.d_x)), np.float32)
        y = np.asarray(jax.random.normal(kk[3], (n_obs, D_Y)), np.float32)
        batch.append({"context": ctx, "observations": (t, x, y)})
    return batch


# ----------------------------------- main -------------------------------------
if __name__ == "__main__":
    key = jax.random.PRNGKey(0)
    k_param, k_data, k_fwd = jax.random.split(key, 3)

    params = init_params(k_param)
    batch = make_batch(k_data)

    obs_ll, proc_ll, kl_qp, aux = model_forward(params, batch, CFG, SPACE_RANGE, k_fwd)
    jax.block_until_ready((obs_ll, proc_ll, kl_qp))
    print("KERNEL_OK")
</pallas_src>

<mosaic_0001>
module attributes {stable_mosaic.version = 11 : i64} {
  func.func @_fused_forward_kernel(%arg0: i32, %arg1: memref<1x1x8x4xf32, #tpu.memory_space<vmem>>, %arg2: memref<1x1x1x8xf32, #tpu.memory_space<vmem>>, %arg3: memref<1x1x8xf32, #tpu.memory_space<vmem>>, %arg4: memref<1x1x1xf32, #tpu.memory_space<vmem>>, %arg5: memref<1x48x3xf32, #tpu.memory_space<vmem>>, %arg6: memref<1x48x1xf32, #tpu.memory_space<vmem>>, %arg7: memref<1x48x3xf32, #tpu.memory_space<vmem>>, %arg8: memref<4x8xf32, #tpu.memory_space<vmem>>, %arg9: memref<1x8xf32, #tpu.memory_space<vmem>>, %arg10: memref<4x8xf32, #tpu.memory_space<vmem>>, %arg11: memref<1x8xf32, #tpu.memory_space<vmem>>, %arg12: memref<8x32xf32, #tpu.memory_space<vmem>>, %arg13: memref<1x32xf32, #tpu.memory_space<vmem>>, %arg14: memref<32x8xf32, #tpu.memory_space<vmem>>, %arg15: memref<1x8xf32, #tpu.memory_space<vmem>>, %arg16: memref<2x32xf32, #tpu.memory_space<vmem>>, %arg17: memref<8x32xf32, #tpu.memory_space<vmem>>, %arg18: memref<1x32xf32, #tpu.memory_space<vmem>>, %arg19: memref<32x16xf32, #tpu.memory_space<vmem>>, %arg20: memref<1x16xf32, #tpu.memory_space<vmem>>, %arg21: memref<16x1xf32, #tpu.memory_space<vmem>>, %arg22: memref<1x1xf32, #tpu.memory_space<vmem>>, %arg23: memref<16x1xf32, #tpu.memory_space<vmem>>, %arg24: memref<1x1xf32, #tpu.memory_space<vmem>>, %arg25: memref<1x1x128xf32, #tpu.memory_space<vmem>>, %arg26: memref<1x48x128xf32, #tpu.memory_space<vmem>>) attributes {dimension_semantics = [#tpu.dimension_semantics<parallel>], iteration_bounds = array<i64: 2>, scalar_prefetch = 0 : i64, scratch_operands = 0 : i64, tpu.core_type = #tpu.core_type<tc>, window_params = [{transform_indices = @transform_0, window_bounds = array<i64: 1, 1, 8, 4>}, {transform_indices = @transform_1, window_bounds = array<i64: 1, 1, 1, 8>}, {transform_indices = @transform_2, window_bounds = array<i64: 1, 1, 8>}, {transform_indices = @transform_3, window_bounds = array<i64: 1, 1, 1>}, {transform_indices = @transform_4, window_bounds = array<i64: 1, 48, 3>}, {transform_indices = @transform_5, window_bounds = array<i64: 1, 48, 1>}, {transform_indices = @transform_6, window_bounds = array<i64: 1, 48, 3>}, {pipeline_mode = #tpu.pipeline_mode<synchronous>, transform_indices = @transform_7, window_bounds = array<i64: 4, 8>}, {pipeline_mode = #tpu.pipeline_mode<synchronous>, transform_indices = @transform_8, window_bounds = array<i64: 1, 8>}, {pipeline_mode = #tpu.pipeline_mode<synchronous>, transform_indices = @transform_9, window_bounds = array<i64: 4, 8>}, {pipeline_mode = #tpu.pipeline_mode<synchronous>, transform_indices = @transform_10, window_bounds = array<i64: 1, 8>}, {pipeline_mode = #tpu.pipeline_mode<synchronous>, transform_indices = @transform_11, window_bounds = array<i64: 8, 32>}, {pipeline_mode = #tpu.pipeline_mode<synchronous>, transform_indices = @transform_12, window_bounds = array<i64: 1, 32>}, {pipeline_mode = #tpu.pipeline_mode<synchronous>, transform_indices = @transform_13, window_bounds = array<i64: 32, 8>}, {pipeline_mode = #tpu.pipeline_mode<synchronous>, transform_indices = @transform_14, window_bounds = array<i64: 1, 8>}, {pipeline_mode = #tpu.pipeline_mode<synchronous>, transform_indices = @transform_15, window_bounds = array<i64: 2, 32>}, {pipeline_mode = #tpu.pipeline_mode<synchronous>, transform_indices = @transform_16, window_bounds = array<i64: 8, 32>}, {pipeline_mode = #tpu.pipeline_mode<synchronous>, transform_indices = @transform_17, window_bounds = array<i64: 1, 32>}, {pipeline_mode = #tpu.pipeline_mode<synchronous>, transform_indices = @transform_18, window_bounds = array<i64: 32, 16>}, {pipeline_mode = #tpu.pipeline_mode<synchronous>, transform_indices = @transform_19, window_bounds = array<i64: 1, 16>}, {pipeline_mode = #tpu.pipeline_mode<synchronous>, transform_indices = @transform_20, window_bounds = array<i64: 16, 1>}, {pipeline_mode = #tpu.pipeline_mode<synchronous>, transform_indices = @transform_21, window_bounds = array<i64: 1, 1>}, {pipeline_mode = #tpu.pipeline_mode<synchronous>, transform_indices = @transform_22, window_bounds = array<i64: 16, 1>}, {pipeline_mode = #tpu.pipeline_mode<synchronous>, transform_indices = @transform_23, window_bounds = array<i64: 1, 1>}, {transform_indices = @transform_24, window_bounds = array<i64: 1, 1, 128>}, {transform_indices = @transform_25, window_bounds = array<i64: 1, 48, 128>}]} {
    %c0 = arith.constant 0 : index
    %c0_0 = arith.constant 0 : index
    %c0_1 = arith.constant 0 : index
    %c0_2 = arith.constant 0 : index
    %0 = vector.load %arg2[%c0, %c0_0, %c0_1, %c0_2] : memref<1x1x1x8xf32, #tpu.memory_space<vmem>>, vector<1x1x1x8xf32>
    %1 = vector.shape_cast %0 : vector<1x1x1x8xf32> to vector<1x8xf32>
    %c0_3 = arith.constant 0 : index
    %c0_4 = arith.constant 0 : index
    %c0_5 = arith.constant 0 : index
    %c0_6 = arith.constant 0 : index
    %2 = vector.load %arg1[%c0_3, %c0_4, %c0_5, %c0_6] : memref<1x1x8x4xf32, #tpu.memory_space<vmem>>, vector<1x1x8x4xf32>
    %3 = vector.shape_cast %2 : vector<1x1x8x4xf32> to vector<8x4xf32>
    %cst = arith.constant dense<0.000000e+00> : vector<1x4xf32>
    %4 = tpu.matmul %1, %3, %cst {dimension_numbers = #tpu.dot_dimension_numbers<[1], [0], [0], [1], [0, 0, 1, 1], [], []>} : vector<1x8xf32>, vector<8x4xf32>, vector<1x4xf32> -> vector<1x4xf32>
    %cst_7 = arith.constant dense<0.000000e+00> : vector<1xf32>
    %5 = vector.multi_reduction <add>, %1, %cst_7 [1] : vector<1x8xf32> to vector<1xf32>
    %6 = vector.shape_cast %5 : vector<1xf32> to vector<1x1xf32>
    %cst_8 = arith.constant 1.000000e+00 : f32
    %7 = vector.broadcast %cst_8 : f32 to vector<1x1xf32>
    %8 = arith.maximumf %6, %7 : vector<1x1xf32>
    %9 = vector.broadcast %8 : vector<1x1xf32> to vector<1x4xf32>
    %10 = arith.divf %4, %9 : vector<1x4xf32>
    %c0_9 = arith.constant 0 : index
    %c0_10 = arith.constant 0 : index
    %11 = vector.load %arg8[%c0_9, %c0_10] : memref<4x8xf32, #tpu.memory_space<vmem>>, vector<4x8xf32>
    %cst_11 = arith.constant dense<0.000000e+00> : vector<1x8xf32>
    %12 = tpu.matmul %10, %11, %cst_11 {dimension_numbers = #tpu.dot_dimension_numbers<[1], [0], [0], [1], [0, 0, 1, 1], [], []>} : vector<1x4xf32>, vector<4x8xf32>, vector<1x8xf32> -> vector<1x8xf32>
    %c0_12 = arith.constant 0 : index
    %c0_13 = arith.constant 0 : index
    %13 = vector.load %arg9[%c0_12, %c0_13] : memref<1x8xf32, #tpu.memory_space<vmem>>, vector<1x8xf32>
    %14 = arith.addf %12, %13 : vector<1x8xf32>
    %c0_14 = arith.constant 0 : index
    %c0_15 = arith.constant 0 : index
    %15 = vector.load %arg10[%c0_14, %c0_15] : memref<4x8xf32, #tpu.memory_space<vmem>>, vector<4x8xf32>
    %cst_16 = arith.constant dense<0.000000e+00> : vector<1x8xf32>
    %16 = tpu.matmul %10, %15, %cst_16 {dimension_numbers = #tpu.dot_dimension_numbers<[1], [0], [0], [1], [0, 0, 1, 1], [], []>} : vector<1x4xf32>, vector<4x8xf32>, vector<1x8xf32> -> vector<1x8xf32>
    %c0_17 = arith.constant 0 : index
    %c0_18 = arith.constant 0 : index
    %17 = vector.load %arg11[%c0_17, %c0_18] : memref<1x8xf32, #tpu.memory_space<vmem>>, vector<1x8xf32>
    %18 = arith.addf %16, %17 : vector<1x8xf32>
    %cst_19 = arith.constant 0.000000e+00 : f32
    %19 = vector.broadcast %cst_19 : f32 to vector<1x8xf32>
    %20 = arith.maximumf %18, %19 : vector<1x8xf32>
    %21 = vector.broadcast %cst_19 : f32 to vector<1x8xf32>
    %22 = arith.subf %18, %21 : vector<1x8xf32>
    %23 = arith.cmpf one, %22, %22 : vector<1x8xf32>
    %24 = vector.broadcast %cst_19 : f32 to vector<1x8xf32>
    %25 = arith.addf %18, %24 : vector<1x8xf32>
    %26 = math.absf %22 : vector<1x8xf32>
    %cst_20 = arith.constant 0.000000e+00 : f32
    %27 = vector.broadcast %cst_20 : f32 to vector<1x8xf32>
    %28 = arith.subf %27, %26 : vector<1x8xf32>
    %29 = math.exp %28 : vector<1x8xf32>
    %30 = math.log1p %29 : vector<1x8xf32>
    %31 = arith.addf %20, %30 : vector<1x8xf32>
    %32 = arith.select %23, %25, %31 : vector<1x8xi1>, vector<1x8xf32>
    %c0_21 = arith.constant 0 : index
    %c0_22 = arith.constant 0 : index
    %c0_23 = arith.constant 0 : index
    %33 = vector.load %arg4[%c0_21, %c0_22, %c0_23] : memref<1x1x1xf32, #tpu.memory_space<vmem>>, vector<1x1x1xf32>
    %34 = vector.shape_cast %33 : vector<1x1x1xf32> to vector<1x1xf32>
    %35 = math.log %32 : vector<1x8xf32>
    %cst_24 = arith.constant 0.000000e+00 : f32
    %36 = vector.broadcast %cst_24 : f32 to vector<1x8xf32>
    %37 = arith.subf %36, %35 : vector<1x8xf32>
    %38 = arith.mulf %32, %32 : vector<1x8xf32>
    %39 = arith.mulf %14, %14 : vector<1x8xf32>
    %40 = arith.addf %38, %39 : vector<1x8xf32>
    %cst_25 = arith.constant 5.000000e-01 : f32
    %41 = vector.broadcast %cst_25 : f32 to vector<1x8xf32>
    %42 = arith.mulf %41, %40 : vector<1x8xf32>
    %43 = arith.addf %37, %42 : vector<1x8xf32>
    %cst_26 = arith.constant 5.000000e-01 : f32
    %44 = vector.broadcast %cst_26 : f32 to vector<1x8xf32>
    %45 = arith.subf %43, %44 : vector<1x8xf32>
    %cst_27 = arith.constant dense<0.000000e+00> : vector<1xf32>
    %46 = vector.multi_reduction <add>, %45, %cst_27 [1] : vector<1x8xf32> to vector<1xf32>
    %47 = vector.shape_cast %46 : vector<1xf32> to vector<1x1xf32>
    %48 = arith.mulf %34, %47 : vector<1x1xf32>
    %49 = vector.shape_cast %48 : vector<1x1xf32> to vector<1x1x1xf32>
    %cst_28 = arith.constant dense<0.000000e+00> : vector<1xf32>
    %50 = vector.multi_reduction <add>, %49, %cst_28 [1, 2] : vector<1x1x1xf32> to vector<1xf32>
    %51 = vector.shape_cast %50 : vector<1xf32> to vector<1x1x1xf32>
    %52 = vector.extract %51[0, 0, 0] : f32 from vector<1x1x1xf32>
    %c0_29 = arith.constant 0 : index
    %c0_30 = arith.constant 0 : index
    %c0_31 = arith.constant 0 : index
    %53 = vector.load %arg3[%c0_29, %c0_30, %c0_31] : memref<1x1x8xf32, #tpu.memory_space<vmem>>, vector<1x1x8xf32>
    %54 = vector.shape_cast %53 : vector<1x1x8xf32> to vector<1x8xf32>
    %55 = arith.mulf %32, %54 : vector<1x8xf32>
    %56 = arith.addf %14, %55 : vector<1x8xf32>
    %c0_32 = arith.constant 0 : index
    %c0_33 = arith.constant 0 : index
    %57 = vector.load %arg12[%c0_32, %c0_33] : memref<8x32xf32, #tpu.memory_space<vmem>>, vector<8x32xf32>
    %c0_34 = arith.constant 0 : index
    %c0_35 = arith.constant 0 : index
    %58 = vector.load %arg14[%c0_34, %c0_35] : memref<32x8xf32, #tpu.memory_space<vmem>>, vector<32x8xf32>
    %c0_36 = arith.constant 0 : index
    %c0_37 = arith.constant 0 : index
    %59 = vector.load %arg13[%c0_36, %c0_37] : memref<1x32xf32, #tpu.memory_space<vmem>>, vector<1x32xf32>
    %c0_38 = arith.constant 0 : index
    %c0_39 = arith.constant 0 : index
    %60 = vector.load %arg15[%c0_38, %c0_39] : memref<1x8xf32, #tpu.memory_space<vmem>>, vector<1x8xf32>
    %cst_40 = arith.constant dense<0.000000e+00> : vector<1x32xf32>
    %61 = tpu.matmul %56, %57, %cst_40 {dimension_numbers = #tpu.dot_dimension_numbers<[1], [0], [0], [1], [0, 0, 1, 1], [], []>} : vector<1x8xf32>, vector<8x32xf32>, vector<1x32xf32> -> vector<1x32xf32>
    %62 = arith.addf %61, %59 : vector<1x32xf32>
    %63 = math.tanh %62 : vector<1x32xf32>
    %cst_41 = arith.constant dense<0.000000e+00> : vector<1x8xf32>
    %64 = tpu.matmul %63, %58, %cst_41 {dimension_numbers = #tpu.dot_dimension_numbers<[1], [0], [0], [1], [0, 0, 1, 1], [], []>} : vector<1x32xf32>, vector<32x8xf32>, vector<1x8xf32> -> vector<1x8xf32>
    %65 = arith.addf %64, %60 : vector<1x8xf32>
    %cst_42 = arith.constant 0.266666681 : f32
    %66 = vector.broadcast %cst_42 : f32 to vector<1x8xf32>
    %67 = arith.mulf %66, %65 : vector<1x8xf32>
    %68 = arith.addf %56, %67 : vector<1x8xf32>
    %cst_43 = arith.constant dense<0.000000e+00> : vector<1x32xf32>
    %69 = tpu.matmul %68, %57, %cst_43 {dimension_numbers = #tpu.dot_dimension_numbers<[1], [0], [0], [1], [0, 0, 1, 1], [], []>} : vector<1x8xf32>, vector<8x32xf32>, vector<1x32xf32> -> vector<1x32xf32>
    %70 = arith.addf %69, %59 : vector<1x32xf32>
    %71 = math.tanh %70 : vector<1x32xf32>
    %cst_44 = arith.constant dense<0.000000e+00> : vector<1x8xf32>
    %72 = tpu.matmul %71, %58, %cst_44 {dimension_numbers = #tpu.dot_dimension_numbers<[1], [0], [0], [1], [0, 0, 1, 1], [], []>} : vector<1x32xf32>, vector<32x8xf32>, vector<1x8xf32> -> vector<1x8xf32>
    %73 = arith.addf %72, %60 : vector<1x8xf32>
    %cst_45 = arith.constant 0.266666681 : f32
    %74 = vector.broadcast %cst_45 : f32 to vector<1x8xf32>
    %75 = arith.mulf %74, %73 : vector<1x8xf32>
    %76 = arith.addf %56, %75 : vector<1x8xf32>
    %cst_46 = arith.constant dense<0.000000e+00> : vector<1x32xf32>
    %77 = tpu.matmul %76, %57, %cst_46 {dimension_numbers = #tpu.dot_dimension_numbers<[1], [0], [0], [1], [0, 0, 1, 1], [], []>} : vector<1x8xf32>, vector<8x32xf32>, vector<1x32xf32> -> vector<1x32xf32>
    %78 = arith.addf %77, %59 : vector<1x32xf32>
    %79 = math.tanh %78 : vector<1x32xf32>
    %cst_47 = arith.constant dense<0.000000e+00> : vector<1x8xf32>
    %80 = tpu.matmul %79, %58, %cst_47 {dimension_numbers = #tpu.dot_dimension_numbers<[1], [0], [0], [1], [0, 0, 1, 1], [], []>} : vector<1x32xf32>, vector<32x8xf32>, vector<1x8xf32> -> vector<1x8xf32>
    %81 = arith.addf %80, %60 : vector<1x8xf32>
    %cst_48 = arith.constant 0.533333361 : f32
    %82 = vector.broadcast %cst_48 : f32 to vector<1x8xf32>
    %83 = arith.mulf %82, %81 : vector<1x8xf32>
    %84 = arith.addf %56, %83 : vector<1x8xf32>
    %cst_49 = arith.constant dense<0.000000e+00> : vector<1x32xf32>
    %85 = tpu.matmul %84, %57, %cst_49 {dimension_numbers = #tpu.dot_dimension_numbers<[1], [0], [0], [1], [0, 0, 1, 1], [], []>} : vector<1x8xf32>, vector<8x32xf32>, vector<1x32xf32> -> vector<1x32xf32>
    %86 = arith.addf %85, %59 : vector<1x32xf32>
    %87 = math.tanh %86 : vector<1x32xf32>
    %cst_50 = arith.constant dense<0.000000e+00> : vector<1x8xf32>
    %88 = tpu.matmul %87, %58, %cst_50 {dimension_numbers = #tpu.dot_dimension_numbers<[1], [0], [0], [1], [0, 0, 1, 1], [], []>} : vector<1x32xf32>, vector<32x8xf32>, vector<1x8xf32> -> vector<1x8xf32>
    %89 = arith.addf %88, %60 : vector<1x8xf32>
    %cst_51 = arith.constant 2.000000e+00 : f32
    %90 = vector.broadcast %cst_51 : f32 to vector<1x8xf32>
    %91 = arith.mulf %90, %73 : vector<1x8xf32>
    %92 = arith.addf %65, %91 : vector<1x8xf32>
    %cst_52 = arith.constant 2.000000e+00 : f32
    %93 = vector.broadcast %cst_52 : f32 to vector<1x8xf32>
    %94 = arith.mulf %93, %81 : vector<1x8xf32>
    %95 = arith.addf %92, %94 : vector<1x8xf32>
    %96 = arith.addf %95, %89 : vector<1x8xf32>
    %cst_53 = arith.constant 0.088888891 : f32
    %97 = vector.broadcast %cst_53 : f32 to vector<1x8xf32>
    %98 = arith.mulf %97, %96 : vector<1x8xf32>
    %99 = arith.addf %56, %98 : vector<1x8xf32>
    %cst_54 = arith.constant dense<0.000000e+00> : vector<1x32xf32>
    %100 = tpu.matmul %99, %57, %cst_54 {dimension_numbers = #tpu.dot_dimension_numbers<[1], [0], [0], [1], [0, 0, 1, 1], [], []>} : vector<1x8xf32>, vector<8x32xf32>, vector<1x32xf32> -> vector<1x32xf32>
    %101 = arith.addf %100, %59 : vector<1x32xf32>
    %102 = math.tanh %101 : vector<1x32xf32>
    %cst_55 = arith.constant dense<0.000000e+00> : vector<1x8xf32>
    %103 = tpu.matmul %102, %58, %cst_55 {dimension_numbers = #tpu.dot_dimension_numbers<[1], [0], [0], [1], [0, 0, 1, 1], [], []>} : vector<1x32xf32>, vector<32x8xf32>, vector<1x8xf32> -> vector<1x8xf32>
    %104 = arith.addf %103, %60 : vector<1x8xf32>
    %cst_56 = arith.constant 0.266666681 : f32
    %105 = vector.broadcast %cst_56 : f32 to vector<1x8xf32>
    %106 = arith.mulf %105, %104 : vector<1x8xf32>
    %107 = arith.addf %99, %106 : vector<1x8xf32>
    %cst_57 = arith.constant dense<0.000000e+00> : vector<1x32xf32>
    %108 = tpu.matmul %107, %57, %cst_57 {dimension_numbers = #tpu.dot_dimension_numbers<[1], [0], [0], [1], [0, 0, 1, 1], [], []>} : vector<1x8xf32>, vector<8x32xf32>, vector<1x32xf32> -> vector<1x32xf32>
    %109 = arith.addf %108, %59 : vector<1x32xf32>
    %110 = math.tanh %109 : vector<1x32xf32>
    %cst_58 = arith.constant dense<0.000000e+00> : vector<1x8xf32>
    %111 = tpu.matmul %110, %58, %cst_58 {dimension_numbers = #tpu.dot_dimension_numbers<[1], [0], [0], [1], [0, 0, 1, 1], [], []>} : vector<1x32xf32>, vector<32x8xf32>, vector<1x8xf32> -> vector<1x8xf32>
    %112 = arith.addf %111, %60 : vector<1x8xf32>
    %cst_59 = arith.constant 0.266666681 : f32
    %113 = vector.broadcast %cst_59 : f32 to vector<1x8xf32>
    %114 = arith.mulf %113, %112 : vector<1x8xf32>
    %115 = arith.addf %99, %114 : vector<1x8xf32>
    %cst_60 = arith.constant dense<0.000000e+00> : vector<1x32xf32>
    %116 = tpu.matmul %115, %57, %cst_60 {dimension_numbers = #tpu.dot_dimension_numbers<[1], [0], [0], [1], [0, 0, 1, 1], [], []>} : vector<1x8xf32>, vector<8x32xf32>, vector<1x32xf32> -> vector<1x32xf32>
    %117 = arith.addf %116, %59 : vector<1x32xf32>
    %118 = math.tanh %117 : vector<1x32xf32>
    %cst_61 = arith.constant dense<0.000000e+00> : vector<1x8xf32>
    %119 = tpu.matmul %118, %58, %cst_61 {dimension_numbers = #tpu.dot_dimension_numbers<[1], [0], [0], [1], [0, 0, 1, 1], [], []>} : vector<1x32xf32>, vector<32x8xf32>, vector<1x8xf32> -> vector<1x8xf32>
    %120 = arith.addf %119, %60 : vector<1x8xf32>
    %cst_62 = arith.constant 0.533333361 : f32
    %121 = vector.broadcast %cst_62 : f32 to vector<1x8xf32>
    %122 = arith.mulf %121, %120 : vector<1x8xf32>
    %123 = arith.addf %99, %122 : vector<1x8xf32>
    %cst_63 = arith.constant dense<0.000000e+00> : vector<1x32xf32>
    %124 = tpu.matmul %123, %57, %cst_63 {dimension_numbers = #tpu.dot_dimension_numbers<[1], [0], [0], [1], [0, 0, 1, 1], [], []>} : vector<1x8xf32>, vector<8x32xf32>, vector<1x32xf32> -> vector<1x32xf32>
    %125 = arith.addf %124, %59 : vector<1x32xf32>
    %126 = math.tanh %125 : vector<1x32xf32>
    %cst_64 = arith.constant dense<0.000000e+00> : vector<1x8xf32>
    %127 = tpu.matmul %126, %58, %cst_64 {dimension_numbers = #tpu.dot_dimension_numbers<[1], [0], [0], [1], [0, 0, 1, 1], [], []>} : vector<1x32xf32>, vector<32x8xf32>, vector<1x8xf32> -> vector<1x8xf32>
    %128 = arith.addf %127, %60 : vector<1x8xf32>
    %cst_65 = arith.constant 2.000000e+00 : f32
    %129 = vector.broadcast %cst_65 : f32 to vector<1x8xf32>
    %130 = arith.mulf %129, %112 : vector<1x8xf32>
    %131 = arith.addf %104, %130 : vector<1x8xf32>
    %cst_66 = arith.constant 2.000000e+00 : f32
    %132 = vector.broadcast %cst_66 : f32 to vector<1x8xf32>
    %133 = arith.mulf %132, %120 : vector<1x8xf32>
    %134 = arith.addf %131, %133 : vector<1x8xf32>
    %135 = arith.addf %134, %128 : vector<1x8xf32>
    %cst_67 = arith.constant 0.088888891 : f32
    %136 = vector.broadcast %cst_67 : f32 to vector<1x8xf32>
    %137 = arith.mulf %136, %135 : vector<1x8xf32>
    %138 = arith.addf %99, %137 : vector<1x8xf32>
    %cst_68 = arith.constant dense<0.000000e+00> : vector<1x32xf32>
    %139 = tpu.matmul %138, %57, %cst_68 {dimension_numbers = #tpu.dot_dimension_numbers<[1], [0], [0], [1], [0, 0, 1, 1], [], []>} : vector<1x8xf32>, vector<8x32xf32>, vector<1x32xf32> -> vector<1x32xf32>
    %140 = arith.addf %139, %59 : vector<1x32xf32>
    %141 = math.tanh %140 : vector<1x32xf32>
    %cst_69 = arith.constant dense<0.000000e+00> : vector<1x8xf32>
    %142 = tpu.matmul %141, %58, %cst_69 {dimension_numbers = #tpu.dot_dimension_numbers<[1], [0], [0], [1], [0, 0, 1, 1], [], []>} : vector<1x32xf32>, vector<32x8xf32>, vector<1x8xf32> -> vector<1x8xf32>
    %143 = arith.addf %142, %60 : vector<1x8xf32>
    %cst_70 = arith.constant 0.266666681 : f32
    %144 = vector.broadcast %cst_70 : f32 to vector<1x8xf32>
    %145 = arith.mulf %144, %143 : vector<1x8xf32>
    %146 = arith.addf %138, %145 : vector<1x8xf32>
    %cst_71 = arith.constant dense<0.000000e+00> : vector<1x32xf32>
    %147 = tpu.matmul %146, %57, %cst_71 {dimension_numbers = #tpu.dot_dimension_numbers<[1], [0], [0], [1], [0, 0, 1, 1], [], []>} : vector<1x8xf32>, vector<8x32xf32>, vector<1x32xf32> -> vector<1x32xf32>
    %148 = arith.addf %147, %59 : vector<1x32xf32>
    %149 = math.tanh %148 : vector<1x32xf32>
    %cst_72 = arith.constant dense<0.000000e+00> : vector<1x8xf32>
    %150 = tpu.matmul %149, %58, %cst_72 {dimension_numbers = #tpu.dot_dimension_numbers<[1], [0], [0], [1], [0, 0, 1, 1], [], []>} : vector<1x32xf32>, vector<32x8xf32>, vector<1x8xf32> -> vector<1x8xf32>
    %151 = arith.addf %150, %60 : vector<1x8xf32>
    %cst_73 = arith.constant 0.266666681 : f32
    %152 = vector.broadcast %cst_73 : f32 to vector<1x8xf32>
    %153 = arith.mulf %152, %151 : vector<1x8xf32>
    %154 = arith.addf %138, %153 : vector<1x8xf32>
    %cst_74 = arith.constant dense<0.000000e+00> : vector<1x32xf32>
    %155 = tpu.matmul %154, %57, %cst_74 {dimension_numbers = #tpu.dot_dimension_numbers<[1], [0], [0], [1], [0, 0, 1, 1], [], []>} : vector<1x8xf32>, vector<8x32xf32>, vector<1x32xf32> -> vector<1x32xf32>
    %156 = arith.addf %155, %59 : vector<1x32xf32>
    %157 = math.tanh %156 : vector<1x32xf32>
    %cst_75 = arith.constant dense<0.000000e+00> : vector<1x8xf32>
    %158 = tpu.matmul %157, %58, %cst_75 {dimension_numbers = #tpu.dot_dimension_numbers<[1], [0], [0], [1], [0, 0, 1, 1], [], []>} : vector<1x32xf32>, vector<32x8xf32>, vector<1x8xf32> -> vector<1x8xf32>
    %159 = arith.addf %158, %60 : vector<1x8xf32>
    %cst_76 = arith.constant 0.533333361 : f32
    %160 = vector.broadcast %cst_76 : f32 to vector<1x8xf32>
    %161 = arith.mulf %160, %159 : vector<1x8xf32>
    %162 = arith.addf %138, %161 : vector<1x8xf32>
    %cst_77 = arith.constant dense<0.000000e+00> : vector<1x32xf32>
    %163 = tpu.matmul %162, %57, %cst_77 {dimension_numbers = #tpu.dot_dimension_numbers<[1], [0], [0], [1], [0, 0, 1, 1], [], []>} : vector<1x8xf32>, vector<8x32xf32>, vector<1x32xf32> -> vector<1x32xf32>
    %164 = arith.addf %163, %59 : vector<1x32xf32>
    %165 = math.tanh %164 : vector<1x32xf32>
    %cst_78 = arith.constant dense<0.000000e+00> : vector<1x8xf32>
    %166 = tpu.matmul %165, %58, %cst_78 {dimension_numbers = #tpu.dot_dimension_numbers<[1], [0], [0], [1], [0, 0, 1, 1], [], []>} : vector<1x32xf32>, vector<32x8xf32>, vector<1x8xf32> -> vector<1x8xf32>
    %167 = arith.addf %166, %60 : vector<1x8xf32>
    %cst_79 = arith.constant 2.000000e+00 : f32
    %168 = vector.broadcast %cst_79 : f32 to vector<1x8xf32>
    %169 = arith.mulf %168, %151 : vector<1x8xf32>
    %170 = arith.addf %143, %169 : vector<1x8xf32>
    %cst_80 = arith.constant 2.000000e+00 : f32
    %171 = vector.broadcast %cst_80 : f32 to vector<1x8xf32>
    %172 = arith.mulf %171, %159 : vector<1x8xf32>
    %173 = arith.addf %170, %172 : vector<1x8xf32>
    %174 = arith.addf %173, %167 : vector<1x8xf32>
    %cst_81 = arith.constant 0.088888891 : f32
    %175 = vector.broadcast %cst_81 : f32 to vector<1x8xf32>
    %176 = arith.mulf %175, %174 : vector<1x8xf32>
    %177 = arith.addf %138, %176 : vector<1x8xf32>
    %cst_82 = arith.constant dense<0.000000e+00> : vector<1x32xf32>
    %178 = tpu.matmul %177, %57, %cst_82 {dimension_numbers = #tpu.dot_dimension_numbers<[1], [0], [0], [1], [0, 0, 1, 1], [], []>} : vector<1x8xf32>, vector<8x32xf32>, vector<1x32xf32> -> vector<1x32xf32>
    %179 = arith.addf %178, %59 : vector<1x32xf32>
    %180 = math.tanh %179 : vector<1x32xf32>
    %cst_83 = arith.constant dense<0.000000e+00> : vector<1x8xf32>
    %181 = tpu.matmul %180, %58, %cst_83 {dimension_numbers = #tpu.dot_dimension_numbers<[1], [0], [0], [1], [0, 0, 1, 1], [], []>} : vector<1x32xf32>, vector<32x8xf32>, vector<1x8xf32> -> vector<1x8xf32>
    %182 = arith.addf %181, %60 : vector<1x8xf32>
    %cst_84 = arith.constant 0.266666681 : f32
    %183 = vector.broadcast %cst_84 : f32 to vector<1x8xf32>
    %184 = arith.mulf %183, %182 : vector<1x8xf32>
    %185 = arith.addf %177, %184 : vector<1x8xf32>
    %cst_85 = arith.constant dense<0.000000e+00> : vector<1x32xf32>
    %186 = tpu.matmul %185, %57, %cst_85 {dimension_numbers = #tpu.dot_dimension_numbers<[1], [0], [0], [1], [0, 0, 1, 1], [], []>} : vector<1x8xf32>, vector<8x32xf32>, vector<1x32xf32> -> vector<1x32xf32>
    %187 = arith.addf %186, %59 : vector<1x32xf32>
    %188 = math.tanh %187 : vector<1x32xf32>
    %cst_86 = arith.constant dense<0.000000e+00> : vector<1x8xf32>
    %189 = tpu.matmul %188, %58, %cst_86 {dimension_numbers = #tpu.dot_dimension_numbers<[1], [0], [0], [1], [0, 0, 1, 1], [], []>} : vector<1x32xf32>, vector<32x8xf32>, vector<1x8xf32> -> vector<1x8xf32>
    %190 = arith.addf %189, %60 : vector<1x8xf32>
    %cst_87 = arith.constant 0.266666681 : f32
    %191 = vector.broadcast %cst_87 : f32 to vector<1x8xf32>
    %192 = arith.mulf %191, %190 : vector<1x8xf32>
    %193 = arith.addf %177, %192 : vector<1x8xf32>
    %cst_88 = arith.constant dense<0.000000e+00> : vector<1x32xf32>
    %194 = tpu.matmul %193, %57, %cst_88 {dimension_numbers = #tpu.dot_dimension_numbers<[1], [0], [0], [1], [0, 0, 1, 1], [], []>} : vector<1x8xf32>, vector<8x32xf32>, vector<1x32xf32> -> vector<1x32xf32>
    %195 = arith.addf %194, %59 : vector<1x32xf32>
    %196 = math.tanh %195 : vector<1x32xf32>
    %cst_89 = arith.constant dense<0.000000e+00> : vector<1x8xf32>
    %197 = tpu.matmul %196, %58, %cst_89 {dimension_numbers = #tpu.dot_dimension_numbers<[1], [0], [0], [1], [0, 0, 1, 1], [], []>} : vector<1x32xf32>, vector<32x8xf32>, vector<1x8xf32> -> vector<1x8xf32>
    %198 = arith.addf %197, %60 : vector<1x8xf32>
    %cst_90 = arith.constant 0.533333361 : f32
    %199 = vector.broadcast %cst_90 : f32 to vector<1x8xf32>
    %200 = arith.mulf %199, %198 : vector<1x8xf32>
    %201 = arith.addf %177, %200 : vector<1x8xf32>
    %cst_91 = arith.constant dense<0.000000e+00> : vector<1x32xf32>
    %202 = tpu.matmul %201, %57, %cst_91 {dimension_numbers = #tpu.dot_dimension_numbers<[1], [0], [0], [1], [0, 0, 1, 1], [], []>} : vector<1x8xf32>, vector<8x32xf32>, vector<1x32xf32> -> vector<1x32xf32>
    %203 = arith.addf %202, %59 : vector<1x32xf32>
    %204 = math.tanh %203 : vector<1x32xf32>
    %cst_92 = arith.constant dense<0.000000e+00> : vector<1x8xf32>
    %205 = tpu.matmul %204, %58, %cst_92 {dimension_numbers = #tpu.dot_dimension_numbers<[1], [0], [0], [1], [0, 0, 1, 1], [], []>} : vector<1x32xf32>, vector<32x8xf32>, vector<1x8xf32> -> vector<1x8xf32>
    %206 = arith.addf %205, %60 : vector<1x8xf32>
    %cst_93 = arith.constant 2.000000e+00 : f32
    %207 = vector.broadcast %cst_93 : f32 to vector<1x8xf32>
    %208 = arith.mulf %207, %190 : vector<1x8xf32>
    %209 = arith.addf %182, %208 : vector<1x8xf32>
    %cst_94 = arith.constant 2.000000e+00 : f32
    %210 = vector.broadcast %cst_94 : f32 to vector<1x8xf32>
    %211 = arith.mulf %210, %198 : vector<1x8xf32>
    %212 = arith.addf %209, %211 : vector<1x8xf32>
    %213 = arith.addf %212, %206 : vector<1x8xf32>
    %cst_95 = arith.constant 0.088888891 : f32
    %214 = vector.broadcast %cst_95 : f32 to vector<1x8xf32>
    %215 = arith.mulf %214, %213 : vector<1x8xf32>
    %216 = arith.addf %177, %215 : vector<1x8xf32>
    %cst_96 = arith.constant dense<0.000000e+00> : vector<1x32xf32>
    %217 = tpu.matmul %216, %57, %cst_96 {dimension_numbers = #tpu.dot_dimension_numbers<[1], [0], [0], [1], [0, 0, 1, 1], [], []>} : vector<1x8xf32>, vector<8x32xf32>, vector<1x32xf32> -> vector<1x32xf32>
    %218 = arith.addf %217, %59 : vector<1x32xf32>
    %219 = math.tanh %218 : vector<1x32xf32>
    %cst_97 = arith.constant dense<0.000000e+00> : vector<1x8xf32>
    %220 = tpu.matmul %219, %58, %cst_97 {dimension_numbers = #tpu.dot_dimension_numbers<[1], [0], [0], [1], [0, 0, 1, 1], [], []>} : vector<1x32xf32>, vector<32x8xf32>, vector<1x8xf32> -> vector<1x8xf32>
    %221 = arith.addf %220, %60 : vector<1x8xf32>
    %cst_98 = arith.constant 0.266666681 : f32
    %222 = vector.broadcast %cst_98 : f32 to vector<1x8xf32>
    %223 = arith.mulf %222, %221 : vector<1x8xf32>
    %224 = arith.addf %216, %223 : vector<1x8xf32>
    %cst_99 = arith.constant dense<0.000000e+00> : vector<1x32xf32>
    %225 = tpu.matmul %224, %57, %cst_99 {dimension_numbers = #tpu.dot_dimension_numbers<[1], [0], [0], [1], [0, 0, 1, 1], [], []>} : vector<1x8xf32>, vector<8x32xf32>, vector<1x32xf32> -> vector<1x32xf32>
    %226 = arith.addf %225, %59 : vector<1x32xf32>
    %227 = math.tanh %226 : vector<1x32xf32>
    %cst_100 = arith.constant dense<0.000000e+00> : vector<1x8xf32>
    %228 = tpu.matmul %227, %58, %cst_100 {dimension_numbers = #tpu.dot_dimension_numbers<[1], [0], [0], [1], [0, 0, 1, 1], [], []>} : vector<1x32xf32>, vector<32x8xf32>, vector<1x8xf32> -> vector<1x8xf32>
    %229 = arith.addf %228, %60 : vector<1x8xf32>
    %cst_101 = arith.constant 0.266666681 : f32
    %230 = vector.broadcast %cst_101 : f32 to vector<1x8xf32>
    %231 = arith.mulf %230, %229 : vector<1x8xf32>
    %232 = arith.addf %216, %231 : vector<1x8xf32>
    %cst_102 = arith.constant dense<0.000000e+00> : vector<1x32xf32>
    %233 = tpu.matmul %232, %57, %cst_102 {dimension_numbers = #tpu.dot_dimension_numbers<[1], [0], [0], [1], [0, 0, 1, 1], [], []>} : vector<1x8xf32>, vector<8x32xf32>, vector<1x32xf32> -> vector<1x32xf32>
    %234 = arith.addf %233, %59 : vector<1x32xf32>
    %235 = math.tanh %234 : vector<1x32xf32>
    %cst_103 = arith.constant dense<0.000000e+00> : vector<1x8xf32>
    %236 = tpu.matmul %235, %58, %cst_103 {dimension_numbers = #tpu.dot_dimension_numbers<[1], [0], [0], [1], [0, 0, 1, 1], [], []>} : vector<1x32xf32>, vector<32x8xf32>, vector<1x8xf32> -> vector<1x8xf32>
    %237 = arith.addf %236, %60 : vector<1x8xf32>
    %cst_104 = arith.constant 0.533333361 : f32
    %238 = vector.broadcast %cst_104 : f32 to vector<1x8xf32>
    %239 = arith.mulf %238, %237 : vector<1x8xf32>
    %240 = arith.addf %216, %239 : vector<1x8xf32>
    %cst_105 = arith.constant dense<0.000000e+00> : vector<1x32xf32>
    %241 = tpu.matmul %240, %57, %cst_105 {dimension_numbers = #tpu.dot_dimension_numbers<[1], [0], [0], [1], [0, 0, 1, 1], [], []>} : vector<1x8xf32>, vector<8x32xf32>, vector<1x32xf32> -> vector<1x32xf32>
    %242 = arith.addf %241, %59 : vector<1x32xf32>
    %243 = math.tanh %242 : vector<1x32xf32>
    %cst_106 = arith.constant dense<0.000000e+00> : vector<1x8xf32>
    %244 = tpu.matmul %243, %58, %cst_106 {dimension_numbers = #tpu.dot_dimension_numbers<[1], [0], [0], [1], [0, 0, 1, 1], [], []>} : vector<1x32xf32>, vector<32x8xf32>, vector<1x8xf32> -> vector<1x8xf32>
    %245 = arith.addf %244, %60 : vector<1x8xf32>
    %cst_107 = arith.constant 2.000000e+00 : f32
    %246 = vector.broadcast %cst_107 : f32 to vector<1x8xf32>
    %247 = arith.mulf %246, %229 : vector<1x8xf32>
    %248 = arith.addf %221, %247 : vector<1x8xf32>
    %cst_108 = arith.constant 2.000000e+00 : f32
    %249 = vector.broadcast %cst_108 : f32 to vector<1x8xf32>
    %250 = arith.mulf %249, %237 : vector<1x8xf32>
    %251 = arith.addf %248, %250 : vector<1x8xf32>
    %252 = arith.addf %251, %245 : vector<1x8xf32>
    %cst_109 = arith.constant 0.088888891 : f32
    %253 = vector.broadcast %cst_109 : f32 to vector<1x8xf32>
    %254 = arith.mulf %253, %252 : vector<1x8xf32>
    %255 = arith.addf %216, %254 : vector<1x8xf32>
    %cst_110 = arith.constant dense<0.000000e+00> : vector<1x32xf32>
    %256 = tpu.matmul %255, %57, %cst_110 {dimension_numbers = #tpu.dot_dimension_numbers<[1], [0], [0], [1], [0, 0, 1, 1], [], []>} : vector<1x8xf32>, vector<8x32xf32>, vector<1x32xf32> -> vector<1x32xf32>
    %257 = arith.addf %256, %59 : vector<1x32xf32>
    %258 = math.tanh %257 : vector<1x32xf32>
    %cst_111 = arith.constant dense<0.000000e+00> : vector<1x8xf32>
    %259 = tpu.matmul %258, %58, %cst_111 {dimension_numbers = #tpu.dot_dimension_numbers<[1], [0], [0], [1], [0, 0, 1, 1], [], []>} : vector<1x32xf32>, vector<32x8xf32>, vector<1x8xf32> -> vector<1x8xf32>
    %260 = arith.addf %259, %60 : vector<1x8xf32>
    %cst_112 = arith.constant 0.266666681 : f32
    %261 = vector.broadcast %cst_112 : f32 to vector<1x8xf32>
    %262 = arith.mulf %261, %260 : vector<1x8xf32>
    %263 = arith.addf %255, %262 : vector<1x8xf32>
    %cst_113 = arith.constant dense<0.000000e+00> : vector<1x32xf32>
    %264 = tpu.matmul %263, %57, %cst_113 {dimension_numbers = #tpu.dot_dimension_numbers<[1], [0], [0], [1], [0, 0, 1, 1], [], []>} : vector<1x8xf32>, vector<8x32xf32>, vector<1x32xf32> -> vector<1x32xf32>
    %265 = arith.addf %264, %59 : vector<1x32xf32>
    %266 = math.tanh %265 : vector<1x32xf32>
    %cst_114 = arith.constant dense<0.000000e+00> : vector<1x8xf32>
    %267 = tpu.matmul %266, %58, %cst_114 {dimension_numbers = #tpu.dot_dimension_numbers<[1], [0], [0], [1], [0, 0, 1, 1], [], []>} : vector<1x32xf32>, vector<32x8xf32>, vector<1x8xf32> -> vector<1x8xf32>
    %268 = arith.addf %267, %60 : vector<1x8xf32>
    %cst_115 = arith.constant 0.266666681 : f32
    %269 = vector.broadcast %cst_115 : f32 to vector<1x8xf32>
    %270 = arith.mulf %269, %268 : vector<1x8xf32>
    %271 = arith.addf %255, %270 : vector<1x8xf32>
    %cst_116 = arith.constant dense<0.000000e+00> : vector<1x32xf32>
    %272 = tpu.matmul %271, %57, %cst_116 {dimension_numbers = #tpu.dot_dimension_numbers<[1], [0], [0], [1], [0, 0, 1, 1], [], []>} : vector<1x8xf32>, vector<8x32xf32>, vector<1x32xf32> -> vector<1x32xf32>
    %273 = arith.addf %272, %59 : vector<1x32xf32>
    %274 = math.tanh %273 : vector<1x32xf32>
    %cst_117 = arith.constant dense<0.000000e+00> : vector<1x8xf32>
    %275 = tpu.matmul %274, %58, %cst_117 {dimension_numbers = #tpu.dot_dimension_numbers<[1], [0], [0], [1], [0, 0, 1, 1], [], []>} : vector<1x32xf32>, vector<32x8xf32>, vector<1x8xf32> -> vector<1x8xf32>
    %276 = arith.addf %275, %60 : vector<1x8xf32>
    %cst_118 = arith.constant 0.533333361 : f32
    %277 = vector.broadcast %cst_118 : f32 to vector<1x8xf32>
    %278 = arith.mulf %277, %276 : vector<1x8xf32>
    %279 = arith.addf %255, %278 : vector<1x8xf32>
    %cst_119 = arith.constant dense<0.000000e+00> : vector<1x32xf32>
    %280 = tpu.matmul %279, %57, %cst_119 {dimension_numbers = #tpu.dot_dimension_numbers<[1], [0], [0], [1], [0, 0, 1, 1], [], []>} : vector<1x8xf32>, vector<8x32xf32>, vector<1x32xf32> -> vector<1x32xf32>
    %281 = arith.addf %280, %59 : vector<1x32xf32>
    %282 = math.tanh %281 : vector<1x32xf32>
    %cst_120 = arith.constant dense<0.000000e+00> : vector<1x8xf32>
    %283 = tpu.matmul %282, %58, %cst_120 {dimension_numbers = #tpu.dot_dimension_numbers<[1], [0], [0], [1], [0, 0, 1, 1], [], []>} : vector<1x32xf32>, vector<32x8xf32>, vector<1x8xf32> -> vector<1x8xf32>
    %284 = arith.addf %283, %60 : vector<1x8xf32>
    %cst_121 = arith.constant 2.000000e+00 : f32
    %285 = vector.broadcast %cst_121 : f32 to vector<1x8xf32>
    %286 = arith.mulf %285, %268 : vector<1x8xf32>
    %287 = arith.addf %260, %286 : vector<1x8xf32>
    %cst_122 = arith.constant 2.000000e+00 : f32
    %288 = vector.broadcast %cst_122 : f32 to vector<1x8xf32>
    %289 = arith.mulf %288, %276 : vector<1x8xf32>
    %290 = arith.addf %287, %289 : vector<1x8xf32>
    %291 = arith.addf %290, %284 : vector<1x8xf32>
    %cst_123 = arith.constant 0.088888891 : f32
    %292 = vector.broadcast %cst_123 : f32 to vector<1x8xf32>
    %293 = arith.mulf %292, %291 : vector<1x8xf32>
    %294 = arith.addf %255, %293 : vector<1x8xf32>
    %cst_124 = arith.constant dense<0.000000e+00> : vector<1x32xf32>
    %295 = tpu.matmul %294, %57, %cst_124 {dimension_numbers = #tpu.dot_dimension_numbers<[1], [0], [0], [1], [0, 0, 1, 1], [], []>} : vector<1x8xf32>, vector<8x32xf32>, vector<1x32xf32> -> vector<1x32xf32>
    %296 = arith.addf %295, %59 : vector<1x32xf32>
    %297 = math.tanh %296 : vector<1x32xf32>
    %cst_125 = arith.constant dense<0.000000e+00> : vector<1x8xf32>
    %298 = tpu.matmul %297, %58, %cst_125 {dimension_numbers = #tpu.dot_dimension_numbers<[1], [0], [0], [1], [0, 0, 1, 1], [], []>} : vector<1x32xf32>, vector<32x8xf32>, vector<1x8xf32> -> vector<1x8xf32>
    %299 = arith.addf %298, %60 : vector<1x8xf32>
    %cst_126 = arith.constant 0.266666681 : f32
    %300 = vector.broadcast %cst_126 : f32 to vector<1x8xf32>
    %301 = arith.mulf %300, %299 : vector<1x8xf32>
    %302 = arith.addf %294, %301 : vector<1x8xf32>
    %cst_127 = arith.constant dense<0.000000e+00> : vector<1x32xf32>
    %303 = tpu.matmul %302, %57, %cst_127 {dimension_numbers = #tpu.dot_dimension_numbers<[1], [0], [0], [1], [0, 0, 1, 1], [], []>} : vector<1x8xf32>, vector<8x32xf32>, vector<1x32xf32> -> vector<1x32xf32>
    %304 = arith.addf %303, %59 : vector<1x32xf32>
    %305 = math.tanh %304 : vector<1x32xf32>
    %cst_128 = arith.constant dense<0.000000e+00> : vector<1x8xf32>
    %306 = tpu.matmul %305, %58, %cst_128 {dimension_numbers = #tpu.dot_dimension_numbers<[1], [0], [0], [1], [0, 0, 1, 1], [], []>} : vector<1x32xf32>, vector<32x8xf32>, vector<1x8xf32> -> vector<1x8xf32>
    %307 = arith.addf %306, %60 : vector<1x8xf32>
    %cst_129 = arith.constant 0.266666681 : f32
    %308 = vector.broadcast %cst_129 : f32 to vector<1x8xf32>
    %309 = arith.mulf %308, %307 : vector<1x8xf32>
    %310 = arith.addf %294, %309 : vector<1x8xf32>
    %cst_130 = arith.constant dense<0.000000e+00> : vector<1x32xf32>
    %311 = tpu.matmul %310, %57, %cst_130 {dimension_numbers = #tpu.dot_dimension_numbers<[1], [0], [0], [1], [0, 0, 1, 1], [], []>} : vector<1x8xf32>, vector<8x32xf32>, vector<1x32xf32> -> vector<1x32xf32>
    %312 = arith.addf %311, %59 : vector<1x32xf32>
    %313 = math.tanh %312 : vector<1x32xf32>
    %cst_131 = arith.constant dense<0.000000e+00> : vector<1x8xf32>
    %314 = tpu.matmul %313, %58, %cst_131 {dimension_numbers = #tpu.dot_dimension_numbers<[1], [0], [0], [1], [0, 0, 1, 1], [], []>} : vector<1x32xf32>, vector<32x8xf32>, vector<1x8xf32> -> vector<1x8xf32>
    %315 = arith.addf %314, %60 : vector<1x8xf32>
    %cst_132 = arith.constant 0.533333361 : f32
    %316 = vector.broadcast %cst_132 : f32 to vector<1x8xf32>
    %317 = arith.mulf %316, %315 : vector<1x8xf32>
    %318 = arith.addf %294, %317 : vector<1x8xf32>
    %cst_133 = arith.constant dense<0.000000e+00> : vector<1x32xf32>
    %319 = tpu.matmul %318, %57, %cst_133 {dimension_numbers = #tpu.dot_dimension_numbers<[1], [0], [0], [1], [0, 0, 1, 1], [], []>} : vector<1x8xf32>, vector<8x32xf32>, vector<1x32xf32> -> vector<1x32xf32>
    %320 = arith.addf %319, %59 : vector<1x32xf32>
    %321 = math.tanh %320 : vector<1x32xf32>
    %cst_134 = arith.constant dense<0.000000e+00> : vector<1x8xf32>
    %322 = tpu.matmul %321, %58, %cst_134 {dimension_numbers = #tpu.dot_dimension_numbers<[1], [0], [0], [1], [0, 0, 1, 1], [], []>} : vector<1x32xf32>, vector<32x8xf32>, vector<1x8xf32> -> vector<1x8xf32>
    %323 = arith.addf %322, %60 : vector<1x8xf32>
    %cst_135 = arith.constant 2.000000e+00 : f32
    %324 = vector.broadcast %cst_135 : f32 to vector<1x8xf32>
    %325 = arith.mulf %324, %307 : vector<1x8xf32>
    %326 = arith.addf %299, %325 : vector<1x8xf32>
    %cst_136 = arith.constant 2.000000e+00 : f32
    %327 = vector.broadcast %cst_136 : f32 to vector<1x8xf32>
    %328 = arith.mulf %327, %315 : vector<1x8xf32>
    %329 = arith.addf %326, %328 : vector<1x8xf32>
    %330 = arith.addf %329, %323 : vector<1x8xf32>
    %cst_137 = arith.constant 0.088888891 : f32
    %331 = vector.broadcast %cst_137 : f32 to vector<1x8xf32>
    %332 = arith.mulf %331, %330 : vector<1x8xf32>
    %333 = arith.addf %294, %332 : vector<1x8xf32>
    %cst_138 = arith.constant dense<0.000000e+00> : vector<1x32xf32>
    %334 = tpu.matmul %333, %57, %cst_138 {dimension_numbers = #tpu.dot_dimension_numbers<[1], [0], [0], [1], [0, 0, 1, 1], [], []>} : vector<1x8xf32>, vector<8x32xf32>, vector<1x32xf32> -> vector<1x32xf32>
    %335 = arith.addf %334, %59 : vector<1x32xf32>
    %336 = math.tanh %335 : vector<1x32xf32>
    %cst_139 = arith.constant dense<0.000000e+00> : vector<1x8xf32>
    %337 = tpu.matmul %336, %58, %cst_139 {dimension_numbers = #tpu.dot_dimension_numbers<[1], [0], [0], [1], [0, 0, 1, 1], [], []>} : vector<1x32xf32>, vector<32x8xf32>, vector<1x8xf32> -> vector<1x8xf32>
    %338 = arith.addf %337, %60 : vector<1x8xf32>
    %cst_140 = arith.constant 0.266666681 : f32
    %339 = vector.broadcast %cst_140 : f32 to vector<1x8xf32>
    %340 = arith.mulf %339, %338 : vector<1x8xf32>
    %341 = arith.addf %333, %340 : vector<1x8xf32>
    %cst_141 = arith.constant dense<0.000000e+00> : vector<1x32xf32>
    %342 = tpu.matmul %341, %57, %cst_141 {dimension_numbers = #tpu.dot_dimension_numbers<[1], [0], [0], [1], [0, 0, 1, 1], [], []>} : vector<1x8xf32>, vector<8x32xf32>, vector<1x32xf32> -> vector<1x32xf32>
    %343 = arith.addf %342, %59 : vector<1x32xf32>
    %344 = math.tanh %343 : vector<1x32xf32>
    %cst_142 = arith.constant dense<0.000000e+00> : vector<1x8xf32>
    %345 = tpu.matmul %344, %58, %cst_142 {dimension_numbers = #tpu.dot_dimension_numbers<[1], [0], [0], [1], [0, 0, 1, 1], [], []>} : vector<1x32xf32>, vector<32x8xf32>, vector<1x8xf32> -> vector<1x8xf32>
    %346 = arith.addf %345, %60 : vector<1x8xf32>
    %cst_143 = arith.constant 0.266666681 : f32
    %347 = vector.broadcast %cst_143 : f32 to vector<1x8xf32>
    %348 = arith.mulf %347, %346 : vector<1x8xf32>
    %349 = arith.addf %333, %348 : vector<1x8xf32>
    %cst_144 = arith.constant dense<0.000000e+00> : vector<1x32xf32>
    %350 = tpu.matmul %349, %57, %cst_144 {dimension_numbers = #tpu.dot_dimension_numbers<[1], [0], [0], [1], [0, 0, 1, 1], [], []>} : vector<1x8xf32>, vector<8x32xf32>, vector<1x32xf32> -> vector<1x32xf32>
    %351 = arith.addf %350, %59 : vector<1x32xf32>
    %352 = math.tanh %351 : vector<1x32xf32>
    %cst_145 = arith.constant dense<0.000000e+00> : vector<1x8xf32>
    %353 = tpu.matmul %352, %58, %cst_145 {dimension_numbers = #tpu.dot_dimension_numbers<[1], [0], [0], [1], [0, 0, 1, 1], [], []>} : vector<1x32xf32>, vector<32x8xf32>, vector<1x8xf32> -> vector<1x8xf32>
    %354 = arith.addf %353, %60 : vector<1x8xf32>
    %cst_146 = arith.constant 0.533333361 : f32
    %355 = vector.broadcast %cst_146 : f32 to vector<1x8xf32>
    %356 = arith.mulf %355, %354 : vector<1x8xf32>
    %357 = arith.addf %333, %356 : vector<1x8xf32>
    %cst_147 = arith.constant dense<0.000000e+00> : vector<1x32xf32>
    %358 = tpu.matmul %357, %57, %cst_147 {dimension_numbers = #tpu.dot_dimension_numbers<[1], [0], [0], [1], [0, 0, 1, 1], [], []>} : vector<1x8xf32>, vector<8x32xf32>, vector<1x32xf32> -> vector<1x32xf32>
    %359 = arith.addf %358, %59 : vector<1x32xf32>
    %360 = math.tanh %359 : vector<1x32xf32>
    %cst_148 = arith.constant dense<0.000000e+00> : vector<1x8xf32>
    %361 = tpu.matmul %360, %58, %cst_148 {dimension_numbers = #tpu.dot_dimension_numbers<[1], [0], [0], [1], [0, 0, 1, 1], [], []>} : vector<1x32xf32>, vector<32x8xf32>, vector<1x8xf32> -> vector<1x8xf32>
    %362 = arith.addf %361, %60 : vector<1x8xf32>
    %cst_149 = arith.constant 2.000000e+00 : f32
    %363 = vector.broadcast %cst_149 : f32 to vector<1x8xf32>
    %364 = arith.mulf %363, %346 : vector<1x8xf32>
    %365 = arith.addf %338, %364 : vector<1x8xf32>
    %cst_150 = arith.constant 2.000000e+00 : f32
    %366 = vector.broadcast %cst_150 : f32 to vector<1x8xf32>
    %367 = arith.mulf %366, %354 : vector<1x8xf32>
    %368 = arith.addf %365, %367 : vector<1x8xf32>
    %369 = arith.addf %368, %362 : vector<1x8xf32>
    %cst_151 = arith.constant 0.088888891 : f32
    %370 = vector.broadcast %cst_151 : f32 to vector<1x8xf32>
    %371 = arith.mulf %370, %369 : vector<1x8xf32>
    %372 = arith.addf %333, %371 : vector<1x8xf32>
    %cst_152 = arith.constant dense<0.000000e+00> : vector<1x32xf32>
    %373 = tpu.matmul %372, %57, %cst_152 {dimension_numbers = #tpu.dot_dimension_numbers<[1], [0], [0], [1], [0, 0, 1, 1], [], []>} : vector<1x8xf32>, vector<8x32xf32>, vector<1x32xf32> -> vector<1x32xf32>
    %374 = arith.addf %373, %59 : vector<1x32xf32>
    %375 = math.tanh %374 : vector<1x32xf32>
    %cst_153 = arith.constant dense<0.000000e+00> : vector<1x8xf32>
    %376 = tpu.matmul %375, %58, %cst_153 {dimension_numbers = #tpu.dot_dimension_numbers<[1], [0], [0], [1], [0, 0, 1, 1], [], []>} : vector<1x32xf32>, vector<32x8xf32>, vector<1x8xf32> -> vector<1x8xf32>
    %377 = arith.addf %376, %60 : vector<1x8xf32>
    %cst_154 = arith.constant 0.266666681 : f32
    %378 = vector.broadcast %cst_154 : f32 to vector<1x8xf32>
    %379 = arith.mulf %378, %377 : vector<1x8xf32>
    %380 = arith.addf %372, %379 : vector<1x8xf32>
    %cst_155 = arith.constant dense<0.000000e+00> : vector<1x32xf32>
    %381 = tpu.matmul %380, %57, %cst_155 {dimension_numbers = #tpu.dot_dimension_numbers<[1], [0], [0], [1], [0, 0, 1, 1], [], []>} : vector<1x8xf32>, vector<8x32xf32>, vector<1x32xf32> -> vector<1x32xf32>
    %382 = arith.addf %381, %59 : vector<1x32xf32>
    %383 = math.tanh %382 : vector<1x32xf32>
    %cst_156 = arith.constant dense<0.000000e+00> : vector<1x8xf32>
    %384 = tpu.matmul %383, %58, %cst_156 {dimension_numbers = #tpu.dot_dimension_numbers<[1], [0], [0], [1], [0, 0, 1, 1], [], []>} : vector<1x32xf32>, vector<32x8xf32>, vector<1x8xf32> -> vector<1x8xf32>
    %385 = arith.addf %384, %60 : vector<1x8xf32>
    %cst_157 = arith.constant 0.266666681 : f32
    %386 = vector.broadcast %cst_157 : f32 to vector<1x8xf32>
    %387 = arith.mulf %386, %385 : vector<1x8xf32>
    %388 = arith.addf %372, %387 : vector<1x8xf32>
    %cst_158 = arith.constant dense<0.000000e+00> : vector<1x32xf32>
    %389 = tpu.matmul %388, %57, %cst_158 {dimension_numbers = #tpu.dot_dimension_numbers<[1], [0], [0], [1], [0, 0, 1, 1], [], []>} : vector<1x8xf32>, vector<8x32xf32>, vector<1x32xf32> -> vector<1x32xf32>
    %390 = arith.addf %389, %59 : vector<1x32xf32>
    %391 = math.tanh %390 : vector<1x32xf32>
    %cst_159 = arith.constant dense<0.000000e+00> : vector<1x8xf32>
    %392 = tpu.matmul %391, %58, %cst_159 {dimension_numbers = #tpu.dot_dimension_numbers<[1], [0], [0], [1], [0, 0, 1, 1], [], []>} : vector<1x32xf32>, vector<32x8xf32>, vector<1x8xf32> -> vector<1x8xf32>
    %393 = arith.addf %392, %60 : vector<1x8xf32>
    %cst_160 = arith.constant 0.533333361 : f32
    %394 = vector.broadcast %cst_160 : f32 to vector<1x8xf32>
    %395 = arith.mulf %394, %393 : vector<1x8xf32>
    %396 = arith.addf %372, %395 : vector<1x8xf32>
    %cst_161 = arith.constant dense<0.000000e+00> : vector<1x32xf32>
    %397 = tpu.matmul %396, %57, %cst_161 {dimension_numbers = #tpu.dot_dimension_numbers<[1], [0], [0], [1], [0, 0, 1, 1], [], []>} : vector<1x8xf32>, vector<8x32xf32>, vector<1x32xf32> -> vector<1x32xf32>
    %398 = arith.addf %397, %59 : vector<1x32xf32>
    %399 = math.tanh %398 : vector<1x32xf32>
    %cst_162 = arith.constant dense<0.000000e+00> : vector<1x8xf32>
    %400 = tpu.matmul %399, %58, %cst_162 {dimension_numbers = #tpu.dot_dimension_numbers<[1], [0], [0], [1], [0, 0, 1, 1], [], []>} : vector<1x32xf32>, vector<32x8xf32>, vector<1x8xf32> -> vector<1x8xf32>
    %401 = arith.addf %400, %60 : vector<1x8xf32>
    %cst_163 = arith.constant 2.000000e+00 : f32
    %402 = vector.broadcast %cst_163 : f32 to vector<1x8xf32>
    %403 = arith.mulf %402, %385 : vector<1x8xf32>
    %404 = arith.addf %377, %403 : vector<1x8xf32>
    %cst_164 = arith.constant 2.000000e+00 : f32
    %405 = vector.broadcast %cst_164 : f32 to vector<1x8xf32>
    %406 = arith.mulf %405, %393 : vector<1x8xf32>
    %407 = arith.addf %404, %406 : vector<1x8xf32>
    %408 = arith.addf %407, %401 : vector<1x8xf32>
    %cst_165 = arith.constant 0.088888891 : f32
    %409 = vector.broadcast %cst_165 : f32 to vector<1x8xf32>
    %410 = arith.mulf %409, %408 : vector<1x8xf32>
    %411 = arith.addf %372, %410 : vector<1x8xf32>
    %cst_166 = arith.constant dense<0.000000e+00> : vector<1x32xf32>
    %412 = tpu.matmul %411, %57, %cst_166 {dimension_numbers = #tpu.dot_dimension_numbers<[1], [0], [0], [1], [0, 0, 1, 1], [], []>} : vector<1x8xf32>, vector<8x32xf32>, vector<1x32xf32> -> vector<1x32xf32>
    %413 = arith.addf %412, %59 : vector<1x32xf32>
    %414 = math.tanh %413 : vector<1x32xf32>
    %cst_167 = arith.constant dense<0.000000e+00> : vector<1x8xf32>
    %415 = tpu.matmul %414, %58, %cst_167 {dimension_numbers = #tpu.dot_dimension_numbers<[1], [0], [0], [1], [0, 0, 1, 1], [], []>} : vector<1x32xf32>, vector<32x8xf32>, vector<1x8xf32> -> vector<1x8xf32>
    %416 = arith.addf %415, %60 : vector<1x8xf32>
    %cst_168 = arith.constant 0.266666681 : f32
    %417 = vector.broadcast %cst_168 : f32 to vector<1x8xf32>
    %418 = arith.mulf %417, %416 : vector<1x8xf32>
    %419 = arith.addf %411, %418 : vector<1x8xf32>
    %cst_169 = arith.constant dense<0.000000e+00> : vector<1x32xf32>
    %420 = tpu.matmul %419, %57, %cst_169 {dimension_numbers = #tpu.dot_dimension_numbers<[1], [0], [0], [1], [0, 0, 1, 1], [], []>} : vector<1x8xf32>, vector<8x32xf32>, vector<1x32xf32> -> vector<1x32xf32>
    %421 = arith.addf %420, %59 : vector<1x32xf32>
    %422 = math.tanh %421 : vector<1x32xf32>
    %cst_170 = arith.constant dense<0.000000e+00> : vector<1x8xf32>
    %423 = tpu.matmul %422, %58, %cst_170 {dimension_numbers = #tpu.dot_dimension_numbers<[1], [0], [0], [1], [0, 0, 1, 1], [], []>} : vector<1x32xf32>, vector<32x8xf32>, vector<1x8xf32> -> vector<1x8xf32>
    %424 = arith.addf %423, %60 : vector<1x8xf32>
    %cst_171 = arith.constant 0.266666681 : f32
    %425 = vector.broadcast %cst_171 : f32 to vector<1x8xf32>
    %426 = arith.mulf %425, %424 : vector<1x8xf32>
    %427 = arith.addf %411, %426 : vector<1x8xf32>
    %cst_172 = arith.constant dense<0.000000e+00> : vector<1x32xf32>
    %428 = tpu.matmul %427, %57, %cst_172 {dimension_numbers = #tpu.dot_dimension_numbers<[1], [0], [0], [1], [0, 0, 1, 1], [], []>} : vector<1x8xf32>, vector<8x32xf32>, vector<1x32xf32> -> vector<1x32xf32>
    %429 = arith.addf %428, %59 : vector<1x32xf32>
    %430 = math.tanh %429 : vector<1x32xf32>
    %cst_173 = arith.constant dense<0.000000e+00> : vector<1x8xf32>
    %431 = tpu.matmul %430, %58, %cst_173 {dimension_numbers = #tpu.dot_dimension_numbers<[1], [0], [0], [1], [0, 0, 1, 1], [], []>} : vector<1x32xf32>, vector<32x8xf32>, vector<1x8xf32> -> vector<1x8xf32>
    %432 = arith.addf %431, %60 : vector<1x8xf32>
    %cst_174 = arith.constant 0.533333361 : f32
    %433 = vector.broadcast %cst_174 : f32 to vector<1x8xf32>
    %434 = arith.mulf %433, %432 : vector<1x8xf32>
    %435 = arith.addf %411, %434 : vector<1x8xf32>
    %cst_175 = arith.constant dense<0.000000e+00> : vector<1x32xf32>
    %436 = tpu.matmul %435, %57, %cst_175 {dimension_numbers = #tpu.dot_dimension_numbers<[1], [0], [0], [1], [0, 0, 1, 1], [], []>} : vector<1x8xf32>, vector<8x32xf32>, vector<1x32xf32> -> vector<1x32xf32>
    %437 = arith.addf %436, %59 : vector<1x32xf32>
    %438 = math.tanh %437 : vector<1x32xf32>
    %cst_176 = arith.constant dense<0.000000e+00> : vector<1x8xf32>
    %439 = tpu.matmul %438, %58, %cst_176 {dimension_numbers = #tpu.dot_dimension_numbers<[1], [0], [0], [1], [0, 0, 1, 1], [], []>} : vector<1x32xf32>, vector<32x8xf32>, vector<1x8xf32> -> vector<1x8xf32>
    %440 = arith.addf %439, %60 : vector<1x8xf32>
    %cst_177 = arith.constant 2.000000e+00 : f32
    %441 = vector.broadcast %cst_177 : f32 to vector<1x8xf32>
    %442 = arith.mulf %441, %424 : vector<1x8xf32>
    %443 = arith.addf %416, %442 : vector<1x8xf32>
    %cst_178 = arith.constant 2.000000e+00 : f32
    %444 = vector.broadcast %cst_178 : f32 to vector<1x8xf32>
    %445 = arith.mulf %444, %432 : vector<1x8xf32>
    %446 = arith.addf %443, %445 : vector<1x8xf32>
    %447 = arith.addf %446, %440 : vector<1x8xf32>
    %cst_179 = arith.constant 0.088888891 : f32
    %448 = vector.broadcast %cst_179 : f32 to vector<1x8xf32>
    %449 = arith.mulf %448, %447 : vector<1x8xf32>
    %450 = arith.addf %411, %449 : vector<1x8xf32>
    %cst_180 = arith.constant dense<0.000000e+00> : vector<1x32xf32>
    %451 = tpu.matmul %450, %57, %cst_180 {dimension_numbers = #tpu.dot_dimension_numbers<[1], [0], [0], [1], [0, 0, 1, 1], [], []>} : vector<1x8xf32>, vector<8x32xf32>, vector<1x32xf32> -> vector<1x32xf32>
    %452 = arith.addf %451, %59 : vector<1x32xf32>
    %453 = math.tanh %452 : vector<1x32xf32>
    %cst_181 = arith.constant dense<0.000000e+00> : vector<1x8xf32>
    %454 = tpu.matmul %453, %58, %cst_181 {dimension_numbers = #tpu.dot_dimension_numbers<[1], [0], [0], [1], [0, 0, 1, 1], [], []>} : vector<1x32xf32>, vector<32x8xf32>, vector<1x8xf32> -> vector<1x8xf32>
    %455 = arith.addf %454, %60 : vector<1x8xf32>
    %cst_182 = arith.constant 0.266666681 : f32
    %456 = vector.broadcast %cst_182 : f32 to vector<1x8xf32>
    %457 = arith.mulf %456, %455 : vector<1x8xf32>
    %458 = arith.addf %450, %457 : vector<1x8xf32>
    %cst_183 = arith.constant dense<0.000000e+00> : vector<1x32xf32>
    %459 = tpu.matmul %458, %57, %cst_183 {dimension_numbers = #tpu.dot_dimension_numbers<[1], [0], [0], [1], [0, 0, 1, 1], [], []>} : vector<1x8xf32>, vector<8x32xf32>, vector<1x32xf32> -> vector<1x32xf32>
    %460 = arith.addf %459, %59 : vector<1x32xf32>
    %461 = math.tanh %460 : vector<1x32xf32>
    %cst_184 = arith.constant dense<0.000000e+00> : vector<1x8xf32>
    %462 = tpu.matmul %461, %58, %cst_184 {dimension_numbers = #tpu.dot_dimension_numbers<[1], [0], [0], [1], [0, 0, 1, 1], [], []>} : vector<1x32xf32>, vector<32x8xf32>, vector<1x8xf32> -> vector<1x8xf32>
    %463 = arith.addf %462, %60 : vector<1x8xf32>
    %cst_185 = arith.constant 0.266666681 : f32
    %464 = vector.broadcast %cst_185 : f32 to vector<1x8xf32>
    %465 = arith.mulf %464, %463 : vector<1x8xf32>
    %466 = arith.addf %450, %465 : vector<1x8xf32>
    %cst_186 = arith.constant dense<0.000000e+00> : vector<1x32xf32>
    %467 = tpu.matmul %466, %57, %cst_186 {dimension_numbers = #tpu.dot_dimension_numbers<[1], [0], [0], [1], [0, 0, 1, 1], [], []>} : vector<1x8xf32>, vector<8x32xf32>, vector<1x32xf32> -> vector<1x32xf32>
    %468 = arith.addf %467, %59 : vector<1x32xf32>
    %469 = math.tanh %468 : vector<1x32xf32>
    %cst_187 = arith.constant dense<0.000000e+00> : vector<1x8xf32>
    %470 = tpu.matmul %469, %58, %cst_187 {dimension_numbers = #tpu.dot_dimension_numbers<[1], [0], [0], [1], [0, 0, 1, 1], [], []>} : vector<1x32xf32>, vector<32x8xf32>, vector<1x8xf32> -> vector<1x8xf32>
    %471 = arith.addf %470, %60 : vector<1x8xf32>
    %cst_188 = arith.constant 0.533333361 : f32
    %472 = vector.broadcast %cst_188 : f32 to vector<1x8xf32>
    %473 = arith.mulf %472, %471 : vector<1x8xf32>
    %474 = arith.addf %450, %473 : vector<1x8xf32>
    %cst_189 = arith.constant dense<0.000000e+00> : vector<1x32xf32>
    %475 = tpu.matmul %474, %57, %cst_189 {dimension_numbers = #tpu.dot_dimension_numbers<[1], [0], [0], [1], [0, 0, 1, 1], [], []>} : vector<1x8xf32>, vector<8x32xf32>, vector<1x32xf32> -> vector<1x32xf32>
    %476 = arith.addf %475, %59 : vector<1x32xf32>
    %477 = math.tanh %476 : vector<1x32xf32>
    %cst_190 = arith.constant dense<0.000000e+00> : vector<1x8xf32>
    %478 = tpu.matmul %477, %58, %cst_190 {dimension_numbers = #tpu.dot_dimension_numbers<[1], [0], [0], [1], [0, 0, 1, 1], [], []>} : vector<1x32xf32>, vector<32x8xf32>, vector<1x8xf32> -> vector<1x8xf32>
    %479 = arith.addf %478, %60 : vector<1x8xf32>
    %cst_191 = arith.constant 2.000000e+00 : f32
    %480 = vector.broadcast %cst_191 : f32 to vector<1x8xf32>
    %481 = arith.mulf %480, %463 : vector<1x8xf32>
    %482 = arith.addf %455, %481 : vector<1x8xf32>
    %cst_192 = arith.constant 2.000000e+00 : f32
    %483 = vector.broadcast %cst_192 : f32 to vector<1x8xf32>
    %484 = arith.mulf %483, %471 : vector<1x8xf32>
    %485 = arith.addf %482, %484 : vector<1x8xf32>
    %486 = arith.addf %485, %479 : vector<1x8xf32>
    %cst_193 = arith.constant 0.088888891 : f32
    %487 = vector.broadcast %cst_193 : f32 to vector<1x8xf32>
    %488 = arith.mulf %487, %486 : vector<1x8xf32>
    %489 = arith.addf %450, %488 : vector<1x8xf32>
    %cst_194 = arith.constant dense<0.000000e+00> : vector<1x32xf32>
    %490 = tpu.matmul %489, %57, %cst_194 {dimension_numbers = #tpu.dot_dimension_numbers<[1], [0], [0], [1], [0, 0, 1, 1], [], []>} : vector<1x8xf32>, vector<8x32xf32>, vector<1x32xf32> -> vector<1x32xf32>
    %491 = arith.addf %490, %59 : vector<1x32xf32>
    %492 = math.tanh %491 : vector<1x32xf32>
    %cst_195 = arith.constant dense<0.000000e+00> : vector<1x8xf32>
    %493 = tpu.matmul %492, %58, %cst_195 {dimension_numbers = #tpu.dot_dimension_numbers<[1], [0], [0], [1], [0, 0, 1, 1], [], []>} : vector<1x32xf32>, vector<32x8xf32>, vector<1x8xf32> -> vector<1x8xf32>
    %494 = arith.addf %493, %60 : vector<1x8xf32>
    %cst_196 = arith.constant 0.266666681 : f32
    %495 = vector.broadcast %cst_196 : f32 to vector<1x8xf32>
    %496 = arith.mulf %495, %494 : vector<1x8xf32>
    %497 = arith.addf %489, %496 : vector<1x8xf32>
    %cst_197 = arith.constant dense<0.000000e+00> : vector<1x32xf32>
    %498 = tpu.matmul %497, %57, %cst_197 {dimension_numbers = #tpu.dot_dimension_numbers<[1], [0], [0], [1], [0, 0, 1, 1], [], []>} : vector<1x8xf32>, vector<8x32xf32>, vector<1x32xf32> -> vector<1x32xf32>
    %499 = arith.addf %498, %59 : vector<1x32xf32>
    %500 = math.tanh %499 : vector<1x32xf32>
    %cst_198 = arith.constant dense<0.000000e+00> : vector<1x8xf32>
    %501 = tpu.matmul %500, %58, %cst_198 {dimension_numbers = #tpu.dot_dimension_numbers<[1], [0], [0], [1], [0, 0, 1, 1], [], []>} : vector<1x32xf32>, vector<32x8xf32>, vector<1x8xf32> -> vector<1x8xf32>
    %502 = arith.addf %501, %60 : vector<1x8xf32>
    %cst_199 = arith.constant 0.266666681 : f32
    %503 = vector.broadcast %cst_199 : f32 to vector<1x8xf32>
    %504 = arith.mulf %503, %502 : vector<1x8xf32>
    %505 = arith.addf %489, %504 : vector<1x8xf32>
    %cst_200 = arith.constant dense<0.000000e+00> : vector<1x32xf32>
    %506 = tpu.matmul %505, %57, %cst_200 {dimension_numbers = #tpu.dot_dimension_numbers<[1], [0], [0], [1], [0, 0, 1, 1], [], []>} : vector<1x8xf32>, vector<8x32xf32>, vector<1x32xf32> -> vector<1x32xf32>
    %507 = arith.addf %506, %59 : vector<1x32xf32>
    %508 = math.tanh %507 : vector<1x32xf32>
    %cst_201 = arith.constant dense<0.000000e+00> : vector<1x8xf32>
    %509 = tpu.matmul %508, %58, %cst_201 {dimension_numbers = #tpu.dot_dimension_numbers<[1], [0], [0], [1], [0, 0, 1, 1], [], []>} : vector<1x32xf32>, vector<32x8xf32>, vector<1x8xf32> -> vector<1x8xf32>
    %510 = arith.addf %509, %60 : vector<1x8xf32>
    %cst_202 = arith.constant 0.533333361 : f32
    %511 = vector.broadcast %cst_202 : f32 to vector<1x8xf32>
    %512 = arith.mulf %511, %510 : vector<1x8xf32>
    %513 = arith.addf %489, %512 : vector<1x8xf32>
    %cst_203 = arith.constant dense<0.000000e+00> : vector<1x32xf32>
    %514 = tpu.matmul %513, %57, %cst_203 {dimension_numbers = #tpu.dot_dimension_numbers<[1], [0], [0], [1], [0, 0, 1, 1], [], []>} : vector<1x8xf32>, vector<8x32xf32>, vector<1x32xf32> -> vector<1x32xf32>
    %515 = arith.addf %514, %59 : vector<1x32xf32>
    %516 = math.tanh %515 : vector<1x32xf32>
    %cst_204 = arith.constant dense<0.000000e+00> : vector<1x8xf32>
    %517 = tpu.matmul %516, %58, %cst_204 {dimension_numbers = #tpu.dot_dimension_numbers<[1], [0], [0], [1], [0, 0, 1, 1], [], []>} : vector<1x32xf32>, vector<32x8xf32>, vector<1x8xf32> -> vector<1x8xf32>
    %518 = arith.addf %517, %60 : vector<1x8xf32>
    %cst_205 = arith.constant 2.000000e+00 : f32
    %519 = vector.broadcast %cst_205 : f32 to vector<1x8xf32>
    %520 = arith.mulf %519, %502 : vector<1x8xf32>
    %521 = arith.addf %494, %520 : vector<1x8xf32>
    %cst_206 = arith.constant 2.000000e+00 : f32
    %522 = vector.broadcast %cst_206 : f32 to vector<1x8xf32>
    %523 = arith.mulf %522, %510 : vector<1x8xf32>
    %524 = arith.addf %521, %523 : vector<1x8xf32>
    %525 = arith.addf %524, %518 : vector<1x8xf32>
    %cst_207 = arith.constant 0.088888891 : f32
    %526 = vector.broadcast %cst_207 : f32 to vector<1x8xf32>
    %527 = arith.mulf %526, %525 : vector<1x8xf32>
    %528 = arith.addf %489, %527 : vector<1x8xf32>
    %cst_208 = arith.constant dense<0.000000e+00> : vector<1x32xf32>
    %529 = tpu.matmul %528, %57, %cst_208 {dimension_numbers = #tpu.dot_dimension_numbers<[1], [0], [0], [1], [0, 0, 1, 1], [], []>} : vector<1x8xf32>, vector<8x32xf32>, vector<1x32xf32> -> vector<1x32xf32>
    %530 = arith.addf %529, %59 : vector<1x32xf32>
    %531 = math.tanh %530 : vector<1x32xf32>
    %cst_209 = arith.constant dense<0.000000e+00> : vector<1x8xf32>
    %532 = tpu.matmul %531, %58, %cst_209 {dimension_numbers = #tpu.dot_dimension_numbers<[1], [0], [0], [1], [0, 0, 1, 1], [], []>} : vector<1x32xf32>, vector<32x8xf32>, vector<1x8xf32> -> vector<1x8xf32>
    %533 = arith.addf %532, %60 : vector<1x8xf32>
    %cst_210 = arith.constant 0.266666681 : f32
    %534 = vector.broadcast %cst_210 : f32 to vector<1x8xf32>
    %535 = arith.mulf %534, %533 : vector<1x8xf32>
    %536 = arith.addf %528, %535 : vector<1x8xf32>
    %cst_211 = arith.constant dense<0.000000e+00> : vector<1x32xf32>
    %537 = tpu.matmul %536, %57, %cst_211 {dimension_numbers = #tpu.dot_dimension_numbers<[1], [0], [0], [1], [0, 0, 1, 1], [], []>} : vector<1x8xf32>, vector<8x32xf32>, vector<1x32xf32> -> vector<1x32xf32>
    %538 = arith.addf %537, %59 : vector<1x32xf32>
    %539 = math.tanh %538 : vector<1x32xf32>
    %cst_212 = arith.constant dense<0.000000e+00> : vector<1x8xf32>
    %540 = tpu.matmul %539, %58, %cst_212 {dimension_numbers = #tpu.dot_dimension_numbers<[1], [0], [0], [1], [0, 0, 1, 1], [], []>} : vector<1x32xf32>, vector<32x8xf32>, vector<1x8xf32> -> vector<1x8xf32>
    %541 = arith.addf %540, %60 : vector<1x8xf32>
    %cst_213 = arith.constant 0.266666681 : f32
    %542 = vector.broadcast %cst_213 : f32 to vector<1x8xf32>
    %543 = arith.mulf %542, %541 : vector<1x8xf32>
    %544 = arith.addf %528, %543 : vector<1x8xf32>
    %cst_214 = arith.constant dense<0.000000e+00> : vector<1x32xf32>
    %545 = tpu.matmul %544, %57, %cst_214 {dimension_numbers = #tpu.dot_dimension_numbers<[1], [0], [0], [1], [0, 0, 1, 1], [], []>} : vector<1x8xf32>, vector<8x32xf32>, vector<1x32xf32> -> vector<1x32xf32>
    %546 = arith.addf %545, %59 : vector<1x32xf32>
    %547 = math.tanh %546 : vector<1x32xf32>
    %cst_215 = arith.constant dense<0.000000e+00> : vector<1x8xf32>
    %548 = tpu.matmul %547, %58, %cst_215 {dimension_numbers = #tpu.dot_dimension_numbers<[1], [0], [0], [1], [0, 0, 1, 1], [], []>} : vector<1x32xf32>, vector<32x8xf32>, vector<1x8xf32> -> vector<1x8xf32>
    %549 = arith.addf %548, %60 : vector<1x8xf32>
    %cst_216 = arith.constant 0.533333361 : f32
    %550 = vector.broadcast %cst_216 : f32 to vector<1x8xf32>
    %551 = arith.mulf %550, %549 : vector<1x8xf32>
    %552 = arith.addf %528, %551 : vector<1x8xf32>
    %cst_217 = arith.constant dense<0.000000e+00> : vector<1x32xf32>
    %553 = tpu.matmul %552, %57, %cst_217 {dimension_numbers = #tpu.dot_dimension_numbers<[1], [0], [0], [1], [0, 0, 1, 1], [], []>} : vector<1x8xf32>, vector<8x32xf32>, vector<1x32xf32> -> vector<1x32xf32>
    %554 = arith.addf %553, %59 : vector<1x32xf32>
    %555 = math.tanh %554 : vector<1x32xf32>
    %cst_218 = arith.constant dense<0.000000e+00> : vector<1x8xf32>
    %556 = tpu.matmul %555, %58, %cst_218 {dimension_numbers = #tpu.dot_dimension_numbers<[1], [0], [0], [1], [0, 0, 1, 1], [], []>} : vector<1x32xf32>, vector<32x8xf32>, vector<1x8xf32> -> vector<1x8xf32>
    %557 = arith.addf %556, %60 : vector<1x8xf32>
    %cst_219 = arith.constant 2.000000e+00 : f32
    %558 = vector.broadcast %cst_219 : f32 to vector<1x8xf32>
    %559 = arith.mulf %558, %541 : vector<1x8xf32>
    %560 = arith.addf %533, %559 : vector<1x8xf32>
    %cst_220 = arith.constant 2.000000e+00 : f32
    %561 = vector.broadcast %cst_220 : f32 to vector<1x8xf32>
    %562 = arith.mulf %561, %549 : vector<1x8xf32>
    %563 = arith.addf %560, %562 : vector<1x8xf32>
    %564 = arith.addf %563, %557 : vector<1x8xf32>
    %cst_221 = arith.constant 0.088888891 : f32
    %565 = vector.broadcast %cst_221 : f32 to vector<1x8xf32>
    %566 = arith.mulf %565, %564 : vector<1x8xf32>
    %567 = arith.addf %528, %566 : vector<1x8xf32>
    %cst_222 = arith.constant dense<0.000000e+00> : vector<1x32xf32>
    %568 = tpu.matmul %567, %57, %cst_222 {dimension_numbers = #tpu.dot_dimension_numbers<[1], [0], [0], [1], [0, 0, 1, 1], [], []>} : vector<1x8xf32>, vector<8x32xf32>, vector<1x32xf32> -> vector<1x32xf32>
    %569 = arith.addf %568, %59 : vector<1x32xf32>
    %570 = math.tanh %569 : vector<1x32xf32>
    %cst_223 = arith.constant dense<0.000000e+00> : vector<1x8xf32>
    %571 = tpu.matmul %570, %58, %cst_223 {dimension_numbers = #tpu.dot_dimension_numbers<[1], [0], [0], [1], [0, 0, 1, 1], [], []>} : vector<1x32xf32>, vector<32x8xf32>, vector<1x8xf32> -> vector<1x8xf32>
    %572 = arith.addf %571, %60 : vector<1x8xf32>
    %cst_224 = arith.constant 0.266666681 : f32
    %573 = vector.broadcast %cst_224 : f32 to vector<1x8xf32>
    %574 = arith.mulf %573, %572 : vector<1x8xf32>
    %575 = arith.addf %567, %574 : vector<1x8xf32>
    %cst_225 = arith.constant dense<0.000000e+00> : vector<1x32xf32>
    %576 = tpu.matmul %575, %57, %cst_225 {dimension_numbers = #tpu.dot_dimension_numbers<[1], [0], [0], [1], [0, 0, 1, 1], [], []>} : vector<1x8xf32>, vector<8x32xf32>, vector<1x32xf32> -> vector<1x32xf32>
    %577 = arith.addf %576, %59 : vector<1x32xf32>
    %578 = math.tanh %577 : vector<1x32xf32>
    %cst_226 = arith.constant dense<0.000000e+00> : vector<1x8xf32>
    %579 = tpu.matmul %578, %58, %cst_226 {dimension_numbers = #tpu.dot_dimension_numbers<[1], [0], [0], [1], [0, 0, 1, 1], [], []>} : vector<1x32xf32>, vector<32x8xf32>, vector<1x8xf32> -> vector<1x8xf32>
    %580 = arith.addf %579, %60 : vector<1x8xf32>
    %cst_227 = arith.constant 0.266666681 : f32
    %581 = vector.broadcast %cst_227 : f32 to vector<1x8xf32>
    %582 = arith.mulf %581, %580 : vector<1x8xf32>
    %583 = arith.addf %567, %582 : vector<1x8xf32>
    %cst_228 = arith.constant dense<0.000000e+00> : vector<1x32xf32>
    %584 = tpu.matmul %583, %57, %cst_228 {dimension_numbers = #tpu.dot_dimension_numbers<[1], [0], [0], [1], [0, 0, 1, 1], [], []>} : vector<1x8xf32>, vector<8x32xf32>, vector<1x32xf32> -> vector<1x32xf32>
    %585 = arith.addf %584, %59 : vector<1x32xf32>
    %586 = math.tanh %585 : vector<1x32xf32>
    %cst_229 = arith.constant dense<0.000000e+00> : vector<1x8xf32>
    %587 = tpu.matmul %586, %58, %cst_229 {dimension_numbers = #tpu.dot_dimension_numbers<[1], [0], [0], [1], [0, 0, 1, 1], [], []>} : vector<1x32xf32>, vector<32x8xf32>, vector<1x8xf32> -> vector<1x8xf32>
    %588 = arith.addf %587, %60 : vector<1x8xf32>
    %cst_230 = arith.constant 0.533333361 : f32
    %589 = vector.broadcast %cst_230 : f32 to vector<1x8xf32>
    %590 = arith.mulf %589, %588 : vector<1x8xf32>
    %591 = arith.addf %567, %590 : vector<1x8xf32>
    %cst_231 = arith.constant dense<0.000000e+00> : vector<1x32xf32>
    %592 = tpu.matmul %591, %57, %cst_231 {dimension_numbers = #tpu.dot_dimension_numbers<[1], [0], [0], [1], [0, 0, 1, 1], [], []>} : vector<1x8xf32>, vector<8x32xf32>, vector<1x32xf32> -> vector<1x32xf32>
    %593 = arith.addf %592, %59 : vector<1x32xf32>
    %594 = math.tanh %593 : vector<1x32xf32>
    %cst_232 = arith.constant dense<0.000000e+00> : vector<1x8xf32>
    %595 = tpu.matmul %594, %58, %cst_232 {dimension_numbers = #tpu.dot_dimension_numbers<[1], [0], [0], [1], [0, 0, 1, 1], [], []>} : vector<1x32xf32>, vector<32x8xf32>, vector<1x8xf32> -> vector<1x8xf32>
    %596 = arith.addf %595, %60 : vector<1x8xf32>
    %cst_233 = arith.constant 2.000000e+00 : f32
    %597 = vector.broadcast %cst_233 : f32 to vector<1x8xf32>
    %598 = arith.mulf %597, %580 : vector<1x8xf32>
    %599 = arith.addf %572, %598 : vector<1x8xf32>
    %cst_234 = arith.constant 2.000000e+00 : f32
    %600 = vector.broadcast %cst_234 : f32 to vector<1x8xf32>
    %601 = arith.mulf %600, %588 : vector<1x8xf32>
    %602 = arith.addf %599, %601 : vector<1x8xf32>
    %603 = arith.addf %602, %596 : vector<1x8xf32>
    %cst_235 = arith.constant 0.088888891 : f32
    %604 = vector.broadcast %cst_235 : f32 to vector<1x8xf32>
    %605 = arith.mulf %604, %603 : vector<1x8xf32>
    %606 = arith.addf %567, %605 : vector<1x8xf32>
    %cst_236 = arith.constant dense<0.000000e+00> : vector<1x32xf32>
    %607 = tpu.matmul %606, %57, %cst_236 {dimension_numbers = #tpu.dot_dimension_numbers<[1], [0], [0], [1], [0, 0, 1, 1], [], []>} : vector<1x8xf32>, vector<8x32xf32>, vector<1x32xf32> -> vector<1x32xf32>
    %608 = arith.addf %607, %59 : vector<1x32xf32>
    %609 = math.tanh %608 : vector<1x32xf32>
    %cst_237 = arith.constant dense<0.000000e+00> : vector<1x8xf32>
    %610 = tpu.matmul %609, %58, %cst_237 {dimension_numbers = #tpu.dot_dimension_numbers<[1], [0], [0], [1], [0, 0, 1, 1], [], []>} : vector<1x32xf32>, vector<32x8xf32>, vector<1x8xf32> -> vector<1x8xf32>
    %611 = arith.addf %610, %60 : vector<1x8xf32>
    %cst_238 = arith.constant 0.266666681 : f32
    %612 = vector.broadcast %cst_238 : f32 to vector<1x8xf32>
    %613 = arith.mulf %612, %611 : vector<1x8xf32>
    %614 = arith.addf %606, %613 : vector<1x8xf32>
    %cst_239 = arith.constant dense<0.000000e+00> : vector<1x32xf32>
    %615 = tpu.matmul %614, %57, %cst_239 {dimension_numbers = #tpu.dot_dimension_numbers<[1], [0], [0], [1], [0, 0, 1, 1], [], []>} : vector<1x8xf32>, vector<8x32xf32>, vector<1x32xf32> -> vector<1x32xf32>
    %616 = arith.addf %615, %59 : vector<1x32xf32>
    %617 = math.tanh %616 : vector<1x32xf32>
    %cst_240 = arith.constant dense<0.000000e+00> : vector<1x8xf32>
    %618 = tpu.matmul %617, %58, %cst_240 {dimension_numbers = #tpu.dot_dimension_numbers<[1], [0], [0], [1], [0, 0, 1, 1], [], []>} : vector<1x32xf32>, vector<32x8xf32>, vector<1x8xf32> -> vector<1x8xf32>
    %619 = arith.addf %618, %60 : vector<1x8xf32>
    %cst_241 = arith.constant 0.266666681 : f32
    %620 = vector.broadcast %cst_241 : f32 to vector<1x8xf32>
    %621 = arith.mulf %620, %619 : vector<1x8xf32>
    %622 = arith.addf %606, %621 : vector<1x8xf32>
    %cst_242 = arith.constant dense<0.000000e+00> : vector<1x32xf32>
    %623 = tpu.matmul %622, %57, %cst_242 {dimension_numbers = #tpu.dot_dimension_numbers<[1], [0], [0], [1], [0, 0, 1, 1], [], []>} : vector<1x8xf32>, vector<8x32xf32>, vector<1x32xf32> -> vector<1x32xf32>
    %624 = arith.addf %623, %59 : vector<1x32xf32>
    %625 = math.tanh %624 : vector<1x32xf32>
    %cst_243 = arith.constant dense<0.000000e+00> : vector<1x8xf32>
    %626 = tpu.matmul %625, %58, %cst_243 {dimension_numbers = #tpu.dot_dimension_numbers<[1], [0], [0], [1], [0, 0, 1, 1], [], []>} : vector<1x32xf32>, vector<32x8xf32>, vector<1x8xf32> -> vector<1x8xf32>
    %627 = arith.addf %626, %60 : vector<1x8xf32>
    %cst_244 = arith.constant 0.533333361 : f32
    %628 = vector.broadcast %cst_244 : f32 to vector<1x8xf32>
    %629 = arith.mulf %628, %627 : vector<1x8xf32>
    %630 = arith.addf %606, %629 : vector<1x8xf32>
    %cst_245 = arith.constant dense<0.000000e+00> : vector<1x32xf32>
    %631 = tpu.matmul %630, %57, %cst_245 {dimension_numbers = #tpu.dot_dimension_numbers<[1], [0], [0], [1], [0, 0, 1, 1], [], []>} : vector<1x8xf32>, vector<8x32xf32>, vector<1x32xf32> -> vector<1x32xf32>
    %632 = arith.addf %631, %59 : vector<1x32xf32>
    %633 = math.tanh %632 : vector<1x32xf32>
    %cst_246 = arith.constant dense<0.000000e+00> : vector<1x8xf32>
    %634 = tpu.matmul %633, %58, %cst_246 {dimension_numbers = #tpu.dot_dimension_numbers<[1], [0], [0], [1], [0, 0, 1, 1], [], []>} : vector<1x32xf32>, vector<32x8xf32>, vector<1x8xf32> -> vector<1x8xf32>
    %635 = arith.addf %634, %60 : vector<1x8xf32>
    %cst_247 = arith.constant 2.000000e+00 : f32
    %636 = vector.broadcast %cst_247 : f32 to vector<1x8xf32>
    %637 = arith.mulf %636, %619 : vector<1x8xf32>
    %638 = arith.addf %611, %637 : vector<1x8xf32>
    %cst_248 = arith.constant 2.000000e+00 : f32
    %639 = vector.broadcast %cst_248 : f32 to vector<1x8xf32>
    %640 = arith.mulf %639, %627 : vector<1x8xf32>
    %641 = arith.addf %638, %640 : vector<1x8xf32>
    %642 = arith.addf %641, %635 : vector<1x8xf32>
    %cst_249 = arith.constant 0.088888891 : f32
    %643 = vector.broadcast %cst_249 : f32 to vector<1x8xf32>
    %644 = arith.mulf %643, %642 : vector<1x8xf32>
    %645 = arith.addf %606, %644 : vector<1x8xf32>
    %c0_250 = arith.constant 0 : index
    %c0_251 = arith.constant 0 : index
    %c0_252 = arith.constant 0 : index
    %646 = vector.load %arg5[%c0_250, %c0_251, %c0_252] : memref<1x48x3xf32, #tpu.memory_space<vmem>>, vector<1x48x3xf32>
    %647 = vector.shape_cast %646 : vector<1x48x3xf32> to vector<48x3xf32>
    %648 = vector.extract_strided_slice %647 {offsets = [0, 0], sizes = [48, 1], strides = [1, 1]} : vector<48x3xf32> to vector<48x1xf32>
    %cst_253 = arith.constant 0.000000e+00 : f32
    %cst_254 = arith.constant 8.000000e+00 : f32
    %649 = vector.broadcast %cst_253 : f32 to vector<48x1xf32>
    %650 = arith.maximumf %649, %648 : vector<48x1xf32>
    %651 = vector.broadcast %cst_254 : f32 to vector<48x1xf32>
    %652 = arith.minimumf %651, %650 : vector<48x1xf32>
    %653 = vector.extract_strided_slice %647 {offsets = [0, 1], sizes = [48, 2], strides = [1, 1]} : vector<48x3xf32> to vector<48x2xf32>
    %654 = tpu.iota {dimensions = array<i32: 1>} : vector<1x16xi32>
    %655 = arith.sitofp %654 : vector<1x16xi32> to vector<1x16xf32>
    %cst_255 = arith.constant 0.533333361 : f32
    %656 = vector.broadcast %cst_255 : f32 to vector<1x16xf32>
    %657 = arith.mulf %655, %656 : vector<1x16xf32>
    %658 = vector.broadcast %652 : vector<48x1xf32> to vector<48x16xf32>
    %659 = vector.broadcast %657 : vector<1x16xf32> to vector<48x16xf32>
    %660 = arith.subf %658, %659 : vector<48x16xf32>
    %661 = math.absf %660 : vector<48x16xf32>
    %cst_256 = arith.constant 1.875000e+00 : f32
    %662 = vector.broadcast %cst_256 : f32 to vector<48x16xf32>
    %663 = arith.mulf %661, %662 : vector<48x16xf32>
    %cst_257 = arith.constant 1.000000e+00 : f32
    %664 = vector.broadcast %cst_257 : f32 to vector<48x16xf32>
    %665 = arith.subf %664, %663 : vector<48x16xf32>
    %cst_258 = arith.constant 0.000000e+00 : f32
    %666 = vector.broadcast %cst_258 : f32 to vector<48x16xf32>
    %667 = arith.maximumf %666, %665 : vector<48x16xf32>
    %668 = tpu.concatenate %56, %99, %138, %177, %216, %255, %294, %333, %372, %411, %450, %489, %528, %567, %606, %645 in 0 : vector<1x8xf32>, vector<1x8xf32>, vector<1x8xf32>, vector<1x8xf32>, vector<1x8xf32>, vector<1x8xf32>, vector<1x8xf32>, vector<1x8xf32>, vector<1x8xf32>, vector<1x8xf32>, vector<1x8xf32>, vector<1x8xf32>, vector<1x8xf32>, vector<1x8xf32>, vector<1x8xf32>, vector<1x8xf32> -> vector<16x8xf32>
    %cst_259 = arith.constant dense<0.000000e+00> : vector<48x8xf32>
    %669 = tpu.matmul %667, %668, %cst_259 {dimension_numbers = #tpu.dot_dimension_numbers<[1], [0], [0], [1], [0, 0, 1, 1], [], []>} : vector<48x16xf32>, vector<16x8xf32>, vector<48x8xf32> -> vector<48x8xf32>
    %c0_260 = arith.constant 0 : index
    %c0_261 = arith.constant 0 : index
    %670 = vector.load %arg16[%c0_260, %c0_261] : memref<2x32xf32, #tpu.memory_space<vmem>>, vector<2x32xf32>
    %cst_262 = arith.constant dense<0.000000e+00> : vector<48x32xf32>
    %671 = tpu.matmul %653, %670, %cst_262 {dimension_numbers = #tpu.dot_dimension_numbers<[1], [0], [0], [1], [0, 0, 1, 1], [], []>} : vector<48x2xf32>, vector<2x32xf32>, vector<48x32xf32> -> vector<48x32xf32>
    %c0_263 = arith.constant 0 : index
    %c0_264 = arith.constant 0 : index
    %672 = vector.load %arg17[%c0_263, %c0_264] : memref<8x32xf32, #tpu.memory_space<vmem>>, vector<8x32xf32>
    %cst_265 = arith.constant dense<0.000000e+00> : vector<48x32xf32>
    %673 = tpu.matmul %669, %672, %cst_265 {dimension_numbers = #tpu.dot_dimension_numbers<[1], [0], [0], [1], [0, 0, 1, 1], [], []>} : vector<48x8xf32>, vector<8x32xf32>, vector<48x32xf32> -> vector<48x32xf32>
    %674 = arith.addf %671, %673 : vector<48x32xf32>
    %c0_266 = arith.constant 0 : index
    %c0_267 = arith.constant 0 : index
    %675 = vector.load %arg18[%c0_266, %c0_267] : memref<1x32xf32, #tpu.memory_space<vmem>>, vector<1x32xf32>
    %676 = vector.broadcast %675 : vector<1x32xf32> to vector<48x32xf32>
    %677 = arith.addf %674, %676 : vector<48x32xf32>
    %678 = math.tanh %677 : vector<48x32xf32>
    %c0_268 = arith.constant 0 : index
    %c0_269 = arith.constant 0 : index
    %679 = vector.load %arg19[%c0_268, %c0_269] : memref<32x16xf32, #tpu.memory_space<vmem>>, vector<32x16xf32>
    %cst_270 = arith.constant dense<0.000000e+00> : vector<48x16xf32>
    %680 = tpu.matmul %678, %679, %cst_270 {dimension_numbers = #tpu.dot_dimension_numbers<[1], [0], [0], [1], [0, 0, 1, 1], [], []>} : vector<48x32xf32>, vector<32x16xf32>, vector<48x16xf32> -> vector<48x16xf32>
    %c0_271 = arith.constant 0 : index
    %c0_272 = arith.constant 0 : index
    %681 = vector.load %arg20[%c0_271, %c0_272] : memref<1x16xf32, #tpu.memory_space<vmem>>, vector<1x16xf32>
    %682 = vector.broadcast %681 : vector<1x16xf32> to vector<48x16xf32>
    %683 = arith.addf %680, %682 : vector<48x16xf32>
    %c0_273 = arith.constant 0 : index
    %c0_274 = arith.constant 0 : index
    %684 = vector.load %arg21[%c0_273, %c0_274] : memref<16x1xf32, #tpu.memory_space<vmem>>, vector<16x1xf32>
    %cst_275 = arith.constant dense<0.000000e+00> : vector<48x1xf32>
    %685 = tpu.matmul %683, %684, %cst_275 {dimension_numbers = #tpu.dot_dimension_numbers<[1], [0], [0], [1], [0, 0, 1, 1], [], []>} : vector<48x16xf32>, vector<16x1xf32>, vector<48x1xf32> -> vector<48x1xf32>
    %c0_276 = arith.constant 0 : index
    %c0_277 = arith.constant 0 : index
    %686 = vector.load %arg22[%c0_276, %c0_277] : memref<1x1xf32, #tpu.memory_space<vmem>>, vector<1x1xf32>
    %687 = vector.broadcast %686 : vector<1x1xf32> to vector<48x1xf32>
    %688 = arith.addf %685, %687 : vector<48x1xf32>
    %cst_278 = arith.constant 0.000000e+00 : f32
    %689 = vector.broadcast %cst_278 : f32 to vector<48x1xf32>
    %690 = arith.maximumf %688, %689 : vector<48x1xf32>
    %691 = vector.broadcast %cst_278 : f32 to vector<48x1xf32>
    %692 = arith.subf %688, %691 : vector<48x1xf32>
    %693 = arith.cmpf one, %692, %692 : vector<48x1xf32>
    %694 = vector.broadcast %cst_278 : f32 to vector<48x1xf32>
    %695 = arith.addf %688, %694 : vector<48x1xf32>
    %696 = math.absf %692 : vector<48x1xf32>
    %cst_279 = arith.constant 0.000000e+00 : f32
    %697 = vector.broadcast %cst_279 : f32 to vector<48x1xf32>
    %698 = arith.subf %697, %696 : vector<48x1xf32>
    %699 = math.exp %698 : vector<48x1xf32>
    %700 = math.log1p %699 : vector<48x1xf32>
    %701 = arith.addf %690, %700 : vector<48x1xf32>
    %702 = arith.select %693, %695, %701 : vector<48x1xi1>, vector<48x1xf32>
    %c0_280 = arith.constant 0 : index
    %c0_281 = arith.constant 0 : index
    %703 = vector.load %arg23[%c0_280, %c0_281] : memref<16x1xf32, #tpu.memory_space<vmem>>, vector<16x1xf32>
    %cst_282 = arith.constant dense<0.000000e+00> : vector<48x1xf32>
    %704 = tpu.matmul %683, %703, %cst_282 {dimension_numbers = #tpu.dot_dimension_numbers<[1], [0], [0], [1], [0, 0, 1, 1], [], []>} : vector<48x16xf32>, vector<16x1xf32>, vector<48x1xf32> -> vector<48x1xf32>
    %c0_283 = arith.constant 0 : index
    %c0_284 = arith.constant 0 : index
    %705 = vector.load %arg24[%c0_283, %c0_284] : memref<1x1xf32, #tpu.memory_space<vmem>>, vector<1x1xf32>
    %706 = vector.broadcast %705 : vector<1x1xf32> to vector<48x1xf32>
    %707 = arith.addf %704, %706 : vector<48x1xf32>
    %c0_285 = arith.constant 0 : index
    %c0_286 = arith.constant 0 : index
    %c0_287 = arith.constant 0 : index
    %708 = vector.load %arg7[%c0_285, %c0_286, %c0_287] : memref<1x48x3xf32, #tpu.memory_space<vmem>>, vector<1x48x3xf32>
    %709 = vector.shape_cast %708 : vector<1x48x3xf32> to vector<48x3xf32>
    %710 = vector.extract_strided_slice %709 {offsets = [0, 0], sizes = [48, 1], strides = [1, 1]} : vector<48x3xf32> to vector<48x1xf32>
    %711 = vector.extract_strided_slice %709 {offsets = [0, 1], sizes = [48, 1], strides = [1, 1]} : vector<48x3xf32> to vector<48x1xf32>
    %712 = vector.extract_strided_slice %709 {offsets = [0, 2], sizes = [48, 1], strides = [1, 1]} : vector<48x3xf32> to vector<48x1xf32>
    %c0_288 = arith.constant 0 : index
    %c0_289 = arith.constant 0 : index
    %c0_290 = arith.constant 0 : index
    %713 = vector.load %arg6[%c0_288, %c0_289, %c0_290] : memref<1x48x1xf32, #tpu.memory_space<vmem>>, vector<1x48x1xf32>
    %714 = vector.shape_cast %713 : vector<1x48x1xf32> to vector<48x1xf32>
    %cst_291 = arith.constant 9.99999991E-38 : f32
    %715 = vector.broadcast %cst_291 : f32 to vector<48x1xf32>
    %716 = arith.maximumf %702, %715 : vector<48x1xf32>
    %717 = math.log %716 : vector<48x1xf32>
    %718 = arith.mulf %710, %717 : vector<48x1xf32>
    %719 = vector.shape_cast %718 : vector<48x1xf32> to vector<1x48x1xf32>
    %cst_292 = arith.constant dense<0.000000e+00> : vector<1xf32>
    %720 = vector.multi_reduction <add>, %719, %cst_292 [1, 2] : vector<1x48x1xf32> to vector<1xf32>
    %721 = vector.shape_cast %720 : vector<1xf32> to vector<1x1x1xf32>
    %722 = vector.extract %721[0, 0, 0] : f32 from vector<1x1x1xf32>
    %723 = arith.subf %714, %707 : vector<48x1xf32>
    %cst_293 = arith.constant 1.000000e-01 : f32
    %724 = vector.broadcast %cst_293 : f32 to vector<48x1xf32>
    %725 = arith.divf %723, %724 : vector<48x1xf32>
    %726 = arith.mulf %725, %725 : vector<48x1xf32>
    %cst_294 = arith.constant -5.000000e-01 : f32
    %727 = vector.broadcast %cst_294 : f32 to vector<48x1xf32>
    %728 = arith.mulf %727, %726 : vector<48x1xf32>
    %cst_295 = arith.constant 1.38364661 : f32
    %729 = vector.broadcast %cst_295 : f32 to vector<48x1xf32>
    %730 = arith.addf %728, %729 : vector<48x1xf32>
    %731 = arith.mulf %710, %730 : vector<48x1xf32>
    %732 = vector.shape_cast %731 : vector<48x1xf32> to vector<1x48x1xf32>
    %cst_296 = arith.constant dense<0.000000e+00> : vector<1xf32>
    %733 = vector.multi_reduction <add>, %732, %cst_296 [1, 2] : vector<1x48x1xf32> to vector<1xf32>
    %734 = vector.shape_cast %733 : vector<1xf32> to vector<1x1x1xf32>
    %735 = vector.extract %734[0, 0, 0] : f32 from vector<1x1x1xf32>
    %736 = arith.subf %707, %714 : vector<48x1xf32>
    %737 = math.absf %736 : vector<48x1xf32>
    %738 = arith.mulf %711, %737 : vector<48x1xf32>
    %739 = vector.shape_cast %738 : vector<48x1xf32> to vector<1x48x1xf32>
    %cst_297 = arith.constant dense<0.000000e+00> : vector<1xf32>
    %740 = vector.multi_reduction <add>, %739, %cst_297 [1, 2] : vector<1x48x1xf32> to vector<1xf32>
    %741 = vector.shape_cast %740 : vector<1xf32> to vector<1x1x1xf32>
    %742 = vector.extract %741[0, 0, 0] : f32 from vector<1x1x1xf32>
    %743 = arith.mulf %712, %702 : vector<48x1xf32>
    %744 = vector.shape_cast %743 : vector<48x1xf32> to vector<1x48x1xf32>
    %cst_298 = arith.constant dense<0.000000e+00> : vector<1xf32>
    %745 = vector.multi_reduction <add>, %744, %cst_298 [1, 2] : vector<1x48x1xf32> to vector<1xf32>
    %746 = vector.shape_cast %745 : vector<1xf32> to vector<1x1x1xf32>
    %747 = vector.extract %746[0, 0, 0] : f32 from vector<1x1x1xf32>
    %748 = tpu.iota {dimensions = array<i32: 1>} : vector<1x128xi32>
    %c0_i32 = arith.constant 0 : i32
    %749 = vector.broadcast %c0_i32 : i32 to vector<1x128xi32>
    %750 = arith.cmpi eq, %748, %749 : vector<1x128xi32>
    %751 = vector.broadcast %722 : f32 to vector<1x1xf32>
    %cst_299 = arith.constant 0.000000e+00 : f32
    %752 = vector.shape_cast %751 : vector<1x1xf32> to vector<1x1xf32>
    %753 = vector.broadcast %752 : vector<1x1xf32> to vector<1x128xf32>
    %754 = vector.broadcast %cst_299 : f32 to vector<1x128xf32>
    %755 = arith.select %750, %753, %754 : vector<1x128xi1>, vector<1x128xf32>
    %c1_i32 = arith.constant 1 : i32
    %756 = vector.broadcast %c1_i32 : i32 to vector<1x128xi32>
    %757 = arith.cmpi eq, %748, %756 : vector<1x128xi32>
    %758 = vector.broadcast %735 : f32 to vector<1x1xf32>
    %cst_300 = arith.constant 0.000000e+00 : f32
    %759 = vector.shape_cast %758 : vector<1x1xf32> to vector<1x1xf32>
    %760 = vector.broadcast %759 : vector<1x1xf32> to vector<1x128xf32>
    %761 = vector.broadcast %cst_300 : f32 to vector<1x128xf32>
    %762 = arith.select %757, %760, %761 : vector<1x128xi1>, vector<1x128xf32>
    %763 = arith.addf %755, %762 : vector<1x128xf32>
    %c2_i32 = arith.constant 2 : i32
    %764 = vector.broadcast %c2_i32 : i32 to vector<1x128xi32>
    %765 = arith.cmpi eq, %748, %764 : vector<1x128xi32>
    %766 = vector.broadcast %742 : f32 to vector<1x1xf32>
    %cst_301 = arith.constant 0.000000e+00 : f32
    %767 = vector.shape_cast %766 : vector<1x1xf32> to vector<1x1xf32>
    %768 = vector.broadcast %767 : vector<1x1xf32> to vector<1x128xf32>
    %769 = vector.broadcast %cst_301 : f32 to vector<1x128xf32>
    %770 = arith.select %765, %768, %769 : vector<1x128xi1>, vector<1x128xf32>
    %771 = arith.addf %763, %770 : vector<1x128xf32>
    %c3_i32 = arith.constant 3 : i32
    %772 = vector.broadcast %c3_i32 : i32 to vector<1x128xi32>
    %773 = arith.cmpi eq, %748, %772 : vector<1x128xi32>
    %774 = vector.broadcast %747 : f32 to vector<1x1xf32>
    %cst_302 = arith.constant 0.000000e+00 : f32
    %775 = vector.shape_cast %774 : vector<1x1xf32> to vector<1x1xf32>
    %776 = vector.broadcast %775 : vector<1x1xf32> to vector<1x128xf32>
    %777 = vector.broadcast %cst_302 : f32 to vector<1x128xf32>
    %778 = arith.select %773, %776, %777 : vector<1x128xi1>, vector<1x128xf32>
    %779 = arith.addf %771, %778 : vector<1x128xf32>
    %c4_i32 = arith.constant 4 : i32
    %780 = vector.broadcast %c4_i32 : i32 to vector<1x128xi32>
    %781 = arith.cmpi eq, %748, %780 : vector<1x128xi32>
    %782 = vector.broadcast %52 : f32 to vector<1x1xf32>
    %cst_303 = arith.constant 0.000000e+00 : f32
    %783 = vector.shape_cast %782 : vector<1x1xf32> to vector<1x1xf32>
    %784 = vector.broadcast %783 : vector<1x1xf32> to vector<1x128xf32>
    %785 = vector.broadcast %cst_303 : f32 to vector<1x128xf32>
    %786 = arith.select %781, %784, %785 : vector<1x128xi1>, vector<1x128xf32>
    %787 = arith.addf %779, %786 : vector<1x128xf32>
    %c0_304 = arith.constant 0 : index
    %c0_305 = arith.constant 0 : index
    %c0_306 = arith.constant 0 : index
    %788 = vector.load %arg25[%c0_304, %c0_305, %c0_306] : memref<1x1x128xf32, #tpu.memory_space<vmem>>, vector<1x1x128xf32>
    %789 = vector.shape_cast %788 : vector<1x1x128xf32> to vector<1x128xf32>
    %790 = vector.shape_cast %787 : vector<1x128xf32> to vector<1x1x128xf32>
    tpu.vector_store %arg25[%c0_304, %c0_305, %c0_306], %790 {strides = array<i32>} : memref<1x1x128xf32, #tpu.memory_space<vmem>>, vector<1x1x128xf32>,
    %c1_i32_307 = arith.constant 1 : i32
    %791 = arith.cmpi eq, %arg0, %c1_i32_307 : i32
    %792 = arith.extui %791 : i1 to i32
    %c0_i32_308 = arith.constant 0 : i32
    %793 = arith.cmpi ne, %792, %c0_i32_308 : i32
    scf.if %793 {
      %cst_309 = arith.constant 0.000000e+00 : f32
      %794 = vector.broadcast %cst_309 : f32 to vector<48x128xf32>
      %c0_310 = arith.constant 0 : index
      %c0_311 = arith.constant 0 : index
      %c0_312 = arith.constant 0 : index
      %795 = vector.load %arg26[%c0_310, %c0_311, %c0_312] : memref<1x48x128xf32, #tpu.memory_space<vmem>>, vector<1x48x128xf32>
      %796 = vector.shape_cast %795 : vector<1x48x128xf32> to vector<48x128xf32>
      %797 = vector.shape_cast %794 : vector<48x128xf32> to vector<1x48x128xf32>
      tpu.vector_store %arg26[%c0_310, %c0_311, %c0_312], %797 {strides = array<i32>} : memref<1x48x128xf32, #tpu.memory_space<vmem>>, vector<1x48x128xf32>,
      %c0_313 = arith.constant 0 : index
      %c0_314 = arith.constant 0 : index
      %c0_315 = arith.constant 0 : index
      %798 = vector.load %arg26[%c0_313, %c0_314, %c0_315] : memref<1x48x128xf32, #tpu.memory_space<vmem>>, vector<1x48x16xf32>
      %799 = vector.shape_cast %798 : vector<1x48x16xf32> to vector<48x16xf32>
      %800 = vector.shape_cast %683 : vector<48x16xf32> to vector<1x48x16xf32>
      tpu.vector_store %arg26[%c0_313, %c0_314, %c0_315], %800 {strides = array<i32>} : memref<1x48x128xf32, #tpu.memory_space<vmem>>, vector<1x48x16xf32>,
      %c0_316 = arith.constant 0 : index
      %c0_317 = arith.constant 0 : index
      %c16 = arith.constant 16 : index
      %801 = vector.load %arg26[%c0_316, %c0_317, %c16] : memref<1x48x128xf32, #tpu.memory_space<vmem>>, vector<1x48x1xf32>
      %802 = vector.shape_cast %801 : vector<1x48x1xf32> to vector<48x1xf32>
      %803 = vector.shape_cast %702 : vector<48x1xf32> to vector<1x48x1xf32>
      tpu.vector_store %arg26[%c0_316, %c0_317, %c16], %803 {strides = array<i32>} : memref<1x48x128xf32, #tpu.memory_space<vmem>>, vector<1x48x1xf32>,
      %c0_318 = arith.constant 0 : index
      %c0_319 = arith.constant 0 : index
      %c17 = arith.constant 17 : index
      %804 = vector.load %arg26[%c0_318, %c0_319, %c17] : memref<1x48x128xf32, #tpu.memory_space<vmem>>, vector<1x48x1xf32>
      %805 = vector.shape_cast %804 : vector<1x48x1xf32> to vector<48x1xf32>
      %806 = vector.shape_cast %707 : vector<48x1xf32> to vector<1x48x1xf32>
      tpu.vector_store %arg26[%c0_318, %c0_319, %c17], %806 {strides = array<i32>} : memref<1x48x128xf32, #tpu.memory_space<vmem>>, vector<1x48x1xf32>,
    } else {
    }
    return
  }
  func.func @transform_0(%arg0: i32) -> (i32, i32, i32, i32) {
    %c0_i32 = arith.constant 0 : i32
    %c0_i32_0 = arith.constant 0 : i32
    %c0_i32_1 = arith.constant 0 : i32
    %c0_i32_2 = arith.constant 0 : i32
    return %arg0, %c0_i32, %c0_i32_0, %c0_i32_1 : i32, i32, i32, i32
  }
  func.func @transform_1(%arg0: i32) -> (i32, i32, i32, i32) {
    %c0_i32 = arith.constant 0 : i32
    %c0_i32_0 = arith.constant 0 : i32
    %c0_i32_1 = arith.constant 0 : i32
    %c0_i32_2 = arith.constant 0 : i32
    return %arg0, %c0_i32, %c0_i32_0, %c0_i32_1 : i32, i32, i32, i32
  }
  func.func @transform_2(%arg0: i32) -> (i32, i32, i32) {
    %c0_i32 = arith.constant 0 : i32
    %c0_i32_0 = arith.constant 0 : i32
    %c0_i32_1 = arith.constant 0 : i32
    return %arg0, %c0_i32, %c0_i32_0 : i32, i32, i32
  }
  func.func @transform_3(%arg0: i32) -> (i32, i32, i32) {
    %c0_i32 = arith.constant 0 : i32
    %c0_i32_0 = arith.constant 0 : i32
    %c0_i32_1 = arith.constant 0 : i32
    return %arg0, %c0_i32, %c0_i32_0 : i32, i32, i32
  }
  func.func @transform_4(%arg0: i32) -> (i32, i32, i32) {
    %c0_i32 = arith.constant 0 : i32
    %c0_i32_0 = arith.constant 0 : i32
    %c0_i32_1 = arith.constant 0 : i32
    return %arg0, %c0_i32, %c0_i32_0 : i32, i32, i32
  }
  func.func @transform_5(%arg0: i32) -> (i32, i32, i32) {
    %c0_i32 = arith.constant 0 : i32
    %c0_i32_0 = arith.constant 0 : i32
    %c0_i32_1 = arith.constant 0 : i32
    return %arg0, %c0_i32, %c0_i32_0 : i32, i32, i32
  }
  func.func @transform_6(%arg0: i32) -> (i32, i32, i32) {
    %c0_i32 = arith.constant 0 : i32
    %c0_i32_0 = arith.constant 0 : i32
    %c0_i32_1 = arith.constant 0 : i32
    return %arg0, %c0_i32, %c0_i32_0 : i32, i32, i32
  }
  func.func @transform_7(%arg0: i32) -> (i32, i32) {
    %c0_i32 = arith.constant 0 : i32
    %c0_i32_0 = arith.constant 0 : i32
    %c0_i32_1 = arith.constant 0 : i32
    return %c0_i32, %c0_i32_0 : i32, i32
  }
  func.func @transform_8(%arg0: i32) -> (i32, i32) {
    %c0_i32 = arith.constant 0 : i32
    %c0_i32_0 = arith.constant 0 : i32
    %c0_i32_1 = arith.constant 0 : i32
    return %c0_i32, %c0_i32_0 : i32, i32
  }
  func.func @transform_9(%arg0: i32) -> (i32, i32) {
    %c0_i32 = arith.constant 0 : i32
    %c0_i32_0 = arith.constant 0 : i32
    %c0_i32_1 = arith.constant 0 : i32
    return %c0_i32, %c0_i32_0 : i32, i32
  }
  func.func @transform_10(%arg0: i32) -> (i32, i32) {
    %c0_i32 = arith.constant 0 : i32
    %c0_i32_0 = arith.constant 0 : i32
    %c0_i32_1 = arith.constant 0 : i32
    return %c0_i32, %c0_i32_0 : i32, i32
  }
  func.func @transform_11(%arg0: i32) -> (i32, i32) {
    %c0_i32 = arith.constant 0 : i32
    %c0_i32_0 = arith.constant 0 : i32
    %c0_i32_1 = arith.constant 0 : i32
    return %c0_i32, %c0_i32_0 : i32, i32
  }
  func.func @transform_12(%arg0: i32) -> (i32, i32) {
    %c0_i32 = arith.constant 0 : i32
    %c0_i32_0 = arith.constant 0 : i32
    %c0_i32_1 = arith.constant 0 : i32
    return %c0_i32, %c0_i32_0 : i32, i32
  }
  func.func @transform_13(%arg0: i32) -> (i32, i32) {
    %c0_i32 = arith.constant 0 : i32
    %c0_i32_0 = arith.constant 0 : i32
    %c0_i32_1 = arith.constant 0 : i32
    return %c0_i32, %c0_i32_0 : i32, i32
  }
  func.func @transform_14(%arg0: i32) -> (i32, i32) {
    %c0_i32 = arith.constant 0 : i32
    %c0_i32_0 = arith.constant 0 : i32
    %c0_i32_1 = arith.constant 0 : i32
    return %c0_i32, %c0_i32_0 : i32, i32
  }
  func.func @transform_15(%arg0: i32) -> (i32, i32) {
    %c0_i32 = arith.constant 0 : i32
    %c0_i32_0 = arith.constant 0 : i32
    %c0_i32_1 = arith.constant 0 : i32
    return %c0_i32, %c0_i32_0 : i32, i32
  }
  func.func @transform_16(%arg0: i32) -> (i32, i32) {
    %c0_i32 = arith.constant 0 : i32
    %c0_i32_0 = arith.constant 0 : i32
    %c0_i32_1 = arith.constant 0 : i32
    return %c0_i32, %c0_i32_0 : i32, i32
  }
  func.func @transform_17(%arg0: i32) -> (i32, i32) {
    %c0_i32 = arith.constant 0 : i32
    %c0_i32_0 = arith.constant 0 : i32
    %c0_i32_1 = arith.constant 0 : i32
    return %c0_i32, %c0_i32_0 : i32, i32
  }
  func.func @transform_18(%arg0: i32) -> (i32, i32) {
    %c0_i32 = arith.constant 0 : i32
    %c0_i32_0 = arith.constant 0 : i32
    %c0_i32_1 = arith.constant 0 : i32
    return %c0_i32, %c0_i32_0 : i32, i32
  }
  func.func @transform_19(%arg0: i32) -> (i32, i32) {
    %c0_i32 = arith.constant 0 : i32
    %c0_i32_0 = arith.constant 0 : i32
    %c0_i32_1 = arith.constant 0 : i32
    return %c0_i32, %c0_i32_0 : i32, i32
  }
  func.func @transform_20(%arg0: i32) -> (i32, i32) {
    %c0_i32 = arith.constant 0 : i32
    %c0_i32_0 = arith.constant 0 : i32
    %c0_i32_1 = arith.constant 0 : i32
    return %c0_i32, %c0_i32_0 : i32, i32
  }
  func.func @transform_21(%arg0: i32) -> (i32, i32) {
    %c0_i32 = arith.constant 0 : i32
    %c0_i32_0 = arith.constant 0 : i32
    %c0_i32_1 = arith.constant 0 : i32
    return %c0_i32, %c0_i32_0 : i32, i32
  }
  func.func @transform_22(%arg0: i32) -> (i32, i32) {
    %c0_i32 = arith.constant 0 : i32
    %c0_i32_0 = arith.constant 0 : i32
    %c0_i32_1 = arith.constant 0 : i32
    return %c0_i32, %c0_i32_0 : i32, i32
  }
  func.func @transform_23(%arg0: i32) -> (i32, i32) {
    %c0_i32 = arith.constant 0 : i32
    %c0_i32_0 = arith.constant 0 : i32
    %c0_i32_1 = arith.constant 0 : i32
    return %c0_i32, %c0_i32_0 : i32, i32
  }
  func.func @transform_24(%arg0: i32) -> (i32, i32, i32) {
    %c0_i32 = arith.constant 0 : i32
    %c0_i32_0 = arith.constant 0 : i32
    %c0_i32_1 = arith.constant 0 : i32
    return %arg0, %c0_i32, %c0_i32_0 : i32, i32, i32
  }
  func.func @transform_25(%arg0: i32) -> (i32, i32, i32) {
    %c0_i32 = arith.constant 0 : i32
    %c0_i32_0 = arith.constant 0 : i32
    %c0_i32_1 = arith.constant 0 : i32
    return %arg0, %c0_i32, %c0_i32_0 : i32, i32, i32
  }
}

</mosaic_0001>

<llo_original>
// kernel: _device_forward.3
$region0: #{_device_forward.3}
  #allocation0 [shape = 'u32[]', space=smem, size = 0x4, offset = 0x4, fixed_abs, tag = 'smem constant byte address 0x4 - core index']
  #allocation1 [shape = 'u32[72,128]{1,0:T(1,128)}', space=vmem, size = 0x9000, scoped, tag = 'internal scratch']
  #allocation2 [shape = 'f32[1,1]{1,0:T(1,128)S(1)}', space=vmem, size = 0x200, scoped, tag = 'scoped memory for _device_forward.3']
  #allocation3 [shape = 'f32[1,1]{1,0:T(1,128)S(1)}', space=vmem, size = 0x200, scoped, tag = 'scoped memory for _device_forward.3']
  %s0 = inlined_call_operand.vmem [shape: f32[2,1,8,4], index: 0, kind: input, shape index: {}]
  %s1 = inlined_call_operand.vmem [shape: f32[2,1,1,8], index: 1, kind: input, shape index: {}]
  %s2 = inlined_call_operand.vmem [shape: f32[2,1,8], index: 2, kind: input, shape index: {}]
  %s3 = inlined_call_operand.vmem [shape: f32[2,1,1], index: 3, kind: input, shape index: {}]
  %s4 = inlined_call_operand.vmem [shape: f32[2,48,3], index: 4, kind: input, shape index: {}]
  %s5 = inlined_call_operand.vmem [shape: f32[2,48,1], index: 5, kind: input, shape index: {}]
  %s6 = inlined_call_operand.vmem [shape: f32[2,48,3], index: 6, kind: input, shape index: {}]
  %s7 = inlined_call_operand.vmem [shape: f32[4,8], index: 7, kind: input, shape index: {}]
  %s8 = inlined_call_operand.vmem [shape: f32[1,8], index: 8, kind: input, shape index: {}]
  %s9 = inlined_call_operand.vmem [shape: f32[4,8], index: 9, kind: input, shape index: {}]
  %s10 = inlined_call_operand.vmem [shape: f32[1,8], index: 10, kind: input, shape index: {}]
  %s11 = inlined_call_operand.vmem [shape: f32[8,32], index: 11, kind: input, shape index: {}]
  %s12 = inlined_call_operand.vmem [shape: f32[1,32], index: 12, kind: input, shape index: {}]
  %s13 = inlined_call_operand.vmem [shape: f32[32,8], index: 13, kind: input, shape index: {}]
  %s14 = inlined_call_operand.vmem [shape: f32[1,8], index: 14, kind: input, shape index: {}]
  %s15 = inlined_call_operand.vmem [shape: f32[2,32], index: 15, kind: input, shape index: {}]
  %s16 = inlined_call_operand.vmem [shape: f32[8,32], index: 16, kind: input, shape index: {}]
  %s17 = inlined_call_operand.vmem [shape: f32[1,32], index: 17, kind: input, shape index: {}]
  %s18 = inlined_call_operand.vmem [shape: f32[32,16], index: 18, kind: input, shape index: {}]
  %s19 = inlined_call_operand.vmem [shape: f32[1,16], index: 19, kind: input, shape index: {}]
  %s20 = inlined_call_operand.vmem [shape: f32[16,1], index: 20, kind: input, shape index: {}]
  %s21 = inlined_call_operand.<no memory space> [shape: f32[1,1], index: 21, kind: input, shape index: {}]
  %s22 = inlined_call_operand.vmem [shape: f32[16,1], index: 22, kind: input, shape index: {}]
  %s23 = inlined_call_operand.<no memory space> [shape: f32[1,1], index: 23, kind: input, shape index: {}]
  %s24 = inlined_call_operand.vmem [shape: f32[2,1,128], index: 24, kind: output, shape index: {0}]
  %s25 = inlined_call_operand.hbm [shape: f32[2,48,128], index: 25, kind: output, shape index: {1}]
  %26 = xla_tuple %s24, %s25
  %s27 = sld [smem:[#allocation0]]
  $region141: #{_device_forward.3} parent=0
    _
  %s29 = ssub.s32 1, %s27
  %s30 = scalar_select 0, %s29, %s27
  %v31 = vstv %s21
  %32 = vst [vmem:[#allocation2] sm:$0x1] %v31
  %v33 = vstv %s23
  %34 = vst [vmem:[#allocation3] sm:$0x1] %v33
  $region1: #{_device_forward.3} parent=0
    #allocation4 [shape = 'u8[49152]{0}', space=vmem, size = 0xc000, scoped, tag = 'output window, operand 1']
    #allocation5 [shape = 's32[2]{0}', space=sflag, size = 0x8, scoped, tag = 'scoped memory for _device_forward.3']
    %35 = vsyncpa [#allocation5], 0
    %s36 = scalar_lea.sflag [#allocation5], 1
    %37 = vsyncpa %s36, 0
    loop: start=0, step=1, limit=4
    $region2: #{_device_forward.3} parent=1 // loop_pre_header
      _
    $region3: #{_device_forward.3} parent=1 // loop_header
      %s39 = sphi 0, %s43
      %p40 = scmp.ge.s32.totalorder %s39, 4
      %s49 = sphi 0, %s51
      %s52 = sphi 0, %s49
      %s53 = sphi 0, %s52
      %s69 = sphi 0, %s53
      %s75 = sphi 0, %s77
      %s78 = sphi 0, %s75
      %s79 = sphi 0, %s78
      %s95 = sphi 0, %s79
      %s101 = sphi 0, %s103
      %s104 = sphi 0, %s101
      %s105 = sphi 0, %s104
      %s121 = sphi 0, %s105
      %s127 = sphi 0, %s129
      %s130 = sphi 0, %s127
      %s131 = sphi 0, %s130
      %s147 = sphi 0, %s131
      %s153 = sphi 0, %s155
      %s156 = sphi 0, %s153
      %s157 = sphi 0, %s156
      %s173 = sphi 0, %s157
      %s179 = sphi 0, %s181
      %s182 = sphi 0, %s179
      %s183 = sphi 0, %s182
      %s199 = sphi 0, %s183
      %s205 = sphi 0, %s207
      %s208 = sphi 0, %s205
      %s209 = sphi 0, %s208
      %s225 = sphi 0, %s209
      %s229 = sphi 0, %s229
      %s231 = sphi 0, %s229
      %s232 = sphi 0, %s231
      %s246 = sphi 0, %s232
      %s250 = sphi 0, %s250
      %s252 = sphi 0, %s250
      %s253 = sphi 0, %s252
      %s267 = sphi 0, %s253
      %s271 = sphi 0, %s271
      %s273 = sphi 0, %s271
      %s274 = sphi 0, %s273
      %s288 = sphi 0, %s274
      %s292 = sphi 0, %s292
      %s294 = sphi 0, %s292
      %s295 = sphi 0, %s294
      %s309 = sphi 0, %s295
      %s313 = sphi 0, %s313
      %s315 = sphi 0, %s313
      %s316 = sphi 0, %s315
      %s330 = sphi 0, %s316
      %s334 = sphi 0, %s334
      %s336 = sphi 0, %s334
      %s337 = sphi 0, %s336
      %s351 = sphi 0, %s337
      %s355 = sphi 0, %s355
      %s357 = sphi 0, %s355
      %s358 = sphi 0, %s357
      %s372 = sphi 0, %s358
      %s376 = sphi 0, %s376
      %s378 = sphi 0, %s376
      %s379 = sphi 0, %s378
      %s393 = sphi 0, %s379
      %s397 = sphi 0, %s397
      %s399 = sphi 0, %s397
      %s400 = sphi 0, %s399
      %s414 = sphi 0, %s400
      %s418 = sphi 0, %s418
      %s420 = sphi 0, %s418
      %s421 = sphi 0, %s420
      %s435 = sphi 0, %s421
      %s439 = sphi 0, %s439
      %s441 = sphi 0, %s439
      %s442 = sphi 0, %s441
      %s456 = sphi 0, %s442
      %s460 = sphi 0, %s460
      %s462 = sphi 0, %s460
      %s463 = sphi 0, %s462
      %s477 = sphi 0, %s463
      %s481 = sphi 0, %s481
      %s483 = sphi 0, %s481
      %s484 = sphi 0, %s483
      %s498 = sphi 0, %s484
      %s502 = sphi 0, %s502
      %s504 = sphi 0, %s502
      %s505 = sphi 0, %s504
      %s519 = sphi 0, %s505
      %s523 = sphi 0, %s523
      %s525 = sphi 0, %s523
      %s526 = sphi 0, %s525
      %s540 = sphi 0, %s526
      %s544 = sphi 0, %s544
      %s546 = sphi 0, %s544
      %s547 = sphi 0, %s546
      %s561 = sphi 0, %s547
      %s565 = sphi 0, %s565
      %s567 = sphi 0, %s565
      %s568 = sphi 0, %s567
      %s582 = sphi 0, %s568
      %s588 = sphi 0, %s590
      %s591 = sphi 0, %s588
      %s592 = sphi 0, %s591
      %s608 = sphi 0, %s592
      %s614 = sphi 0, %s616
      %s617 = sphi 0, %s614
      %s618 = sphi 0, %s617
      %s634 = sphi 0, %s618
    $region4: #{_device_forward.3} parent=1 // loop_header_branch
      %42 = sbr.rel (%p40) target = $region8
    $region5: #{_device_forward.3} parent=1 // loop_body
      %s44 = ssub.s32 %s39, 1
      %s45 = ssub.s32 %s39, 2
      %s46 = sadd.s32 %s39, 1
      %s47 = ssub.s32 %s39, %s46
      %p48 = scmp.eq.s32.totalorder %s47, 0
      %s50 = sadd.s32 %s49, 1
      %s51 = scalar_select %p48, %s49, %s50
      %p54 = pneg %p48
      %p55 = scmp.eq.s32.totalorder %s39, 1
      %p56 = por %p54, %p55
      %p57 = scmp.ne.s32.totalorder %s49, %s52
      %p58 = scmp.eq.s32.totalorder %s39, 0
      %p59 = por %p57, %p58
      %p60 = scmp.ne.s32.totalorder %s49, %s52
      %p61 = scmp.eq.s32.totalorder %s44, 1
      %p62 = por %p60, %p61
      %p63 = scmp.ne.s32.totalorder %s52, %s53
      %p64 = scmp.eq.s32.totalorder %s44, 0
      %p65 = por %p63, %p64
      %p66 = scmp.ne.s32.totalorder %s52, %s53
      %p67 = scmp.eq.s32.totalorder %s45, 1
      %p68 = por %p66, %p67
      %p70 = scmp.ne.s32.totalorder %s53, %s69
      %p71 = scmp.eq.s32.totalorder %s45, 0
      %p72 = por %p70, %p71
      %s73 = ssub.s32 %s39, %s46
      %p74 = scmp.eq.s32.totalorder %s73, 0
      %s76 = sadd.s32 %s75, 1
      %s77 = scalar_select %p74, %s75, %s76
      %p80 = pneg %p74
      %p81 = scmp.eq.s32.totalorder %s39, 1
      %p82 = por %p80, %p81
      %p83 = scmp.ne.s32.totalorder %s75, %s78
      %p84 = scmp.eq.s32.totalorder %s39, 0
      %p85 = por %p83, %p84
      %p86 = scmp.ne.s32.totalorder %s75, %s78
      %p87 = scmp.eq.s32.totalorder %s44, 1
      %p88 = por %p86, %p87
      %p89 = scmp.ne.s32.totalorder %s78, %s79
      %p90 = scmp.eq.s32.totalorder %s44, 0
      %p91 = por %p89, %p90
      %p92 = scmp.ne.s32.totalorder %s78, %s79
      %p93 = scmp.eq.s32.totalorder %s45, 1
      %p94 = por %p92, %p93
      %p96 = scmp.ne.s32.totalorder %s79, %s95
      %p97 = scmp.eq.s32.totalorder %s45, 0
      %p98 = por %p96, %p97
      %s99 = ssub.s32 %s39, %s46
      %p100 = scmp.eq.s32.totalorder %s99, 0
      %s102 = sadd.s32 %s101, 1
      %s103 = scalar_select %p100, %s101, %s102
      %p106 = pneg %p100
      %p107 = scmp.eq.s32.totalorder %s39, 1
      %p108 = por %p106, %p107
      %p109 = scmp.ne.s32.totalorder %s101, %s104
      %p110 = scmp.eq.s32.totalorder %s39, 0
      %p111 = por %p109, %p110
      %p112 = scmp.ne.s32.totalorder %s101, %s104
      %p113 = scmp.eq.s32.totalorder %s44, 1
      %p114 = por %p112, %p113
      %p115 = scmp.ne.s32.totalorder %s104, %s105
      %p116 = scmp.eq.s32.totalorder %s44, 0
      %p117 = por %p115, %p116
      %p118 = scmp.ne.s32.totalorder %s104, %s105
      %p119 = scmp.eq.s32.totalorder %s45, 1
      %p120 = por %p118, %p119
      %p122 = scmp.ne.s32.totalorder %s105, %s121
      %p123 = scmp.eq.s32.totalorder %s45, 0
      %p124 = por %p122, %p123
      %s125 = ssub.s32 %s39, %s46
      %p126 = scmp.eq.s32.totalorder %s125, 0
      %s128 = sadd.s32 %s127, 1
      %s129 = scalar_select %p126, %s127, %s128
      %p132 = pneg %p126
      %p133 = scmp.eq.s32.totalorder %s39, 1
      %p134 = por %p132, %p133
      %p135 = scmp.ne.s32.totalorder %s127, %s130
      %p136 = scmp.eq.s32.totalorder %s39, 0
      %p137 = por %p135, %p136
      %p138 = scmp.ne.s32.totalorder %s127, %s130
      %p139 = scmp.eq.s32.totalorder %s44, 1
      %p140 = por %p138, %p139
      %p141 = scmp.ne.s32.totalorder %s130, %s131
      %p142 = scmp.eq.s32.totalorder %s44, 0
      %p143 = por %p141, %p142
      %p144 = scmp.ne.s32.totalorder %s130, %s131
      %p145 = scmp.eq.s32.totalorder %s45, 1
      %p146 = por %p144, %p145
      %p148 = scmp.ne.s32.totalorder %s131, %s147
      %p149 = scmp.eq.s32.totalorder %s45, 0
      %p150 = por %p148, %p149
      %s151 = ssub.s32 %s39, %s46
      %p152 = scmp.eq.s32.totalorder %s151, 0
      %s154 = sadd.s32 %s153, 1
      %s155 = scalar_select %p152, %s153, %s154
      %p158 = pneg %p152
      %p159 = scmp.eq.s32.totalorder %s39, 1
      %p160 = por %p158, %p159
      %p161 = scmp.ne.s32.totalorder %s153, %s156
      %p162 = scmp.eq.s32.totalorder %s39, 0
      %p163 = por %p161, %p162
      %p164 = scmp.ne.s32.totalorder %s153, %s156
      %p165 = scmp.eq.s32.totalorder %s44, 1
      %p166 = por %p164, %p165
      %p167 = scmp.ne.s32.totalorder %s156, %s157
      %p168 = scmp.eq.s32.totalorder %s44, 0
      %p169 = por %p167, %p168
      %p170 = scmp.ne.s32.totalorder %s156, %s157
      %p171 = scmp.eq.s32.totalorder %s45, 1
      %p172 = por %p170, %p171
      %p174 = scmp.ne.s32.totalorder %s157, %s173
      %p175 = scmp.eq.s32.totalorder %s45, 0
      %p176 = por %p174, %p175
      %s177 = ssub.s32 %s39, %s46
      %p178 = scmp.eq.s32.totalorder %s177, 0
      %s180 = sadd.s32 %s179, 1
      %s181 = scalar_select %p178, %s179, %s180
      %p184 = pneg %p178
      %p185 = scmp.eq.s32.totalorder %s39, 1
      %p186 = por %p184, %p185
      %p187 = scmp.ne.s32.totalorder %s179, %s182
      %p188 = scmp.eq.s32.totalorder %s39, 0
      %p189 = por %p187, %p188
      %p190 = scmp.ne.s32.totalorder %s179, %s182
      %p191 = scmp.eq.s32.totalorder %s44, 1
      %p192 = por %p190, %p191
      %p193 = scmp.ne.s32.totalorder %s182, %s183
      %p194 = scmp.eq.s32.totalorder %s44, 0
      %p195 = por %p193, %p194
      %p196 = scmp.ne.s32.totalorder %s182, %s183
      %p197 = scmp.eq.s32.totalorder %s45, 1
      %p198 = por %p196, %p197
      %p200 = scmp.ne.s32.totalorder %s183, %s199
      %p201 = scmp.eq.s32.totalorder %s45, 0
      %p202 = por %p200, %p201
      %s203 = ssub.s32 %s39, %s46
      %p204 = scmp.eq.s32.totalorder %s203, 0
      %s206 = sadd.s32 %s205, 1
      %s207 = scalar_select %p204, %s205, %s206
      %p210 = pneg %p204
      %p211 = scmp.eq.s32.totalorder %s39, 1
      %p212 = por %p210, %p211
      %p213 = scmp.ne.s32.totalorder %s205, %s208
      %p214 = scmp.eq.s32.totalorder %s39, 0
      %p215 = por %p213, %p214
      %p216 = scmp.ne.s32.totalorder %s205, %s208
      %p217 = scmp.eq.s32.totalorder %s44, 1
      %p218 = por %p216, %p217
      %p219 = scmp.ne.s32.totalorder %s208, %s209
      %p220 = scmp.eq.s32.totalorder %s44, 0
      %p221 = por %p219, %p220
      %p222 = scmp.ne.s32.totalorder %s208, %s209
      %p223 = scmp.eq.s32.totalorder %s45, 1
      %p224 = por %p222, %p223
      %p226 = scmp.ne.s32.totalorder %s209, %s225
      %p227 = scmp.eq.s32.totalorder %s45, 0
      %p228 = por %p226, %p227
      %s230 = sadd.s32 %s229, 1
      %p233 = scmp.eq.s32.totalorder %s39, 1
      %p234 = scmp.ne.s32.totalorder %s229, %s231
      %p235 = scmp.eq.s32.totalorder %s39, 0
      %p236 = por %p234, %p235
      %p237 = scmp.ne.s32.totalorder %s229, %s231
      %p238 = scmp.eq.s32.totalorder %s44, 1
      %p239 = por %p237, %p238
      %p240 = scmp.ne.s32.totalorder %s231, %s232
      %p241 = scmp.eq.s32.totalorder %s44, 0
      %p242 = por %p240, %p241
      %p243 = scmp.ne.s32.totalorder %s231, %s232
      %p244 = scmp.eq.s32.totalorder %s45, 1
      %p245 = por %p243, %p244
      %p247 = scmp.ne.s32.totalorder %s232, %s246
      %p248 = scmp.eq.s32.totalorder %s45, 0
      %p249 = por %p247, %p248
      %s251 = sadd.s32 %s250, 1
      %p254 = scmp.eq.s32.totalorder %s39, 1
      %p255 = scmp.ne.s32.totalorder %s250, %s252
      %p256 = scmp.eq.s32.totalorder %s39, 0
      %p257 = por %p255, %p256
      %p258 = scmp.ne.s32.totalorder %s250, %s252
      %p259 = scmp.eq.s32.totalorder %s44, 1
      %p260 = por %p258, %p259
      %p261 = scmp.ne.s32.totalorder %s252, %s253
      %p262 = scmp.eq.s32.totalorder %s44, 0
      %p263 = por %p261, %p262
      %p264 = scmp.ne.s32.totalorder %s252, %s253
      %p265 = scmp.eq.s32.totalorder %s45, 1
      %p266 = por %p264, %p265
      %p268 = scmp.ne.s32.totalorder %s253, %s267
      %p269 = scmp.eq.s32.totalorder %s45, 0
      %p270 = por %p268, %p269
      %s272 = sadd.s32 %s271, 1
      %p275 = scmp.eq.s32.totalorder %s39, 1
      %p276 = scmp.ne.s32.totalorder %s271, %s273
      %p277 = scmp.eq.s32.totalorder %s39, 0
      %p278 = por %p276, %p277
      %p279 = scmp.ne.s32.totalorder %s271, %s273
      %p280 = scmp.eq.s32.totalorder %s44, 1
      %p281 = por %p279, %p280
      %p282 = scmp.ne.s32.totalorder %s273, %s274
      %p283 = scmp.eq.s32.totalorder %s44, 0
      %p284 = por %p282, %p283
      %p285 = scmp.ne.s32.totalorder %s273, %s274
      %p286 = scmp.eq.s32.totalorder %s45, 1
      %p287 = por %p285, %p286
      %p289 = scmp.ne.s32.totalorder %s274, %s288
      %p290 = scmp.eq.s32.totalorder %s45, 0
      %p291 = por %p289, %p290
      %s293 = sadd.s32 %s292, 1
      %p296 = scmp.eq.s32.totalorder %s39, 1
      %p297 = scmp.ne.s32.totalorder %s292, %s294
      %p298 = scmp.eq.s32.totalorder %s39, 0
      %p299 = por %p297, %p298
      %p300 = scmp.ne.s32.totalorder %s292, %s294
      %p301 = scmp.eq.s32.totalorder %s44, 1
      %p302 = por %p300, %p301
      %p303 = scmp.ne.s32.totalorder %s294, %s295
      %p304 = scmp.eq.s32.totalorder %s44, 0
      %p305 = por %p303, %p304
      %p306 = scmp.ne.s32.totalorder %s294, %s295
      %p307 = scmp.eq.s32.totalorder %s45, 1
      %p308 = por %p306, %p307
      %p310 = scmp.ne.s32.totalorder %s295, %s309
      %p311 = scmp.eq.s32.totalorder %s45, 0
      %p312 = por %p310, %p311
      %s314 = sadd.s32 %s313, 1
      %p317 = scmp.eq.s32.totalorder %s39, 1
      %p318 = scmp.ne.s32.totalorder %s313, %s315
      %p319 = scmp.eq.s32.totalorder %s39, 0
      %p320 = por %p318, %p319
      %p321 = scmp.ne.s32.totalorder %s313, %s315
      %p322 = scmp.eq.s32.totalorder %s44, 1
      %p323 = por %p321, %p322
      %p324 = scmp.ne.s32.totalorder %s315, %s316
      %p325 = scmp.eq.s32.totalorder %s44, 0
      %p326 = por %p324, %p325
      %p327 = scmp.ne.s32.totalorder %s315, %s316
      %p328 = scmp.eq.s32.totalorder %s45, 1
      %p329 = por %p327, %p328
      %p331 = scmp.ne.s32.totalorder %s316, %s330
      %p332 = scmp.eq.s32.totalorder %s45, 0
      %p333 = por %p331, %p332
      %s335 = sadd.s32 %s334, 1
      %p338 = scmp.eq.s32.totalorder %s39, 1
      %p339 = scmp.ne.s32.totalorder %s334, %s336
      %p340 = scmp.eq.s32.totalorder %s39, 0
      %p341 = por %p339, %p340
      %p342 = scmp.ne.s32.totalorder %s334, %s336
      %p343 = scmp.eq.s32.totalorder %s44, 1
      %p344 = por %p342, %p343
      %p345 = scmp.ne.s32.totalorder %s336, %s337
      %p346 = scmp.eq.s32.totalorder %s44, 0
      %p347 = por %p345, %p346
      %p348 = scmp.ne.s32.totalorder %s336, %s337
      %p349 = scmp.eq.s32.totalorder %s45, 1
      %p350 = por %p348, %p349
      %p352 = scmp.ne.s32.totalorder %s337, %s351
      %p353 = scmp.eq.s32.totalorder %s45, 0
      %p354 = por %p352, %p353
      %s356 = sadd.s32 %s355, 1
      %p359 = scmp.eq.s32.totalorder %s39, 1
      %p360 = scmp.ne.s32.totalorder %s355, %s357
      %p361 = scmp.eq.s32.totalorder %s39, 0
      %p362 = por %p360, %p361
      %p363 = scmp.ne.s32.totalorder %s355, %s357
      %p364 = scmp.eq.s32.totalorder %s44, 1
      %p365 = por %p363, %p364
      %p366 = scmp.ne.s32.totalorder %s357, %s358
      %p367 = scmp.eq.s32.totalorder %s44, 0
      %p368 = por %p366, %p367
      %p369 = scmp.ne.s32.totalorder %s357, %s358
      %p370 = scmp.eq.s32.totalorder %s45, 1
      %p371 = por %p369, %p370
      %p373 = scmp.ne.s32.totalorder %s358, %s372
      %p374 = scmp.eq.s32.totalorder %s45, 0
      %p375 = por %p373, %p374
      %s377 = sadd.s32 %s376, 1
      %p380 = scmp.eq.s32.totalorder %s39, 1
      %p381 = scmp.ne.s32.totalorder %s376, %s378
      %p382 = scmp.eq.s32.totalorder %s39, 0
      %p383 = por %p381, %p382
      %p384 = scmp.ne.s32.totalorder %s376, %s378
      %p385 = scmp.eq.s32.totalorder %s44, 1
      %p386 = por %p384, %p385
      %p387 = scmp.ne.s32.totalorder %s378, %s379
      %p388 = scmp.eq.s32.totalorder %s44, 0
      %p389 = por %p387, %p388
      %p390 = scmp.ne.s32.totalorder %s378, %s379
      %p391 = scmp.eq.s32.totalorder %s45, 1
      %p392 = por %p390, %p391
      %p394 = scmp.ne.s32.totalorder %s379, %s393
      %p395 = scmp.eq.s32.totalorder %s45, 0
      %p396 = por %p394, %p395
      %s398 = sadd.s32 %s397, 1
      %p401 = scmp.eq.s32.totalorder %s39, 1
      %p402 = scmp.ne.s32.totalorder %s397, %s399
      %p403 = scmp.eq.s32.totalorder %s39, 0
      %p404 = por %p402, %p403
      %p405 = scmp.ne.s32.totalorder %s397, %s399
      %p406 = scmp.eq.s32.totalorder %s44, 1
      %p407 = por %p405, %p406
      %p408 = scmp.ne.s32.totalorder %s399, %s400
      %p409 = scmp.eq.s32.totalorder %s44, 0
      %p410 = por %p408, %p409
      %p411 = scmp.ne.s32.totalorder %s399, %s400
      %p412 = scmp.eq.s32.totalorder %s45, 1
      %p413 = por %p411, %p412
      %p415 = scmp.ne.s32.totalorder %s400, %s414
      %p416 = scmp.eq.s32.totalorder %s45, 0
      %p417 = por %p415, %p416
      %s419 = sadd.s32 %s418, 1
      %p422 = scmp.eq.s32.totalorder %s39, 1
      %p423 = scmp.ne.s32.totalorder %s418, %s420
      %p424 = scmp.eq.s32.totalorder %s39, 0
      %p425 = por %p423, %p424
      %p426 = scmp.ne.s32.totalorder %s418, %s420
      %p427 = scmp.eq.s32.totalorder %s44, 1
      %p428 = por %p426, %p427
      %p429 = scmp.ne.s32.totalorder %s420, %s421
      %p430 = scmp.eq.s32.totalorder %s44, 0
      %p431 = por %p429, %p430
      %p432 = scmp.ne.s32.totalorder %s420, %s421
      %p433 = scmp.eq.s32.totalorder %s45, 1
      %p434 = por %p432, %p433
      %p436 = scmp.ne.s32.totalorder %s421, %s435
      %p437 = scmp.eq.s32.totalorder %s45, 0
      %p438 = por %p436, %p437
      %s440 = sadd.s32 %s439, 1
      %p443 = scmp.eq.s32.totalorder %s39, 1
      %p444 = scmp.ne.s32.totalorder %s439, %s441
      %p445 = scmp.eq.s32.totalorder %s39, 0
      %p446 = por %p444, %p445
      %p447 = scmp.ne.s32.totalorder %s439, %s441
      %p448 = scmp.eq.s32.totalorder %s44, 1
      %p449 = por %p447, %p448
      %p450 = scmp.ne.s32.totalorder %s441, %s442
      %p451 = scmp.eq.s32.totalorder %s44, 0
      %p452 = por %p450, %p451
      %p453 = scmp.ne.s32.totalorder %s441, %s442
      %p454 = scmp.eq.s32.totalorder %s45, 1
      %p455 = por %p453, %p454
      %p457 = scmp.ne.s32.totalorder %s442, %s456
      %p458 = scmp.eq.s32.totalorder %s45, 0
      %p459 = por %p457, %p458
      %s461 = sadd.s32 %s460, 1
      %p464 = scmp.eq.s32.totalorder %s39, 1
      %p465 = scmp.ne.s32.totalorder %s460, %s462
      %p466 = scmp.eq.s32.totalorder %s39, 0
      %p467 = por %p465, %p466
      %p468 = scmp.ne.s32.totalorder %s460, %s462
      %p469 = scmp.eq.s32.totalorder %s44, 1
      %p470 = por %p468, %p469
      %p471 = scmp.ne.s32.totalorder %s462, %s463
      %p472 = scmp.eq.s32.totalorder %s44, 0
      %p473 = por %p471, %p472
      %p474 = scmp.ne.s32.totalorder %s462, %s463
      %p475 = scmp.eq.s32.totalorder %s45, 1
      %p476 = por %p474, %p475
      %p478 = scmp.ne.s32.totalorder %s463, %s477
      %p479 = scmp.eq.s32.totalorder %s45, 0
      %p480 = por %p478, %p479
      %s482 = sadd.s32 %s481, 1
      %p485 = scmp.eq.s32.totalorder %s39, 1
      %p486 = scmp.ne.s32.totalorder %s481, %s483
      %p487 = scmp.eq.s32.totalorder %s39, 0
      %p488 = por %p486, %p487
      %p489 = scmp.ne.s32.totalorder %s481, %s483
      %p490 = scmp.eq.s32.totalorder %s44, 1
      %p491 = por %p489, %p490
      %p492 = scmp.ne.s32.totalorder %s483, %s484
      %p493 = scmp.eq.s32.totalorder %s44, 0
      %p494 = por %p492, %p493
      %p495 = scmp.ne.s32.totalorder %s483, %s484
      %p496 = scmp.eq.s32.totalorder %s45, 1
      %p497 = por %p495, %p496
      %p499 = scmp.ne.s32.totalorder %s484, %s498
      %p500 = scmp.eq.s32.totalorder %s45, 0
      %p501 = por %p499, %p500
      %s503 = sadd.s32 %s502, 1
      %p506 = scmp.eq.s32.totalorder %s39, 1
      %p507 = scmp.ne.s32.totalorder %s502, %s504
      %p508 = scmp.eq.s32.totalorder %s39, 0
      %p509 = por %p507, %p508
      %p510 = scmp.ne.s32.totalorder %s502, %s504
      %p511 = scmp.eq.s32.totalorder %s44, 1
      %p512 = por %p510, %p511
      %p513 = scmp.ne.s32.totalorder %s504, %s505
      %p514 = scmp.eq.s32.totalorder %s44, 0
      %p515 = por %p513, %p514
      %p516 = scmp.ne.s32.totalorder %s504, %s505
      %p517 = scmp.eq.s32.totalorder %s45, 1
      %p518 = por %p516, %p517
      %p520 = scmp.ne.s32.totalorder %s505, %s519
      %p521 = scmp.eq.s32.totalorder %s45, 0
      %p522 = por %p520, %p521
      %s524 = sadd.s32 %s523, 1
      %p527 = scmp.eq.s32.totalorder %s39, 1
      %p528 = scmp.ne.s32.totalorder %s523, %s525
      %p529 = scmp.eq.s32.totalorder %s39, 0
      %p530 = por %p528, %p529
      %p531 = scmp.ne.s32.totalorder %s523, %s525
      %p532 = scmp.eq.s32.totalorder %s44, 1
      %p533 = por %p531, %p532
      %p534 = scmp.ne.s32.totalorder %s525, %s526
      %p535 = scmp.eq.s32.totalorder %s44, 0
      %p536 = por %p534, %p535
      %p537 = scmp.ne.s32.totalorder %s525, %s526
      %p538 = scmp.eq.s32.totalorder %s45, 1
      %p539 = por %p537, %p538
      %p541 = scmp.ne.s32.totalorder %s526, %s540
      %p542 = scmp.eq.s32.totalorder %s45, 0
      %p543 = por %p541, %p542
      %s545 = sadd.s32 %s544, 1
      %p548 = scmp.eq.s32.totalorder %s39, 1
      %p549 = scmp.ne.s32.totalorder %s544, %s546
      %p550 = scmp.eq.s32.totalorder %s39, 0
      %p551 = por %p549, %p550
      %p552 = scmp.ne.s32.totalorder %s544, %s546
      %p553 = scmp.eq.s32.totalorder %s44, 1
      %p554 = por %p552, %p553
      %p555 = scmp.ne.s32.totalorder %s546, %s547
      %p556 = scmp.eq.s32.totalorder %s44, 0
      %p557 = por %p555, %p556
      %p558 = scmp.ne.s32.totalorder %s546, %s547
      %p559 = scmp.eq.s32.totalorder %s45, 1
      %p560 = por %p558, %p559
      %p562 = scmp.ne.s32.totalorder %s547, %s561
      %p563 = scmp.eq.s32.totalorder %s45, 0
      %p564 = por %p562, %p563
      %s566 = sadd.s32 %s565, 1
      %p569 = scmp.eq.s32.totalorder %s39, 1
      %p570 = scmp.ne.s32.totalorder %s565, %s567
      %p571 = scmp.eq.s32.totalorder %s39, 0
      %p572 = por %p570, %p571
      %p573 = scmp.ne.s32.totalorder %s565, %s567
      %p574 = scmp.eq.s32.totalorder %s44, 1
      %p575 = por %p573, %p574
      %p576 = scmp.ne.s32.totalorder %s567, %s568
      %p577 = scmp.eq.s32.totalorder %s44, 0
      %p578 = por %p576, %p577
      %p579 = scmp.ne.s32.totalorder %s567, %s568
      %p580 = scmp.eq.s32.totalorder %s45, 1
      %p581 = por %p579, %p580
      %p583 = scmp.ne.s32.totalorder %s568, %s582
      %p584 = scmp.eq.s32.totalorder %s45, 0
      %p585 = por %p583, %p584
      %s586 = ssub.s32 %s39, %s46
      %p587 = scmp.eq.s32.totalorder %s586, 0
      %s589 = sadd.s32 %s588, 1
      %s590 = scalar_select %p587, %s588, %s589
      %p593 = pneg %p587
      %p594 = scmp.eq.s32.totalorder %s39, 1
      %p595 = por %p593, %p594
      %p596 = scmp.ne.s32.totalorder %s588, %s591
      %p597 = scmp.eq.s32.totalorder %s39, 0
      %p598 = por %p596, %p597
      %p599 = scmp.ne.s32.totalorder %s588, %s591
      %p600 = scmp.eq.s32.totalorder %s44, 1
      %p601 = por %p599, %p600
      %p602 = scmp.ne.s32.totalorder %s591, %s592
      %p603 = scmp.eq.s32.totalorder %s44, 0
      %p604 = por %p602, %p603
      %p605 = scmp.ne.s32.totalorder %s591, %s592
      %p606 = scmp.eq.s32.totalorder %s45, 1
      %p607 = por %p605, %p606
      %p609 = scmp.ne.s32.totalorder %s592, %s608
      %p610 = scmp.eq.s32.totalorder %s45, 0
      %p611 = por %p609, %p610
      %s612 = ssub.s32 %s39, %s46
      %p613 = scmp.eq.s32.totalorder %s612, 0
      %s615 = sadd.s32 %s614, 1
      %s616 = scalar_select %p613, %s614, %s615
      %p619 = pneg %p613
      %p620 = scmp.eq.s32.totalorder %s39, 1
      %p621 = por %p619, %p620
      %p622 = scmp.ne.s32.totalorder %s614, %s617
      %p623 = scmp.eq.s32.totalorder %s39, 0
      %p624 = por %p622, %p623
      %p625 = scmp.ne.s32.totalorder %s614, %s617
      %p626 = scmp.eq.s32.totalorder %s44, 1
      %p627 = por %p625, %p626
      %p628 = scmp.ne.s32.totalorder %s617, %s618
      %p629 = scmp.eq.s32.totalorder %s44, 0
      %p630 = por %p628, %p629
      %p631 = scmp.ne.s32.totalorder %s617, %s618
      %p632 = scmp.eq.s32.totalorder %s45, 1
      %p633 = por %p631, %p632
      %p635 = scmp.ne.s32.totalorder %s618, %s634
      %p636 = scmp.eq.s32.totalorder %s45, 0
      %p637 = por %p635, %p636
      %p638 = scmp.le.s32.totalorder 1, %s39
      %p639 = scmp.lt.s32.totalorder %s39, 3
      %p640 = pnand %p638, %p639
      %p641 = pneg %p640
      // Predicated region
      $region9: #{_device_forward.3} parent=5 // pred_check
        _
      $region10: #{_device_forward.3} parent=5 // pred_check_branch
        %643 = sbr.rel (%p640) target = $region12
      $region11: #{_device_forward.3} parent=5 // pred_region
        %s644 = ssub.s32 %s39, 1
        // Predicated region
        $region13: #{_device_forward.3} parent=11 // pred_check
          %p645 = pneg %p242
        $region14: #{_device_forward.3} parent=11 // pred_check_branch
          %647 = sbr.rel (%p645) target = $region16
        $region15: #{_device_forward.3} parent=11 // pred_region
          _
        $region16: #{_device_forward.3} parent=11 // pred_fallthru
          _
        // Predicated region
        $region17: #{_device_forward.3} parent=11 // pred_check
          %p648 = pneg %p263
        $region18: #{_device_forward.3} parent=11 // pred_check_branch
          %650 = sbr.rel (%p648) target = $region20
        $region19: #{_device_forward.3} parent=11 // pred_region
          _
        $region20: #{_device_forward.3} parent=11 // pred_fallthru
          _
        // Predicated region
        $region21: #{_device_forward.3} parent=11 // pred_check
          %p651 = pneg %p284
        $region22: #{_device_forward.3} parent=11 // pred_check_branch
          %653 = sbr.rel (%p651) target = $region24
        $region23: #{_device_forward.3} parent=11 // pred_region
          _
        $region24: #{_device_forward.3} parent=11 // pred_fallthru
          _
        // Predicated region
        $region25: #{_device_forward.3} parent=11 // pred_check
          %p654 = pneg %p305
        $region26: #{_device_forward.3} parent=11 // pred_check_branch
          %656 = sbr.rel (%p654) target = $region28
        $region27: #{_device_forward.3} parent=11 // pred_region
          _
        $region28: #{_device_forward.3} parent=11 // pred_fallthru
          _
        // Predicated region
        $region29: #{_device_forward.3} parent=11 // pred_check
          %p657 = pneg %p326
        $region30: #{_device_forward.3} parent=11 // pred_check_branch
          %659 = sbr.rel (%p657) target = $region32
        $region31: #{_device_forward.3} parent=11 // pred_region
          _
        $region32: #{_device_forward.3} parent=11 // pred_fallthru
          _
        // Predicated region
        $region33: #{_device_forward.3} parent=11 // pred_check
          %p660 = pneg %p347
        $region34: #{_device_forward.3} parent=11 // pred_check_branch
          %662 = sbr.rel (%p660) target = $region36
        $region35: #{_device_forward.3} parent=11 // pred_region
          _
        $region36: #{_device_forward.3} parent=11 // pred_fallthru
          _
        // Predicated region
        $region37: #{_device_forward.3} parent=11 // pred_check
          %p663 = pneg %p368
        $region38: #{_device_forward.3} parent=11 // pred_check_branch
          %665 = sbr.rel (%p663) target = $region40
        $region39: #{_device_forward.3} parent=11 // pred_region
          _
        $region40: #{_device_forward.3} parent=11 // pred_fallthru
          _
        // Predicated region
        $region41: #{_device_forward.3} parent=11 // pred_check
          %p666 = pneg %p389
        $region42: #{_device_forward.3} parent=11 // pred_check_branch
          %668 = sbr.rel (%p666) target = $region44
        $region43: #{_device_forward.3} parent=11 // pred_region
          _
        $region44: #{_device_forward.3} parent=11 // pred_fallthru
          _
        // Predicated region
        $region45: #{_device_forward.3} parent=11 // pred_check
          %p669 = pneg %p410
        $region46: #{_device_forward.3} parent=11 // pred_check_branch
          %671 = sbr.rel (%p669) target = $region48
        $region47: #{_device_forward.3} parent=11 // pred_region
          _
        $region48: #{_device_forward.3} parent=11 // pred_fallthru
          _
        // Predicated region
        $region49: #{_device_forward.3} parent=11 // pred_check
          %p672 = pneg %p431
        $region50: #{_device_forward.3} parent=11 // pred_check_branch
          %674 = sbr.rel (%p672) target = $region52
        $region51: #{_device_forward.3} parent=11 // pred_region
          _
        $region52: #{_device_forward.3} parent=11 // pred_fallthru
          _
        // Predicated region
        $region53: #{_device_forward.3} parent=11 // pred_check
          %p675 = pneg %p452
        $region54: #{_device_forward.3} parent=11 // pred_check_branch
          %677 = sbr.rel (%p675) target = $region56
        $region55: #{_device_forward.3} parent=11 // pred_region
          _
        $region56: #{_device_forward.3} parent=11 // pred_fallthru
          _
        // Predicated region
        $region57: #{_device_forward.3} parent=11 // pred_check
          %p678 = pneg %p473
        $region58: #{_device_forward.3} parent=11 // pred_check_branch
          %680 = sbr.rel (%p678) target = $region60
        $region59: #{_device_forward.3} parent=11 // pred_region
          _
        $region60: #{_device_forward.3} parent=11 // pred_fallthru
          _
        // Predicated region
        $region61: #{_device_forward.3} parent=11 // pred_check
          %p681 = pneg %p494
        $region62: #{_device_forward.3} parent=11 // pred_check_branch
          %683 = sbr.rel (%p681) target = $region64
        $region63: #{_device_forward.3} parent=11 // pred_region
          _
        $region64: #{_device_forward.3} parent=11 // pred_fallthru
          _
        // Predicated region
        $region65: #{_device_forward.3} parent=11 // pred_check
          %p684 = pneg %p515
        $region66: #{_device_forward.3} parent=11 // pred_check_branch
          %686 = sbr.rel (%p684) target = $region68
        $region67: #{_device_forward.3} parent=11 // pred_region
          _
        $region68: #{_device_forward.3} parent=11 // pred_fallthru
          _
        // Predicated region
        $region69: #{_device_forward.3} parent=11 // pred_check
          %p687 = pneg %p536
        $region70: #{_device_forward.3} parent=11 // pred_check_branch
          %689 = sbr.rel (%p687) target = $region72
        $region71: #{_device_forward.3} parent=11 // pred_region
          _
        $region72: #{_device_forward.3} parent=11 // pred_fallthru
          _
        // Predicated region
        $region73: #{_device_forward.3} parent=11 // pred_check
          %p690 = pneg %p557
        $region74: #{_device_forward.3} parent=11 // pred_check_branch
          %692 = sbr.rel (%p690) target = $region76
        $region75: #{_device_forward.3} parent=11 // pred_region
          _
        $region76: #{_device_forward.3} parent=11 // pred_fallthru
          _
        // Predicated region
        $region77: #{_device_forward.3} parent=11 // pred_check
          %p693 = pneg %p578
        $region78: #{_device_forward.3} parent=11 // pred_check_branch
          %695 = sbr.rel (%p693) target = $region80
        $region79: #{_device_forward.3} parent=11 // pred_region
          _
        $region80: #{_device_forward.3} parent=11 // pred_fallthru
          _
      $region12: #{_device_forward.3} parent=5 // pred_fallthru
        _
      %p696 = scmp.lt.s32.totalorder %s39, 2
      // Predicated region
      $region81: #{_device_forward.3} parent=5 // pred_check
        %p697 = pneg %p696
      $region82: #{_device_forward.3} parent=5 // pred_check_branch
        %699 = sbr.rel (%p697) target = $region84
      $region83: #{_device_forward.3} parent=5 // pred_region
        // Predicated region
        $region85: #{_device_forward.3} parent=83 // pred_check
          %p700 = pneg %p59
        $region86: #{_device_forward.3} parent=83 // pred_check_branch
          %702 = sbr.rel (%p700) target = $region88
        $region87: #{_device_forward.3} parent=83 // pred_region
          %p703 = scmp.lt.s32.totalorder %s39, 1
          %s704 = scalar_select %p703, %s39, 1
          %s705 = smul.addr %s704, 8
          %s706 = scalar_lea.vmem %s0, %s705
        $region88: #{_device_forward.3} parent=83 // pred_fallthru
          _
        // Predicated region
        $region89: #{_device_forward.3} parent=83 // pred_check
          %p707 = pneg %p85
        $region90: #{_device_forward.3} parent=83 // pred_check_branch
          %709 = sbr.rel (%p707) target = $region92
        $region91: #{_device_forward.3} parent=83 // pred_region
          %p710 = scmp.lt.s32.totalorder %s39, 1
          %s711 = scalar_select %p710, %s39, 1
          %s712 = scalar_lea.vmem %s1, %s711
        $region92: #{_device_forward.3} parent=83 // pred_fallthru
          _
        // Predicated region
        $region93: #{_device_forward.3} parent=83 // pred_check
          %p713 = pneg %p111
        $region94: #{_device_forward.3} parent=83 // pred_check_branch
          %715 = sbr.rel (%p713) target = $region96
        $region95: #{_device_forward.3} parent=83 // pred_region
          %p716 = scmp.lt.s32.totalorder %s39, 1
          %s717 = scalar_select %p716, %s39, 1
          %s718 = scalar_lea.vmem %s2, %s717
        $region96: #{_device_forward.3} parent=83 // pred_fallthru
          _
        // Predicated region
        $region97: #{_device_forward.3} parent=83 // pred_check
          %p719 = pneg %p137
        $region98: #{_device_forward.3} parent=83 // pred_check_branch
          %721 = sbr.rel (%p719) target = $region100
        $region99: #{_device_forward.3} parent=83 // pred_region
          %p722 = scmp.lt.s32.totalorder %s39, 1
          %s723 = scalar_select %p722, %s39, 1
          %s724 = scalar_lea.vmem %s3, %s723
        $region100: #{_device_forward.3} parent=83 // pred_fallthru
          _
        // Predicated region
        $region101: #{_device_forward.3} parent=83 // pred_check
          %p725 = pneg %p163
        $region102: #{_device_forward.3} parent=83 // pred_check_branch
          %727 = sbr.rel (%p725) target = $region104
        $region103: #{_device_forward.3} parent=83 // pred_region
          %p728 = scmp.lt.s32.totalorder %s39, 1
          %s729 = scalar_select %p728, %s39, 1
          %s730 = smul.addr %s729, 6
          %s731 = smul.addr %s730, 8
          %s732 = scalar_lea.vmem %s4, %s731
        $region104: #{_device_forward.3} parent=83 // pred_fallthru
          _
        // Predicated region
        $region105: #{_device_forward.3} parent=83 // pred_check
          %p733 = pneg %p189
        $region106: #{_device_forward.3} parent=83 // pred_check_branch
          %735 = sbr.rel (%p733) target = $region108
        $region107: #{_device_forward.3} parent=83 // pred_region
          %p736 = scmp.lt.s32.totalorder %s39, 1
          %s737 = scalar_select %p736, %s39, 1
          %s738 = smul.addr %s737, 6
          %s739 = smul.addr %s738, 8
          %s740 = scalar_lea.vmem %s5, %s739
        $region108: #{_device_forward.3} parent=83 // pred_fallthru
          _
        // Predicated region
        $region109: #{_device_forward.3} parent=83 // pred_check
          %p741 = pneg %p215
        $region110: #{_device_forward.3} parent=83 // pred_check_branch
          %743 = sbr.rel (%p741) target = $region112
        $region111: #{_device_forward.3} parent=83 // pred_region
          %p744 = scmp.lt.s32.totalorder %s39, 1
          %s745 = scalar_select %p744, %s39, 1
          %s746 = smul.addr %s745, 6
          %s747 = smul.addr %s746, 8
          %s748 = scalar_lea.vmem %s6, %s747
        $region112: #{_device_forward.3} parent=83 // pred_fallthru
          _
      $region84: #{_device_forward.3} parent=5 // pred_fallthru
        _
      %p749 = scmp.le.s32.totalorder 1, %s39
      %p750 = scmp.lt.s32.totalorder %s39, 3
      %p751 = pnand %p749, %p750
      %p752 = pneg %p751
      // Predicated region
      $region113: #{_device_forward.3} parent=5 // pred_check
        _
      $region114: #{_device_forward.3} parent=5 // pred_check_branch
        %754 = sbr.rel (%p751) target = $region116
      $region115: #{_device_forward.3} parent=5 // pred_region
        %s755 = ssub.s32 %s39, 1
        %p756 = scmp.lt.s32.totalorder %s44, 1
        %s757 = scalar_select %p756, %s44, 1
        %s758 = smul.addr %s757, 8
        %s759 = scalar_lea.vmem %s0, %s758
        %p760 = pneg %p65
        %p761 = pneg %p62
        %p762 = scmp.lt.s32.totalorder %s44, 1
        %s763 = scalar_select %p762, %s44, 1
        %s764 = scalar_lea.vmem %s1, %s763
        %p765 = pneg %p91
        %p766 = pneg %p88
        %p767 = scmp.lt.s32.totalorder %s44, 1
        %s768 = scalar_select %p767, %s44, 1
        %s769 = scalar_lea.vmem %s2, %s768
        %p770 = pneg %p117
        %p771 = pneg %p114
        %p772 = scmp.lt.s32.totalorder %s44, 1
        %s773 = scalar_select %p772, %s44, 1
        %s774 = scalar_lea.vmem %s3, %s773
        %p775 = pneg %p143
        %p776 = pneg %p140
        %p777 = scmp.lt.s32.totalorder %s44, 1
        %s778 = scalar_select %p777, %s44, 1
        %s779 = smul.addr %s778, 6
        %s780 = smul.addr %s779, 8
        %s781 = scalar_lea.vmem %s4, %s780
        %p782 = pneg %p169
        %p783 = pneg %p166
        %p784 = scmp.lt.s32.totalorder %s44, 1
        %s785 = scalar_select %p784, %s44, 1
        %s786 = smul.addr %s785, 6
        %s787 = smul.addr %s786, 8
        %s788 = scalar_lea.vmem %s5, %s787
        %p789 = pneg %p195
        %p790 = pneg %p192
        %p791 = scmp.lt.s32.totalorder %s44, 1
        %s792 = scalar_select %p791, %s44, 1
        %s793 = smul.addr %s792, 6
        %s794 = smul.addr %s793, 8
        %s795 = scalar_lea.vmem %s6, %s794
        %p796 = pneg %p221
        %p797 = pneg %p218
        %p798 = pneg %p242
        %p799 = pneg %p239
        %p800 = pneg %p263
        %p801 = pneg %p260
        %p802 = pneg %p284
        %p803 = pneg %p281
        %p804 = pneg %p305
        %p805 = pneg %p302
        %p806 = pneg %p326
        %p807 = pneg %p323
        %p808 = pneg %p347
        %p809 = pneg %p344
        %p810 = pneg %p368
        %p811 = pneg %p365
        %p812 = pneg %p389
        %p813 = pneg %p386
        %p814 = pneg %p410
        %p815 = pneg %p407
        %p816 = pneg %p431
        %p817 = pneg %p428
        %p818 = pneg %p452
        %p819 = pneg %p449
        %p820 = pneg %p473
        %p821 = pneg %p470
        %p822 = pneg %p494
        %p823 = pneg %p491
        %p824 = pneg %p515
        %p825 = pneg %p512
        %p826 = pneg %p536
        %p827 = pneg %p533
        %p828 = pneg %p557
        %p829 = pneg %p554
        %p830 = pneg %p578
        %p831 = pneg %p575
        %p832 = pneg %p604
        %p833 = pneg %p601
        %p834 = scmp.lt.s32.totalorder %s44, 1
        %s835 = scalar_select %p834, %s44, 1
        %s836 = scalar_lea.vmem %s24, %s835
        %p837 = pneg %p630
        %p838 = pneg %p627
        %s839 = sand.u32 %s617, 1
        %s840 = scalar_lea.sflag [#allocation5], %s839
        %s841 = sand.u32 %s617, 1
        %s842 = smul.addr %s841, 48
        %s843 = scalar_lea.vmem [#allocation4], %s842
        %p844 = scmp.lt.s32.totalorder %s44, 1
        %s845 = scalar_select %p844, %s44, 1
        %s846 = smul.addr %s845, 8
        %s847 = scalar_lea.vmem %s0, %s846
        %p848 = scmp.lt.s32.totalorder %s44, 1
        %s849 = scalar_select %p848, %s44, 1
        %s850 = scalar_lea.vmem %s1, %s849
        %p851 = scmp.lt.s32.totalorder %s44, 1
        %s852 = scalar_select %p851, %s44, 1
        %s853 = scalar_lea.vmem %s2, %s852
        %p854 = scmp.lt.s32.totalorder %s44, 1
        %s855 = scalar_select %p854, %s44, 1
        %s856 = scalar_lea.vmem %s3, %s855
        %p857 = scmp.lt.s32.totalorder %s44, 1
        %s858 = scalar_select %p857, %s44, 1
        %s859 = smul.addr %s858, 6
        %s860 = smul.addr %s859, 8
        %s861 = scalar_lea.vmem %s4, %s860
        %p862 = scmp.lt.s32.totalorder %s44, 1
        %s863 = scalar_select %p862, %s44, 1
        %s864 = smul.addr %s863, 6
        %s865 = smul.addr %s864, 8
        %s866 = scalar_lea.vmem %s5, %s865
        %p867 = scmp.lt.s32.totalorder %s44, 1
        %s868 = scalar_select %p867, %s44, 1
        %s869 = smul.addr %s868, 6
        %s870 = smul.addr %s869, 8
        %s871 = scalar_lea.vmem %s6, %s870
        %p872 = scmp.lt.s32.totalorder %s44, 1
        %s873 = scalar_select %p872, %s44, 1
        %s874 = scalar_lea.vmem %s24, %s873
        %v875 = vld [vmem:[%s850] sm:$0x1]
        %v876 = vld [vmem:[%s847] sm:$0xff]
        %vm877 = vcmask 64512
        %v879 = vsel %vm877, %v875, 0
        %881 = vmatpush.msra.mxu0 0.0
        %882 = vmatpush.msra.mxu0 0.0
        %883 = vmatpush.msra.mxu0 0.0
        %884 = vmatpush.msra.mxu0 0.0
        %885 = vmatpush.msra.mxu0 0.0
        %886 = vmatpush.msra.mxu0 0.0
        %887 = vmatpush.msra.mxu0 0.0
        %888 = vmatpush.msra.mxu0 0.0
        %889 = vmatpush.msra.mxu0 0.0
        %890 = vmatpush.msra.mxu0 0.0
        %891 = vmatpush.msra.mxu0 0.0
        %892 = vmatpush.msra.mxu0 0.0
        %893 = vmatpush.msra.mxu0 0.0
        %894 = vmatpush.msra.mxu0 0.0
        %895 = vmatpush.msra.mxu0 0.0
        %896 = vmatpush.msra.mxu0 %v876
        %897 = vmatmul.f32.gmra.mxu0 %v879
        %v898 = vpop.f32.mrf.mxu0
        %v899 = vadd.f32 0.0, %v898
        %900 = vdwg.mxu0
        %vm901 = vcmask 57344
        %v902 = vsel %vm901, %v875, 0.0
        %903 = vadd.xlane.f32.xlu0 %v902
        %v904 = vpop.xlane.xlu0 %903
        %v905 = vmax.f32 %v904, 1.0
        %v906 = vrcp.pop %v905
        %v907 = vmul.f32 %v905, %v906
        %v908 = vsub.f32 1.0, %v907
        %v909 = vmul.f32 %v906, %v908
        %v910 = vadd.f32 %v906, %v909
        %vm911 = vweird.f32 %v905
        %vm912 = vweird.f32 %v906
        %vm913 = vmor %vm911, %vm912
        %v914 = vsel %vm913, %v906, %v910
        %v915 = vand.u32 2147483647, %v905
        %vm916 = vcmp.eq.f32.partialorder %v915, 8.507059e+37
        %v917 = vand.u32 %v905, 2147483648
        %v918 = vor.u32 1.1754944e-38, %v917
        %v919 = vsel %vm916, %v918, %v914
        %v920 = vmul.f32 %v899, %v919
        %v921 = vld [vmem:[%s7] sm:$0xf]
        %v922 = vld [vmem:[%s8] sm:$0x1]
        %vm923 = vcmask 31744
        %v925 = vsel %vm923, %v920, 0
        %vm927 = vcmask 1043456
        %v929 = vsel %vm927, %v921, 0
        %931 = vmatpush.msra.mxu0 0.0
        %932 = vmatpush.msra.mxu0 0.0
        %933 = vmatpush.msra.mxu0 0.0
        %934 = vmatpush.msra.mxu0 0.0
        %935 = vmatpush.msra.mxu0 0.0
        %936 = vmatpush.msra.mxu0 0.0
        %937 = vmatpush.msra.mxu0 0.0
        %938 = vmatpush.msra.mxu0 0.0
        %939 = vmatpush.msra.mxu0 0.0
        %940 = vmatpush.msra.mxu0 0.0
        %941 = vmatpush.msra.mxu0 0.0
        %942 = vmatpush.msra.mxu0 0.0
        %943 = vmatpush.msra.mxu0 0.0
        %944 = vmatpush.msra.mxu0 0.0
        %945 = vmatpush.msra.mxu0 0.0
        %946 = vmatpush.msra.mxu0 %v929
        %947 = vmatmul.f32.gmra.mxu0 %v925
        %v948 = vpop.f32.mrf.mxu0
        %v949 = vadd.f32 %v922, %v948
        %950 = vdwg.mxu0
        %v951 = vld [vmem:[%s9] sm:$0xf]
        %v952 = vld [vmem:[%s10] sm:$0x1]
        %v954 = vsel %vm927, %v951, 0
        %956 = vmatpush.msra.mxu0 0.0
        %957 = vmatpush.msra.mxu0 0.0
        %958 = vmatpush.msra.mxu0 0.0
        %959 = vmatpush.msra.mxu0 0.0
        %960 = vmatpush.msra.mxu0 0.0
        %961 = vmatpush.msra.mxu0 0.0
        %962 = vmatpush.msra.mxu0 0.0
        %963 = vmatpush.msra.mxu0 0.0
        %964 = vmatpush.msra.mxu0 0.0
        %965 = vmatpush.msra.mxu0 0.0
        %966 = vmatpush.msra.mxu0 0.0
        %967 = vmatpush.msra.mxu0 0.0
        %968 = vmatpush.msra.mxu0 0.0
        %969 = vmatpush.msra.mxu0 0.0
        %970 = vmatpush.msra.mxu0 0.0
        %971 = vmatpush.msra.mxu0 %v954
        %972 = vmatmul.f32.gmra.mxu0 %v925
        %v973 = vpop.f32.mrf.mxu0
        %v974 = vadd.f32 %v952, %v973
        %975 = vdwg.mxu0
        %v976 = vmax.f32 %v974, 0.0
        %vm977 = vcmp.ne.f32.partialorder %v974, %v974
        %v978 = vadd.f32 %v974, 0.0
        %v979 = vand.u32 2147483647, %v974
        %v980 = vsub.f32 0.0, %v979
        %v981 = vmul.f32 %v980, 1.442695
        %v982 = vpow.pop %v981
        %v983 = vadd.f32 %v982, 1.0
        %v984 = vlog2.pop %v983
        %v985 = vmul.f32 %v984, 0.6931472
        %v986 = vmul.f32 -0.5, %v982
        %v987 = vadd.f32 %v986, 1.0
        %v988 = vmul.f32 %v987, %v982
        %v989 = vand.u32 2147483647, %v982
        %vm990 = vcmp.lt.f32.partialorder %v989, 0.0004427343
        %v991 = vsel %vm990, %v988, %v985
        %v992 = vadd.f32 %v976, %v991
        %v993 = vsel %vm977, %v978, %v992
        %v994 = vld [vmem:[%s856] sm:$0x1]
        %v995 = vlog2.pop %v993
        %v996 = vmul.f32 %v995, 0.6931472
        %v997 = vsub.f32 0.0, %v996
        %v998 = vmul.f32 %v993, %v993
        %v999 = vmul.f32 %v949, %v949
        %v1000 = vadd.f32 %v998, %v999
        %v1001 = vmul.f32 %v1000, 0.5
        %v1002 = vadd.f32 %v997, %v1001
        %v1003 = vsub.f32 %v1002, 0.5
        %v1004 = vsel %vm901, %v1003, 0.0
        %1005 = vadd.xlane.f32.xlu0 %v1004
        %v1006 = vpop.xlane.xlu0 %1005
        %v1007 = vmul.f32 %v994, %v1006
        %v1008 = vadd.f32 %v1007, 0.0
        %s1009 = vtos %v1008
        %v1010 = vld [vmem:[%s853] sm:$0x1]
        %v1011 = vmul.f32 %v993, %v1010
        %v1012 = vadd.f32 %v949, %v1011
        %v1013 = vld [vmem:[%s11] sm:$0xff]
        %v1014 = vld [vmem:[%s13] sm:$0xff]
        %v1015 = vld [vmem:[%s13 + $0x8] sm:$0xff]
        %v1016 = vld [vmem:[%s13 + $0x10] sm:$0xff]
        %v1017 = vld [vmem:[%s13 + $0x18] sm:$0xff]
        %v1018 = vld [vmem:[%s12] sm:$0x1]
        %v1019 = vld [vmem:[%s14] sm:$0x1]
        %v1021 = vsel %vm877, %v1012, 0
        %1023 = vmatpush.msra.mxu0 0.0
        %1024 = vmatpush.msra.mxu0 0.0
        %1025 = vmatpush.msra.mxu0 0.0
        %1026 = vmatpush.msra.mxu0 0.0
        %1027 = vmatpush.msra.mxu0 0.0
        %1028 = vmatpush.msra.mxu0 0.0
        %1029 = vmatpush.msra.mxu0 0.0
        %1030 = vmatpush.msra.mxu0 0.0
        %1031 = vmatpush.msra.mxu0 0.0
        %1032 = vmatpush.msra.mxu0 0.0
        %1033 = vmatpush.msra.mxu0 0.0
        %1034 = vmatpush.msra.mxu0 0.0
        %1035 = vmatpush.msra.mxu0 0.0
        %1036 = vmatpush.msra.mxu0 0.0
        %1037 = vmatpush.msra.mxu0 0.0
        %1038 = vmatpush.msra.mxu0 %v1013
        %1039 = vmatmul.f32.gmra.mxu0 %v1021
        %v1040 = vpop.f32.mrf.mxu0
        %v1041 = vadd.f32 %v1018, %v1040
        %1042 = vdwg.mxu0
        %v1043 = vtanh.pop %v1041
        %vm1044 = vcmask 261120
        %v1046 = vsel %vm1044, %v1043, 0
        %1048 = vmatpush.msra.mxu0 0.0
        %1049 = vmatpush.msra.mxu0 0.0
        %1050 = vmatpush.msra.mxu0 0.0
        %1051 = vmatpush.msra.mxu0 0.0
        %1052 = vmatpush.msra.mxu0 0.0
        %1053 = vmatpush.msra.mxu0 0.0
        %1054 = vmatpush.msra.mxu0 0.0
        %1055 = vmatpush.msra.mxu0 0.0
        %1056 = vmatpush.msra.mxu0 0.0
        %1057 = vmatpush.msra.mxu0 0.0
        %1058 = vmatpush.msra.mxu0 0.0
        %1059 = vmatpush.msra.mxu0 0.0
        %1060 = vmatpush.msra.mxu0 %v1017
        %1061 = vmatpush.msra.mxu0 %v1016
        %1062 = vmatpush.msra.mxu0 %v1015
        %1063 = vmatpush.msra.mxu0 %v1014
        %1064 = vmatmul.f32.gmra.mxu0 %v1046
        %v1065 = vpop.f32.mrf.mxu0
        %v1066 = vadd.f32 %v1019, %v1065
        %1067 = vdwg.mxu0
        %v1068 = vmul.f32 %v1066, 0.26666668
        %v1069 = vadd.f32 %v1012, %v1068
        %v1071 = vsel %vm877, %v1069, 0
        %1073 = vmatpush.msra.mxu0 0.0
        %1074 = vmatpush.msra.mxu0 0.0
        %1075 = vmatpush.msra.mxu0 0.0
        %1076 = vmatpush.msra.mxu0 0.0
        %1077 = vmatpush.msra.mxu0 0.0
        %1078 = vmatpush.msra.mxu0 0.0
        %1079 = vmatpush.msra.mxu0 0.0
        %1080 = vmatpush.msra.mxu0 0.0
        %1081 = vmatpush.msra.mxu0 0.0
        %1082 = vmatpush.msra.mxu0 0.0
        %1083 = vmatpush.msra.mxu0 0.0
        %1084 = vmatpush.msra.mxu0 0.0
        %1085 = vmatpush.msra.mxu0 0.0
        %1086 = vmatpush.msra.mxu0 0.0
        %1087 = vmatpush.msra.mxu0 0.0
        %1088 = vmatpush.msra.mxu0 %v1013
        %1089 = vmatmul.f32.gmra.mxu0 %v1071
        %v1090 = vpop.f32.mrf.mxu0
        %v1091 = vadd.f32 %v1018, %v1090
        %1092 = vdwg.mxu0
        %v1093 = vtanh.pop %v1091
        %v1095 = vsel %vm1044, %v1093, 0
        %1097 = vmatpush.msra.mxu0 0.0
        %1098 = vmatpush.msra.mxu0 0.0
        %1099 = vmatpush.msra.mxu0 0.0
        %1100 = vmatpush.msra.mxu0 0.0
        %1101 = vmatpush.msra.mxu0 0.0
        %1102 = vmatpush.msra.mxu0 0.0
        %1103 = vmatpush.msra.mxu0 0.0
        %1104 = vmatpush.msra.mxu0 0.0
        %1105 = vmatpush.msra.mxu0 0.0
        %1106 = vmatpush.msra.mxu0 0.0
        %1107 = vmatpush.msra.mxu0 0.0
        %1108 = vmatpush.msra.mxu0 0.0
        %1109 = vmatpush.msra.mxu0 %v1017
        %1110 = vmatpush.msra.mxu0 %v1016
        %1111 = vmatpush.msra.mxu0 %v1015
        %1112 = vmatpush.msra.mxu0 %v1014
        %1113 = vmatmul.f32.gmra.mxu0 %v1095
        %v1114 = vpop.f32.mrf.mxu0
        %v1115 = vadd.f32 %v1019, %v1114
        %1116 = vdwg.mxu0
        %v1117 = vmul.f32 %v1115, 0.26666668
        %v1118 = vadd.f32 %v1012, %v1117
        %v1120 = vsel %vm877, %v1118, 0
        %1122 = vmatpush.msra.mxu0 0.0
        %1123 = vmatpush.msra.mxu0 0.0
        %1124 = vmatpush.msra.mxu0 0.0
        %1125 = vmatpush.msra.mxu0 0.0
        %1126 = vmatpush.msra.mxu0 0.0
        %1127 = vmatpush.msra.mxu0 0.0
        %1128 = vmatpush.msra.mxu0 0.0
        %1129 = vmatpush.msra.mxu0 0.0
        %1130 = vmatpush.msra.mxu0 0.0
        %1131 = vmatpush.msra.mxu0 0.0
        %1132 = vmatpush.msra.mxu0 0.0
        %1133 = vmatpush.msra.mxu0 0.0
        %1134 = vmatpush.msra.mxu0 0.0
        %1135 = vmatpush.msra.mxu0 0.0
        %1136 = vmatpush.msra.mxu0 0.0
        %1137 = vmatpush.msra.mxu0 %v1013
        %1138 = vmatmul.f32.gmra.mxu0 %v1120
        %v1139 = vpop.f32.mrf.mxu0
        %v1140 = vadd.f32 %v1018, %v1139
        %1141 = vdwg.mxu0
        %v1142 = vtanh.pop %v1140
        %v1144 = vsel %vm1044, %v1142, 0
        %1146 = vmatpush.msra.mxu0 0.0
        %1147 = vmatpush.msra.mxu0 0.0
        %1148 = vmatpush.msra.mxu0 0.0
        %1149 = vmatpush.msra.mxu0 0.0
        %1150 = vmatpush.msra.mxu0 0.0
        %1151 = vmatpush.msra.mxu0 0.0
        %1152 = vmatpush.msra.mxu0 0.0
        %1153 = vmatpush.msra.mxu0 0.0
        %1154 = vmatpush.msra.mxu0 0.0
        %1155 = vmatpush.msra.mxu0 0.0
        %1156 = vmatpush.msra.mxu0 0.0
        %1157 = vmatpush.msra.mxu0 0.0
        %1158 = vmatpush.msra.mxu0 %v1017
        %1159 = vmatpush.msra.mxu0 %v1016
        %1160 = vmatpush.msra.mxu0 %v1015
        %1161 = vmatpush.msra.mxu0 %v1014
        %1162 = vmatmul.f32.gmra.mxu0 %v1144
        %v1163 = vpop.f32.mrf.mxu0
        %v1164 = vadd.f32 %v1019, %v1163
        %1165 = vdwg.mxu0
        %v1166 = vmul.f32 %v1164, 0.53333336
        %v1167 = vadd.f32 %v1012, %v1166
        %v1169 = vsel %vm877, %v1167, 0
        %1171 = vmatpush.msra.mxu0 0.0
        %1172 = vmatpush.msra.mxu0 0.0
        %1173 = vmatpush.msra.mxu0 0.0
        %1174 = vmatpush.msra.mxu0 0.0
        %1175 = vmatpush.msra.mxu0 0.0
        %1176 = vmatpush.msra.mxu0 0.0
        %1177 = vmatpush.msra.mxu0 0.0
        %1178 = vmatpush.msra.mxu0 0.0
        %1179 = vmatpush.msra.mxu0 0.0
        %1180 = vmatpush.msra.mxu0 0.0
        %1181 = vmatpush.msra.mxu0 0.0
        %1182 = vmatpush.msra.mxu0 0.0
        %1183 = vmatpush.msra.mxu0 0.0
        %1184 = vmatpush.msra.mxu0 0.0
        %1185 = vmatpush.msra.mxu0 0.0
        %1186 = vmatpush.msra.mxu0 %v1013
        %1187 = vmatmul.f32.gmra.mxu0 %v1169
        %v1188 = vpop.f32.mrf.mxu0
        %v1189 = vadd.f32 %v1018, %v1188
        %1190 = vdwg.mxu0
        %v1191 = vtanh.pop %v1189
        %v1193 = vsel %vm1044, %v1191, 0
        %1195 = vmatpush.msra.mxu0 0.0
        %1196 = vmatpush.msra.mxu0 0.0
        %1197 = vmatpush.msra.mxu0 0.0
        %1198 = vmatpush.msra.mxu0 0.0
        %1199 = vmatpush.msra.mxu0 0.0
        %1200 = vmatpush.msra.mxu0 0.0
        %1201 = vmatpush.msra.mxu0 0.0
        %1202 = vmatpush.msra.mxu0 0.0
        %1203 = vmatpush.msra.mxu0 0.0
        %1204 = vmatpush.msra.mxu0 0.0
        %1205 = vmatpush.msra.mxu0 0.0
        %1206 = vmatpush.msra.mxu0 0.0
        %1207 = vmatpush.msra.mxu0 %v1017
        %1208 = vmatpush.msra.mxu0 %v1016
        %1209 = vmatpush.msra.mxu0 %v1015
        %1210 = vmatpush.msra.mxu0 %v1014
        %1211 = vmatmul.f32.gmra.mxu0 %v1193
        %v1212 = vpop.f32.mrf.mxu0
        %v1213 = vadd.f32 %v1019, %v1212
        %1214 = vdwg.mxu0
        %v1215 = vmul.f32 %v1115, 2.0
        %v1216 = vadd.f32 %v1066, %v1215
        %v1217 = vmul.f32 %v1164, 2.0
        %v1218 = vadd.f32 %v1216, %v1217
        %v1219 = vadd.f32 %v1218, %v1213
        %v1220 = vmul.f32 %v1219, 0.08888889
        %v1221 = vadd.f32 %v1012, %v1220
        %v1223 = vsel %vm877, %v1221, 0
        %1225 = vmatpush.msra.mxu0 0.0
        %1226 = vmatpush.msra.mxu0 0.0
        %1227 = vmatpush.msra.mxu0 0.0
        %1228 = vmatpush.msra.mxu0 0.0
        %1229 = vmatpush.msra.mxu0 0.0
        %1230 = vmatpush.msra.mxu0 0.0
        %1231 = vmatpush.msra.mxu0 0.0
        %1232 = vmatpush.msra.mxu0 0.0
        %1233 = vmatpush.msra.mxu0 0.0
        %1234 = vmatpush.msra.mxu0 0.0
        %1235 = vmatpush.msra.mxu0 0.0
        %1236 = vmatpush.msra.mxu0 0.0
        %1237 = vmatpush.msra.mxu0 0.0
        %1238 = vmatpush.msra.mxu0 0.0
        %1239 = vmatpush.msra.mxu0 0.0
        %1240 = vmatpush.msra.mxu0 %v1013
        %1241 = vmatmul.f32.gmra.mxu0 %v1223
        %v1242 = vpop.f32.mrf.mxu0
        %v1243 = vadd.f32 %v1018, %v1242
        %1244 = vdwg.mxu0
        %v1245 = vtanh.pop %v1243
        %v1247 = vsel %vm1044, %v1245, 0
        %1249 = vmatpush.msra.mxu0 0.0
        %1250 = vmatpush.msra.mxu0 0.0
        %1251 = vmatpush.msra.mxu0 0.0
        %1252 = vmatpush.msra.mxu0 0.0
        %1253 = vmatpush.msra.mxu0 0.0
        %1254 = vmatpush.msra.mxu0 0.0
        %1255 = vmatpush.msra.mxu0 0.0
        %1256 = vmatpush.msra.mxu0 0.0
        %1257 = vmatpush.msra.mxu0 0.0
        %1258 = vmatpush.msra.mxu0 0.0
        %1259 = vmatpush.msra.mxu0 0.0
        %1260 = vmatpush.msra.mxu0 0.0
        %1261 = vmatpush.msra.mxu0 %v1017
        %1262 = vmatpush.msra.mxu0 %v1016
        %1263 = vmatpush.msra.mxu0 %v1015
        %1264 = vmatpush.msra.mxu0 %v1014
        %1265 = vmatmul.f32.gmra.mxu0 %v1247
        %v1266 = vpop.f32.mrf.mxu0
        %v1267 = vadd.f32 %v1019, %v1266
        %1268 = vdwg.mxu0
        %v1269 = vmul.f32 %v1267, 0.26666668
        %v1270 = vadd.f32 %v1221, %v1269
        %v1272 = vsel %vm877, %v1270, 0
        %1274 = vmatpush.msra.mxu0 0.0
        %1275 = vmatpush.msra.mxu0 0.0
        %1276 = vmatpush.msra.mxu0 0.0
        %1277 = vmatpush.msra.mxu0 0.0
        %1278 = vmatpush.msra.mxu0 0.0
        %1279 = vmatpush.msra.mxu0 0.0
        %1280 = vmatpush.msra.mxu0 0.0
        %1281 = vmatpush.msra.mxu0 0.0
        %1282 = vmatpush.msra.mxu0 0.0
        %1283 = vmatpush.msra.mxu0 0.0
        %1284 = vmatpush.msra.mxu0 0.0
        %1285 = vmatpush.msra.mxu0 0.0
        %1286 = vmatpush.msra.mxu0 0.0
        %1287 = vmatpush.msra.mxu0 0.0
        %1288 = vmatpush.msra.mxu0 0.0
        %1289 = vmatpush.msra.mxu0 %v1013
        %1290 = vmatmul.f32.gmra.mxu0 %v1272
        %v1291 = vpop.f32.mrf.mxu0
        %v1292 = vadd.f32 %v1018, %v1291
        %1293 = vdwg.mxu0
        %v1294 = vtanh.pop %v1292
        %v1296 = vsel %vm1044, %v1294, 0
        %1298 = vmatpush.msra.mxu0 0.0
        %1299 = vmatpush.msra.mxu0 0.0
        %1300 = vmatpush.msra.mxu0 0.0
        %1301 = vmatpush.msra.mxu0 0.0
        %1302 = vmatpush.msra.mxu0 0.0
        %1303 = vmatpush.msra.mxu0 0.0
        %1304 = vmatpush.msra.mxu0 0.0
        %1305 = vmatpush.msra.mxu0 0.0
        %1306 = vmatpush.msra.mxu0 0.0
        %1307 = vmatpush.msra.mxu0 0.0
        %1308 = vmatpush.msra.mxu0 0.0
        %1309 = vmatpush.msra.mxu0 0.0
        %1310 = vmatpush.msra.mxu0 %v1017
        %1311 = vmatpush.msra.mxu0 %v1016
        %1312 = vmatpush.msra.mxu0 %v1015
        %1313 = vmatpush.msra.mxu0 %v1014
        %1314 = vmatmul.f32.gmra.mxu0 %v1296
        %v1315 = vpop.f32.mrf.mxu0
        %v1316 = vadd.f32 %v1019, %v1315
        %1317 = vdwg.mxu0
        %v1318 = vmul.f32 %v1316, 0.26666668
        %v1319 = vadd.f32 %v1221, %v1318
        %v1321 = vsel %vm877, %v1319, 0
        %1323 = vmatpush.msra.mxu0 0.0
        %1324 = vmatpush.msra.mxu0 0.0
        %1325 = vmatpush.msra.mxu0 0.0
        %1326 = vmatpush.msra.mxu0 0.0
        %1327 = vmatpush.msra.mxu0 0.0
        %1328 = vmatpush.msra.mxu0 0.0
        %1329 = vmatpush.msra.mxu0 0.0
        %1330 = vmatpush.msra.mxu0 0.0
        %1331 = vmatpush.msra.mxu0 0.0
        %1332 = vmatpush.msra.mxu0 0.0
        %1333 = vmatpush.msra.mxu0 0.0
        %1334 = vmatpush.msra.mxu0 0.0
        %1335 = vmatpush.msra.mxu0 0.0
        %1336 = vmatpush.msra.mxu0 0.0
        %1337 = vmatpush.msra.mxu0 0.0
        %1338 = vmatpush.msra.mxu0 %v1013
        %1339 = vmatmul.f32.gmra.mxu0 %v1321
        %v1340 = vpop.f32.mrf.mxu0
        %v1341 = vadd.f32 %v1018, %v1340
        %1342 = vdwg.mxu0
        %v1343 = vtanh.pop %v1341
        %v1345 = vsel %vm1044, %v1343, 0
        %1347 = vmatpush.msra.mxu0 0.0
        %1348 = vmatpush.msra.mxu0 0.0
        %1349 = vmatpush.msra.mxu0 0.0
        %1350 = vmatpush.msra.mxu0 0.0
        %1351 = vmatpush.msra.mxu0 0.0
        %1352 = vmatpush.msra.mxu0 0.0
        %1353 = vmatpush.msra.mxu0 0.0
        %1354 = vmatpush.msra.mxu0 0.0
        %1355 = vmatpush.msra.mxu0 0.0
        %1356 = vmatpush.msra.mxu0 0.0
        %1357 = vmatpush.msra.mxu0 0.0
        %1358 = vmatpush.msra.mxu0 0.0
        %1359 = vmatpush.msra.mxu0 %v1017
        %1360 = vmatpush.msra.mxu0 %v1016
        %1361 = vmatpush.msra.mxu0 %v1015
        %1362 = vmatpush.msra.mxu0 %v1014
        %1363 = vmatmul.f32.gmra.mxu0 %v1345
        %v1364 = vpop.f32.mrf.mxu0
        %v1365 = vadd.f32 %v1019, %v1364
        %1366 = vdwg.mxu0
        %v1367 = vmul.f32 %v1365, 0.53333336
        %v1368 = vadd.f32 %v1221, %v1367
        %v1370 = vsel %vm877, %v1368, 0
        %1372 = vmatpush.msra.mxu0 0.0
        %1373 = vmatpush.msra.mxu0 0.0
        %1374 = vmatpush.msra.mxu0 0.0
        %1375 = vmatpush.msra.mxu0 0.0
        %1376 = vmatpush.msra.mxu0 0.0
        %1377 = vmatpush.msra.mxu0 0.0
        %1378 = vmatpush.msra.mxu0 0.0
        %1379 = vmatpush.msra.mxu0 0.0
        %1380 = vmatpush.msra.mxu0 0.0
        %1381 = vmatpush.msra.mxu0 0.0
        %1382 = vmatpush.msra.mxu0 0.0
        %1383 = vmatpush.msra.mxu0 0.0
        %1384 = vmatpush.msra.mxu0 0.0
        %1385 = vmatpush.msra.mxu0 0.0
        %1386 = vmatpush.msra.mxu0 0.0
        %1387 = vmatpush.msra.mxu0 %v1013
        %1388 = vmatmul.f32.gmra.mxu0 %v1370
        %v1389 = vpop.f32.mrf.mxu0
        %v1390 = vadd.f32 %v1018, %v1389
        %1391 = vdwg.mxu0
        %v1392 = vtanh.pop %v1390
        %v1394 = vsel %vm1044, %v1392, 0
        %1396 = vmatpush.msra.mxu0 0.0
        %1397 = vmatpush.msra.mxu0 0.0
        %1398 = vmatpush.msra.mxu0 0.0
        %1399 = vmatpush.msra.mxu0 0.0
        %1400 = vmatpush.msra.mxu0 0.0
        %1401 = vmatpush.msra.mxu0 0.0
        %1402 = vmatpush.msra.mxu0 0.0
        %1403 = vmatpush.msra.mxu0 0.0
        %1404 = vmatpush.msra.mxu0 0.0
        %1405 = vmatpush.msra.mxu0 0.0
        %1406 = vmatpush.msra.mxu0 0.0
        %1407 = vmatpush.msra.mxu0 0.0
        %1408 = vmatpush.msra.mxu0 %v1017
        %1409 = vmatpush.msra.mxu0 %v1016
        %1410 = vmatpush.msra.mxu0 %v1015
        %1411 = vmatpush.msra.mxu0 %v1014
        %1412 = vmatmul.f32.gmra.mxu0 %v1394
        %v1413 = vpop.f32.mrf.mxu0
        %v1414 = vadd.f32 %v1019, %v1413
        %1415 = vdwg.mxu0
        %v1416 = vmul.f32 %v1316, 2.0
        %v1417 = vadd.f32 %v1267, %v1416
        %v1418 = vmul.f32 %v1365, 2.0
        %v1419 = vadd.f32 %v1417, %v1418
        %v1420 = vadd.f32 %v1419, %v1414
        %v1421 = vmul.f32 %v1420, 0.08888889
        %v1422 = vadd.f32 %v1221, %v1421
        %v1424 = vsel %vm877, %v1422, 0
        %1426 = vmatpush.msra.mxu0 0.0
        %1427 = vmatpush.msra.mxu0 0.0
        %1428 = vmatpush.msra.mxu0 0.0
        %1429 = vmatpush.msra.mxu0 0.0
        %1430 = vmatpush.msra.mxu0 0.0
        %1431 = vmatpush.msra.mxu0 0.0
        %1432 = vmatpush.msra.mxu0 0.0
        %1433 = vmatpush.msra.mxu0 0.0
        %1434 = vmatpush.msra.mxu0 0.0
        %1435 = vmatpush.msra.mxu0 0.0
        %1436 = vmatpush.msra.mxu0 0.0
        %1437 = vmatpush.msra.mxu0 0.0
        %1438 = vmatpush.msra.mxu0 0.0
        %1439 = vmatpush.msra.mxu0 0.0
        %1440 = vmatpush.msra.mxu0 0.0
        %1441 = vmatpush.msra.mxu0 %v1013
        %1442 = vmatmul.f32.gmra.mxu0 %v1424
        %v1443 = vpop.f32.mrf.mxu0
        %v1444 = vadd.f32 %v1018, %v1443
        %1445 = vdwg.mxu0
        %v1446 = vtanh.pop %v1444
        %v1448 = vsel %vm1044, %v1446, 0
        %1450 = vmatpush.msra.mxu0 0.0
        %1451 = vmatpush.msra.mxu0 0.0
        %1452 = vmatpush.msra.mxu0 0.0
        %1453 = vmatpush.msra.mxu0 0.0
        %1454 = vmatpush.msra.mxu0 0.0
        %1455 = vmatpush.msra.mxu0 0.0
        %1456 = vmatpush.msra.mxu0 0.0
        %1457 = vmatpush.msra.mxu0 0.0
        %1458 = vmatpush.msra.mxu0 0.0
        %1459 = vmatpush.msra.mxu0 0.0
        %1460 = vmatpush.msra.mxu0 0.0
        %1461 = vmatpush.msra.mxu0 0.0
        %1462 = vmatpush.msra.mxu0 %v1017
        %1463 = vmatpush.msra.mxu0 %v1016
        %1464 = vmatpush.msra.mxu0 %v1015
        %1465 = vmatpush.msra.mxu0 %v1014
        %1466 = vmatmul.f32.gmra.mxu0 %v1448
        %v1467 = vpop.f32.mrf.mxu0
        %v1468 = vadd.f32 %v1019, %v1467
        %1469 = vdwg.mxu0
        %v1470 = vmul.f32 %v1468, 0.26666668
        %v1471 = vadd.f32 %v1422, %v1470
        %v1473 = vsel %vm877, %v1471, 0
        %1475 = vmatpush.msra.mxu0 0.0
        %1476 = vmatpush.msra.mxu0 0.0
        %1477 = vmatpush.msra.mxu0 0.0
        %1478 = vmatpush.msra.mxu0 0.0
        %1479 = vmatpush.msra.mxu0 0.0
        %1480 = vmatpush.msra.mxu0 0.0
        %1481 = vmatpush.msra.mxu0 0.0
        %1482 = vmatpush.msra.mxu0 0.0
        %1483 = vmatpush.msra.mxu0 0.0
        %1484 = vmatpush.msra.mxu0 0.0
        %1485 = vmatpush.msra.mxu0 0.0
        %1486 = vmatpush.msra.mxu0 0.0
        %1487 = vmatpush.msra.mxu0 0.0
        %1488 = vmatpush.msra.mxu0 0.0
        %1489 = vmatpush.msra.mxu0 0.0
        %1490 = vmatpush.msra.mxu0 %v1013
        %1491 = vmatmul.f32.gmra.mxu0 %v1473
        %v1492 = vpop.f32.mrf.mxu0
        %v1493 = vadd.f32 %v1018, %v1492
        %1494 = vdwg.mxu0
        %v1495 = vtanh.pop %v1493
        %v1497 = vsel %vm1044, %v1495, 0
        %1499 = vmatpush.msra.mxu0 0.0
        %1500 = vmatpush.msra.mxu0 0.0
        %1501 = vmatpush.msra.mxu0 0.0
        %1502 = vmatpush.msra.mxu0 0.0
        %1503 = vmatpush.msra.mxu0 0.0
        %1504 = vmatpush.msra.mxu0 0.0
        %1505 = vmatpush.msra.mxu0 0.0
        %1506 = vmatpush.msra.mxu0 0.0
        %1507 = vmatpush.msra.mxu0 0.0
        %1508 = vmatpush.msra.mxu0 0.0
        %1509 = vmatpush.msra.mxu0 0.0
        %1510 = vmatpush.msra.mxu0 0.0
        %1511 = vmatpush.msra.mxu0 %v1017
        %1512 = vmatpush.msra.mxu0 %v1016
        %1513 = vmatpush.msra.mxu0 %v1015
        %1514 = vmatpush.msra.mxu0 %v1014
        %1515 = vmatmul.f32.gmra.mxu0 %v1497
        %v1516 = vpop.f32.mrf.mxu0
        %v1517 = vadd.f32 %v1019, %v1516
        %1518 = vdwg.mxu0
        %v1519 = vmul.f32 %v1517, 0.26666668
        %v1520 = vadd.f32 %v1422, %v1519
        %v1522 = vsel %vm877, %v1520, 0
        %1524 = vmatpush.msra.mxu0 0.0
        %1525 = vmatpush.msra.mxu0 0.0
        %1526 = vmatpush.msra.mxu0 0.0
        %1527 = vmatpush.msra.mxu0 0.0
        %1528 = vmatpush.msra.mxu0 0.0
        %1529 = vmatpush.msra.mxu0 0.0
        %1530 = vmatpush.msra.mxu0 0.0
        %1531 = vmatpush.msra.mxu0 0.0
        %1532 = vmatpush.msra.mxu0 0.0
        %1533 = vmatpush.msra.mxu0 0.0
        %1534 = vmatpush.msra.mxu0 0.0
        %1535 = vmatpush.msra.mxu0 0.0
        %1536 = vmatpush.msra.mxu0 0.0
        %1537 = vmatpush.msra.mxu0 0.0
        %1538 = vmatpush.msra.mxu0 0.0
        %1539 = vmatpush.msra.mxu0 %v1013
        %1540 = vmatmul.f32.gmra.mxu0 %v1522
        %v1541 = vpop.f32.mrf.mxu0
        %v1542 = vadd.f32 %v1018, %v1541
        %1543 = vdwg.mxu0
        %v1544 = vtanh.pop %v1542
        %v1546 = vsel %vm1044, %v1544, 0
        %1548 = vmatpush.msra.mxu0 0.0
        %1549 = vmatpush.msra.mxu0 0.0
        %1550 = vmatpush.msra.mxu0 0.0
        %1551 = vmatpush.msra.mxu0 0.0
        %1552 = vmatpush.msra.mxu0 0.0
        %1553 = vmatpush.msra.mxu0 0.0
        %1554 = vmatpush.msra.mxu0 0.0
        %1555 = vmatpush.msra.mxu0 0.0
        %1556 = vmatpush.msra.mxu0 0.0
        %1557 = vmatpush.msra.mxu0 0.0
        %1558 = vmatpush.msra.mxu0 0.0
        %1559 = vmatpush.msra.mxu0 0.0
        %1560 = vmatpush.msra.mxu0 %v1017
        %1561 = vmatpush.msra.mxu0 %v1016
        %1562 = vmatpush.msra.mxu0 %v1015
        %1563 = vmatpush.msra.mxu0 %v1014
        %1564 = vmatmul.f32.gmra.mxu0 %v1546
        %v1565 = vpop.f32.mrf.mxu0
        %v1566 = vadd.f32 %v1019, %v1565
        %1567 = vdwg.mxu0
        %v1568 = vmul.f32 %v1566, 0.53333336
        %v1569 = vadd.f32 %v1422, %v1568
        %v1571 = vsel %vm877, %v1569, 0
        %1573 = vmatpush.msra.mxu0 0.0
        %1574 = vmatpush.msra.mxu0 0.0
        %1575 = vmatpush.msra.mxu0 0.0
        %1576 = vmatpush.msra.mxu0 0.0
        %1577 = vmatpush.msra.mxu0 0.0
        %1578 = vmatpush.msra.mxu0 0.0
        %1579 = vmatpush.msra.mxu0 0.0
        %1580 = vmatpush.msra.mxu0 0.0
        %1581 = vmatpush.msra.mxu0 0.0
        %1582 = vmatpush.msra.mxu0 0.0
        %1583 = vmatpush.msra.mxu0 0.0
        %1584 = vmatpush.msra.mxu0 0.0
        %1585 = vmatpush.msra.mxu0 0.0
        %1586 = vmatpush.msra.mxu0 0.0
        %1587 = vmatpush.msra.mxu0 0.0
        %1588 = vmatpush.msra.mxu0 %v1013
        %1589 = vmatmul.f32.gmra.mxu0 %v1571
        %v1590 = vpop.f32.mrf.mxu0
        %v1591 = vadd.f32 %v1018, %v1590
        %1592 = vdwg.mxu0
        %v1593 = vtanh.pop %v1591
        %v1595 = vsel %vm1044, %v1593, 0
        %1597 = vmatpush.msra.mxu0 0.0
        %1598 = vmatpush.msra.mxu0 0.0
        %1599 = vmatpush.msra.mxu0 0.0
        %1600 = vmatpush.msra.mxu0 0.0
        %1601 = vmatpush.msra.mxu0 0.0
        %1602 = vmatpush.msra.mxu0 0.0
        %1603 = vmatpush.msra.mxu0 0.0
        %1604 = vmatpush.msra.mxu0 0.0
        %1605 = vmatpush.msra.mxu0 0.0
        %1606 = vmatpush.msra.mxu0 0.0
        %1607 = vmatpush.msra.mxu0 0.0
        %1608 = vmatpush.msra.mxu0 0.0
        %1609 = vmatpush.msra.mxu0 %v1017
        %1610 = vmatpush.msra.mxu0 %v1016
        %1611 = vmatpush.msra.mxu0 %v1015
        %1612 = vmatpush.msra.mxu0 %v1014
        %1613 = vmatmul.f32.gmra.mxu0 %v1595
        %v1614 = vpop.f32.mrf.mxu0
        %v1615 = vadd.f32 %v1019, %v1614
        %1616 = vdwg.mxu0
        %v1617 = vmul.f32 %v1517, 2.0
        %v1618 = vadd.f32 %v1468, %v1617
        %v1619 = vmul.f32 %v1566, 2.0
        %v1620 = vadd.f32 %v1618, %v1619
        %v1621 = vadd.f32 %v1620, %v1615
        %v1622 = vmul.f32 %v1621, 0.08888889
        %v1623 = vadd.f32 %v1422, %v1622
        %v1625 = vsel %vm877, %v1623, 0
        %1627 = vmatpush.msra.mxu0 0.0
        %1628 = vmatpush.msra.mxu0 0.0
        %1629 = vmatpush.msra.mxu0 0.0
        %1630 = vmatpush.msra.mxu0 0.0
        %1631 = vmatpush.msra.mxu0 0.0
        %1632 = vmatpush.msra.mxu0 0.0
        %1633 = vmatpush.msra.mxu0 0.0
        %1634 = vmatpush.msra.mxu0 0.0
        %1635 = vmatpush.msra.mxu0 0.0
        %1636 = vmatpush.msra.mxu0 0.0
        %1637 = vmatpush.msra.mxu0 0.0
        %1638 = vmatpush.msra.mxu0 0.0
        %1639 = vmatpush.msra.mxu0 0.0
        %1640 = vmatpush.msra.mxu0 0.0
        %1641 = vmatpush.msra.mxu0 0.0
        %1642 = vmatpush.msra.mxu0 %v1013
        %1643 = vmatmul.f32.gmra.mxu0 %v1625
        %v1644 = vpop.f32.mrf.mxu0
        %v1645 = vadd.f32 %v1018, %v1644
        %1646 = vdwg.mxu0
        %v1647 = vtanh.pop %v1645
        %v1649 = vsel %vm1044, %v1647, 0
        %1651 = vmatpush.msra.mxu0 0.0
        %1652 = vmatpush.msra.mxu0 0.0
        %1653 = vmatpush.msra.mxu0 0.0
        %1654 = vmatpush.msra.mxu0 0.0
        %1655 = vmatpush.msra.mxu0 0.0
        %1656 = vmatpush.msra.mxu0 0.0
        %1657 = vmatpush.msra.mxu0 0.0
        %1658 = vmatpush.msra.mxu0 0.0
        %1659 = vmatpush.msra.mxu0 0.0
        %1660 = vmatpush.msra.mxu0 0.0
        %1661 = vmatpush.msra.mxu0 0.0
        %1662 = vmatpush.msra.mxu0 0.0
        %1663 = vmatpush.msra.mxu0 %v1017
        %1664 = vmatpush.msra.mxu0 %v1016
        %1665 = vmatpush.msra.mxu0 %v1015
        %1666 = vmatpush.msra.mxu0 %v1014
        %1667 = vmatmul.f32.gmra.mxu0 %v1649
        %v1668 = vpop.f32.mrf.mxu0
        %v1669 = vadd.f32 %v1019, %v1668
        %1670 = vdwg.mxu0
        %v1671 = vmul.f32 %v1669, 0.26666668
        %v1672 = vadd.f32 %v1623, %v1671
        %v1674 = vsel %vm877, %v1672, 0
        %1676 = vmatpush.msra.mxu0 0.0
        %1677 = vmatpush.msra.mxu0 0.0
        %1678 = vmatpush.msra.mxu0 0.0
        %1679 = vmatpush.msra.mxu0 0.0
        %1680 = vmatpush.msra.mxu0 0.0
        %1681 = vmatpush.msra.mxu0 0.0
        %1682 = vmatpush.msra.mxu0 0.0
        %1683 = vmatpush.msra.mxu0 0.0
        %1684 = vmatpush.msra.mxu0 0.0
        %1685 = vmatpush.msra.mxu0 0.0
        %1686 = vmatpush.msra.mxu0 0.0
        %1687 = vmatpush.msra.mxu0 0.0
        %1688 = vmatpush.msra.mxu0 0.0
        %1689 = vmatpush.msra.mxu0 0.0
        %1690 = vmatpush.msra.mxu0 0.0
        %1691 = vmatpush.msra.mxu0 %v1013
        %1692 = vmatmul.f32.gmra.mxu0 %v1674
        %v1693 = vpop.f32.mrf.mxu0
        %v1694 = vadd.f32 %v1018, %v1693
        %1695 = vdwg.mxu0
        %v1696 = vtanh.pop %v1694
        %v1698 = vsel %vm1044, %v1696, 0
        %1700 = vmatpush.msra.mxu0 0.0
        %1701 = vmatpush.msra.mxu0 0.0
        %1702 = vmatpush.msra.mxu0 0.0
        %1703 = vmatpush.msra.mxu0 0.0
        %1704 = vmatpush.msra.mxu0 0.0
        %1705 = vmatpush.msra.mxu0 0.0
        %1706 = vmatpush.msra.mxu0 0.0
        %1707 = vmatpush.msra.mxu0 0.0
        %1708 = vmatpush.msra.mxu0 0.0
        %1709 = vmatpush.msra.mxu0 0.0
        %1710 = vmatpush.msra.mxu0 0.0
        %1711 = vmatpush.msra.mxu0 0.0
        %1712 = vmatpush.msra.mxu0 %v1017
        %1713 = vmatpush.msra.mxu0 %v1016
        %1714 = vmatpush.msra.mxu0 %v1015
        %1715 = vmatpush.msra.mxu0 %v1014
        %1716 = vmatmul.f32.gmra.mxu0 %v1698
        %v1717 = vpop.f32.mrf.mxu0
        %v1718 = vadd.f32 %v1019, %v1717
        %1719 = vdwg.mxu0
        %v1720 = vmul.f32 %v1718, 0.26666668
        %v1721 = vadd.f32 %v1623, %v1720
        %v1723 = vsel %vm877, %v1721, 0
        %1725 = vmatpush.msra.mxu0 0.0
        %1726 = vmatpush.msra.mxu0 0.0
        %1727 = vmatpush.msra.mxu0 0.0
        %1728 = vmatpush.msra.mxu0 0.0
        %1729 = vmatpush.msra.mxu0 0.0
        %1730 = vmatpush.msra.mxu0 0.0
        %1731 = vmatpush.msra.mxu0 0.0
        %1732 = vmatpush.msra.mxu0 0.0
        %1733 = vmatpush.msra.mxu0 0.0
        %1734 = vmatpush.msra.mxu0 0.0
        %1735 = vmatpush.msra.mxu0 0.0
        %1736 = vmatpush.msra.mxu0 0.0
        %1737 = vmatpush.msra.mxu0 0.0
        %1738 = vmatpush.msra.mxu0 0.0
        %1739 = vmatpush.msra.mxu0 0.0
        %1740 = vmatpush.msra.mxu0 %v1013
        %1741 = vmatmul.f32.gmra.mxu0 %v1723
        %v1742 = vpop.f32.mrf.mxu0
        %v1743 = vadd.f32 %v1018, %v1742
        %1744 = vdwg.mxu0
        %v1745 = vtanh.pop %v1743
        %v1747 = vsel %vm1044, %v1745, 0
        %1749 = vmatpush.msra.mxu0 0.0
        %1750 = vmatpush.msra.mxu0 0.0
        %1751 = vmatpush.msra.mxu0 0.0
        %1752 = vmatpush.msra.mxu0 0.0
        %1753 = vmatpush.msra.mxu0 0.0
        %1754 = vmatpush.msra.mxu0 0.0
        %1755 = vmatpush.msra.mxu0 0.0
        %1756 = vmatpush.msra.mxu0 0.0
        %1757 = vmatpush.msra.mxu0 0.0
        %1758 = vmatpush.msra.mxu0 0.0
        %1759 = vmatpush.msra.mxu0 0.0
        %1760 = vmatpush.msra.mxu0 0.0
        %1761 = vmatpush.msra.mxu0 %v1017
        %1762 = vmatpush.msra.mxu0 %v1016
        %1763 = vmatpush.msra.mxu0 %v1015
        %1764 = vmatpush.msra.mxu0 %v1014
        %1765 = vmatmul.f32.gmra.mxu0 %v1747
        %v1766 = vpop.f32.mrf.mxu0
        %v1767 = vadd.f32 %v1019, %v1766
        %1768 = vdwg.mxu0
        %v1769 = vmul.f32 %v1767, 0.53333336
        %v1770 = vadd.f32 %v1623, %v1769
        %v1772 = vsel %vm877, %v1770, 0
        %1774 = vmatpush.msra.mxu0 0.0
        %1775 = vmatpush.msra.mxu0 0.0
        %1776 = vmatpush.msra.mxu0 0.0
        %1777 = vmatpush.msra.mxu0 0.0
        %1778 = vmatpush.msra.mxu0 0.0
        %1779 = vmatpush.msra.mxu0 0.0
        %1780 = vmatpush.msra.mxu0 0.0
        %1781 = vmatpush.msra.mxu0 0.0
        %1782 = vmatpush.msra.mxu0 0.0
        %1783 = vmatpush.msra.mxu0 0.0
        %1784 = vmatpush.msra.mxu0 0.0
        %1785 = vmatpush.msra.mxu0 0.0
        %1786 = vmatpush.msra.mxu0 0.0
        %1787 = vmatpush.msra.mxu0 0.0
        %1788 = vmatpush.msra.mxu0 0.0
        %1789 = vmatpush.msra.mxu0 %v1013
        %1790 = vmatmul.f32.gmra.mxu0 %v1772
        %v1791 = vpop.f32.mrf.mxu0
        %v1792 = vadd.f32 %v1018, %v1791
        %1793 = vdwg.mxu0
        %v1794 = vtanh.pop %v1792
        %v1796 = vsel %vm1044, %v1794, 0
        %1798 = vmatpush.msra.mxu0 0.0
        %1799 = vmatpush.msra.mxu0 0.0
        %1800 = vmatpush.msra.mxu0 0.0
        %1801 = vmatpush.msra.mxu0 0.0
        %1802 = vmatpush.msra.mxu0 0.0
        %1803 = vmatpush.msra.mxu0 0.0
        %1804 = vmatpush.msra.mxu0 0.0
        %1805 = vmatpush.msra.mxu0 0.0
        %1806 = vmatpush.msra.mxu0 0.0
        %1807 = vmatpush.msra.mxu0 0.0
        %1808 = vmatpush.msra.mxu0 0.0
        %1809 = vmatpush.msra.mxu0 0.0
        %1810 = vmatpush.msra.mxu0 %v1017
        %1811 = vmatpush.msra.mxu0 %v1016
        %1812 = vmatpush.msra.mxu0 %v1015
        %1813 = vmatpush.msra.mxu0 %v1014
        %1814 = vmatmul.f32.gmra.mxu0 %v1796
        %v1815 = vpop.f32.mrf.mxu0
        %v1816 = vadd.f32 %v1019, %v1815
        %1817 = vdwg.mxu0
        %v1818 = vmul.f32 %v1718, 2.0
        %v1819 = vadd.f32 %v1669, %v1818
        %v1820 = vmul.f32 %v1767, 2.0
        %v1821 = vadd.f32 %v1819, %v1820
        %v1822 = vadd.f32 %v1821, %v1816
        %v1823 = vmul.f32 %v1822, 0.08888889
        %v1824 = vadd.f32 %v1623, %v1823
        %v1826 = vsel %vm877, %v1824, 0
        %1828 = vmatpush.msra.mxu0 0.0
        %1829 = vmatpush.msra.mxu0 0.0
        %1830 = vmatpush.msra.mxu0 0.0
        %1831 = vmatpush.msra.mxu0 0.0
        %1832 = vmatpush.msra.mxu0 0.0
        %1833 = vmatpush.msra.mxu0 0.0
        %1834 = vmatpush.msra.mxu0 0.0
        %1835 = vmatpush.msra.mxu0 0.0
        %1836 = vmatpush.msra.mxu0 0.0
        %1837 = vmatpush.msra.mxu0 0.0
        %1838 = vmatpush.msra.mxu0 0.0
        %1839 = vmatpush.msra.mxu0 0.0
        %1840 = vmatpush.msra.mxu0 0.0
        %1841 = vmatpush.msra.mxu0 0.0
        %1842 = vmatpush.msra.mxu0 0.0
        %1843 = vmatpush.msra.mxu0 %v1013
        %1844 = vmatmul.f32.gmra.mxu0 %v1826
        %v1845 = vpop.f32.mrf.mxu0
        %v1846 = vadd.f32 %v1018, %v1845
        %1847 = vdwg.mxu0
        %v1848 = vtanh.pop %v1846
        %v1850 = vsel %vm1044, %v1848, 0
        %1852 = vmatpush.msra.mxu0 0.0
        %1853 = vmatpush.msra.mxu0 0.0
        %1854 = vmatpush.msra.mxu0 0.0
        %1855 = vmatpush.msra.mxu0 0.0
        %1856 = vmatpush.msra.mxu0 0.0
        %1857 = vmatpush.msra.mxu0 0.0
        %1858 = vmatpush.msra.mxu0 0.0
        %1859 = vmatpush.msra.mxu0 0.0
        %1860 = vmatpush.msra.mxu0 0.0
        %1861 = vmatpush.msra.mxu0 0.0
        %1862 = vmatpush.msra.mxu0 0.0
        %1863 = vmatpush.msra.mxu0 0.0
        %1864 = vmatpush.msra.mxu0 %v1017
        %1865 = vmatpush.msra.mxu0 %v1016
        %1866 = vmatpush.msra.mxu0 %v1015
        %1867 = vmatpush.msra.mxu0 %v1014
        %1868 = vmatmul.f32.gmra.mxu0 %v1850
        %v1869 = vpop.f32.mrf.mxu0
        %v1870 = vadd.f32 %v1019, %v1869
        %1871 = vdwg.mxu0
        %v1872 = vmul.f32 %v1870, 0.26666668
        %v1873 = vadd.f32 %v1824, %v1872
        %v1875 = vsel %vm877, %v1873, 0
        %1877 = vmatpush.msra.mxu0 0.0
        %1878 = vmatpush.msra.mxu0 0.0
        %1879 = vmatpush.msra.mxu0 0.0
        %1880 = vmatpush.msra.mxu0 0.0
        %1881 = vmatpush.msra.mxu0 0.0
        %1882 = vmatpush.msra.mxu0 0.0
        %1883 = vmatpush.msra.mxu0 0.0
        %1884 = vmatpush.msra.mxu0 0.0
        %1885 = vmatpush.msra.mxu0 0.0
        %1886 = vmatpush.msra.mxu0 0.0
        %1887 = vmatpush.msra.mxu0 0.0
        %1888 = vmatpush.msra.mxu0 0.0
        %1889 = vmatpush.msra.mxu0 0.0
        %1890 = vmatpush.msra.mxu0 0.0
        %1891 = vmatpush.msra.mxu0 0.0
        %1892 = vmatpush.msra.mxu0 %v1013
        %1893 = vmatmul.f32.gmra.mxu0 %v1875
        %v1894 = vpop.f32.mrf.mxu0
        %v1895 = vadd.f32 %v1018, %v1894
        %1896 = vdwg.mxu0
        %v1897 = vtanh.pop %v1895
        %v1899 = vsel %vm1044, %v1897, 0
        %1901 = vmatpush.msra.mxu0 0.0
        %1902 = vmatpush.msra.mxu0 0.0
        %1903 = vmatpush.msra.mxu0 0.0
        %1904 = vmatpush.msra.mxu0 0.0
        %1905 = vmatpush.msra.mxu0 0.0
        %1906 = vmatpush.msra.mxu0 0.0
        %1907 = vmatpush.msra.mxu0 0.0
        %1908 = vmatpush.msra.mxu0 0.0
        %1909 = vmatpush.msra.mxu0 0.0
        %1910 = vmatpush.msra.mxu0 0.0
        %1911 = vmatpush.msra.mxu0 0.0
        %1912 = vmatpush.msra.mxu0 0.0
        %1913 = vmatpush.msra.mxu0 %v1017
        %1914 = vmatpush.msra.mxu0 %v1016
        %1915 = vmatpush.msra.mxu0 %v1015
        %1916 = vmatpush.msra.mxu0 %v1014
        %1917 = vmatmul.f32.gmra.mxu0 %v1899
        %v1918 = vpop.f32.mrf.mxu0
        %v1919 = vadd.f32 %v1019, %v1918
        %1920 = vdwg.mxu0
        %v1921 = vmul.f32 %v1919, 0.26666668
        %v1922 = vadd.f32 %v1824, %v1921
        %v1924 = vsel %vm877, %v1922, 0
        %1926 = vmatpush.msra.mxu0 0.0
        %1927 = vmatpush.msra.mxu0 0.0
        %1928 = vmatpush.msra.mxu0 0.0
        %1929 = vmatpush.msra.mxu0 0.0
        %1930 = vmatpush.msra.mxu0 0.0
        %1931 = vmatpush.msra.mxu0 0.0
        %1932 = vmatpush.msra.mxu0 0.0
        %1933 = vmatpush.msra.mxu0 0.0
        %1934 = vmatpush.msra.mxu0 0.0
        %1935 = vmatpush.msra.mxu0 0.0
        %1936 = vmatpush.msra.mxu0 0.0
        %1937 = vmatpush.msra.mxu0 0.0
        %1938 = vmatpush.msra.mxu0 0.0
        %1939 = vmatpush.msra.mxu0 0.0
        %1940 = vmatpush.msra.mxu0 0.0
        %1941 = vmatpush.msra.mxu0 %v1013
        %1942 = vmatmul.f32.gmra.mxu0 %v1924
        %v1943 = vpop.f32.mrf.mxu0
        %v1944 = vadd.f32 %v1018, %v1943
        %1945 = vdwg.mxu0
        %v1946 = vtanh.pop %v1944
        %v1948 = vsel %vm1044, %v1946, 0
        %1950 = vmatpush.msra.mxu0 0.0
        %1951 = vmatpush.msra.mxu0 0.0
        %1952 = vmatpush.msra.mxu0 0.0
        %1953 = vmatpush.msra.mxu0 0.0
        %1954 = vmatpush.msra.mxu0 0.0
        %1955 = vmatpush.msra.mxu0 0.0
        %1956 = vmatpush.msra.mxu0 0.0
        %1957 = vmatpush.msra.mxu0 0.0
        %1958 = vmatpush.msra.mxu0 0.0
        %1959 = vmatpush.msra.mxu0 0.0
        %1960 = vmatpush.msra.mxu0 0.0
        %1961 = vmatpush.msra.mxu0 0.0
        %1962 = vmatpush.msra.mxu0 %v1017
        %1963 = vmatpush.msra.mxu0 %v1016
        %1964 = vmatpush.msra.mxu0 %v1015
        %1965 = vmatpush.msra.mxu0 %v1014
        %1966 = vmatmul.f32.gmra.mxu0 %v1948
        %v1967 = vpop.f32.mrf.mxu0
        %v1968 = vadd.f32 %v1019, %v1967
        %1969 = vdwg.mxu0
        %v1970 = vmul.f32 %v1968, 0.53333336
        %v1971 = vadd.f32 %v1824, %v1970
        %v1973 = vsel %vm877, %v1971, 0
        %1975 = vmatpush.msra.mxu0 0.0
        %1976 = vmatpush.msra.mxu0 0.0
        %1977 = vmatpush.msra.mxu0 0.0
        %1978 = vmatpush.msra.mxu0 0.0
        %1979 = vmatpush.msra.mxu0 0.0
        %1980 = vmatpush.msra.mxu0 0.0
        %1981 = vmatpush.msra.mxu0 0.0
        %1982 = vmatpush.msra.mxu0 0.0
        %1983 = vmatpush.msra.mxu0 0.0
        %1984 = vmatpush.msra.mxu0 0.0
        %1985 = vmatpush.msra.mxu0 0.0
        %1986 = vmatpush.msra.mxu0 0.0
        %1987 = vmatpush.msra.mxu0 0.0
        %1988 = vmatpush.msra.mxu0 0.0
        %1989 = vmatpush.msra.mxu0 0.0
        %1990 = vmatpush.msra.mxu0 %v1013
        %1991 = vmatmul.f32.gmra.mxu0 %v1973
        %v1992 = vpop.f32.mrf.mxu0
        %v1993 = vadd.f32 %v1018, %v1992
        %1994 = vdwg.mxu0
        %v1995 = vtanh.pop %v1993
        %v1997 = vsel %vm1044, %v1995, 0
        %1999 = vmatpush.msra.mxu0 0.0
        %2000 = vmatpush.msra.mxu0 0.0
        %2001 = vmatpush.msra.mxu0 0.0
        %2002 = vmatpush.msra.mxu0 0.0
        %2003 = vmatpush.msra.mxu0 0.0
        %2004 = vmatpush.msra.mxu0 0.0
        %2005 = vmatpush.msra.mxu0 0.0
        %2006 = vmatpush.msra.mxu0 0.0
        %2007 = vmatpush.msra.mxu0 0.0
        %2008 = vmatpush.msra.mxu0 0.0
        %2009 = vmatpush.msra.mxu0 0.0
        %2010 = vmatpush.msra.mxu0 0.0
        %2011 = vmatpush.msra.mxu0 %v1017
        %2012 = vmatpush.msra.mxu0 %v1016
        %2013 = vmatpush.msra.mxu0 %v1015
        %2014 = vmatpush.msra.mxu0 %v1014
        %2015 = vmatmul.f32.gmra.mxu0 %v1997
        %v2016 = vpop.f32.mrf.mxu0
        %v2017 = vadd.f32 %v1019, %v2016
        %2018 = vdwg.mxu0
        %v2019 = vmul.f32 %v1919, 2.0
        %v2020 = vadd.f32 %v1870, %v2019
        %v2021 = vmul.f32 %v1968, 2.0
        %v2022 = vadd.f32 %v2020, %v2021
        %v2023 = vadd.f32 %v2022, %v2017
        %v2024 = vmul.f32 %v2023, 0.08888889
        %v2025 = vadd.f32 %v1824, %v2024
        %v2027 = vsel %vm877, %v2025, 0
        %2029 = vmatpush.msra.mxu0 0.0
        %2030 = vmatpush.msra.mxu0 0.0
        %2031 = vmatpush.msra.mxu0 0.0
        %2032 = vmatpush.msra.mxu0 0.0
        %2033 = vmatpush.msra.mxu0 0.0
        %2034 = vmatpush.msra.mxu0 0.0
        %2035 = vmatpush.msra.mxu0 0.0
        %2036 = vmatpush.msra.mxu0 0.0
        %2037 = vmatpush.msra.mxu0 0.0
        %2038 = vmatpush.msra.mxu0 0.0
        %2039 = vmatpush.msra.mxu0 0.0
        %2040 = vmatpush.msra.mxu0 0.0
        %2041 = vmatpush.msra.mxu0 0.0
        %2042 = vmatpush.msra.mxu0 0.0
        %2043 = vmatpush.msra.mxu0 0.0
        %2044 = vmatpush.msra.mxu0 %v1013
        %2045 = vmatmul.f32.gmra.mxu0 %v2027
        %v2046 = vpop.f32.mrf.mxu0
        %v2047 = vadd.f32 %v1018, %v2046
        %2048 = vdwg.mxu0
        %v2049 = vtanh.pop %v2047
        %v2051 = vsel %vm1044, %v2049, 0
        %2053 = vmatpush.msra.mxu0 0.0
        %2054 = vmatpush.msra.mxu0 0.0
        %2055 = vmatpush.msra.mxu0 0.0
        %2056 = vmatpush.msra.mxu0 0.0
        %2057 = vmatpush.msra.mxu0 0.0
        %2058 = vmatpush.msra.mxu0 0.0
        %2059 = vmatpush.msra.mxu0 0.0
        %2060 = vmatpush.msra.mxu0 0.0
        %2061 = vmatpush.msra.mxu0 0.0
        %2062 = vmatpush.msra.mxu0 0.0
        %2063 = vmatpush.msra.mxu0 0.0
        %2064 = vmatpush.msra.mxu0 0.0
        %2065 = vmatpush.msra.mxu0 %v1017
        %2066 = vmatpush.msra.mxu0 %v1016
        %2067 = vmatpush.msra.mxu0 %v1015
        %2068 = vmatpush.msra.mxu0 %v1014
        %2069 = vmatmul.f32.gmra.mxu0 %v2051
        %v2070 = vpop.f32.mrf.mxu0
        %v2071 = vadd.f32 %v1019, %v2070
        %2072 = vdwg.mxu0
        %v2073 = vmul.f32 %v2071, 0.26666668
        %v2074 = vadd.f32 %v2025, %v2073
        %v2076 = vsel %vm877, %v2074, 0
        %2078 = vmatpush.msra.mxu0 0.0
        %2079 = vmatpush.msra.mxu0 0.0
        %2080 = vmatpush.msra.mxu0 0.0
        %2081 = vmatpush.msra.mxu0 0.0
        %2082 = vmatpush.msra.mxu0 0.0
        %2083 = vmatpush.msra.mxu0 0.0
        %2084 = vmatpush.msra.mxu0 0.0
        %2085 = vmatpush.msra.mxu0 0.0
        %2086 = vmatpush.msra.mxu0 0.0
        %2087 = vmatpush.msra.mxu0 0.0
        %2088 = vmatpush.msra.mxu0 0.0
        %2089 = vmatpush.msra.mxu0 0.0
        %2090 = vmatpush.msra.mxu0 0.0
        %2091 = vmatpush.msra.mxu0 0.0
        %2092 = vmatpush.msra.mxu0 0.0
        %2093 = vmatpush.msra.mxu0 %v1013
        %2094 = vmatmul.f32.gmra.mxu0 %v2076
        %v2095 = vpop.f32.mrf.mxu0
        %v2096 = vadd.f32 %v1018, %v2095
        %2097 = vdwg.mxu0
        %v2098 = vtanh.pop %v2096
        %v2100 = vsel %vm1044, %v2098, 0
        %2102 = vmatpush.msra.mxu0 0.0
        %2103 = vmatpush.msra.mxu0 0.0
        %2104 = vmatpush.msra.mxu0 0.0
        %2105 = vmatpush.msra.mxu0 0.0
        %2106 = vmatpush.msra.mxu0 0.0
        %2107 = vmatpush.msra.mxu0 0.0
        %2108 = vmatpush.msra.mxu0 0.0
        %2109 = vmatpush.msra.mxu0 0.0
        %2110 = vmatpush.msra.mxu0 0.0
        %2111 = vmatpush.msra.mxu0 0.0
        %2112 = vmatpush.msra.mxu0 0.0
        %2113 = vmatpush.msra.mxu0 0.0
        %2114 = vmatpush.msra.mxu0 %v1017
        %2115 = vmatpush.msra.mxu0 %v1016
        %2116 = vmatpush.msra.mxu0 %v1015
        %2117 = vmatpush.msra.mxu0 %v1014
        %2118 = vmatmul.f32.gmra.mxu0 %v2100
        %v2119 = vpop.f32.mrf.mxu0
        %v2120 = vadd.f32 %v1019, %v2119
        %2121 = vdwg.mxu0
        %v2122 = vmul.f32 %v2120, 0.26666668
        %v2123 = vadd.f32 %v2025, %v2122
        %v2125 = vsel %vm877, %v2123, 0
        %2127 = vmatpush.msra.mxu0 0.0
        %2128 = vmatpush.msra.mxu0 0.0
        %2129 = vmatpush.msra.mxu0 0.0
        %2130 = vmatpush.msra.mxu0 0.0
        %2131 = vmatpush.msra.mxu0 0.0
        %2132 = vmatpush.msra.mxu0 0.0
        %2133 = vmatpush.msra.mxu0 0.0
        %2134 = vmatpush.msra.mxu0 0.0
        %2135 = vmatpush.msra.mxu0 0.0
        %2136 = vmatpush.msra.mxu0 0.0
        %2137 = vmatpush.msra.mxu0 0.0
        %2138 = vmatpush.msra.mxu0 0.0
        %2139 = vmatpush.msra.mxu0 0.0
        %2140 = vmatpush.msra.mxu0 0.0
        %2141 = vmatpush.msra.mxu0 0.0
        %2142 = vmatpush.msra.mxu0 %v1013
        %2143 = vmatmul.f32.gmra.mxu0 %v2125
        %v2144 = vpop.f32.mrf.mxu0
        %v2145 = vadd.f32 %v1018, %v2144
        %2146 = vdwg.mxu0
        %v2147 = vtanh.pop %v2145
        %v2149 = vsel %vm1044, %v2147, 0
        %2151 = vmatpush.msra.mxu0 0.0
        %2152 = vmatpush.msra.mxu0 0.0
        %2153 = vmatpush.msra.mxu0 0.0
        %2154 = vmatpush.msra.mxu0 0.0
        %2155 = vmatpush.msra.mxu0 0.0
        %2156 = vmatpush.msra.mxu0 0.0
        %2157 = vmatpush.msra.mxu0 0.0
        %2158 = vmatpush.msra.mxu0 0.0
        %2159 = vmatpush.msra.mxu0 0.0
        %2160 = vmatpush.msra.mxu0 0.0
        %2161 = vmatpush.msra.mxu0 0.0
        %2162 = vmatpush.msra.mxu0 0.0
        %2163 = vmatpush.msra.mxu0 %v1017
        %2164 = vmatpush.msra.mxu0 %v1016
        %2165 = vmatpush.msra.mxu0 %v1015
        %2166 = vmatpush.msra.mxu0 %v1014
        %2167 = vmatmul.f32.gmra.mxu0 %v2149
        %v2168 = vpop.f32.mrf.mxu0
        %v2169 = vadd.f32 %v1019, %v2168
        %2170 = vdwg.mxu0
        %v2171 = vmul.f32 %v2169, 0.53333336
        %v2172 = vadd.f32 %v2025, %v2171
        %v2174 = vsel %vm877, %v2172, 0
        %2176 = vmatpush.msra.mxu0 0.0
        %2177 = vmatpush.msra.mxu0 0.0
        %2178 = vmatpush.msra.mxu0 0.0
        %2179 = vmatpush.msra.mxu0 0.0
        %2180 = vmatpush.msra.mxu0 0.0
        %2181 = vmatpush.msra.mxu0 0.0
        %2182 = vmatpush.msra.mxu0 0.0
        %2183 = vmatpush.msra.mxu0 0.0
        %2184 = vmatpush.msra.mxu0 0.0
        %2185 = vmatpush.msra.mxu0 0.0
        %2186 = vmatpush.msra.mxu0 0.0
        %2187 = vmatpush.msra.mxu0 0.0
        %2188 = vmatpush.msra.mxu0 0.0
        %2189 = vmatpush.msra.mxu0 0.0
        %2190 = vmatpush.msra.mxu0 0.0
        %2191 = vmatpush.msra.mxu0 %v1013
        %2192 = vmatmul.f32.gmra.mxu0 %v2174
        %v2193 = vpop.f32.mrf.mxu0
        %v2194 = vadd.f32 %v1018, %v2193
        %2195 = vdwg.mxu0
        %v2196 = vtanh.pop %v2194
        %v2198 = vsel %vm1044, %v2196, 0
        %2200 = vmatpush.msra.mxu0 0.0
        %2201 = vmatpush.msra.mxu0 0.0
        %2202 = vmatpush.msra.mxu0 0.0
        %2203 = vmatpush.msra.mxu0 0.0
        %2204 = vmatpush.msra.mxu0 0.0
        %2205 = vmatpush.msra.mxu0 0.0
        %2206 = vmatpush.msra.mxu0 0.0
        %2207 = vmatpush.msra.mxu0 0.0
        %2208 = vmatpush.msra.mxu0 0.0
        %2209 = vmatpush.msra.mxu0 0.0
        %2210 = vmatpush.msra.mxu0 0.0
        %2211 = vmatpush.msra.mxu0 0.0
        %2212 = vmatpush.msra.mxu0 %v1017
        %2213 = vmatpush.msra.mxu0 %v1016
        %2214 = vmatpush.msra.mxu0 %v1015
        %2215 = vmatpush.msra.mxu0 %v1014
        %2216 = vmatmul.f32.gmra.mxu0 %v2198
        %v2217 = vpop.f32.mrf.mxu0
        %v2218 = vadd.f32 %v1019, %v2217
        %2219 = vdwg.mxu0
        %v2220 = vmul.f32 %v2120, 2.0
        %v2221 = vadd.f32 %v2071, %v2220
        %v2222 = vmul.f32 %v2169, 2.0
        %v2223 = vadd.f32 %v2221, %v2222
        %v2224 = vadd.f32 %v2223, %v2218
        %v2225 = vmul.f32 %v2224, 0.08888889
        %v2226 = vadd.f32 %v2025, %v2225
        %v2228 = vsel %vm877, %v2226, 0
        %2230 = vmatpush.msra.mxu0 0.0
        %2231 = vmatpush.msra.mxu0 0.0
        %2232 = vmatpush.msra.mxu0 0.0
        %2233 = vmatpush.msra.mxu0 0.0
        %2234 = vmatpush.msra.mxu0 0.0
        %2235 = vmatpush.msra.mxu0 0.0
        %2236 = vmatpush.msra.mxu0 0.0
        %2237 = vmatpush.msra.mxu0 0.0
        %2238 = vmatpush.msra.mxu0 0.0
        %2239 = vmatpush.msra.mxu0 0.0
        %2240 = vmatpush.msra.mxu0 0.0
        %2241 = vmatpush.msra.mxu0 0.0
        %2242 = vmatpush.msra.mxu0 0.0
        %2243 = vmatpush.msra.mxu0 0.0
        %2244 = vmatpush.msra.mxu0 0.0
        %2245 = vmatpush.msra.mxu0 %v1013
        %2246 = vmatmul.f32.gmra.mxu0 %v2228
        %v2247 = vpop.f32.mrf.mxu0
        %v2248 = vadd.f32 %v1018, %v2247
        %2249 = vdwg.mxu0
        %v2250 = vtanh.pop %v2248
        %v2252 = vsel %vm1044, %v2250, 0
        %2254 = vmatpush.msra.mxu0 0.0
        %2255 = vmatpush.msra.mxu0 0.0
        %2256 = vmatpush.msra.mxu0 0.0
        %2257 = vmatpush.msra.mxu0 0.0
        %2258 = vmatpush.msra.mxu0 0.0
        %2259 = vmatpush.msra.mxu0 0.0
        %2260 = vmatpush.msra.mxu0 0.0
        %2261 = vmatpush.msra.mxu0 0.0
        %2262 = vmatpush.msra.mxu0 0.0
        %2263 = vmatpush.msra.mxu0 0.0
        %2264 = vmatpush.msra.mxu0 0.0
        %2265 = vmatpush.msra.mxu0 0.0
        %2266 = vmatpush.msra.mxu0 %v1017
        %2267 = vmatpush.msra.mxu0 %v1016
        %2268 = vmatpush.msra.mxu0 %v1015
        %2269 = vmatpush.msra.mxu0 %v1014
        %2270 = vmatmul.f32.gmra.mxu0 %v2252
        %v2271 = vpop.f32.mrf.mxu0
        %v2272 = vadd.f32 %v1019, %v2271
        %2273 = vdwg.mxu0
        %v2274 = vmul.f32 %v2272, 0.26666668
        %v2275 = vadd.f32 %v2226, %v2274
        %v2277 = vsel %vm877, %v2275, 0
        %2279 = vmatpush.msra.mxu0 0.0
        %2280 = vmatpush.msra.mxu0 0.0
        %2281 = vmatpush.msra.mxu0 0.0
        %2282 = vmatpush.msra.mxu0 0.0
        %2283 = vmatpush.msra.mxu0 0.0
        %2284 = vmatpush.msra.mxu0 0.0
        %2285 = vmatpush.msra.mxu0 0.0
        %2286 = vmatpush.msra.mxu0 0.0
        %2287 = vmatpush.msra.mxu0 0.0
        %2288 = vmatpush.msra.mxu0 0.0
        %2289 = vmatpush.msra.mxu0 0.0
        %2290 = vmatpush.msra.mxu0 0.0
        %2291 = vmatpush.msra.mxu0 0.0
        %2292 = vmatpush.msra.mxu0 0.0
        %2293 = vmatpush.msra.mxu0 0.0
        %2294 = vmatpush.msra.mxu0 %v1013
        %2295 = vmatmul.f32.gmra.mxu0 %v2277
        %v2296 = vpop.f32.mrf.mxu0
        %v2297 = vadd.f32 %v1018, %v2296
        %2298 = vdwg.mxu0
        %v2299 = vtanh.pop %v2297
        %v2301 = vsel %vm1044, %v2299, 0
        %2303 = vmatpush.msra.mxu0 0.0
        %2304 = vmatpush.msra.mxu0 0.0
        %2305 = vmatpush.msra.mxu0 0.0
        %2306 = vmatpush.msra.mxu0 0.0
        %2307 = vmatpush.msra.mxu0 0.0
        %2308 = vmatpush.msra.mxu0 0.0
        %2309 = vmatpush.msra.mxu0 0.0
        %2310 = vmatpush.msra.mxu0 0.0
        %2311 = vmatpush.msra.mxu0 0.0
        %2312 = vmatpush.msra.mxu0 0.0
        %2313 = vmatpush.msra.mxu0 0.0
        %2314 = vmatpush.msra.mxu0 0.0
        %2315 = vmatpush.msra.mxu0 %v1017
        %2316 = vmatpush.msra.mxu0 %v1016
        %2317 = vmatpush.msra.mxu0 %v1015
        %2318 = vmatpush.msra.mxu0 %v1014
        %2319 = vmatmul.f32.gmra.mxu0 %v2301
        %v2320 = vpop.f32.mrf.mxu0
        %v2321 = vadd.f32 %v1019, %v2320
        %2322 = vdwg.mxu0
        %v2323 = vmul.f32 %v2321, 0.26666668
        %v2324 = vadd.f32 %v2226, %v2323
        %v2326 = vsel %vm877, %v2324, 0
        %2328 = vmatpush.msra.mxu0 0.0
        %2329 = vmatpush.msra.mxu0 0.0
        %2330 = vmatpush.msra.mxu0 0.0
        %2331 = vmatpush.msra.mxu0 0.0
        %2332 = vmatpush.msra.mxu0 0.0
        %2333 = vmatpush.msra.mxu0 0.0
        %2334 = vmatpush.msra.mxu0 0.0
        %2335 = vmatpush.msra.mxu0 0.0
        %2336 = vmatpush.msra.mxu0 0.0
        %2337 = vmatpush.msra.mxu0 0.0
        %2338 = vmatpush.msra.mxu0 0.0
        %2339 = vmatpush.msra.mxu0 0.0
        %2340 = vmatpush.msra.mxu0 0.0
        %2341 = vmatpush.msra.mxu0 0.0
        %2342 = vmatpush.msra.mxu0 0.0
        %2343 = vmatpush.msra.mxu0 %v1013
        %2344 = vmatmul.f32.gmra.mxu0 %v2326
        %v2345 = vpop.f32.mrf.mxu0
        %v2346 = vadd.f32 %v1018, %v2345
        %2347 = vdwg.mxu0
        %v2348 = vtanh.pop %v2346
        %v2350 = vsel %vm1044, %v2348, 0
        %2352 = vmatpush.msra.mxu0 0.0
        %2353 = vmatpush.msra.mxu0 0.0
        %2354 = vmatpush.msra.mxu0 0.0
        %2355 = vmatpush.msra.mxu0 0.0
        %2356 = vmatpush.msra.mxu0 0.0
        %2357 = vmatpush.msra.mxu0 0.0
        %2358 = vmatpush.msra.mxu0 0.0
        %2359 = vmatpush.msra.mxu0 0.0
        %2360 = vmatpush.msra.mxu0 0.0
        %2361 = vmatpush.msra.mxu0 0.0
        %2362 = vmatpush.msra.mxu0 0.0
        %2363 = vmatpush.msra.mxu0 0.0
        %2364 = vmatpush.msra.mxu0 %v1017
        %2365 = vmatpush.msra.mxu0 %v1016
        %2366 = vmatpush.msra.mxu0 %v1015
        %2367 = vmatpush.msra.mxu0 %v1014
        %2368 = vmatmul.f32.gmra.mxu0 %v2350
        %v2369 = vpop.f32.mrf.mxu0
        %v2370 = vadd.f32 %v1019, %v2369
        %2371 = vdwg.mxu0
        %v2372 = vmul.f32 %v2370, 0.53333336
        %v2373 = vadd.f32 %v2226, %v2372
        %v2375 = vsel %vm877, %v2373, 0
        %2377 = vmatpush.msra.mxu0 0.0
        %2378 = vmatpush.msra.mxu0 0.0
        %2379 = vmatpush.msra.mxu0 0.0
        %2380 = vmatpush.msra.mxu0 0.0
        %2381 = vmatpush.msra.mxu0 0.0
        %2382 = vmatpush.msra.mxu0 0.0
        %2383 = vmatpush.msra.mxu0 0.0
        %2384 = vmatpush.msra.mxu0 0.0
        %2385 = vmatpush.msra.mxu0 0.0
        %2386 = vmatpush.msra.mxu0 0.0
        %2387 = vmatpush.msra.mxu0 0.0
        %2388 = vmatpush.msra.mxu0 0.0
        %2389 = vmatpush.msra.mxu0 0.0
        %2390 = vmatpush.msra.mxu0 0.0
        %2391 = vmatpush.msra.mxu0 0.0
        %2392 = vmatpush.msra.mxu0 %v1013
        %2393 = vmatmul.f32.gmra.mxu0 %v2375
        %v2394 = vpop.f32.mrf.mxu0
        %v2395 = vadd.f32 %v1018, %v2394
        %2396 = vdwg.mxu0
        %v2397 = vtanh.pop %v2395
        %v2399 = vsel %vm1044, %v2397, 0
        %2401 = vmatpush.msra.mxu0 0.0
        %2402 = vmatpush.msra.mxu0 0.0
        %2403 = vmatpush.msra.mxu0 0.0
        %2404 = vmatpush.msra.mxu0 0.0
        %2405 = vmatpush.msra.mxu0 0.0
        %2406 = vmatpush.msra.mxu0 0.0
        %2407 = vmatpush.msra.mxu0 0.0
        %2408 = vmatpush.msra.mxu0 0.0
        %2409 = vmatpush.msra.mxu0 0.0
        %2410 = vmatpush.msra.mxu0 0.0
        %2411 = vmatpush.msra.mxu0 0.0
        %2412 = vmatpush.msra.mxu0 0.0
        %2413 = vmatpush.msra.mxu0 %v1017
        %2414 = vmatpush.msra.mxu0 %v1016
        %2415 = vmatpush.msra.mxu0 %v1015
        %2416 = vmatpush.msra.mxu0 %v1014
        %2417 = vmatmul.f32.gmra.mxu0 %v2399
        %v2418 = vpop.f32.mrf.mxu0
        %v2419 = vadd.f32 %v1019, %v2418
        %2420 = vdwg.mxu0
        %v2421 = vmul.f32 %v2321, 2.0
        %v2422 = vadd.f32 %v2272, %v2421
        %v2423 = vmul.f32 %v2370, 2.0
        %v2424 = vadd.f32 %v2422, %v2423
        %v2425 = vadd.f32 %v2424, %v2419
        %v2426 = vmul.f32 %v2425, 0.08888889
        %v2427 = vadd.f32 %v2226, %v2426
        %v2429 = vsel %vm877, %v2427, 0
        %2431 = vmatpush.msra.mxu0 0.0
        %2432 = vmatpush.msra.mxu0 0.0
        %2433 = vmatpush.msra.mxu0 0.0
        %2434 = vmatpush.msra.mxu0 0.0
        %2435 = vmatpush.msra.mxu0 0.0
        %2436 = vmatpush.msra.mxu0 0.0
        %2437 = vmatpush.msra.mxu0 0.0
        %2438 = vmatpush.msra.mxu0 0.0
        %2439 = vmatpush.msra.mxu0 0.0
        %2440 = vmatpush.msra.mxu0 0.0
        %2441 = vmatpush.msra.mxu0 0.0
        %2442 = vmatpush.msra.mxu0 0.0
        %2443 = vmatpush.msra.mxu0 0.0
        %2444 = vmatpush.msra.mxu0 0.0
        %2445 = vmatpush.msra.mxu0 0.0
        %2446 = vmatpush.msra.mxu0 %v1013
        %2447 = vmatmul.f32.gmra.mxu0 %v2429
        %v2448 = vpop.f32.mrf.mxu0
        %v2449 = vadd.f32 %v1018, %v2448
        %2450 = vdwg.mxu0
        %v2451 = vtanh.pop %v2449
        %v2453 = vsel %vm1044, %v2451, 0
        %2455 = vmatpush.msra.mxu0 0.0
        %2456 = vmatpush.msra.mxu0 0.0
        %2457 = vmatpush.msra.mxu0 0.0
        %2458 = vmatpush.msra.mxu0 0.0
        %2459 = vmatpush.msra.mxu0 0.0
        %2460 = vmatpush.msra.mxu0 0.0
        %2461 = vmatpush.msra.mxu0 0.0
        %2462 = vmatpush.msra.mxu0 0.0
        %2463 = vmatpush.msra.mxu0 0.0
        %2464 = vmatpush.msra.mxu0 0.0
        %2465 = vmatpush.msra.mxu0 0.0
        %2466 = vmatpush.msra.mxu0 0.0
        %2467 = vmatpush.msra.mxu0 %v1017
        %2468 = vmatpush.msra.mxu0 %v1016
        %2469 = vmatpush.msra.mxu0 %v1015
        %2470 = vmatpush.msra.mxu0 %v1014
        %2471 = vmatmul.f32.gmra.mxu0 %v2453
        %v2472 = vpop.f32.mrf.mxu0
        %v2473 = vadd.f32 %v1019, %v2472
        %2474 = vdwg.mxu0
        %v2475 = vmul.f32 %v2473, 0.26666668
        %v2476 = vadd.f32 %v2427, %v2475
        %v2478 = vsel %vm877, %v2476, 0
        %2480 = vmatpush.msra.mxu0 0.0
        %2481 = vmatpush.msra.mxu0 0.0
        %2482 = vmatpush.msra.mxu0 0.0
        %2483 = vmatpush.msra.mxu0 0.0
        %2484 = vmatpush.msra.mxu0 0.0
        %2485 = vmatpush.msra.mxu0 0.0
        %2486 = vmatpush.msra.mxu0 0.0
        %2487 = vmatpush.msra.mxu0 0.0
        %2488 = vmatpush.msra.mxu0 0.0
        %2489 = vmatpush.msra.mxu0 0.0
        %2490 = vmatpush.msra.mxu0 0.0
        %2491 = vmatpush.msra.mxu0 0.0
        %2492 = vmatpush.msra.mxu0 0.0
        %2493 = vmatpush.msra.mxu0 0.0
        %2494 = vmatpush.msra.mxu0 0.0
        %2495 = vmatpush.msra.mxu0 %v1013
        %2496 = vmatmul.f32.gmra.mxu0 %v2478
        %v2497 = vpop.f32.mrf.mxu0
        %v2498 = vadd.f32 %v1018, %v2497
        %2499 = vdwg.mxu0
        %v2500 = vtanh.pop %v2498
        %v2502 = vsel %vm1044, %v2500, 0
        %2504 = vmatpush.msra.mxu0 0.0
        %2505 = vmatpush.msra.mxu0 0.0
        %2506 = vmatpush.msra.mxu0 0.0
        %2507 = vmatpush.msra.mxu0 0.0
        %2508 = vmatpush.msra.mxu0 0.0
        %2509 = vmatpush.msra.mxu0 0.0
        %2510 = vmatpush.msra.mxu0 0.0
        %2511 = vmatpush.msra.mxu0 0.0
        %2512 = vmatpush.msra.mxu0 0.0
        %2513 = vmatpush.msra.mxu0 0.0
        %2514 = vmatpush.msra.mxu0 0.0
        %2515 = vmatpush.msra.mxu0 0.0
        %2516 = vmatpush.msra.mxu0 %v1017
        %2517 = vmatpush.msra.mxu0 %v1016
        %2518 = vmatpush.msra.mxu0 %v1015
        %2519 = vmatpush.msra.mxu0 %v1014
        %2520 = vmatmul.f32.gmra.mxu0 %v2502
        %v2521 = vpop.f32.mrf.mxu0
        %v2522 = vadd.f32 %v1019, %v2521
        %2523 = vdwg.mxu0
        %v2524 = vmul.f32 %v2522, 0.26666668
        %v2525 = vadd.f32 %v2427, %v2524
        %v2527 = vsel %vm877, %v2525, 0
        %2529 = vmatpush.msra.mxu0 0.0
        %2530 = vmatpush.msra.mxu0 0.0
        %2531 = vmatpush.msra.mxu0 0.0
        %2532 = vmatpush.msra.mxu0 0.0
        %2533 = vmatpush.msra.mxu0 0.0
        %2534 = vmatpush.msra.mxu0 0.0
        %2535 = vmatpush.msra.mxu0 0.0
        %2536 = vmatpush.msra.mxu0 0.0
        %2537 = vmatpush.msra.mxu0 0.0
        %2538 = vmatpush.msra.mxu0 0.0
        %2539 = vmatpush.msra.mxu0 0.0
        %2540 = vmatpush.msra.mxu0 0.0
        %2541 = vmatpush.msra.mxu0 0.0
        %2542 = vmatpush.msra.mxu0 0.0
        %2543 = vmatpush.msra.mxu0 0.0
        %2544 = vmatpush.msra.mxu0 %v1013
        %2545 = vmatmul.f32.gmra.mxu0 %v2527
        %v2546 = vpop.f32.mrf.mxu0
        %v2547 = vadd.f32 %v1018, %v2546
        %2548 = vdwg.mxu0
        %v2549 = vtanh.pop %v2547
        %v2551 = vsel %vm1044, %v2549, 0
        %2553 = vmatpush.msra.mxu0 0.0
        %2554 = vmatpush.msra.mxu0 0.0
        %2555 = vmatpush.msra.mxu0 0.0
        %2556 = vmatpush.msra.mxu0 0.0
        %2557 = vmatpush.msra.mxu0 0.0
        %2558 = vmatpush.msra.mxu0 0.0
        %2559 = vmatpush.msra.mxu0 0.0
        %2560 = vmatpush.msra.mxu0 0.0
        %2561 = vmatpush.msra.mxu0 0.0
        %2562 = vmatpush.msra.mxu0 0.0
        %2563 = vmatpush.msra.mxu0 0.0
        %2564 = vmatpush.msra.mxu0 0.0
        %2565 = vmatpush.msra.mxu0 %v1017
        %2566 = vmatpush.msra.mxu0 %v1016
        %2567 = vmatpush.msra.mxu0 %v1015
        %2568 = vmatpush.msra.mxu0 %v1014
        %2569 = vmatmul.f32.gmra.mxu0 %v2551
        %v2570 = vpop.f32.mrf.mxu0
        %v2571 = vadd.f32 %v1019, %v2570
        %2572 = vdwg.mxu0
        %v2573 = vmul.f32 %v2571, 0.53333336
        %v2574 = vadd.f32 %v2427, %v2573
        %v2576 = vsel %vm877, %v2574, 0
        %2578 = vmatpush.msra.mxu0 0.0
        %2579 = vmatpush.msra.mxu0 0.0
        %2580 = vmatpush.msra.mxu0 0.0
        %2581 = vmatpush.msra.mxu0 0.0
        %2582 = vmatpush.msra.mxu0 0.0
        %2583 = vmatpush.msra.mxu0 0.0
        %2584 = vmatpush.msra.mxu0 0.0
        %2585 = vmatpush.msra.mxu0 0.0
        %2586 = vmatpush.msra.mxu0 0.0
        %2587 = vmatpush.msra.mxu0 0.0
        %2588 = vmatpush.msra.mxu0 0.0
        %2589 = vmatpush.msra.mxu0 0.0
        %2590 = vmatpush.msra.mxu0 0.0
        %2591 = vmatpush.msra.mxu0 0.0
        %2592 = vmatpush.msra.mxu0 0.0
        %2593 = vmatpush.msra.mxu0 %v1013
        %2594 = vmatmul.f32.gmra.mxu0 %v2576
        %v2595 = vpop.f32.mrf.mxu0
        %v2596 = vadd.f32 %v1018, %v2595
        %2597 = vdwg.mxu0
        %v2598 = vtanh.pop %v2596
        %v2600 = vsel %vm1044, %v2598, 0
        %2602 = vmatpush.msra.mxu0 0.0
        %2603 = vmatpush.msra.mxu0 0.0
        %2604 = vmatpush.msra.mxu0 0.0
        %2605 = vmatpush.msra.mxu0 0.0
        %2606 = vmatpush.msra.mxu0 0.0
        %2607 = vmatpush.msra.mxu0 0.0
        %2608 = vmatpush.msra.mxu0 0.0
        %2609 = vmatpush.msra.mxu0 0.0
        %2610 = vmatpush.msra.mxu0 0.0
        %2611 = vmatpush.msra.mxu0 0.0
        %2612 = vmatpush.msra.mxu0 0.0
        %2613 = vmatpush.msra.mxu0 0.0
        %2614 = vmatpush.msra.mxu0 %v1017
        %2615 = vmatpush.msra.mxu0 %v1016
        %2616 = vmatpush.msra.mxu0 %v1015
        %2617 = vmatpush.msra.mxu0 %v1014
        %2618 = vmatmul.f32.gmra.mxu0 %v2600
        %v2619 = vpop.f32.mrf.mxu0
        %v2620 = vadd.f32 %v1019, %v2619
        %2621 = vdwg.mxu0
        %v2622 = vmul.f32 %v2522, 2.0
        %v2623 = vadd.f32 %v2473, %v2622
        %v2624 = vmul.f32 %v2571, 2.0
        %v2625 = vadd.f32 %v2623, %v2624
        %v2626 = vadd.f32 %v2625, %v2620
        %v2627 = vmul.f32 %v2626, 0.08888889
        %v2628 = vadd.f32 %v2427, %v2627
        %v2630 = vsel %vm877, %v2628, 0
        %2632 = vmatpush.msra.mxu0 0.0
        %2633 = vmatpush.msra.mxu0 0.0
        %2634 = vmatpush.msra.mxu0 0.0
        %2635 = vmatpush.msra.mxu0 0.0
        %2636 = vmatpush.msra.mxu0 0.0
        %2637 = vmatpush.msra.mxu0 0.0
        %2638 = vmatpush.msra.mxu0 0.0
        %2639 = vmatpush.msra.mxu0 0.0
        %2640 = vmatpush.msra.mxu0 0.0
        %2641 = vmatpush.msra.mxu0 0.0
        %2642 = vmatpush.msra.mxu0 0.0
        %2643 = vmatpush.msra.mxu0 0.0
        %2644 = vmatpush.msra.mxu0 0.0
        %2645 = vmatpush.msra.mxu0 0.0
        %2646 = vmatpush.msra.mxu0 0.0
        %2647 = vmatpush.msra.mxu0 %v1013
        %2648 = vmatmul.f32.gmra.mxu0 %v2630
        %v2649 = vpop.f32.mrf.mxu0
        %v2650 = vadd.f32 %v1018, %v2649
        %2651 = vdwg.mxu0
        %v2652 = vtanh.pop %v2650
        %v2654 = vsel %vm1044, %v2652, 0
        %2656 = vmatpush.msra.mxu0 0.0
        %2657 = vmatpush.msra.mxu0 0.0
        %2658 = vmatpush.msra.mxu0 0.0
        %2659 = vmatpush.msra.mxu0 0.0
        %2660 = vmatpush.msra.mxu0 0.0
        %2661 = vmatpush.msra.mxu0 0.0
        %2662 = vmatpush.msra.mxu0 0.0
        %2663 = vmatpush.msra.mxu0 0.0
        %2664 = vmatpush.msra.mxu0 0.0
        %2665 = vmatpush.msra.mxu0 0.0
        %2666 = vmatpush.msra.mxu0 0.0
        %2667 = vmatpush.msra.mxu0 0.0
        %2668 = vmatpush.msra.mxu0 %v1017
        %2669 = vmatpush.msra.mxu0 %v1016
        %2670 = vmatpush.msra.mxu0 %v1015
        %2671 = vmatpush.msra.mxu0 %v1014
        %2672 = vmatmul.f32.gmra.mxu0 %v2654
        %v2673 = vpop.f32.mrf.mxu0
        %v2674 = vadd.f32 %v1019, %v2673
        %2675 = vdwg.mxu0
        %v2676 = vmul.f32 %v2674, 0.26666668
        %v2677 = vadd.f32 %v2628, %v2676
        %v2679 = vsel %vm877, %v2677, 0
        %2681 = vmatpush.msra.mxu0 0.0
        %2682 = vmatpush.msra.mxu0 0.0
        %2683 = vmatpush.msra.mxu0 0.0
        %2684 = vmatpush.msra.mxu0 0.0
        %2685 = vmatpush.msra.mxu0 0.0
        %2686 = vmatpush.msra.mxu0 0.0
        %2687 = vmatpush.msra.mxu0 0.0
        %2688 = vmatpush.msra.mxu0 0.0
        %2689 = vmatpush.msra.mxu0 0.0
        %2690 = vmatpush.msra.mxu0 0.0
        %2691 = vmatpush.msra.mxu0 0.0
        %2692 = vmatpush.msra.mxu0 0.0
        %2693 = vmatpush.msra.mxu0 0.0
        %2694 = vmatpush.msra.mxu0 0.0
        %2695 = vmatpush.msra.mxu0 0.0
        %2696 = vmatpush.msra.mxu0 %v1013
        %2697 = vmatmul.f32.gmra.mxu0 %v2679
        %v2698 = vpop.f32.mrf.mxu0
        %v2699 = vadd.f32 %v1018, %v2698
        %2700 = vdwg.mxu0
        %v2701 = vtanh.pop %v2699
        %v2703 = vsel %vm1044, %v2701, 0
        %2705 = vmatpush.msra.mxu0 0.0
        %2706 = vmatpush.msra.mxu0 0.0
        %2707 = vmatpush.msra.mxu0 0.0
        %2708 = vmatpush.msra.mxu0 0.0
        %2709 = vmatpush.msra.mxu0 0.0
        %2710 = vmatpush.msra.mxu0 0.0
        %2711 = vmatpush.msra.mxu0 0.0
        %2712 = vmatpush.msra.mxu0 0.0
        %2713 = vmatpush.msra.mxu0 0.0
        %2714 = vmatpush.msra.mxu0 0.0
        %2715 = vmatpush.msra.mxu0 0.0
        %2716 = vmatpush.msra.mxu0 0.0
        %2717 = vmatpush.msra.mxu0 %v1017
        %2718 = vmatpush.msra.mxu0 %v1016
        %2719 = vmatpush.msra.mxu0 %v1015
        %2720 = vmatpush.msra.mxu0 %v1014
        %2721 = vmatmul.f32.gmra.mxu0 %v2703
        %v2722 = vpop.f32.mrf.mxu0
        %v2723 = vadd.f32 %v1019, %v2722
        %2724 = vdwg.mxu0
        %v2725 = vmul.f32 %v2723, 0.26666668
        %v2726 = vadd.f32 %v2628, %v2725
        %v2728 = vsel %vm877, %v2726, 0
        %2730 = vmatpush.msra.mxu0 0.0
        %2731 = vmatpush.msra.mxu0 0.0
        %2732 = vmatpush.msra.mxu0 0.0
        %2733 = vmatpush.msra.mxu0 0.0
        %2734 = vmatpush.msra.mxu0 0.0
        %2735 = vmatpush.msra.mxu0 0.0
        %2736 = vmatpush.msra.mxu0 0.0
        %2737 = vmatpush.msra.mxu0 0.0
        %2738 = vmatpush.msra.mxu0 0.0
        %2739 = vmatpush.msra.mxu0 0.0
        %2740 = vmatpush.msra.mxu0 0.0
        %2741 = vmatpush.msra.mxu0 0.0
        %2742 = vmatpush.msra.mxu0 0.0
        %2743 = vmatpush.msra.mxu0 0.0
        %2744 = vmatpush.msra.mxu0 0.0
        %2745 = vmatpush.msra.mxu0 %v1013
        %2746 = vmatmul.f32.gmra.mxu0 %v2728
        %v2747 = vpop.f32.mrf.mxu0
        %v2748 = vadd.f32 %v1018, %v2747
        %2749 = vdwg.mxu0
        %v2750 = vtanh.pop %v2748
        %v2752 = vsel %vm1044, %v2750, 0
        %2754 = vmatpush.msra.mxu0 0.0
        %2755 = vmatpush.msra.mxu0 0.0
        %2756 = vmatpush.msra.mxu0 0.0
        %2757 = vmatpush.msra.mxu0 0.0
        %2758 = vmatpush.msra.mxu0 0.0
        %2759 = vmatpush.msra.mxu0 0.0
        %2760 = vmatpush.msra.mxu0 0.0
        %2761 = vmatpush.msra.mxu0 0.0
        %2762 = vmatpush.msra.mxu0 0.0
        %2763 = vmatpush.msra.mxu0 0.0
        %2764 = vmatpush.msra.mxu0 0.0
        %2765 = vmatpush.msra.mxu0 0.0
        %2766 = vmatpush.msra.mxu0 %v1017
        %2767 = vmatpush.msra.mxu0 %v1016
        %2768 = vmatpush.msra.mxu0 %v1015
        %2769 = vmatpush.msra.mxu0 %v1014
        %2770 = vmatmul.f32.gmra.mxu0 %v2752
        %v2771 = vpop.f32.mrf.mxu0
        %v2772 = vadd.f32 %v1019, %v2771
        %2773 = vdwg.mxu0
        %v2774 = vmul.f32 %v2772, 0.53333336
        %v2775 = vadd.f32 %v2628, %v2774
        %v2777 = vsel %vm877, %v2775, 0
        %2779 = vmatpush.msra.mxu0 0.0
        %2780 = vmatpush.msra.mxu0 0.0
        %2781 = vmatpush.msra.mxu0 0.0
        %2782 = vmatpush.msra.mxu0 0.0
        %2783 = vmatpush.msra.mxu0 0.0
        %2784 = vmatpush.msra.mxu0 0.0
        %2785 = vmatpush.msra.mxu0 0.0
        %2786 = vmatpush.msra.mxu0 0.0
        %2787 = vmatpush.msra.mxu0 0.0
        %2788 = vmatpush.msra.mxu0 0.0
        %2789 = vmatpush.msra.mxu0 0.0
        %2790 = vmatpush.msra.mxu0 0.0
        %2791 = vmatpush.msra.mxu0 0.0
        %2792 = vmatpush.msra.mxu0 0.0
        %2793 = vmatpush.msra.mxu0 0.0
        %2794 = vmatpush.msra.mxu0 %v1013
        %2795 = vmatmul.f32.gmra.mxu0 %v2777
        %v2796 = vpop.f32.mrf.mxu0
        %v2797 = vadd.f32 %v1018, %v2796
        %2798 = vdwg.mxu0
        %v2799 = vtanh.pop %v2797
        %v2801 = vsel %vm1044, %v2799, 0
        %2803 = vmatpush.msra.mxu0 0.0
        %2804 = vmatpush.msra.mxu0 0.0
        %2805 = vmatpush.msra.mxu0 0.0
        %2806 = vmatpush.msra.mxu0 0.0
        %2807 = vmatpush.msra.mxu0 0.0
        %2808 = vmatpush.msra.mxu0 0.0
        %2809 = vmatpush.msra.mxu0 0.0
        %2810 = vmatpush.msra.mxu0 0.0
        %2811 = vmatpush.msra.mxu0 0.0
        %2812 = vmatpush.msra.mxu0 0.0
        %2813 = vmatpush.msra.mxu0 0.0
        %2814 = vmatpush.msra.mxu0 0.0
        %2815 = vmatpush.msra.mxu0 %v1017
        %2816 = vmatpush.msra.mxu0 %v1016
        %2817 = vmatpush.msra.mxu0 %v1015
        %2818 = vmatpush.msra.mxu0 %v1014
        %2819 = vmatmul.f32.gmra.mxu0 %v2801
        %v2820 = vpop.f32.mrf.mxu0
        %v2821 = vadd.f32 %v1019, %v2820
        %2822 = vdwg.mxu0
        %v2823 = vmul.f32 %v2723, 2.0
        %v2824 = vadd.f32 %v2674, %v2823
        %v2825 = vmul.f32 %v2772, 2.0
        %v2826 = vadd.f32 %v2824, %v2825
        %v2827 = vadd.f32 %v2826, %v2821
        %v2828 = vmul.f32 %v2827, 0.08888889
        %v2829 = vadd.f32 %v2628, %v2828
        %v2831 = vsel %vm877, %v2829, 0
        %2833 = vmatpush.msra.mxu0 0.0
        %2834 = vmatpush.msra.mxu0 0.0
        %2835 = vmatpush.msra.mxu0 0.0
        %2836 = vmatpush.msra.mxu0 0.0
        %2837 = vmatpush.msra.mxu0 0.0
        %2838 = vmatpush.msra.mxu0 0.0
        %2839 = vmatpush.msra.mxu0 0.0
        %2840 = vmatpush.msra.mxu0 0.0
        %2841 = vmatpush.msra.mxu0 0.0
        %2842 = vmatpush.msra.mxu0 0.0
        %2843 = vmatpush.msra.mxu0 0.0
        %2844 = vmatpush.msra.mxu0 0.0
        %2845 = vmatpush.msra.mxu0 0.0
        %2846 = vmatpush.msra.mxu0 0.0
        %2847 = vmatpush.msra.mxu0 0.0
        %2848 = vmatpush.msra.mxu0 %v1013
        %2849 = vmatmul.f32.gmra.mxu0 %v2831
        %v2850 = vpop.f32.mrf.mxu0
        %v2851 = vadd.f32 %v1018, %v2850
        %2852 = vdwg.mxu0
        %v2853 = vtanh.pop %v2851
        %v2855 = vsel %vm1044, %v2853, 0
        %2857 = vmatpush.msra.mxu0 0.0
        %2858 = vmatpush.msra.mxu0 0.0
        %2859 = vmatpush.msra.mxu0 0.0
        %2860 = vmatpush.msra.mxu0 0.0
        %2861 = vmatpush.msra.mxu0 0.0
        %2862 = vmatpush.msra.mxu0 0.0
        %2863 = vmatpush.msra.mxu0 0.0
        %2864 = vmatpush.msra.mxu0 0.0
        %2865 = vmatpush.msra.mxu0 0.0
        %2866 = vmatpush.msra.mxu0 0.0
        %2867 = vmatpush.msra.mxu0 0.0
        %2868 = vmatpush.msra.mxu0 0.0
        %2869 = vmatpush.msra.mxu0 %v1017
        %2870 = vmatpush.msra.mxu0 %v1016
        %2871 = vmatpush.msra.mxu0 %v1015
        %2872 = vmatpush.msra.mxu0 %v1014
        %2873 = vmatmul.f32.gmra.mxu0 %v2855
        %v2874 = vpop.f32.mrf.mxu0
        %v2875 = vadd.f32 %v1019, %v2874
        %2876 = vdwg.mxu0
        %v2877 = vmul.f32 %v2875, 0.26666668
        %v2878 = vadd.f32 %v2829, %v2877
        %v2880 = vsel %vm877, %v2878, 0
        %2882 = vmatpush.msra.mxu0 0.0
        %2883 = vmatpush.msra.mxu0 0.0
        %2884 = vmatpush.msra.mxu0 0.0
        %2885 = vmatpush.msra.mxu0 0.0
        %2886 = vmatpush.msra.mxu0 0.0
        %2887 = vmatpush.msra.mxu0 0.0
        %2888 = vmatpush.msra.mxu0 0.0
        %2889 = vmatpush.msra.mxu0 0.0
        %2890 = vmatpush.msra.mxu0 0.0
        %2891 = vmatpush.msra.mxu0 0.0
        %2892 = vmatpush.msra.mxu0 0.0
        %2893 = vmatpush.msra.mxu0 0.0
        %2894 = vmatpush.msra.mxu0 0.0
        %2895 = vmatpush.msra.mxu0 0.0
        %2896 = vmatpush.msra.mxu0 0.0
        %2897 = vmatpush.msra.mxu0 %v1013
        %2898 = vmatmul.f32.gmra.mxu0 %v2880
        %v2899 = vpop.f32.mrf.mxu0
        %v2900 = vadd.f32 %v1018, %v2899
        %2901 = vdwg.mxu0
        %v2902 = vtanh.pop %v2900
        %v2904 = vsel %vm1044, %v2902, 0
        %2906 = vmatpush.msra.mxu0 0.0
        %2907 = vmatpush.msra.mxu0 0.0
        %2908 = vmatpush.msra.mxu0 0.0
        %2909 = vmatpush.msra.mxu0 0.0
        %2910 = vmatpush.msra.mxu0 0.0
        %2911 = vmatpush.msra.mxu0 0.0
        %2912 = vmatpush.msra.mxu0 0.0
        %2913 = vmatpush.msra.mxu0 0.0
        %2914 = vmatpush.msra.mxu0 0.0
        %2915 = vmatpush.msra.mxu0 0.0
        %2916 = vmatpush.msra.mxu0 0.0
        %2917 = vmatpush.msra.mxu0 0.0
        %2918 = vmatpush.msra.mxu0 %v1017
        %2919 = vmatpush.msra.mxu0 %v1016
        %2920 = vmatpush.msra.mxu0 %v1015
        %2921 = vmatpush.msra.mxu0 %v1014
        %2922 = vmatmul.f32.gmra.mxu0 %v2904
        %v2923 = vpop.f32.mrf.mxu0
        %v2924 = vadd.f32 %v1019, %v2923
        %2925 = vdwg.mxu0
        %v2926 = vmul.f32 %v2924, 0.26666668
        %v2927 = vadd.f32 %v2829, %v2926
        %v2929 = vsel %vm877, %v2927, 0
        %2931 = vmatpush.msra.mxu0 0.0
        %2932 = vmatpush.msra.mxu0 0.0
        %2933 = vmatpush.msra.mxu0 0.0
        %2934 = vmatpush.msra.mxu0 0.0
        %2935 = vmatpush.msra.mxu0 0.0
        %2936 = vmatpush.msra.mxu0 0.0
        %2937 = vmatpush.msra.mxu0 0.0
        %2938 = vmatpush.msra.mxu0 0.0
        %2939 = vmatpush.msra.mxu0 0.0
        %2940 = vmatpush.msra.mxu0 0.0
        %2941 = vmatpush.msra.mxu0 0.0
        %2942 = vmatpush.msra.mxu0 0.0
        %2943 = vmatpush.msra.mxu0 0.0
        %2944 = vmatpush.msra.mxu0 0.0
        %2945 = vmatpush.msra.mxu0 0.0
        %2946 = vmatpush.msra.mxu0 %v1013
        %2947 = vmatmul.f32.gmra.mxu0 %v2929
        %v2948 = vpop.f32.mrf.mxu0
        %v2949 = vadd.f32 %v1018, %v2948
        %2950 = vdwg.mxu0
        %v2951 = vtanh.pop %v2949
        %v2953 = vsel %vm1044, %v2951, 0
        %2955 = vmatpush.msra.mxu0 0.0
        %2956 = vmatpush.msra.mxu0 0.0
        %2957 = vmatpush.msra.mxu0 0.0
        %2958 = vmatpush.msra.mxu0 0.0
        %2959 = vmatpush.msra.mxu0 0.0
        %2960 = vmatpush.msra.mxu0 0.0
        %2961 = vmatpush.msra.mxu0 0.0
        %2962 = vmatpush.msra.mxu0 0.0
        %2963 = vmatpush.msra.mxu0 0.0
        %2964 = vmatpush.msra.mxu0 0.0
        %2965 = vmatpush.msra.mxu0 0.0
        %2966 = vmatpush.msra.mxu0 0.0
        %2967 = vmatpush.msra.mxu0 %v1017
        %2968 = vmatpush.msra.mxu0 %v1016
        %2969 = vmatpush.msra.mxu0 %v1015
        %2970 = vmatpush.msra.mxu0 %v1014
        %2971 = vmatmul.f32.gmra.mxu0 %v2953
        %v2972 = vpop.f32.mrf.mxu0
        %v2973 = vadd.f32 %v1019, %v2972
        %2974 = vdwg.mxu0
        %v2975 = vmul.f32 %v2973, 0.53333336
        %v2976 = vadd.f32 %v2829, %v2975
        %v2978 = vsel %vm877, %v2976, 0
        %2980 = vmatpush.msra.mxu0 0.0
        %2981 = vmatpush.msra.mxu0 0.0
        %2982 = vmatpush.msra.mxu0 0.0
        %2983 = vmatpush.msra.mxu0 0.0
        %2984 = vmatpush.msra.mxu0 0.0
        %2985 = vmatpush.msra.mxu0 0.0
        %2986 = vmatpush.msra.mxu0 0.0
        %2987 = vmatpush.msra.mxu0 0.0
        %2988 = vmatpush.msra.mxu0 0.0
        %2989 = vmatpush.msra.mxu0 0.0
        %2990 = vmatpush.msra.mxu0 0.0
        %2991 = vmatpush.msra.mxu0 0.0
        %2992 = vmatpush.msra.mxu0 0.0
        %2993 = vmatpush.msra.mxu0 0.0
        %2994 = vmatpush.msra.mxu0 0.0
        %2995 = vmatpush.msra.mxu0 %v1013
        %2996 = vmatmul.f32.gmra.mxu0 %v2978
        %v2997 = vpop.f32.mrf.mxu0
        %v2998 = vadd.f32 %v1018, %v2997
        %2999 = vdwg.mxu0
        %v3000 = vtanh.pop %v2998
        %v3002 = vsel %vm1044, %v3000, 0
        %3004 = vmatpush.msra.mxu0 0.0
        %3005 = vmatpush.msra.mxu0 0.0
        %3006 = vmatpush.msra.mxu0 0.0
        %3007 = vmatpush.msra.mxu0 0.0
        %3008 = vmatpush.msra.mxu0 0.0
        %3009 = vmatpush.msra.mxu0 0.0
        %3010 = vmatpush.msra.mxu0 0.0
        %3011 = vmatpush.msra.mxu0 0.0
        %3012 = vmatpush.msra.mxu0 0.0
        %3013 = vmatpush.msra.mxu0 0.0
        %3014 = vmatpush.msra.mxu0 0.0
        %3015 = vmatpush.msra.mxu0 0.0
        %3016 = vmatpush.msra.mxu0 %v1017
        %3017 = vmatpush.msra.mxu0 %v1016
        %3018 = vmatpush.msra.mxu0 %v1015
        %3019 = vmatpush.msra.mxu0 %v1014
        %3020 = vmatmul.f32.gmra.mxu0 %v3002
        %v3021 = vpop.f32.mrf.mxu0
        %v3022 = vadd.f32 %v1019, %v3021
        %3023 = vdwg.mxu0
        %v3024 = vmul.f32 %v2924, 2.0
        %v3025 = vadd.f32 %v2875, %v3024
        %v3026 = vmul.f32 %v2973, 2.0
        %v3027 = vadd.f32 %v3025, %v3026
        %v3028 = vadd.f32 %v3027, %v3022
        %v3029 = vmul.f32 %v3028, 0.08888889
        %v3030 = vadd.f32 %v2829, %v3029
        %v3032 = vsel %vm877, %v3030, 0
        %3034 = vmatpush.msra.mxu0 0.0
        %3035 = vmatpush.msra.mxu0 0.0
        %3036 = vmatpush.msra.mxu0 0.0
        %3037 = vmatpush.msra.mxu0 0.0
        %3038 = vmatpush.msra.mxu0 0.0
        %3039 = vmatpush.msra.mxu0 0.0
        %3040 = vmatpush.msra.mxu0 0.0
        %3041 = vmatpush.msra.mxu0 0.0
        %3042 = vmatpush.msra.mxu0 0.0
        %3043 = vmatpush.msra.mxu0 0.0
        %3044 = vmatpush.msra.mxu0 0.0
        %3045 = vmatpush.msra.mxu0 0.0
        %3046 = vmatpush.msra.mxu0 0.0
        %3047 = vmatpush.msra.mxu0 0.0
        %3048 = vmatpush.msra.mxu0 0.0
        %3049 = vmatpush.msra.mxu0 %v1013
        %3050 = vmatmul.f32.gmra.mxu0 %v3032
        %v3051 = vpop.f32.mrf.mxu0
        %v3052 = vadd.f32 %v1018, %v3051
        %3053 = vdwg.mxu0
        %v3054 = vtanh.pop %v3052
        %v3056 = vsel %vm1044, %v3054, 0
        %3058 = vmatpush.msra.mxu0 0.0
        %3059 = vmatpush.msra.mxu0 0.0
        %3060 = vmatpush.msra.mxu0 0.0
        %3061 = vmatpush.msra.mxu0 0.0
        %3062 = vmatpush.msra.mxu0 0.0
        %3063 = vmatpush.msra.mxu0 0.0
        %3064 = vmatpush.msra.mxu0 0.0
        %3065 = vmatpush.msra.mxu0 0.0
        %3066 = vmatpush.msra.mxu0 0.0
        %3067 = vmatpush.msra.mxu0 0.0
        %3068 = vmatpush.msra.mxu0 0.0
        %3069 = vmatpush.msra.mxu0 0.0
        %3070 = vmatpush.msra.mxu0 %v1017
        %3071 = vmatpush.msra.mxu0 %v1016
        %3072 = vmatpush.msra.mxu0 %v1015
        %3073 = vmatpush.msra.mxu0 %v1014
        %3074 = vmatmul.f32.gmra.mxu0 %v3056
        %v3075 = vpop.f32.mrf.mxu0
        %v3076 = vadd.f32 %v1019, %v3075
        %3077 = vdwg.mxu0
        %v3078 = vmul.f32 %v3076, 0.26666668
        %v3079 = vadd.f32 %v3030, %v3078
        %v3081 = vsel %vm877, %v3079, 0
        %3083 = vmatpush.msra.mxu0 0.0
        %3084 = vmatpush.msra.mxu0 0.0
        %3085 = vmatpush.msra.mxu0 0.0
        %3086 = vmatpush.msra.mxu0 0.0
        %3087 = vmatpush.msra.mxu0 0.0
        %3088 = vmatpush.msra.mxu0 0.0
        %3089 = vmatpush.msra.mxu0 0.0
        %3090 = vmatpush.msra.mxu0 0.0
        %3091 = vmatpush.msra.mxu0 0.0
        %3092 = vmatpush.msra.mxu0 0.0
        %3093 = vmatpush.msra.mxu0 0.0
        %3094 = vmatpush.msra.mxu0 0.0
        %3095 = vmatpush.msra.mxu0 0.0
        %3096 = vmatpush.msra.mxu0 0.0
        %3097 = vmatpush.msra.mxu0 0.0
        %3098 = vmatpush.msra.mxu0 %v1013
        %3099 = vmatmul.f32.gmra.mxu0 %v3081
        %v3100 = vpop.f32.mrf.mxu0
        %v3101 = vadd.f32 %v1018, %v3100
        %3102 = vdwg.mxu0
        %v3103 = vtanh.pop %v3101
        %v3105 = vsel %vm1044, %v3103, 0
        %3107 = vmatpush.msra.mxu0 0.0
        %3108 = vmatpush.msra.mxu0 0.0
        %3109 = vmatpush.msra.mxu0 0.0
        %3110 = vmatpush.msra.mxu0 0.0
        %3111 = vmatpush.msra.mxu0 0.0
        %3112 = vmatpush.msra.mxu0 0.0
        %3113 = vmatpush.msra.mxu0 0.0
        %3114 = vmatpush.msra.mxu0 0.0
        %3115 = vmatpush.msra.mxu0 0.0
        %3116 = vmatpush.msra.mxu0 0.0
        %3117 = vmatpush.msra.mxu0 0.0
        %3118 = vmatpush.msra.mxu0 0.0
        %3119 = vmatpush.msra.mxu0 %v1017
        %3120 = vmatpush.msra.mxu0 %v1016
        %3121 = vmatpush.msra.mxu0 %v1015
        %3122 = vmatpush.msra.mxu0 %v1014
        %3123 = vmatmul.f32.gmra.mxu0 %v3105
        %v3124 = vpop.f32.mrf.mxu0
        %v3125 = vadd.f32 %v1019, %v3124
        %3126 = vdwg.mxu0
        %v3127 = vmul.f32 %v3125, 0.26666668
        %v3128 = vadd.f32 %v3030, %v3127
        %v3130 = vsel %vm877, %v3128, 0
        %3132 = vmatpush.msra.mxu0 0.0
        %3133 = vmatpush.msra.mxu0 0.0
        %3134 = vmatpush.msra.mxu0 0.0
        %3135 = vmatpush.msra.mxu0 0.0
        %3136 = vmatpush.msra.mxu0 0.0
        %3137 = vmatpush.msra.mxu0 0.0
        %3138 = vmatpush.msra.mxu0 0.0
        %3139 = vmatpush.msra.mxu0 0.0
        %3140 = vmatpush.msra.mxu0 0.0
        %3141 = vmatpush.msra.mxu0 0.0
        %3142 = vmatpush.msra.mxu0 0.0
        %3143 = vmatpush.msra.mxu0 0.0
        %3144 = vmatpush.msra.mxu0 0.0
        %3145 = vmatpush.msra.mxu0 0.0
        %3146 = vmatpush.msra.mxu0 0.0
        %3147 = vmatpush.msra.mxu0 %v1013
        %3148 = vmatmul.f32.gmra.mxu0 %v3130
        %v3149 = vpop.f32.mrf.mxu0
        %v3150 = vadd.f32 %v1018, %v3149
        %3151 = vdwg.mxu0
        %v3152 = vtanh.pop %v3150
        %v3154 = vsel %vm1044, %v3152, 0
        %3156 = vmatpush.msra.mxu0 0.0
        %3157 = vmatpush.msra.mxu0 0.0
        %3158 = vmatpush.msra.mxu0 0.0
        %3159 = vmatpush.msra.mxu0 0.0
        %3160 = vmatpush.msra.mxu0 0.0
        %3161 = vmatpush.msra.mxu0 0.0
        %3162 = vmatpush.msra.mxu0 0.0
        %3163 = vmatpush.msra.mxu0 0.0
        %3164 = vmatpush.msra.mxu0 0.0
        %3165 = vmatpush.msra.mxu0 0.0
        %3166 = vmatpush.msra.mxu0 0.0
        %3167 = vmatpush.msra.mxu0 0.0
        %3168 = vmatpush.msra.mxu0 %v1017
        %3169 = vmatpush.msra.mxu0 %v1016
        %3170 = vmatpush.msra.mxu0 %v1015
        %3171 = vmatpush.msra.mxu0 %v1014
        %3172 = vmatmul.f32.gmra.mxu0 %v3154
        %v3173 = vpop.f32.mrf.mxu0
        %v3174 = vadd.f32 %v1019, %v3173
        %3175 = vdwg.mxu0
        %v3176 = vmul.f32 %v3174, 0.53333336
        %v3177 = vadd.f32 %v3030, %v3176
        %v3179 = vsel %vm877, %v3177, 0
        %3181 = vmatpush.msra.mxu0 0.0
        %3182 = vmatpush.msra.mxu0 0.0
        %3183 = vmatpush.msra.mxu0 0.0
        %3184 = vmatpush.msra.mxu0 0.0
        %3185 = vmatpush.msra.mxu0 0.0
        %3186 = vmatpush.msra.mxu0 0.0
        %3187 = vmatpush.msra.mxu0 0.0
        %3188 = vmatpush.msra.mxu0 0.0
        %3189 = vmatpush.msra.mxu0 0.0
        %3190 = vmatpush.msra.mxu0 0.0
        %3191 = vmatpush.msra.mxu0 0.0
        %3192 = vmatpush.msra.mxu0 0.0
        %3193 = vmatpush.msra.mxu0 0.0
        %3194 = vmatpush.msra.mxu0 0.0
        %3195 = vmatpush.msra.mxu0 0.0
        %3196 = vmatpush.msra.mxu0 %v1013
        %3197 = vmatmul.f32.gmra.mxu0 %v3179
        %v3198 = vpop.f32.mrf.mxu0
        %v3199 = vadd.f32 %v1018, %v3198
        %3200 = vdwg.mxu0
        %v3201 = vtanh.pop %v3199
        %v3203 = vsel %vm1044, %v3201, 0
        %3205 = vmatpush.msra.mxu0 0.0
        %3206 = vmatpush.msra.mxu0 0.0
        %3207 = vmatpush.msra.mxu0 0.0
        %3208 = vmatpush.msra.mxu0 0.0
        %3209 = vmatpush.msra.mxu0 0.0
        %3210 = vmatpush.msra.mxu0 0.0
        %3211 = vmatpush.msra.mxu0 0.0
        %3212 = vmatpush.msra.mxu0 0.0
        %3213 = vmatpush.msra.mxu0 0.0
        %3214 = vmatpush.msra.mxu0 0.0
        %3215 = vmatpush.msra.mxu0 0.0
        %3216 = vmatpush.msra.mxu0 0.0
        %3217 = vmatpush.msra.mxu0 %v1017
        %3218 = vmatpush.msra.mxu0 %v1016
        %3219 = vmatpush.msra.mxu0 %v1015
        %3220 = vmatpush.msra.mxu0 %v1014
        %3221 = vmatmul.f32.gmra.mxu0 %v3203
        %v3222 = vpop.f32.mrf.mxu0
        %v3223 = vadd.f32 %v1019, %v3222
        %3224 = vdwg.mxu0
        %v3225 = vmul.f32 %v3125, 2.0
        %v3226 = vadd.f32 %v3076, %v3225
        %v3227 = vmul.f32 %v3174, 2.0
        %v3228 = vadd.f32 %v3226, %v3227
        %v3229 = vadd.f32 %v3228, %v3223
        %v3230 = vmul.f32 %v3229, 0.08888889
        %v3231 = vadd.f32 %v3030, %v3230
        %v3233 = vsel %vm877, %v3231, 0
        %3235 = vmatpush.msra.mxu0 0.0
        %3236 = vmatpush.msra.mxu0 0.0
        %3237 = vmatpush.msra.mxu0 0.0
        %3238 = vmatpush.msra.mxu0 0.0
        %3239 = vmatpush.msra.mxu0 0.0
        %3240 = vmatpush.msra.mxu0 0.0
        %3241 = vmatpush.msra.mxu0 0.0
        %3242 = vmatpush.msra.mxu0 0.0
        %3243 = vmatpush.msra.mxu0 0.0
        %3244 = vmatpush.msra.mxu0 0.0
        %3245 = vmatpush.msra.mxu0 0.0
        %3246 = vmatpush.msra.mxu0 0.0
        %3247 = vmatpush.msra.mxu0 0.0
        %3248 = vmatpush.msra.mxu0 0.0
        %3249 = vmatpush.msra.mxu0 0.0
        %3250 = vmatpush.msra.mxu0 %v1013
        %3251 = vmatmul.f32.gmra.mxu0 %v3233
        %v3252 = vpop.f32.mrf.mxu0
        %v3253 = vadd.f32 %v1018, %v3252
        %3254 = vdwg.mxu0
        %v3255 = vtanh.pop %v3253
        %v3257 = vsel %vm1044, %v3255, 0
        %3259 = vmatpush.msra.mxu0 0.0
        %3260 = vmatpush.msra.mxu0 0.0
        %3261 = vmatpush.msra.mxu0 0.0
        %3262 = vmatpush.msra.mxu0 0.0
        %3263 = vmatpush.msra.mxu0 0.0
        %3264 = vmatpush.msra.mxu0 0.0
        %3265 = vmatpush.msra.mxu0 0.0
        %3266 = vmatpush.msra.mxu0 0.0
        %3267 = vmatpush.msra.mxu0 0.0
        %3268 = vmatpush.msra.mxu0 0.0
        %3269 = vmatpush.msra.mxu0 0.0
        %3270 = vmatpush.msra.mxu0 0.0
        %3271 = vmatpush.msra.mxu0 %v1017
        %3272 = vmatpush.msra.mxu0 %v1016
        %3273 = vmatpush.msra.mxu0 %v1015
        %3274 = vmatpush.msra.mxu0 %v1014
        %3275 = vmatmul.f32.gmra.mxu0 %v3257
        %v3276 = vpop.f32.mrf.mxu0
        %v3277 = vadd.f32 %v1019, %v3276
        %3278 = vdwg.mxu0
        %v3279 = vmul.f32 %v3277, 0.26666668
        %v3280 = vadd.f32 %v3231, %v3279
        %v3282 = vsel %vm877, %v3280, 0
        %3284 = vmatpush.msra.mxu0 0.0
        %3285 = vmatpush.msra.mxu0 0.0
        %3286 = vmatpush.msra.mxu0 0.0
        %3287 = vmatpush.msra.mxu0 0.0
        %3288 = vmatpush.msra.mxu0 0.0
        %3289 = vmatpush.msra.mxu0 0.0
        %3290 = vmatpush.msra.mxu0 0.0
        %3291 = vmatpush.msra.mxu0 0.0
        %3292 = vmatpush.msra.mxu0 0.0
        %3293 = vmatpush.msra.mxu0 0.0
        %3294 = vmatpush.msra.mxu0 0.0
        %3295 = vmatpush.msra.mxu0 0.0
        %3296 = vmatpush.msra.mxu0 0.0
        %3297 = vmatpush.msra.mxu0 0.0
        %3298 = vmatpush.msra.mxu0 0.0
        %3299 = vmatpush.msra.mxu0 %v1013
        %3300 = vmatmul.f32.gmra.mxu0 %v3282
        %v3301 = vpop.f32.mrf.mxu0
        %v3302 = vadd.f32 %v1018, %v3301
        %3303 = vdwg.mxu0
        %v3304 = vtanh.pop %v3302
        %v3306 = vsel %vm1044, %v3304, 0
        %3308 = vmatpush.msra.mxu0 0.0
        %3309 = vmatpush.msra.mxu0 0.0
        %3310 = vmatpush.msra.mxu0 0.0
        %3311 = vmatpush.msra.mxu0 0.0
        %3312 = vmatpush.msra.mxu0 0.0
        %3313 = vmatpush.msra.mxu0 0.0
        %3314 = vmatpush.msra.mxu0 0.0
        %3315 = vmatpush.msra.mxu0 0.0
        %3316 = vmatpush.msra.mxu0 0.0
        %3317 = vmatpush.msra.mxu0 0.0
        %3318 = vmatpush.msra.mxu0 0.0
        %3319 = vmatpush.msra.mxu0 0.0
        %3320 = vmatpush.msra.mxu0 %v1017
        %3321 = vmatpush.msra.mxu0 %v1016
        %3322 = vmatpush.msra.mxu0 %v1015
        %3323 = vmatpush.msra.mxu0 %v1014
        %3324 = vmatmul.f32.gmra.mxu0 %v3306
        %v3325 = vpop.f32.mrf.mxu0
        %v3326 = vadd.f32 %v1019, %v3325
        %3327 = vdwg.mxu0
        %v3328 = vmul.f32 %v3326, 0.26666668
        %v3329 = vadd.f32 %v3231, %v3328
        %v3331 = vsel %vm877, %v3329, 0
        %3333 = vmatpush.msra.mxu0 0.0
        %3334 = vmatpush.msra.mxu0 0.0
        %3335 = vmatpush.msra.mxu0 0.0
        %3336 = vmatpush.msra.mxu0 0.0
        %3337 = vmatpush.msra.mxu0 0.0
        %3338 = vmatpush.msra.mxu0 0.0
        %3339 = vmatpush.msra.mxu0 0.0
        %3340 = vmatpush.msra.mxu0 0.0
        %3341 = vmatpush.msra.mxu0 0.0
        %3342 = vmatpush.msra.mxu0 0.0
        %3343 = vmatpush.msra.mxu0 0.0
        %3344 = vmatpush.msra.mxu0 0.0
        %3345 = vmatpush.msra.mxu0 0.0
        %3346 = vmatpush.msra.mxu0 0.0
        %3347 = vmatpush.msra.mxu0 0.0
        %3348 = vmatpush.msra.mxu0 %v1013
        %3349 = vmatmul.f32.gmra.mxu0 %v3331
        %v3350 = vpop.f32.mrf.mxu0
        %v3351 = vadd.f32 %v1018, %v3350
        %3352 = vdwg.mxu0
        %v3353 = vtanh.pop %v3351
        %v3355 = vsel %vm1044, %v3353, 0
        %3357 = vmatpush.msra.mxu0 0.0
        %3358 = vmatpush.msra.mxu0 0.0
        %3359 = vmatpush.msra.mxu0 0.0
        %3360 = vmatpush.msra.mxu0 0.0
        %3361 = vmatpush.msra.mxu0 0.0
        %3362 = vmatpush.msra.mxu0 0.0
        %3363 = vmatpush.msra.mxu0 0.0
        %3364 = vmatpush.msra.mxu0 0.0
        %3365 = vmatpush.msra.mxu0 0.0
        %3366 = vmatpush.msra.mxu0 0.0
        %3367 = vmatpush.msra.mxu0 0.0
        %3368 = vmatpush.msra.mxu0 0.0
        %3369 = vmatpush.msra.mxu0 %v1017
        %3370 = vmatpush.msra.mxu0 %v1016
        %3371 = vmatpush.msra.mxu0 %v1015
        %3372 = vmatpush.msra.mxu0 %v1014
        %3373 = vmatmul.f32.gmra.mxu0 %v3355
        %v3374 = vpop.f32.mrf.mxu0
        %v3375 = vadd.f32 %v1019, %v3374
        %3376 = vdwg.mxu0
        %v3377 = vmul.f32 %v3375, 0.53333336
        %v3378 = vadd.f32 %v3231, %v3377
        %v3380 = vsel %vm877, %v3378, 0
        %3382 = vmatpush.msra.mxu0 0.0
        %3383 = vmatpush.msra.mxu0 0.0
        %3384 = vmatpush.msra.mxu0 0.0
        %3385 = vmatpush.msra.mxu0 0.0
        %3386 = vmatpush.msra.mxu0 0.0
        %3387 = vmatpush.msra.mxu0 0.0
        %3388 = vmatpush.msra.mxu0 0.0
        %3389 = vmatpush.msra.mxu0 0.0
        %3390 = vmatpush.msra.mxu0 0.0
        %3391 = vmatpush.msra.mxu0 0.0
        %3392 = vmatpush.msra.mxu0 0.0
        %3393 = vmatpush.msra.mxu0 0.0
        %3394 = vmatpush.msra.mxu0 0.0
        %3395 = vmatpush.msra.mxu0 0.0
        %3396 = vmatpush.msra.mxu0 0.0
        %3397 = vmatpush.msra.mxu0 %v1013
        %3398 = vmatmul.f32.gmra.mxu0 %v3380
        %v3399 = vpop.f32.mrf.mxu0
        %v3400 = vadd.f32 %v1018, %v3399
        %3401 = vdwg.mxu0
        %v3402 = vtanh.pop %v3400
        %v3404 = vsel %vm1044, %v3402, 0
        %3406 = vmatpush.msra.mxu0 0.0
        %3407 = vmatpush.msra.mxu0 0.0
        %3408 = vmatpush.msra.mxu0 0.0
        %3409 = vmatpush.msra.mxu0 0.0
        %3410 = vmatpush.msra.mxu0 0.0
        %3411 = vmatpush.msra.mxu0 0.0
        %3412 = vmatpush.msra.mxu0 0.0
        %3413 = vmatpush.msra.mxu0 0.0
        %3414 = vmatpush.msra.mxu0 0.0
        %3415 = vmatpush.msra.mxu0 0.0
        %3416 = vmatpush.msra.mxu0 0.0
        %3417 = vmatpush.msra.mxu0 0.0
        %3418 = vmatpush.msra.mxu0 %v1017
        %3419 = vmatpush.msra.mxu0 %v1016
        %3420 = vmatpush.msra.mxu0 %v1015
        %3421 = vmatpush.msra.mxu0 %v1014
        %3422 = vmatmul.f32.gmra.mxu0 %v3404
        %v3423 = vpop.f32.mrf.mxu0
        %v3424 = vadd.f32 %v1019, %v3423
        %3425 = vdwg.mxu0
        %v3426 = vmul.f32 %v3326, 2.0
        %v3427 = vadd.f32 %v3277, %v3426
        %v3428 = vmul.f32 %v3375, 2.0
        %v3429 = vadd.f32 %v3427, %v3428
        %v3430 = vadd.f32 %v3429, %v3424
        %v3431 = vmul.f32 %v3430, 0.08888889
        %v3432 = vadd.f32 %v3231, %v3431
        %v3434 = vsel %vm877, %v3432, 0
        %3436 = vmatpush.msra.mxu0 0.0
        %3437 = vmatpush.msra.mxu0 0.0
        %3438 = vmatpush.msra.mxu0 0.0
        %3439 = vmatpush.msra.mxu0 0.0
        %3440 = vmatpush.msra.mxu0 0.0
        %3441 = vmatpush.msra.mxu0 0.0
        %3442 = vmatpush.msra.mxu0 0.0
        %3443 = vmatpush.msra.mxu0 0.0
        %3444 = vmatpush.msra.mxu0 0.0
        %3445 = vmatpush.msra.mxu0 0.0
        %3446 = vmatpush.msra.mxu0 0.0
        %3447 = vmatpush.msra.mxu0 0.0
        %3448 = vmatpush.msra.mxu0 0.0
        %3449 = vmatpush.msra.mxu0 0.0
        %3450 = vmatpush.msra.mxu0 0.0
        %3451 = vmatpush.msra.mxu0 %v1013
        %3452 = vmatmul.f32.gmra.mxu0 %v3434
        %v3453 = vpop.f32.mrf.mxu0
        %v3454 = vadd.f32 %v1018, %v3453
        %3455 = vdwg.mxu0
        %v3456 = vtanh.pop %v3454
        %v3458 = vsel %vm1044, %v3456, 0
        %3460 = vmatpush.msra.mxu0 0.0
        %3461 = vmatpush.msra.mxu0 0.0
        %3462 = vmatpush.msra.mxu0 0.0
        %3463 = vmatpush.msra.mxu0 0.0
        %3464 = vmatpush.msra.mxu0 0.0
        %3465 = vmatpush.msra.mxu0 0.0
        %3466 = vmatpush.msra.mxu0 0.0
        %3467 = vmatpush.msra.mxu0 0.0
        %3468 = vmatpush.msra.mxu0 0.0
        %3469 = vmatpush.msra.mxu0 0.0
        %3470 = vmatpush.msra.mxu0 0.0
        %3471 = vmatpush.msra.mxu0 0.0
        %3472 = vmatpush.msra.mxu0 %v1017
        %3473 = vmatpush.msra.mxu0 %v1016
        %3474 = vmatpush.msra.mxu0 %v1015
        %3475 = vmatpush.msra.mxu0 %v1014
        %3476 = vmatmul.f32.gmra.mxu0 %v3458
        %v3477 = vpop.f32.mrf.mxu0
        %v3478 = vadd.f32 %v1019, %v3477
        %3479 = vdwg.mxu0
        %v3480 = vmul.f32 %v3478, 0.26666668
        %v3481 = vadd.f32 %v3432, %v3480
        %v3483 = vsel %vm877, %v3481, 0
        %3485 = vmatpush.msra.mxu0 0.0
        %3486 = vmatpush.msra.mxu0 0.0
        %3487 = vmatpush.msra.mxu0 0.0
        %3488 = vmatpush.msra.mxu0 0.0
        %3489 = vmatpush.msra.mxu0 0.0
        %3490 = vmatpush.msra.mxu0 0.0
        %3491 = vmatpush.msra.mxu0 0.0
        %3492 = vmatpush.msra.mxu0 0.0
        %3493 = vmatpush.msra.mxu0 0.0
        %3494 = vmatpush.msra.mxu0 0.0
        %3495 = vmatpush.msra.mxu0 0.0
        %3496 = vmatpush.msra.mxu0 0.0
        %3497 = vmatpush.msra.mxu0 0.0
        %3498 = vmatpush.msra.mxu0 0.0
        %3499 = vmatpush.msra.mxu0 0.0
        %3500 = vmatpush.msra.mxu0 %v1013
        %3501 = vmatmul.f32.gmra.mxu0 %v3483
        %v3502 = vpop.f32.mrf.mxu0
        %v3503 = vadd.f32 %v1018, %v3502
        %3504 = vdwg.mxu0
        %v3505 = vtanh.pop %v3503
        %v3507 = vsel %vm1044, %v3505, 0
        %3509 = vmatpush.msra.mxu0 0.0
        %3510 = vmatpush.msra.mxu0 0.0
        %3511 = vmatpush.msra.mxu0 0.0
        %3512 = vmatpush.msra.mxu0 0.0
        %3513 = vmatpush.msra.mxu0 0.0
        %3514 = vmatpush.msra.mxu0 0.0
        %3515 = vmatpush.msra.mxu0 0.0
        %3516 = vmatpush.msra.mxu0 0.0
        %3517 = vmatpush.msra.mxu0 0.0
        %3518 = vmatpush.msra.mxu0 0.0
        %3519 = vmatpush.msra.mxu0 0.0
        %3520 = vmatpush.msra.mxu0 0.0
        %3521 = vmatpush.msra.mxu0 %v1017
        %3522 = vmatpush.msra.mxu0 %v1016
        %3523 = vmatpush.msra.mxu0 %v1015
        %3524 = vmatpush.msra.mxu0 %v1014
        %3525 = vmatmul.f32.gmra.mxu0 %v3507
        %v3526 = vpop.f32.mrf.mxu0
        %v3527 = vadd.f32 %v1019, %v3526
        %3528 = vdwg.mxu0
        %v3529 = vmul.f32 %v3527, 0.26666668
        %v3530 = vadd.f32 %v3432, %v3529
        %v3532 = vsel %vm877, %v3530, 0
        %3534 = vmatpush.msra.mxu0 0.0
        %3535 = vmatpush.msra.mxu0 0.0
        %3536 = vmatpush.msra.mxu0 0.0
        %3537 = vmatpush.msra.mxu0 0.0
        %3538 = vmatpush.msra.mxu0 0.0
        %3539 = vmatpush.msra.mxu0 0.0
        %3540 = vmatpush.msra.mxu0 0.0
        %3541 = vmatpush.msra.mxu0 0.0
        %3542 = vmatpush.msra.mxu0 0.0
        %3543 = vmatpush.msra.mxu0 0.0
        %3544 = vmatpush.msra.mxu0 0.0
        %3545 = vmatpush.msra.mxu0 0.0
        %3546 = vmatpush.msra.mxu0 0.0
        %3547 = vmatpush.msra.mxu0 0.0
        %3548 = vmatpush.msra.mxu0 0.0
        %3549 = vmatpush.msra.mxu0 %v1013
        %3550 = vmatmul.f32.gmra.mxu0 %v3532
        %v3551 = vpop.f32.mrf.mxu0
        %v3552 = vadd.f32 %v1018, %v3551
        %3553 = vdwg.mxu0
        %v3554 = vtanh.pop %v3552
        %v3556 = vsel %vm1044, %v3554, 0
        %3558 = vmatpush.msra.mxu0 0.0
        %3559 = vmatpush.msra.mxu0 0.0
        %3560 = vmatpush.msra.mxu0 0.0
        %3561 = vmatpush.msra.mxu0 0.0
        %3562 = vmatpush.msra.mxu0 0.0
        %3563 = vmatpush.msra.mxu0 0.0
        %3564 = vmatpush.msra.mxu0 0.0
        %3565 = vmatpush.msra.mxu0 0.0
        %3566 = vmatpush.msra.mxu0 0.0
        %3567 = vmatpush.msra.mxu0 0.0
        %3568 = vmatpush.msra.mxu0 0.0
        %3569 = vmatpush.msra.mxu0 0.0
        %3570 = vmatpush.msra.mxu0 %v1017
        %3571 = vmatpush.msra.mxu0 %v1016
        %3572 = vmatpush.msra.mxu0 %v1015
        %3573 = vmatpush.msra.mxu0 %v1014
        %3574 = vmatmul.f32.gmra.mxu0 %v3556
        %v3575 = vpop.f32.mrf.mxu0
        %v3576 = vadd.f32 %v1019, %v3575
        %3577 = vdwg.mxu0
        %v3578 = vmul.f32 %v3576, 0.53333336
        %v3579 = vadd.f32 %v3432, %v3578
        %v3581 = vsel %vm877, %v3579, 0
        %3583 = vmatpush.msra.mxu0 0.0
        %3584 = vmatpush.msra.mxu0 0.0
        %3585 = vmatpush.msra.mxu0 0.0
        %3586 = vmatpush.msra.mxu0 0.0
        %3587 = vmatpush.msra.mxu0 0.0
        %3588 = vmatpush.msra.mxu0 0.0
        %3589 = vmatpush.msra.mxu0 0.0
        %3590 = vmatpush.msra.mxu0 0.0
        %3591 = vmatpush.msra.mxu0 0.0
        %3592 = vmatpush.msra.mxu0 0.0
        %3593 = vmatpush.msra.mxu0 0.0
        %3594 = vmatpush.msra.mxu0 0.0
        %3595 = vmatpush.msra.mxu0 0.0
        %3596 = vmatpush.msra.mxu0 0.0
        %3597 = vmatpush.msra.mxu0 0.0
        %3598 = vmatpush.msra.mxu0 %v1013
        %3599 = vmatmul.f32.gmra.mxu0 %v3581
        %v3600 = vpop.f32.mrf.mxu0
        %v3601 = vadd.f32 %v1018, %v3600
        %3602 = vdwg.mxu0
        %v3603 = vtanh.pop %v3601
        %v3605 = vsel %vm1044, %v3603, 0
        %3607 = vmatpush.msra.mxu0 0.0
        %3608 = vmatpush.msra.mxu0 0.0
        %3609 = vmatpush.msra.mxu0 0.0
        %3610 = vmatpush.msra.mxu0 0.0
        %3611 = vmatpush.msra.mxu0 0.0
        %3612 = vmatpush.msra.mxu0 0.0
        %3613 = vmatpush.msra.mxu0 0.0
        %3614 = vmatpush.msra.mxu0 0.0
        %3615 = vmatpush.msra.mxu0 0.0
        %3616 = vmatpush.msra.mxu0 0.0
        %3617 = vmatpush.msra.mxu0 0.0
        %3618 = vmatpush.msra.mxu0 0.0
        %3619 = vmatpush.msra.mxu0 %v1017
        %3620 = vmatpush.msra.mxu0 %v1016
        %3621 = vmatpush.msra.mxu0 %v1015
        %3622 = vmatpush.msra.mxu0 %v1014
        %3623 = vmatmul.f32.gmra.mxu0 %v3605
        %v3624 = vpop.f32.mrf.mxu0
        %v3625 = vadd.f32 %v1019, %v3624
        %3626 = vdwg.mxu0
        %v3627 = vmul.f32 %v3527, 2.0
        %v3628 = vadd.f32 %v3478, %v3627
        %v3629 = vmul.f32 %v3576, 2.0
        %v3630 = vadd.f32 %v3628, %v3629
        %v3631 = vadd.f32 %v3630, %v3625
        %v3632 = vmul.f32 %v3631, 0.08888889
        %v3633 = vadd.f32 %v3432, %v3632
        %v3635 = vsel %vm877, %v3633, 0
        %3637 = vmatpush.msra.mxu0 0.0
        %3638 = vmatpush.msra.mxu0 0.0
        %3639 = vmatpush.msra.mxu0 0.0
        %3640 = vmatpush.msra.mxu0 0.0
        %3641 = vmatpush.msra.mxu0 0.0
        %3642 = vmatpush.msra.mxu0 0.0
        %3643 = vmatpush.msra.mxu0 0.0
        %3644 = vmatpush.msra.mxu0 0.0
        %3645 = vmatpush.msra.mxu0 0.0
        %3646 = vmatpush.msra.mxu0 0.0
        %3647 = vmatpush.msra.mxu0 0.0
        %3648 = vmatpush.msra.mxu0 0.0
        %3649 = vmatpush.msra.mxu0 0.0
        %3650 = vmatpush.msra.mxu0 0.0
        %3651 = vmatpush.msra.mxu0 0.0
        %3652 = vmatpush.msra.mxu0 %v1013
        %3653 = vmatmul.f32.gmra.mxu0 %v3635
        %v3654 = vpop.f32.mrf.mxu0
        %v3655 = vadd.f32 %v1018, %v3654
        %3656 = vdwg.mxu0
        %v3657 = vtanh.pop %v3655
        %v3659 = vsel %vm1044, %v3657, 0
        %3661 = vmatpush.msra.mxu0 0.0
        %3662 = vmatpush.msra.mxu0 0.0
        %3663 = vmatpush.msra.mxu0 0.0
        %3664 = vmatpush.msra.mxu0 0.0
        %3665 = vmatpush.msra.mxu0 0.0
        %3666 = vmatpush.msra.mxu0 0.0
        %3667 = vmatpush.msra.mxu0 0.0
        %3668 = vmatpush.msra.mxu0 0.0
        %3669 = vmatpush.msra.mxu0 0.0
        %3670 = vmatpush.msra.mxu0 0.0
        %3671 = vmatpush.msra.mxu0 0.0
        %3672 = vmatpush.msra.mxu0 0.0
        %3673 = vmatpush.msra.mxu0 %v1017
        %3674 = vmatpush.msra.mxu0 %v1016
        %3675 = vmatpush.msra.mxu0 %v1015
        %3676 = vmatpush.msra.mxu0 %v1014
        %3677 = vmatmul.f32.gmra.mxu0 %v3659
        %v3678 = vpop.f32.mrf.mxu0
        %v3679 = vadd.f32 %v1019, %v3678
        %3680 = vdwg.mxu0
        %v3681 = vmul.f32 %v3679, 0.26666668
        %v3682 = vadd.f32 %v3633, %v3681
        %v3684 = vsel %vm877, %v3682, 0
        %3686 = vmatpush.msra.mxu0 0.0
        %3687 = vmatpush.msra.mxu0 0.0
        %3688 = vmatpush.msra.mxu0 0.0
        %3689 = vmatpush.msra.mxu0 0.0
        %3690 = vmatpush.msra.mxu0 0.0
        %3691 = vmatpush.msra.mxu0 0.0
        %3692 = vmatpush.msra.mxu0 0.0
        %3693 = vmatpush.msra.mxu0 0.0
        %3694 = vmatpush.msra.mxu0 0.0
        %3695 = vmatpush.msra.mxu0 0.0
        %3696 = vmatpush.msra.mxu0 0.0
        %3697 = vmatpush.msra.mxu0 0.0
        %3698 = vmatpush.msra.mxu0 0.0
        %3699 = vmatpush.msra.mxu0 0.0
        %3700 = vmatpush.msra.mxu0 0.0
        %3701 = vmatpush.msra.mxu0 %v1013
        %3702 = vmatmul.f32.gmra.mxu0 %v3684
        %v3703 = vpop.f32.mrf.mxu0
        %v3704 = vadd.f32 %v1018, %v3703
        %3705 = vdwg.mxu0
        %v3706 = vtanh.pop %v3704
        %v3708 = vsel %vm1044, %v3706, 0
        %3710 = vmatpush.msra.mxu0 0.0
        %3711 = vmatpush.msra.mxu0 0.0
        %3712 = vmatpush.msra.mxu0 0.0
        %3713 = vmatpush.msra.mxu0 0.0
        %3714 = vmatpush.msra.mxu0 0.0
        %3715 = vmatpush.msra.mxu0 0.0
        %3716 = vmatpush.msra.mxu0 0.0
        %3717 = vmatpush.msra.mxu0 0.0
        %3718 = vmatpush.msra.mxu0 0.0
        %3719 = vmatpush.msra.mxu0 0.0
        %3720 = vmatpush.msra.mxu0 0.0
        %3721 = vmatpush.msra.mxu0 0.0
        %3722 = vmatpush.msra.mxu0 %v1017
        %3723 = vmatpush.msra.mxu0 %v1016
        %3724 = vmatpush.msra.mxu0 %v1015
        %3725 = vmatpush.msra.mxu0 %v1014
        %3726 = vmatmul.f32.gmra.mxu0 %v3708
        %v3727 = vpop.f32.mrf.mxu0
        %v3728 = vadd.f32 %v1019, %v3727
        %3729 = vdwg.mxu0
        %v3730 = vmul.f32 %v3728, 0.26666668
        %v3731 = vadd.f32 %v3633, %v3730
        %v3733 = vsel %vm877, %v3731, 0
        %3735 = vmatpush.msra.mxu0 0.0
        %3736 = vmatpush.msra.mxu0 0.0
        %3737 = vmatpush.msra.mxu0 0.0
        %3738 = vmatpush.msra.mxu0 0.0
        %3739 = vmatpush.msra.mxu0 0.0
        %3740 = vmatpush.msra.mxu0 0.0
        %3741 = vmatpush.msra.mxu0 0.0
        %3742 = vmatpush.msra.mxu0 0.0
        %3743 = vmatpush.msra.mxu0 0.0
        %3744 = vmatpush.msra.mxu0 0.0
        %3745 = vmatpush.msra.mxu0 0.0
        %3746 = vmatpush.msra.mxu0 0.0
        %3747 = vmatpush.msra.mxu0 0.0
        %3748 = vmatpush.msra.mxu0 0.0
        %3749 = vmatpush.msra.mxu0 0.0
        %3750 = vmatpush.msra.mxu0 %v1013
        %3751 = vmatmul.f32.gmra.mxu0 %v3733
        %v3752 = vpop.f32.mrf.mxu0
        %v3753 = vadd.f32 %v1018, %v3752
        %3754 = vdwg.mxu0
        %v3755 = vtanh.pop %v3753
        %v3757 = vsel %vm1044, %v3755, 0
        %3759 = vmatpush.msra.mxu0 0.0
        %3760 = vmatpush.msra.mxu0 0.0
        %3761 = vmatpush.msra.mxu0 0.0
        %3762 = vmatpush.msra.mxu0 0.0
        %3763 = vmatpush.msra.mxu0 0.0
        %3764 = vmatpush.msra.mxu0 0.0
        %3765 = vmatpush.msra.mxu0 0.0
        %3766 = vmatpush.msra.mxu0 0.0
        %3767 = vmatpush.msra.mxu0 0.0
        %3768 = vmatpush.msra.mxu0 0.0
        %3769 = vmatpush.msra.mxu0 0.0
        %3770 = vmatpush.msra.mxu0 0.0
        %3771 = vmatpush.msra.mxu0 %v1017
        %3772 = vmatpush.msra.mxu0 %v1016
        %3773 = vmatpush.msra.mxu0 %v1015
        %3774 = vmatpush.msra.mxu0 %v1014
        %3775 = vmatmul.f32.gmra.mxu0 %v3757
        %v3776 = vpop.f32.mrf.mxu0
        %v3777 = vadd.f32 %v1019, %v3776
        %3778 = vdwg.mxu0
        %v3779 = vmul.f32 %v3777, 0.53333336
        %v3780 = vadd.f32 %v3633, %v3779
        %v3782 = vsel %vm877, %v3780, 0
        %3784 = vmatpush.msra.mxu0 0.0
        %3785 = vmatpush.msra.mxu0 0.0
        %3786 = vmatpush.msra.mxu0 0.0
        %3787 = vmatpush.msra.mxu0 0.0
        %3788 = vmatpush.msra.mxu0 0.0
        %3789 = vmatpush.msra.mxu0 0.0
        %3790 = vmatpush.msra.mxu0 0.0
        %3791 = vmatpush.msra.mxu0 0.0
        %3792 = vmatpush.msra.mxu0 0.0
        %3793 = vmatpush.msra.mxu0 0.0
        %3794 = vmatpush.msra.mxu0 0.0
        %3795 = vmatpush.msra.mxu0 0.0
        %3796 = vmatpush.msra.mxu0 0.0
        %3797 = vmatpush.msra.mxu0 0.0
        %3798 = vmatpush.msra.mxu0 0.0
        %3799 = vmatpush.msra.mxu0 %v1013
        %3800 = vmatmul.f32.gmra.mxu0 %v3782
        %v3801 = vpop.f32.mrf.mxu0
        %v3802 = vadd.f32 %v1018, %v3801
        %3803 = vdwg.mxu0
        %v3804 = vtanh.pop %v3802
        %v3806 = vsel %vm1044, %v3804, 0
        %3808 = vmatpush.msra.mxu0 0.0
        %3809 = vmatpush.msra.mxu0 0.0
        %3810 = vmatpush.msra.mxu0 0.0
        %3811 = vmatpush.msra.mxu0 0.0
        %3812 = vmatpush.msra.mxu0 0.0
        %3813 = vmatpush.msra.mxu0 0.0
        %3814 = vmatpush.msra.mxu0 0.0
        %3815 = vmatpush.msra.mxu0 0.0
        %3816 = vmatpush.msra.mxu0 0.0
        %3817 = vmatpush.msra.mxu0 0.0
        %3818 = vmatpush.msra.mxu0 0.0
        %3819 = vmatpush.msra.mxu0 0.0
        %3820 = vmatpush.msra.mxu0 %v1017
        %3821 = vmatpush.msra.mxu0 %v1016
        %3822 = vmatpush.msra.mxu0 %v1015
        %3823 = vmatpush.msra.mxu0 %v1014
        %3824 = vmatmul.f32.gmra.mxu0 %v3806
        %v3825 = vpop.f32.mrf.mxu0
        %v3826 = vadd.f32 %v1019, %v3825
        %3827 = vdwg.mxu0
        %v3828 = vmul.f32 %v3728, 2.0
        %v3829 = vadd.f32 %v3679, %v3828
        %v3830 = vmul.f32 %v3777, 2.0
        %v3831 = vadd.f32 %v3829, %v3830
        %v3832 = vadd.f32 %v3831, %v3826
        %v3833 = vmul.f32 %v3832, 0.08888889
        %v3834 = vadd.f32 %v3633, %v3833
        %v3836 = vsel %vm877, %v3834, 0
        %3838 = vmatpush.msra.mxu0 0.0
        %3839 = vmatpush.msra.mxu0 0.0
        %3840 = vmatpush.msra.mxu0 0.0
        %3841 = vmatpush.msra.mxu0 0.0
        %3842 = vmatpush.msra.mxu0 0.0
        %3843 = vmatpush.msra.mxu0 0.0
        %3844 = vmatpush.msra.mxu0 0.0
        %3845 = vmatpush.msra.mxu0 0.0
        %3846 = vmatpush.msra.mxu0 0.0
        %3847 = vmatpush.msra.mxu0 0.0
        %3848 = vmatpush.msra.mxu0 0.0
        %3849 = vmatpush.msra.mxu0 0.0
        %3850 = vmatpush.msra.mxu0 0.0
        %3851 = vmatpush.msra.mxu0 0.0
        %3852 = vmatpush.msra.mxu0 0.0
        %3853 = vmatpush.msra.mxu0 %v1013
        %3854 = vmatmul.f32.gmra.mxu0 %v3836
        %v3855 = vpop.f32.mrf.mxu0
        %v3856 = vadd.f32 %v1018, %v3855
        %3857 = vdwg.mxu0
        %v3858 = vtanh.pop %v3856
        %v3860 = vsel %vm1044, %v3858, 0
        %3862 = vmatpush.msra.mxu0 0.0
        %3863 = vmatpush.msra.mxu0 0.0
        %3864 = vmatpush.msra.mxu0 0.0
        %3865 = vmatpush.msra.mxu0 0.0
        %3866 = vmatpush.msra.mxu0 0.0
        %3867 = vmatpush.msra.mxu0 0.0
        %3868 = vmatpush.msra.mxu0 0.0
        %3869 = vmatpush.msra.mxu0 0.0
        %3870 = vmatpush.msra.mxu0 0.0
        %3871 = vmatpush.msra.mxu0 0.0
        %3872 = vmatpush.msra.mxu0 0.0
        %3873 = vmatpush.msra.mxu0 0.0
        %3874 = vmatpush.msra.mxu0 %v1017
        %3875 = vmatpush.msra.mxu0 %v1016
        %3876 = vmatpush.msra.mxu0 %v1015
        %3877 = vmatpush.msra.mxu0 %v1014
        %3878 = vmatmul.f32.gmra.mxu0 %v3860
        %v3879 = vpop.f32.mrf.mxu0
        %v3880 = vadd.f32 %v1019, %v3879
        %3881 = vdwg.mxu0
        %v3882 = vmul.f32 %v3880, 0.26666668
        %v3883 = vadd.f32 %v3834, %v3882
        %v3885 = vsel %vm877, %v3883, 0
        %3887 = vmatpush.msra.mxu0 0.0
        %3888 = vmatpush.msra.mxu0 0.0
        %3889 = vmatpush.msra.mxu0 0.0
        %3890 = vmatpush.msra.mxu0 0.0
        %3891 = vmatpush.msra.mxu0 0.0
        %3892 = vmatpush.msra.mxu0 0.0
        %3893 = vmatpush.msra.mxu0 0.0
        %3894 = vmatpush.msra.mxu0 0.0
        %3895 = vmatpush.msra.mxu0 0.0
        %3896 = vmatpush.msra.mxu0 0.0
        %3897 = vmatpush.msra.mxu0 0.0
        %3898 = vmatpush.msra.mxu0 0.0
        %3899 = vmatpush.msra.mxu0 0.0
        %3900 = vmatpush.msra.mxu0 0.0
        %3901 = vmatpush.msra.mxu0 0.0
        %3902 = vmatpush.msra.mxu0 %v1013
        %3903 = vmatmul.f32.gmra.mxu0 %v3885
        %v3904 = vpop.f32.mrf.mxu0
        %v3905 = vadd.f32 %v1018, %v3904
        %3906 = vdwg.mxu0
        %v3907 = vtanh.pop %v3905
        %v3909 = vsel %vm1044, %v3907, 0
        %3911 = vmatpush.msra.mxu0 0.0
        %3912 = vmatpush.msra.mxu0 0.0
        %3913 = vmatpush.msra.mxu0 0.0
        %3914 = vmatpush.msra.mxu0 0.0
        %3915 = vmatpush.msra.mxu0 0.0
        %3916 = vmatpush.msra.mxu0 0.0
        %3917 = vmatpush.msra.mxu0 0.0
        %3918 = vmatpush.msra.mxu0 0.0
        %3919 = vmatpush.msra.mxu0 0.0
        %3920 = vmatpush.msra.mxu0 0.0
        %3921 = vmatpush.msra.mxu0 0.0
        %3922 = vmatpush.msra.mxu0 0.0
        %3923 = vmatpush.msra.mxu0 %v1017
        %3924 = vmatpush.msra.mxu0 %v1016
        %3925 = vmatpush.msra.mxu0 %v1015
        %3926 = vmatpush.msra.mxu0 %v1014
        %3927 = vmatmul.f32.gmra.mxu0 %v3909
        %v3928 = vpop.f32.mrf.mxu0
        %v3929 = vadd.f32 %v1019, %v3928
        %3930 = vdwg.mxu0
        %v3931 = vmul.f32 %v3929, 0.26666668
        %v3932 = vadd.f32 %v3834, %v3931
        %v3934 = vsel %vm877, %v3932, 0
        %3936 = vmatpush.msra.mxu0 0.0
        %3937 = vmatpush.msra.mxu0 0.0
        %3938 = vmatpush.msra.mxu0 0.0
        %3939 = vmatpush.msra.mxu0 0.0
        %3940 = vmatpush.msra.mxu0 0.0
        %3941 = vmatpush.msra.mxu0 0.0
        %3942 = vmatpush.msra.mxu0 0.0
        %3943 = vmatpush.msra.mxu0 0.0
        %3944 = vmatpush.msra.mxu0 0.0
        %3945 = vmatpush.msra.mxu0 0.0
        %3946 = vmatpush.msra.mxu0 0.0
        %3947 = vmatpush.msra.mxu0 0.0
        %3948 = vmatpush.msra.mxu0 0.0
        %3949 = vmatpush.msra.mxu0 0.0
        %3950 = vmatpush.msra.mxu0 0.0
        %3951 = vmatpush.msra.mxu0 %v1013
        %3952 = vmatmul.f32.gmra.mxu0 %v3934
        %v3953 = vpop.f32.mrf.mxu0
        %v3954 = vadd.f32 %v1018, %v3953
        %3955 = vdwg.mxu0
        %v3956 = vtanh.pop %v3954
        %v3958 = vsel %vm1044, %v3956, 0
        %3960 = vmatpush.msra.mxu0 0.0
        %3961 = vmatpush.msra.mxu0 0.0
        %3962 = vmatpush.msra.mxu0 0.0
        %3963 = vmatpush.msra.mxu0 0.0
        %3964 = vmatpush.msra.mxu0 0.0
        %3965 = vmatpush.msra.mxu0 0.0
        %3966 = vmatpush.msra.mxu0 0.0
        %3967 = vmatpush.msra.mxu0 0.0
        %3968 = vmatpush.msra.mxu0 0.0
        %3969 = vmatpush.msra.mxu0 0.0
        %3970 = vmatpush.msra.mxu0 0.0
        %3971 = vmatpush.msra.mxu0 0.0
        %3972 = vmatpush.msra.mxu0 %v1017
        %3973 = vmatpush.msra.mxu0 %v1016
        %3974 = vmatpush.msra.mxu0 %v1015
        %3975 = vmatpush.msra.mxu0 %v1014
        %3976 = vmatmul.f32.gmra.mxu0 %v3958
        %v3977 = vpop.f32.mrf.mxu0
        %v3978 = vadd.f32 %v1019, %v3977
        %3979 = vdwg.mxu0
        %v3980 = vmul.f32 %v3978, 0.53333336
        %v3981 = vadd.f32 %v3834, %v3980
        %v3983 = vsel %vm877, %v3981, 0
        %3985 = vmatpush.msra.mxu0 0.0
        %3986 = vmatpush.msra.mxu0 0.0
        %3987 = vmatpush.msra.mxu0 0.0
        %3988 = vmatpush.msra.mxu0 0.0
        %3989 = vmatpush.msra.mxu0 0.0
        %3990 = vmatpush.msra.mxu0 0.0
        %3991 = vmatpush.msra.mxu0 0.0
        %3992 = vmatpush.msra.mxu0 0.0
        %3993 = vmatpush.msra.mxu0 0.0
        %3994 = vmatpush.msra.mxu0 0.0
        %3995 = vmatpush.msra.mxu0 0.0
        %3996 = vmatpush.msra.mxu0 0.0
        %3997 = vmatpush.msra.mxu0 0.0
        %3998 = vmatpush.msra.mxu0 0.0
        %3999 = vmatpush.msra.mxu0 0.0
        %4000 = vmatpush.msra.mxu0 %v1013
        %4001 = vmatmul.f32.gmra.mxu0 %v3983
        %v4002 = vpop.f32.mrf.mxu0
        %v4003 = vadd.f32 %v1018, %v4002
        %4004 = vdwg.mxu0
        %v4005 = vtanh.pop %v4003
        %v4007 = vsel %vm1044, %v4005, 0
        %4009 = vmatpush.msra.mxu0 0.0
        %4010 = vmatpush.msra.mxu0 0.0
        %4011 = vmatpush.msra.mxu0 0.0
        %4012 = vmatpush.msra.mxu0 0.0
        %4013 = vmatpush.msra.mxu0 0.0
        %4014 = vmatpush.msra.mxu0 0.0
        %4015 = vmatpush.msra.mxu0 0.0
        %4016 = vmatpush.msra.mxu0 0.0
        %4017 = vmatpush.msra.mxu0 0.0
        %4018 = vmatpush.msra.mxu0 0.0
        %4019 = vmatpush.msra.mxu0 0.0
        %4020 = vmatpush.msra.mxu0 0.0
        %4021 = vmatpush.msra.mxu0 %v1017
        %4022 = vmatpush.msra.mxu0 %v1016
        %4023 = vmatpush.msra.mxu0 %v1015
        %4024 = vmatpush.msra.mxu0 %v1014
        %4025 = vmatmul.f32.gmra.mxu0 %v4007
        %v4026 = vpop.f32.mrf.mxu0
        %v4027 = vadd.f32 %v1019, %v4026
        %4028 = vdwg.mxu0
        %v4029 = vmul.f32 %v3929, 2.0
        %v4030 = vadd.f32 %v3880, %v4029
        %v4031 = vmul.f32 %v3978, 2.0
        %v4032 = vadd.f32 %v4030, %v4031
        %v4033 = vadd.f32 %v4032, %v4027
        %v4034 = vmul.f32 %v4033, 0.08888889
        %v4035 = vadd.f32 %v3834, %v4034
        %v4036 = vld [vmem:[%s861] sm:$0xff]
        %v4037 = vld [vmem:[%s861 + $0x8] sm:$0xff]
        %v4038 = vld [vmem:[%s861 + $0x10] sm:$0xff]
        %v4039 = vld [vmem:[%s861 + $0x18] sm:$0xff]
        %v4040 = vld [vmem:[%s861 + $0x20] sm:$0xff]
        %v4041 = vld [vmem:[%s861 + $0x28] sm:$0xff]
        %v4042 = vmax.f32 %v4036, 0.0
        %v4043 = vmax.f32 %v4037, 0.0
        %v4044 = vmax.f32 %v4038, 0.0
        %v4045 = vmax.f32 %v4039, 0.0
        %v4046 = vmax.f32 %v4040, 0.0
        %v4047 = vmax.f32 %v4041, 0.0
        %v4048 = vmin.f32 %v4042, 8.0
        %v4049 = vmin.f32 %v4043, 8.0
        %v4050 = vmin.f32 %v4044, 8.0
        %v4051 = vmin.f32 %v4045, 8.0
        %v4052 = vmin.f32 %v4046, 8.0
        %v4053 = vmin.f32 %v4047, 8.0
        %v4054 = vlaneseq
        %v4055 = vand.u32 %v4054, 127
        %v4056 = vcvt.s32.f32 %v4055
        %v4057 = vmul.f32 %v4056, 0.53333336
        %4059 = vset.pattern.permute.xlu0 0
        %4060 = vperm.xlu0 %4059, %v4048
        %v4061 = vpop.permute.xlu0 %4060
        %4064 = vset.pattern.permute.xlu0 0
        %4065 = vperm.xlu0 %4064, %v4049
        %v4066 = vpop.permute.xlu0 %4065
        %4069 = vset.pattern.permute.xlu0 0
        %4070 = vperm.xlu0 %4069, %v4050
        %v4071 = vpop.permute.xlu0 %4070
        %4074 = vset.pattern.permute.xlu0 0
        %4075 = vperm.xlu0 %4074, %v4051
        %v4076 = vpop.permute.xlu0 %4075
        %4079 = vset.pattern.permute.xlu0 0
        %4080 = vperm.xlu0 %4079, %v4052
        %v4081 = vpop.permute.xlu0 %4080
        %4084 = vset.pattern.permute.xlu0 0
        %4085 = vperm.xlu0 %4084, %v4053
        %v4086 = vpop.permute.xlu0 %4085
        %v4088 = vsub.f32 %v4061, %v4057
        %v4089 = vsub.f32 %v4066, %v4057
        %v4090 = vsub.f32 %v4071, %v4057
        %v4091 = vsub.f32 %v4076, %v4057
        %v4092 = vsub.f32 %v4081, %v4057
        %v4093 = vsub.f32 %v4086, %v4057
        %v4094 = vand.u32 2147483647, %v4088
        %v4095 = vand.u32 2147483647, %v4089
        %v4096 = vand.u32 2147483647, %v4090
        %v4097 = vand.u32 2147483647, %v4091
        %v4098 = vand.u32 2147483647, %v4092
        %v4099 = vand.u32 2147483647, %v4093
        %v4100 = vmul.f32 %v4094, 1.875
        %v4101 = vmul.f32 %v4095, 1.875
        %v4102 = vmul.f32 %v4096, 1.875
        %v4103 = vmul.f32 %v4097, 1.875
        %v4104 = vmul.f32 %v4098, 1.875
        %v4105 = vmul.f32 %v4099, 1.875
        %v4106 = vsub.f32 1.0, %v4100
        %v4107 = vsub.f32 1.0, %v4101
        %v4108 = vsub.f32 1.0, %v4102
        %v4109 = vsub.f32 1.0, %v4103
        %v4110 = vsub.f32 1.0, %v4104
        %v4111 = vsub.f32 1.0, %v4105
        %v4112 = vmax.f32 %v4106, 0.0
        %v4113 = vmax.f32 %v4107, 0.0
        %v4114 = vmax.f32 %v4108, 0.0
        %v4115 = vmax.f32 %v4109, 0.0
        %v4116 = vmax.f32 %v4110, 0.0
        %v4117 = vmax.f32 %v4111, 0.0
        %v4118 = vrot.slane %v1221, 7
        %v4120 = vrot.slane %v1422, 6
        %v4122 = vrot.slane %v1623, 5
        %v4124 = vrot.slane %v1824, 4
        %v4126 = vrot.slane %v2025, 3
        %v4128 = vrot.slane %v2226, 2
        %v4130 = vrot.slane %v2427, 1
        %v4132 = vrot.slane %v2829, 7
        %v4134 = vrot.slane %v3030, 6
        %v4136 = vrot.slane %v3231, 5
        %v4138 = vrot.slane %v3432, 4
        %v4140 = vrot.slane %v3633, 3
        %v4142 = vrot.slane %v3834, 2
        %v4145 = vrot.slane %v4035, 1
        %vm4147 = vcmask 1040384
        %v4148 = vsel %vm4147, %v1012, %v4118
        %vm4149 = vcmask 1041408
        %v4150 = vsel %vm4149, %v4148, %v4120
        %vm4151 = vcmask 1042432
        %v4152 = vsel %vm4151, %v4150, %v4122
        %v4153 = vsel %vm927, %v4152, %v4124
        %vm4154 = vcmask 1044480
        %v4155 = vsel %vm4154, %v4153, %v4126
        %vm4156 = vcmask 1045504
        %v4157 = vsel %vm4156, %v4155, %v4128
        %vm4158 = vcmask 1046528
        %v4159 = vsel %vm4158, %v4157, %v4130
        %v4160 = vsel %vm4147, %v2628, %v4132
        %v4161 = vsel %vm4149, %v4160, %v4134
        %v4162 = vsel %vm4151, %v4161, %v4136
        %v4163 = vsel %vm927, %v4162, %v4138
        %v4164 = vsel %vm4154, %v4163, %v4140
        %v4165 = vsel %vm4156, %v4164, %v4142
        %v4166 = vsel %vm4158, %v4165, %v4145
        %vm4167 = vcmask 130048
        %v4169 = vsel %vm4167, %v4112, 0
        %v4172 = vsel %vm4167, %v4113, 0
        %v4175 = vsel %vm4167, %v4114, 0
        %v4178 = vsel %vm4167, %v4115, 0
        %v4181 = vsel %vm4167, %v4116, 0
        %v4184 = vsel %vm4167, %v4117, 0
        %4186 = vmatpush.msra.mxu0 0.0
        %4187 = vmatpush.msra.mxu0 0.0
        %4188 = vmatpush.msra.mxu0 0.0
        %4189 = vmatpush.msra.mxu0 0.0
        %4190 = vmatpush.msra.mxu0 0.0
        %4191 = vmatpush.msra.mxu0 0.0
        %4192 = vmatpush.msra.mxu0 0.0
        %4193 = vmatpush.msra.mxu0 0.0
        %4194 = vmatpush.msra.mxu0 0.0
        %4195 = vmatpush.msra.mxu0 0.0
        %4196 = vmatpush.msra.mxu0 0.0
        %4197 = vmatpush.msra.mxu0 0.0
        %4198 = vmatpush.msra.mxu0 0.0
        %4199 = vmatpush.msra.mxu0 0.0
        %4200 = vmatpush.msra.mxu0 %v4166
        %4201 = vmatpush.msra.mxu0 %v4159
        %4202 = vmatmul.f32.gmra.mxu0 %v4169
        %v4203 = vpop.f32.mrf.mxu0
        %v4204 = vadd.f32 0.0, %v4203
        %4205 = vmatmul.f32.gmra.mxu0 %v4172
        %v4206 = vpop.f32.mrf.mxu0
        %v4207 = vadd.f32 0.0, %v4206
        %4208 = vmatmul.f32.gmra.mxu0 %v4175
        %v4209 = vpop.f32.mrf.mxu0
        %v4210 = vadd.f32 0.0, %v4209
        %4211 = vmatmul.f32.gmra.mxu0 %v4178
        %v4212 = vpop.f32.mrf.mxu0
        %v4213 = vadd.f32 0.0, %v4212
        %4214 = vmatmul.f32.gmra.mxu0 %v4181
        %v4215 = vpop.f32.mrf.mxu0
        %v4216 = vadd.f32 0.0, %v4215
        %4217 = vmatmul.f32.gmra.mxu0 %v4184
        %v4218 = vpop.f32.mrf.mxu0
        %v4219 = vadd.f32 0.0, %v4218
        %4220 = vdwg.mxu0
        %v4221 = vld [vmem:[%s15] sm:$0x3]
        %v4222 = vld [vmem:[%s16] sm:$0xff]
        %v4224 = vsel %vm877, %v4204, 0
        %v4227 = vsel %vm877, %v4207, 0
        %v4230 = vsel %vm877, %v4210, 0
        %v4233 = vsel %vm877, %v4213, 0
        %v4236 = vsel %vm877, %v4216, 0
        %v4239 = vsel %vm877, %v4219, 0
        %4241 = vmatpush.msra.mxu0 0.0
        %4242 = vmatpush.msra.mxu0 0.0
        %4243 = vmatpush.msra.mxu0 0.0
        %4244 = vmatpush.msra.mxu0 0.0
        %4245 = vmatpush.msra.mxu0 0.0
        %4246 = vmatpush.msra.mxu0 0.0
        %4247 = vmatpush.msra.mxu0 0.0
        %4248 = vmatpush.msra.mxu0 0.0
        %4249 = vmatpush.msra.mxu0 0.0
        %4250 = vmatpush.msra.mxu0 0.0
        %4251 = vmatpush.msra.mxu0 0.0
        %4252 = vmatpush.msra.mxu0 0.0
        %4253 = vmatpush.msra.mxu0 0.0
        %4254 = vmatpush.msra.mxu0 0.0
        %4255 = vmatpush.msra.mxu0 0.0
        %4256 = vmatpush.msra.mxu0 %v4222
        %4257 = vmatmul.f32.gmra.mxu0 %v4224
        %v4258 = vpop.f32.mrf.mxu0
        %v4259 = vadd.f32 0.0, %v4258
        %4260 = vmatmul.f32.gmra.mxu0 %v4227
        %v4261 = vpop.f32.mrf.mxu0
        %v4262 = vadd.f32 0.0, %v4261
        %4263 = vmatmul.f32.gmra.mxu0 %v4230
        %v4264 = vpop.f32.mrf.mxu0
        %v4265 = vadd.f32 0.0, %v4264
        %4266 = vmatmul.f32.gmra.mxu0 %v4233
        %v4267 = vpop.f32.mrf.mxu0
        %v4268 = vadd.f32 0.0, %v4267
        %4269 = vmatmul.f32.gmra.mxu0 %v4236
        %v4270 = vpop.f32.mrf.mxu0
        %v4271 = vadd.f32 0.0, %v4270
        %4272 = vmatmul.f32.gmra.mxu0 %v4239
        %v4273 = vpop.f32.mrf.mxu0
        %v4274 = vadd.f32 0.0, %v4273
        %4275 = vdwg.mxu0
        %4282 = vrot.lane.b32.xlu0 %v4036, 127
        %v4283 = vpop.permute.xlu0 %4282
        %4284 = vrot.lane.b32.xlu0 %v4037, 127
        %v4285 = vpop.permute.xlu0 %4284
        %4286 = vrot.lane.b32.xlu0 %v4038, 127
        %v4287 = vpop.permute.xlu0 %4286
        %4288 = vrot.lane.b32.xlu0 %v4039, 127
        %v4289 = vpop.permute.xlu0 %4288
        %4290 = vrot.lane.b32.xlu0 %v4040, 127
        %v4291 = vpop.permute.xlu0 %4290
        %4292 = vrot.lane.b32.xlu0 %v4041, 127
        %v4293 = vpop.permute.xlu0 %4292
        %vm4294 = vcmask 15360
        %v4295 = vsel %vm4294, %v4283, 0
        %v4297 = vsel %vm4294, %v4285, 0
        %v4299 = vsel %vm4294, %v4287, 0
        %v4301 = vsel %vm4294, %v4289, 0
        %v4303 = vsel %vm4294, %v4291, 0
        %v4305 = vsel %vm4294, %v4293, 0
        %v4308 = vsel %vm4149, %v4221, 0
        %4310 = vmatpush.msra.mxu0 0.0
        %4311 = vmatpush.msra.mxu0 0.0
        %4312 = vmatpush.msra.mxu0 0.0
        %4313 = vmatpush.msra.mxu0 0.0
        %4314 = vmatpush.msra.mxu0 0.0
        %4315 = vmatpush.msra.mxu0 0.0
        %4316 = vmatpush.msra.mxu0 0.0
        %4317 = vmatpush.msra.mxu0 0.0
        %4318 = vmatpush.msra.mxu0 0.0
        %4319 = vmatpush.msra.mxu0 0.0
        %4320 = vmatpush.msra.mxu0 0.0
        %4321 = vmatpush.msra.mxu0 0.0
        %4322 = vmatpush.msra.mxu0 0.0
        %4323 = vmatpush.msra.mxu0 0.0
        %4324 = vmatpush.msra.mxu0 0.0
        %4325 = vmatpush.msra.mxu0 %v4308
        %4326 = vmatmul.f32.gmra.mxu0 %v4295
        %v4327 = vpop.f32.mrf.mxu0
        %v4328 = vadd.f32 %v4259, %v4327
        %4329 = vmatmul.f32.gmra.mxu0 %v4297
        %v4330 = vpop.f32.mrf.mxu0
        %v4331 = vadd.f32 %v4262, %v4330
        %4332 = vmatmul.f32.gmra.mxu0 %v4299
        %v4333 = vpop.f32.mrf.mxu0
        %v4334 = vadd.f32 %v4265, %v4333
        %4335 = vmatmul.f32.gmra.mxu0 %v4301
        %v4336 = vpop.f32.mrf.mxu0
        %v4337 = vadd.f32 %v4268, %v4336
        %4338 = vmatmul.f32.gmra.mxu0 %v4303
        %v4339 = vpop.f32.mrf.mxu0
        %v4340 = vadd.f32 %v4271, %v4339
        %4341 = vmatmul.f32.gmra.mxu0 %v4305
        %v4342 = vpop.f32.mrf.mxu0
        %v4343 = vadd.f32 %v4274, %v4342
        %4344 = vdwg.mxu0
        %v4345 = vld [vmem:[%s17] sm:$0x1]
        %v4347 = vperm.slane %v4345, 0
        %v4349 = vadd.f32 %v4328, %v4347
        %v4350 = vadd.f32 %v4331, %v4347
        %v4351 = vadd.f32 %v4334, %v4347
        %v4352 = vadd.f32 %v4337, %v4347
        %v4353 = vadd.f32 %v4340, %v4347
        %v4354 = vadd.f32 %v4343, %v4347
        %v4355 = vtanh.pop %v4349
        %v4356 = vtanh.pop %v4350
        %v4357 = vtanh.pop %v4351
        %v4358 = vtanh.pop %v4352
        %v4359 = vtanh.pop %v4353
        %v4360 = vtanh.pop %v4354
        %v4361 = vld [vmem:[%s18] sm:$0xff]
        %v4362 = vld [vmem:[%s18 + $0x8] sm:$0xff]
        %v4363 = vld [vmem:[%s18 + $0x10] sm:$0xff]
        %v4364 = vld [vmem:[%s18 + $0x18] sm:$0xff]
        %v4365 = vld [vmem:[%s19] sm:$0x1]
        %v4367 = vperm.slane %v4365, 0
        %v4370 = vsel %vm1044, %v4355, 0
        %v4373 = vsel %vm1044, %v4356, 0
        %v4376 = vsel %vm1044, %v4357, 0
        %v4379 = vsel %vm1044, %v4358, 0
        %v4382 = vsel %vm1044, %v4359, 0
        %v4385 = vsel %vm1044, %v4360, 0
        %4387 = vmatpush.msra.mxu0 0.0
        %4388 = vmatpush.msra.mxu0 0.0
        %4389 = vmatpush.msra.mxu0 0.0
        %4390 = vmatpush.msra.mxu0 0.0
        %4391 = vmatpush.msra.mxu0 0.0
        %4392 = vmatpush.msra.mxu0 0.0
        %4393 = vmatpush.msra.mxu0 0.0
        %4394 = vmatpush.msra.mxu0 0.0
        %4395 = vmatpush.msra.mxu0 0.0
        %4396 = vmatpush.msra.mxu0 0.0
        %4397 = vmatpush.msra.mxu0 0.0
        %4398 = vmatpush.msra.mxu0 0.0
        %4399 = vmatpush.msra.mxu0 %v4364
        %4400 = vmatpush.msra.mxu0 %v4363
        %4401 = vmatpush.msra.mxu0 %v4362
        %4402 = vmatpush.msra.mxu0 %v4361
        %4403 = vmatmul.f32.gmra.mxu0 %v4370
        %v4404 = vpop.f32.mrf.mxu0
        %v4405 = vadd.f32 %v4367, %v4404
        %4406 = vmatmul.f32.gmra.mxu0 %v4373
        %v4407 = vpop.f32.mrf.mxu0
        %v4408 = vadd.f32 %v4367, %v4407
        %4409 = vmatmul.f32.gmra.mxu0 %v4376
        %v4410 = vpop.f32.mrf.mxu0
        %v4411 = vadd.f32 %v4367, %v4410
        %4412 = vmatmul.f32.gmra.mxu0 %v4379
        %v4413 = vpop.f32.mrf.mxu0
        %v4414 = vadd.f32 %v4367, %v4413
        %4415 = vmatmul.f32.gmra.mxu0 %v4382
        %v4416 = vpop.f32.mrf.mxu0
        %v4417 = vadd.f32 %v4367, %v4416
        %4418 = vmatmul.f32.gmra.mxu0 %v4385
        %v4419 = vpop.f32.mrf.mxu0
        %v4420 = vadd.f32 %v4367, %v4419
        %4421 = vdwg.mxu0
        %v4422 = vld [vmem:[%s20] sm:$0xff]
        %v4423 = vld [vmem:[%s20 + $0x8] sm:$0xff]
        %v4424 = vld [vmem:[#allocation2] sm:$0x1]
        %v4426 = vperm.slane %v4424, 0
        %v4429 = vsel %vm4167, %v4405, 0
        %v4432 = vsel %vm4167, %v4408, 0
        %v4435 = vsel %vm4167, %v4411, 0
        %v4438 = vsel %vm4167, %v4414, 0
        %v4441 = vsel %vm4167, %v4417, 0
        %v4444 = vsel %vm4167, %v4420, 0
        %4446 = vmatpush.msra.mxu0 0.0
        %4447 = vmatpush.msra.mxu0 0.0
        %4448 = vmatpush.msra.mxu0 0.0
        %4449 = vmatpush.msra.mxu0 0.0
        %4450 = vmatpush.msra.mxu0 0.0
        %4451 = vmatpush.msra.mxu0 0.0
        %4452 = vmatpush.msra.mxu0 0.0
        %4453 = vmatpush.msra.mxu0 0.0
        %4454 = vmatpush.msra.mxu0 0.0
        %4455 = vmatpush.msra.mxu0 0.0
        %4456 = vmatpush.msra.mxu0 0.0
        %4457 = vmatpush.msra.mxu0 0.0
        %4458 = vmatpush.msra.mxu0 0.0
        %4459 = vmatpush.msra.mxu0 0.0
        %4460 = vmatpush.msra.mxu0 %v4423
        %4461 = vmatpush.msra.mxu0 %v4422
        %4462 = vmatmul.f32.gmra.mxu0 %v4429
        %v4463 = vpop.f32.mrf.mxu0
        %v4464 = vadd.f32 %v4426, %v4463
        %4465 = vmatmul.f32.gmra.mxu0 %v4432
        %v4466 = vpop.f32.mrf.mxu0
        %v4467 = vadd.f32 %v4426, %v4466
        %4468 = vmatmul.f32.gmra.mxu0 %v4435
        %v4469 = vpop.f32.mrf.mxu0
        %v4470 = vadd.f32 %v4426, %v4469
        %4471 = vmatmul.f32.gmra.mxu0 %v4438
        %v4472 = vpop.f32.mrf.mxu0
        %v4473 = vadd.f32 %v4426, %v4472
        %4474 = vmatmul.f32.gmra.mxu0 %v4441
        %v4475 = vpop.f32.mrf.mxu0
        %v4476 = vadd.f32 %v4426, %v4475
        %4477 = vmatmul.f32.gmra.mxu0 %v4444
        %v4478 = vpop.f32.mrf.mxu0
        %v4479 = vadd.f32 %v4426, %v4478
        %4480 = vdwg.mxu0
        %v4481 = vmax.f32 %v4464, 0.0
        %v4482 = vmax.f32 %v4467, 0.0
        %v4483 = vmax.f32 %v4470, 0.0
        %v4484 = vmax.f32 %v4473, 0.0
        %v4485 = vmax.f32 %v4476, 0.0
        %v4486 = vmax.f32 %v4479, 0.0
        %vm4487 = vcmp.ne.f32.partialorder %v4464, %v4464
        %vm4488 = vcmp.ne.f32.partialorder %v4467, %v4467
        %vm4489 = vcmp.ne.f32.partialorder %v4470, %v4470
        %vm4490 = vcmp.ne.f32.partialorder %v4473, %v4473
        %vm4491 = vcmp.ne.f32.partialorder %v4476, %v4476
        %vm4492 = vcmp.ne.f32.partialorder %v4479, %v4479
        %v4493 = vadd.f32 %v4464, 0.0
        %v4494 = vadd.f32 %v4467, 0.0
        %v4495 = vadd.f32 %v4470, 0.0
        %v4496 = vadd.f32 %v4473, 0.0
        %v4497 = vadd.f32 %v4476, 0.0
        %v4498 = vadd.f32 %v4479, 0.0
        %v4499 = vand.u32 2147483647, %v4464
        %v4500 = vand.u32 2147483647, %v4467
        %v4501 = vand.u32 2147483647, %v4470
        %v4502 = vand.u32 2147483647, %v4473
        %v4503 = vand.u32 2147483647, %v4476
        %v4504 = vand.u32 2147483647, %v4479
        %v4505 = vsub.f32 0.0, %v4499
        %v4506 = vsub.f32 0.0, %v4500
        %v4507 = vsub.f32 0.0, %v4501
        %v4508 = vsub.f32 0.0, %v4502
        %v4509 = vsub.f32 0.0, %v4503
        %v4510 = vsub.f32 0.0, %v4504
        %v4511 = vmul.f32 %v4505, 1.442695
        %v4512 = vpow.pop %v4511
        %v4513 = vmul.f32 %v4506, 1.442695
        %v4514 = vpow.pop %v4513
        %v4515 = vmul.f32 %v4507, 1.442695
        %v4516 = vpow.pop %v4515
        %v4517 = vmul.f32 %v4508, 1.442695
        %v4518 = vpow.pop %v4517
        %v4519 = vmul.f32 %v4509, 1.442695
        %v4520 = vpow.pop %v4519
        %v4521 = vmul.f32 %v4510, 1.442695
        %v4522 = vpow.pop %v4521
        %v4523 = vadd.f32 %v4512, 1.0
        %v4524 = vlog2.pop %v4523
        %v4525 = vmul.f32 %v4524, 0.6931472
        %v4526 = vmul.f32 -0.5, %v4512
        %v4527 = vadd.f32 %v4526, 1.0
        %v4528 = vmul.f32 %v4527, %v4512
        %v4529 = vand.u32 2147483647, %v4512
        %vm4530 = vcmp.lt.f32.partialorder %v4529, 0.0004427343
        %v4531 = vsel %vm4530, %v4528, %v4525
        %v4532 = vadd.f32 %v4514, 1.0
        %v4533 = vlog2.pop %v4532
        %v4534 = vmul.f32 %v4533, 0.6931472
        %v4535 = vmul.f32 -0.5, %v4514
        %v4536 = vadd.f32 %v4535, 1.0
        %v4537 = vmul.f32 %v4536, %v4514
        %v4538 = vand.u32 2147483647, %v4514
        %vm4539 = vcmp.lt.f32.partialorder %v4538, 0.0004427343
        %v4540 = vsel %vm4539, %v4537, %v4534
        %v4541 = vadd.f32 %v4516, 1.0
        %v4542 = vlog2.pop %v4541
        %v4543 = vmul.f32 %v4542, 0.6931472
        %v4544 = vmul.f32 -0.5, %v4516
        %v4545 = vadd.f32 %v4544, 1.0
        %v4546 = vmul.f32 %v4545, %v4516
        %v4547 = vand.u32 2147483647, %v4516
        %vm4548 = vcmp.lt.f32.partialorder %v4547, 0.0004427343
        %v4549 = vsel %vm4548, %v4546, %v4543
        %v4550 = vadd.f32 %v4518, 1.0
        %v4551 = vlog2.pop %v4550
        %v4552 = vmul.f32 %v4551, 0.6931472
        %v4553 = vmul.f32 -0.5, %v4518
        %v4554 = vadd.f32 %v4553, 1.0
        %v4555 = vmul.f32 %v4554, %v4518
        %v4556 = vand.u32 2147483647, %v4518
        %vm4557 = vcmp.lt.f32.partialorder %v4556, 0.0004427343
        %v4558 = vsel %vm4557, %v4555, %v4552
        %v4559 = vadd.f32 %v4520, 1.0
        %v4560 = vlog2.pop %v4559
        %v4561 = vmul.f32 %v4560, 0.6931472
        %v4562 = vmul.f32 -0.5, %v4520
        %v4563 = vadd.f32 %v4562, 1.0
        %v4564 = vmul.f32 %v4563, %v4520
        %v4565 = vand.u32 2147483647, %v4520
        %vm4566 = vcmp.lt.f32.partialorder %v4565, 0.0004427343
        %v4567 = vsel %vm4566, %v4564, %v4561
        %v4568 = vadd.f32 %v4522, 1.0
        %v4569 = vlog2.pop %v4568
        %v4570 = vmul.f32 %v4569, 0.6931472
        %v4571 = vmul.f32 -0.5, %v4522
        %v4572 = vadd.f32 %v4571, 1.0
        %v4573 = vmul.f32 %v4572, %v4522
        %v4574 = vand.u32 2147483647, %v4522
        %vm4575 = vcmp.lt.f32.partialorder %v4574, 0.0004427343
        %v4576 = vsel %vm4575, %v4573, %v4570
        %v4577 = vadd.f32 %v4481, %v4531
        %v4578 = vadd.f32 %v4482, %v4540
        %v4579 = vadd.f32 %v4483, %v4549
        %v4580 = vadd.f32 %v4484, %v4558
        %v4581 = vadd.f32 %v4485, %v4567
        %v4582 = vadd.f32 %v4486, %v4576
        %v4583 = vsel %vm4487, %v4493, %v4577
        %v4584 = vsel %vm4488, %v4494, %v4578
        %v4585 = vsel %vm4489, %v4495, %v4579
        %v4586 = vsel %vm4490, %v4496, %v4580
        %v4587 = vsel %vm4491, %v4497, %v4581
        %v4588 = vsel %vm4492, %v4498, %v4582
        %v4589 = vld [vmem:[%s22] sm:$0xff]
        %v4590 = vld [vmem:[%s22 + $0x8] sm:$0xff]
        %v4591 = vld [vmem:[#allocation3] sm:$0x1]
        %v4593 = vperm.slane %v4591, 0
        %4595 = vmatpush.msra.mxu0 0.0
        %4596 = vmatpush.msra.mxu0 0.0
        %4597 = vmatpush.msra.mxu0 0.0
        %4598 = vmatpush.msra.mxu0 0.0
        %4599 = vmatpush.msra.mxu0 0.0
        %4600 = vmatpush.msra.mxu0 0.0
        %4601 = vmatpush.msra.mxu0 0.0
        %4602 = vmatpush.msra.mxu0 0.0
        %4603 = vmatpush.msra.mxu0 0.0
        %4604 = vmatpush.msra.mxu0 0.0
        %4605 = vmatpush.msra.mxu0 0.0
        %4606 = vmatpush.msra.mxu0 0.0
        %4607 = vmatpush.msra.mxu0 0.0
        %4608 = vmatpush.msra.mxu0 0.0
        %4609 = vmatpush.msra.mxu0 %v4590
        %4610 = vmatpush.msra.mxu0 %v4589
        %4611 = vmatmul.f32.gmra.mxu0 %v4429
        %v4612 = vpop.f32.mrf.mxu0
        %v4613 = vadd.f32 %v4593, %v4612
        %4614 = vmatmul.f32.gmra.mxu0 %v4432
        %v4615 = vpop.f32.mrf.mxu0
        %v4616 = vadd.f32 %v4593, %v4615
        %4617 = vmatmul.f32.gmra.mxu0 %v4435
        %v4618 = vpop.f32.mrf.mxu0
        %v4619 = vadd.f32 %v4593, %v4618
        %4620 = vmatmul.f32.gmra.mxu0 %v4438
        %v4621 = vpop.f32.mrf.mxu0
        %v4622 = vadd.f32 %v4593, %v4621
        %4623 = vmatmul.f32.gmra.mxu0 %v4441
        %v4624 = vpop.f32.mrf.mxu0
        %v4625 = vadd.f32 %v4593, %v4624
        %4626 = vmatmul.f32.gmra.mxu0 %v4444
        %v4627 = vpop.f32.mrf.mxu0
        %v4628 = vadd.f32 %v4593, %v4627
        %4629 = vdwg.mxu0
        %v4630 = vld [vmem:[%s871] sm:$0xff]
        %v4631 = vld [vmem:[%s871 + $0x8] sm:$0xff]
        %v4632 = vld [vmem:[%s871 + $0x10] sm:$0xff]
        %v4633 = vld [vmem:[%s871 + $0x18] sm:$0xff]
        %v4634 = vld [vmem:[%s871 + $0x20] sm:$0xff]
        %v4635 = vld [vmem:[%s871 + $0x28] sm:$0xff]
        %v4636 = vld [vmem:[%s866] sm:$0xff]
        %v4637 = vld [vmem:[%s866 + $0x8] sm:$0xff]
        %v4638 = vld [vmem:[%s866 + $0x10] sm:$0xff]
        %v4639 = vld [vmem:[%s866 + $0x18] sm:$0xff]
        %v4640 = vld [vmem:[%s866 + $0x20] sm:$0xff]
        %v4641 = vld [vmem:[%s866 + $0x28] sm:$0xff]
        %v4642 = vmax.f32 %v4583, 1e-37
        %v4643 = vmax.f32 %v4584, 1e-37
        %v4644 = vmax.f32 %v4585, 1e-37
        %v4645 = vmax.f32 %v4586, 1e-37
        %v4646 = vmax.f32 %v4587, 1e-37
        %v4647 = vmax.f32 %v4588, 1e-37
        %v4648 = vlog2.pop %v4642
        %v4649 = vmul.f32 %v4648, 0.6931472
        %v4650 = vlog2.pop %v4643
        %v4651 = vmul.f32 %v4650, 0.6931472
        %v4652 = vlog2.pop %v4644
        %v4653 = vmul.f32 %v4652, 0.6931472
        %v4654 = vlog2.pop %v4645
        %v4655 = vmul.f32 %v4654, 0.6931472
        %v4656 = vlog2.pop %v4646
        %v4657 = vmul.f32 %v4656, 0.6931472
        %v4658 = vlog2.pop %v4647
        %v4659 = vmul.f32 %v4658, 0.6931472
        %v4660 = vmul.f32 %v4630, %v4649
        %v4661 = vmul.f32 %v4631, %v4651
        %v4662 = vmul.f32 %v4632, %v4653
        %v4663 = vmul.f32 %v4633, %v4655
        %v4664 = vmul.f32 %v4634, %v4657
        %v4665 = vmul.f32 %v4635, %v4659
        %vm4666 = vcmask 7168
        %v4667 = vsel %vm4666, %v4660, 0.0
        %v4668 = vsel %vm4666, %v4661, 0.0
        %v4669 = vadd.f32 %v4667, %v4668
        %v4670 = vsel %vm4666, %v4662, 0.0
        %v4671 = vadd.f32 %v4669, %v4670
        %v4672 = vsel %vm4666, %v4663, 0.0
        %v4673 = vadd.f32 %v4671, %v4672
        %v4674 = vsel %vm4666, %v4664, 0.0
        %v4675 = vadd.f32 %v4673, %v4674
        %v4676 = vsel %vm4666, %v4665, 0.0
        %v4677 = vadd.f32 %v4675, %v4676
        %4678 = vadd.xlane.f32.xlu0 %v4677
        %v4679 = vpop.xlane.xlu0 %4678
        %v4680 = vrot.slane %v4679, 4
        %v4681 = vadd.f32 %v4679, %v4680
        %v4682 = vrot.slane %v4681, 2
        %v4683 = vadd.f32 %v4681, %v4682
        %v4684 = vrot.slane %v4683, 1
        %v4685 = vadd.f32 %v4683, %v4684
        %s4686 = vtos %v4685
        %v4687 = vsub.f32 %v4636, %v4613
        %v4688 = vsub.f32 %v4637, %v4616
        %v4689 = vsub.f32 %v4638, %v4619
        %v4690 = vsub.f32 %v4639, %v4622
        %v4691 = vsub.f32 %v4640, %v4625
        %v4692 = vsub.f32 %v4641, %v4628
        %v4693 = vrcp.pop 0.1
        %v4694 = vmul.f32 0.1, %v4693
        %v4695 = vsub.f32 1.0, %v4694
        %v4696 = vmul.f32 %v4693, %v4695
        %v4697 = vadd.f32 %v4693, %v4696
        %vm4698 = vweird.f32 %v4693
        %v4699 = vsel %vm4698, %v4693, %v4697
        %v4700 = vmul.f32 %v4687, %v4699
        %v4701 = vmul.f32 %v4688, %v4699
        %v4702 = vmul.f32 %v4689, %v4699
        %v4703 = vmul.f32 %v4690, %v4699
        %v4704 = vmul.f32 %v4691, %v4699
        %v4705 = vmul.f32 %v4692, %v4699
        %v4706 = vmul.f32 %v4700, %v4700
        %v4707 = vmul.f32 %v4701, %v4701
        %v4708 = vmul.f32 %v4702, %v4702
        %v4709 = vmul.f32 %v4703, %v4703
        %v4710 = vmul.f32 %v4704, %v4704
        %v4711 = vmul.f32 %v4705, %v4705
        %v4712 = vmul.f32 %v4706, -0.5
        %v4713 = vmul.f32 %v4707, -0.5
        %v4714 = vmul.f32 %v4708, -0.5
        %v4715 = vmul.f32 %v4709, -0.5
        %v4716 = vmul.f32 %v4710, -0.5
        %v4717 = vmul.f32 %v4711, -0.5
        %v4718 = vadd.f32 %v4712, 1.3836466
        %v4719 = vadd.f32 %v4713, 1.3836466
        %v4720 = vadd.f32 %v4714, 1.3836466
        %v4721 = vadd.f32 %v4715, 1.3836466
        %v4722 = vadd.f32 %v4716, 1.3836466
        %v4723 = vadd.f32 %v4717, 1.3836466
        %v4724 = vmul.f32 %v4630, %v4718
        %v4725 = vmul.f32 %v4631, %v4719
        %v4726 = vmul.f32 %v4632, %v4720
        %v4727 = vmul.f32 %v4633, %v4721
        %v4728 = vmul.f32 %v4634, %v4722
        %v4729 = vmul.f32 %v4635, %v4723
        %v4730 = vsel %vm4666, %v4724, 0.0
        %v4731 = vsel %vm4666, %v4725, 0.0
        %v4732 = vadd.f32 %v4730, %v4731
        %v4733 = vsel %vm4666, %v4726, 0.0
        %v4734 = vadd.f32 %v4732, %v4733
        %v4735 = vsel %vm4666, %v4727, 0.0
        %v4736 = vadd.f32 %v4734, %v4735
        %v4737 = vsel %vm4666, %v4728, 0.0
        %v4738 = vadd.f32 %v4736, %v4737
        %v4739 = vsel %vm4666, %v4729, 0.0
        %v4740 = vadd.f32 %v4738, %v4739
        %4741 = vadd.xlane.f32.xlu0 %v4740
        %v4742 = vpop.xlane.xlu0 %4741
        %v4743 = vrot.slane %v4742, 4
        %v4744 = vadd.f32 %v4742, %v4743
        %v4745 = vrot.slane %v4744, 2
        %v4746 = vadd.f32 %v4744, %v4745
        %v4747 = vrot.slane %v4746, 1
        %v4748 = vadd.f32 %v4746, %v4747
        %s4749 = vtos %v4748
        %v4750 = vsub.f32 %v4613, %v4636
        %v4751 = vsub.f32 %v4616, %v4637
        %v4752 = vsub.f32 %v4619, %v4638
        %v4753 = vsub.f32 %v4622, %v4639
        %v4754 = vsub.f32 %v4625, %v4640
        %v4755 = vsub.f32 %v4628, %v4641
        %v4756 = vand.u32 2147483647, %v4750
        %v4757 = vand.u32 2147483647, %v4751
        %v4758 = vand.u32 2147483647, %v4752
        %v4759 = vand.u32 2147483647, %v4753
        %v4760 = vand.u32 2147483647, %v4754
        %v4761 = vand.u32 2147483647, %v4755
        %4768 = vrot.lane.b32.xlu0 %v4756, 1
        %v4769 = vpop.permute.xlu0 %4768
        %4770 = vrot.lane.b32.xlu0 %v4757, 1
        %v4771 = vpop.permute.xlu0 %4770
        %4772 = vrot.lane.b32.xlu0 %v4758, 1
        %v4773 = vpop.permute.xlu0 %4772
        %4774 = vrot.lane.b32.xlu0 %v4759, 1
        %v4775 = vpop.permute.xlu0 %4774
        %4776 = vrot.lane.b32.xlu0 %v4760, 1
        %v4777 = vpop.permute.xlu0 %4776
        %4778 = vrot.lane.b32.xlu0 %v4761, 1
        %v4779 = vpop.permute.xlu0 %4778
        %v4786 = vmul.f32 %v4630, %v4769
        %v4787 = vmul.f32 %v4631, %v4771
        %v4788 = vmul.f32 %v4632, %v4773
        %v4789 = vmul.f32 %v4633, %v4775
        %v4790 = vmul.f32 %v4634, %v4777
        %v4791 = vmul.f32 %v4635, %v4779
        %4798 = vrot.lane.b32.xlu0 %v4786, 127
        %v4799 = vpop.permute.xlu0 %4798
        %4800 = vrot.lane.b32.xlu0 %v4787, 127
        %v4801 = vpop.permute.xlu0 %4800
        %4802 = vrot.lane.b32.xlu0 %v4788, 127
        %v4803 = vpop.permute.xlu0 %4802
        %4804 = vrot.lane.b32.xlu0 %v4789, 127
        %v4805 = vpop.permute.xlu0 %4804
        %4806 = vrot.lane.b32.xlu0 %v4790, 127
        %v4807 = vpop.permute.xlu0 %4806
        %4808 = vrot.lane.b32.xlu0 %v4791, 127
        %v4809 = vpop.permute.xlu0 %4808
        %v4816 = vsel %vm4666, %v4799, 0.0
        %v4817 = vsel %vm4666, %v4801, 0.0
        %v4818 = vadd.f32 %v4816, %v4817
        %v4819 = vsel %vm4666, %v4803, 0.0
        %v4820 = vadd.f32 %v4818, %v4819
        %v4821 = vsel %vm4666, %v4805, 0.0
        %v4822 = vadd.f32 %v4820, %v4821
        %v4823 = vsel %vm4666, %v4807, 0.0
        %v4824 = vadd.f32 %v4822, %v4823
        %v4825 = vsel %vm4666, %v4809, 0.0
        %v4826 = vadd.f32 %v4824, %v4825
        %4827 = vadd.xlane.f32.xlu0 %v4826
        %v4828 = vpop.xlane.xlu0 %4827
        %v4829 = vrot.slane %v4828, 4
        %v4830 = vadd.f32 %v4828, %v4829
        %v4831 = vrot.slane %v4830, 2
        %v4832 = vadd.f32 %v4830, %v4831
        %v4833 = vrot.slane %v4832, 1
        %v4834 = vadd.f32 %v4832, %v4833
        %s4835 = vtos %v4834
        %4842 = vrot.lane.b32.xlu0 %v4583, 2
        %v4843 = vpop.permute.xlu0 %4842
        %4844 = vrot.lane.b32.xlu0 %v4584, 2
        %v4845 = vpop.permute.xlu0 %4844
        %4846 = vrot.lane.b32.xlu0 %v4585, 2
        %v4847 = vpop.permute.xlu0 %4846
        %4848 = vrot.lane.b32.xlu0 %v4586, 2
        %v4849 = vpop.permute.xlu0 %4848
        %4850 = vrot.lane.b32.xlu0 %v4587, 2
        %v4851 = vpop.permute.xlu0 %4850
        %4852 = vrot.lane.b32.xlu0 %v4588, 2
        %v4853 = vpop.permute.xlu0 %4852
        %v4860 = vmul.f32 %v4630, %v4843
        %v4861 = vmul.f32 %v4631, %v4845
        %v4862 = vmul.f32 %v4632, %v4847
        %v4863 = vmul.f32 %v4633, %v4849
        %v4864 = vmul.f32 %v4634, %v4851
        %v4865 = vmul.f32 %v4635, %v4853
        %4872 = vrot.lane.b32.xlu0 %v4860, 126
        %v4873 = vpop.permute.xlu0 %4872
        %4874 = vrot.lane.b32.xlu0 %v4861, 126
        %v4875 = vpop.permute.xlu0 %4874
        %4876 = vrot.lane.b32.xlu0 %v4862, 126
        %v4877 = vpop.permute.xlu0 %4876
        %4878 = vrot.lane.b32.xlu0 %v4863, 126
        %v4879 = vpop.permute.xlu0 %4878
        %4880 = vrot.lane.b32.xlu0 %v4864, 126
        %v4881 = vpop.permute.xlu0 %4880
        %4882 = vrot.lane.b32.xlu0 %v4865, 126
        %v4883 = vpop.permute.xlu0 %4882
        %v4890 = vsel %vm4666, %v4873, 0.0
        %v4891 = vsel %vm4666, %v4875, 0.0
        %v4892 = vadd.f32 %v4890, %v4891
        %v4893 = vsel %vm4666, %v4877, 0.0
        %v4894 = vadd.f32 %v4892, %v4893
        %v4895 = vsel %vm4666, %v4879, 0.0
        %v4896 = vadd.f32 %v4894, %v4895
        %v4897 = vsel %vm4666, %v4881, 0.0
        %v4898 = vadd.f32 %v4896, %v4897
        %v4899 = vsel %vm4666, %v4883, 0.0
        %v4900 = vadd.f32 %v4898, %v4899
        %4901 = vadd.xlane.f32.xlu0 %v4900
        %v4902 = vpop.xlane.xlu0 %4901
        %v4903 = vrot.slane %v4902, 4
        %v4904 = vadd.f32 %v4902, %v4903
        %v4905 = vrot.slane %v4904, 2
        %v4906 = vadd.f32 %v4904, %v4905
        %v4907 = vrot.slane %v4906, 1
        %v4908 = vadd.f32 %v4906, %v4907
        %s4909 = vtos %v4908
        %vm4910 = vcmp.eq.s32.totalorder %v4055, 0
        %v4911 = vstv %s4686
        %v4912 = vsel %vm4910, %v4911, 0.0
        %vm4913 = vcmp.eq.s32.totalorder %v4055, 1
        %v4914 = vstv %s4749
        %v4915 = vsel %vm4913, %v4914, 0.0
        %v4916 = vadd.f32 %v4912, %v4915
        %vm4917 = vcmp.eq.s32.totalorder %v4055, 2
        %v4918 = vstv %s4835
        %v4919 = vsel %vm4917, %v4918, 0.0
        %v4920 = vadd.f32 %v4916, %v4919
        %vm4921 = vcmp.eq.s32.totalorder %v4055, 3
        %v4922 = vstv %s4909
        %v4923 = vsel %vm4921, %v4922, 0.0
        %v4924 = vadd.f32 %v4920, %v4923
        %vm4925 = vcmp.eq.s32.totalorder %v4055, 4
        %v4926 = vstv %s1009
        %v4927 = vsel %vm4925, %v4926, 0.0
        %v4928 = vadd.f32 %v4924, %v4927
        %4929 = vst [vmem:[%s874] sm:$0x1] %v4928
        %p4930 = scmp.eq.s32.totalorder %s44, 1
        // Predicated region
        $region117: #{_device_forward.3} parent=115 // pred_check
          %p4931 = pneg %p4930
        $region118: #{_device_forward.3} parent=115 // pred_check_branch
          %4933 = sbr.rel (%p4931) target = $region120
        $region119: #{_device_forward.3} parent=115 // pred_region
          %4934 = vst [vmem:[%s843] sm:$0xff] 0.0
          %4935 = vst [vmem:[%s843 + $0x8] sm:$0xff] 0.0
          %4936 = vst [vmem:[%s843 + $0x10] sm:$0xff] 0.0
          %4937 = vst [vmem:[%s843 + $0x18] sm:$0xff] 0.0
          %4938 = vst [vmem:[%s843 + $0x20] sm:$0xff] 0.0
          %4939 = vst [vmem:[%s843 + $0x28] sm:$0xff] 0.0
          %4940 = vst.msk [vmem:[%s843] sm:$0xff] %vm4167, %v4405
          %4941 = vst.msk [vmem:[%s843 + $0x8] sm:$0xff] %vm4167, %v4408
          %4942 = vst.msk [vmem:[%s843 + $0x10] sm:$0xff] %vm4167, %v4411
          %4943 = vst.msk [vmem:[%s843 + $0x18] sm:$0xff] %vm4167, %v4414
          %4944 = vst.msk [vmem:[%s843 + $0x20] sm:$0xff] %vm4167, %v4417
          %4945 = vst.msk [vmem:[%s843 + $0x28] sm:$0xff] %vm4167, %v4420
          %4946 = vrot.lane.b32.xlu0 %v4583, 16
          %v4947 = vpop.permute.xlu0 %4946
          %4948 = vrot.lane.b32.xlu0 %v4584, 16
          %v4949 = vpop.permute.xlu0 %4948
          %4950 = vrot.lane.b32.xlu0 %v4585, 16
          %v4951 = vpop.permute.xlu0 %4950
          %4952 = vrot.lane.b32.xlu0 %v4586, 16
          %v4953 = vpop.permute.xlu0 %4952
          %4954 = vrot.lane.b32.xlu0 %v4587, 16
          %v4955 = vpop.permute.xlu0 %4954
          %4956 = vrot.lane.b32.xlu0 %v4588, 16
          %v4957 = vpop.permute.xlu0 %4956
          %vm4964 = vcmask 138368
          %4965 = vst.msk [vmem:[%s843] sm:$0xff] %vm4964, %v4947
          %4966 = vst.msk [vmem:[%s843 + $0x8] sm:$0xff] %vm4964, %v4949
          %4967 = vst.msk [vmem:[%s843 + $0x10] sm:$0xff] %vm4964, %v4951
          %4968 = vst.msk [vmem:[%s843 + $0x18] sm:$0xff] %vm4964, %v4953
          %4969 = vst.msk [vmem:[%s843 + $0x20] sm:$0xff] %vm4964, %v4955
          %4970 = vst.msk [vmem:[%s843 + $0x28] sm:$0xff] %vm4964, %v4957
          %4977 = vrot.lane.b32.xlu0 %v4613, 17
          %v4978 = vpop.permute.xlu0 %4977
          %4979 = vrot.lane.b32.xlu0 %v4616, 17
          %v4980 = vpop.permute.xlu0 %4979
          %4981 = vrot.lane.b32.xlu0 %v4619, 17
          %v4982 = vpop.permute.xlu0 %4981
          %4983 = vrot.lane.b32.xlu0 %v4622, 17
          %v4984 = vpop.permute.xlu0 %4983
          %4985 = vrot.lane.b32.xlu0 %v4625, 17
          %v4986 = vpop.permute.xlu0 %4985
          %4987 = vrot.lane.b32.xlu0 %v4628, 17
          %v4988 = vpop.permute.xlu0 %4987
          %vm4995 = vcmask 146568
          %4996 = vst.msk [vmem:[%s843] sm:$0xff] %vm4995, %v4978
          %4997 = vst.msk [vmem:[%s843 + $0x8] sm:$0xff] %vm4995, %v4980
          %4998 = vst.msk [vmem:[%s843 + $0x10] sm:$0xff] %vm4995, %v4982
          %4999 = vst.msk [vmem:[%s843 + $0x18] sm:$0xff] %vm4995, %v4984
          %5000 = vst.msk [vmem:[%s843 + $0x20] sm:$0xff] %vm4995, %v4986
          %5001 = vst.msk [vmem:[%s843 + $0x28] sm:$0xff] %vm4995, %v4988
        $region120: #{_device_forward.3} parent=115 // pred_fallthru
          _
        %p5002 = scmp.lt.s32.totalorder %s44, 1
        %s5003 = scalar_select %p5002, %s44, 1
        %s5004 = scalar_lea.vmem %s24, %s5003
        %s5005 = sand.u32 %s617, 1
        %s5006 = scalar_lea.sflag [#allocation5], %s5005
        %s5007 = sand.u32 %s617, 1
        %s5008 = smul.addr %s5007, 48
        %s5009 = scalar_lea.vmem [#allocation4], %s5008
        // Predicated region
        $region121: #{_device_forward.3} parent=115 // pred_check
          %p5010 = pneg %p601
        $region122: #{_device_forward.3} parent=115 // pred_check_branch
          %5012 = sbr.rel (%p5010) target = $region124
        $region123: #{_device_forward.3} parent=115 // pred_region
          _
        $region124: #{_device_forward.3} parent=115 // pred_fallthru
          _
        // Predicated region
        $region125: #{_device_forward.3} parent=115 // pred_check
          %p5013 = pneg %p627
        $region126: #{_device_forward.3} parent=115 // pred_check_branch
          %5015 = sbr.rel (%p5013) target = $region128
        $region127: #{_device_forward.3} parent=115 // pred_region
          %5017 = vsyncadd %s5006, 0
          %s5018 = smul.addr %s44, 6
          %s5019 = smul.addr %s5018, 8
          %s5020 = scalar_lea.hbm %s25, %s5019
          %s5021 = sshll.u32 %s5009, 4
          %s5022 = int_to_ptr.vmem [resolvable:$true] %s5021
          %s5023 = sshll.u32 %s5020, 4
          %s5024 = int_to_ptr.hbm [resolvable:$true] %s5023
          %5029 = dma.vmem_to_hbm [thread:$0]  %s5022, 768, %s5024, %s5006, 128, 128, 8
        $region128: #{_device_forward.3} parent=115 // pred_fallthru
          _
      $region116: #{_device_forward.3} parent=5 // pred_fallthru
        _
      %p5030 = scmp.le.s32.totalorder 2, %s39
      // Predicated region
      $region129: #{_device_forward.3} parent=5 // pred_check
        %p5031 = pneg %p5030
      $region130: #{_device_forward.3} parent=5 // pred_check_branch
        %5033 = sbr.rel (%p5031) target = $region132
      $region131: #{_device_forward.3} parent=5 // pred_region
        %s5034 = ssub.s32 %s39, 2
        // Predicated region
        $region133: #{_device_forward.3} parent=131 // pred_check
          %p5035 = pneg %p607
        $region134: #{_device_forward.3} parent=131 // pred_check_branch
          %5037 = sbr.rel (%p5035) target = $region136
        $region135: #{_device_forward.3} parent=131 // pred_region
          %p5038 = scmp.lt.s32.totalorder %s45, 1
          %s5039 = scalar_select %p5038, %s45, 1
          %s5040 = scalar_lea.vmem %s24, %s5039
        $region136: #{_device_forward.3} parent=131 // pred_fallthru
          _
        // Predicated region
        $region137: #{_device_forward.3} parent=131 // pred_check
          %p5041 = pneg %p633
        $region138: #{_device_forward.3} parent=131 // pred_check_branch
          %5043 = sbr.rel (%p5041) target = $region140
        $region139: #{_device_forward.3} parent=131 // pred_region
          %s5044 = sand.u32 %s618, 1
          %s5045 = scalar_lea.sflag [#allocation5], %s5044
          %s5046 = sand.u32 %s618, 1
          %s5047 = smul.addr %s5046, 48
          %s5048 = scalar_lea.vmem [#allocation4], %s5047
          %5050 = dma.done %s5045, 768
        $region140: #{_device_forward.3} parent=131 // pred_fallthru
          _
      $region132: #{_device_forward.3} parent=5 // pred_fallthru
        _
    $region6: #{_device_forward.3} parent=1 // loop_footer
      %s43 = sadd.s32 1, %s39
    $region7: #{_device_forward.3} parent=1 // loop_footer_branch
      %38 = sbr.rel target = $region3
    $region8: #{_device_forward.3} parent=1 // loop_exit
      _
    %5051 = vsyncpa [#allocation5], 1
    %s5052 = scalar_lea.sflag [#allocation5], 1
    %5053 = vsyncpa %s5052, 1

</llo_original>
